<compile_context>
chip_gen: v7x
topology: tpu7x:2x2x1
jax: 0.10.0
libtpu: 0.0.40
codegen_flags: <defaults>
</compile_context>

<pallas_src>
import functools

import jax
import jax.numpy as jnp
import numpy as np
from jax.experimental import pallas as pl
from jax.experimental.pallas import tpu as pltpu

# Fixed ConvNet geometry: 1x20x20 -> conv1(20ch) -> pool -> conv2(50ch) -> pool
# -> fc1(1250->500) -> fc2(500->10) -> log_softmax.
H1 = 20                 # conv1 spatial size
P1 = H1 + 2             # zero-padded conv1 spatial size (22)
H2 = 10                 # spatial size after pool1
H3 = 5                  # spatial size after pool2
C1 = 20                 # conv1 out channels
C2 = 50                 # conv2 out channels
NH = 500                # fc1 width
NC = 10                 # classes
L1 = C1 * H1            # 400 lanes: conv1 activations, lane = c1*20 + w
L2 = C2 * H2            # 500 lanes: conv2 activations, lane = c2*10 + w
K1 = 3 * P1             # 66: conv1 matmul K = (h-tap ki, padded column j)
ROW_CHUNK = 32          # rows handled at once in the pooling passes (vreg bound)


def _row_chunks(n, chunk=ROW_CHUNK):
    out, s = [], 0
    while s < n:
        out.append((s, min(chunk, n - s)))
        s += chunk
    return tuple(out)


def _make_kernel(bt):
    chunks = _row_chunks(bt)
    n2 = H2 * bt   # conv2 output rows per tile (row = h2*bt + b)

    def kernel(xin_ref, m1_ref, b1_ref, m2_ref, b2_ref,
               f1_ref, fc1b_ref, fc2w_ref, fc2b_ref,
               out_ref,
               h1_ref, p1_ref, h2_ref, fc1_ref):
        f32, bf16 = jnp.float32, jnp.bfloat16

        # ---- conv1 (1->20, 3x3, pad 1): ONE MXU matmul.  The wrapper packs the
        #      zero-padded input as [rows=(padded_row, batch), lanes=(ki, col)];
        #      M1 scatters the 3x3 taps onto output lanes (c1, w).
        h1_ref[...] = jnp.dot(xin_ref[0], m1_ref[...],
                              preferred_element_type=f32)

        # ---- maxpool1 2x2/2 fused with conv1 bias + ReLU.  h-pair = two
        #      contiguous row blocks, w-pair = one-lane shifted max.  Output is
        #      bf16 with one zero row-block per side (conv2's h zero-padding).
        b1l = b1_ref[...]
        p1_ref[pl.ds(0, bt), :] = jnp.zeros((bt, L1 - 1), bf16)
        p1_ref[pl.ds((H2 + 1) * bt, bt), :] = jnp.zeros((bt, L1 - 1), bf16)
        for hp in range(H2):
            for cs, cn in chunks:
                a = h1_ref[pl.ds((2 * hp + 1) * bt + cs, cn), :]
                b = h1_ref[pl.ds((2 * hp + 2) * bt + cs, cn), :]
                hm = jnp.maximum(a, b)                            # pool over h
                wm = jnp.maximum(hm[:, :L1 - 1], hm[:, 1:L1])     # pool over w
                act = jnp.maximum(wm + b1l[:, :L1 - 1], 0.0)      # bias + ReLU
                p1_ref[pl.ds((hp + 1) * bt + cs, cn), :] = act.astype(bf16)

        # ---- conv2 (20->50, 3x3, pad 1): three MXU matmuls (one per h-tap);
        #      the w-taps and the Cin reduction are folded into the structured
        #      K=399 weights, so no im2col buffer is needed.
        for ki in range(3):
            lhs = p1_ref[pl.ds(ki * bt, n2), :]
            c = jnp.dot(lhs, m2_ref[ki], preferred_element_type=f32)
            if ki == 0:
                h2_ref[...] = c
            else:
                h2_ref[...] += c

        # ---- maxpool2 2x2/2 fused with conv2 bias + ReLU, consumed on the fly
        #      by fc1 (5 accumulated matmuls, one per pooled row h3 -- this IS
        #      the NCHW flatten, pre-baked into the f1 weight scatter).
        b2l = b2_ref[...]
        for h3 in range(H3):
            for cs, cn in chunks:
                a = h2_ref[pl.ds((2 * h3) * bt + cs, cn), :]
                b = h2_ref[pl.ds((2 * h3 + 1) * bt + cs, cn), :]
                hm = jnp.maximum(a, b)
                wm = jnp.maximum(hm[:, :L2 - 1], hm[:, 1:L2])
                act = jnp.maximum(wm + b2l[:, :L2 - 1], 0.0)
                c = jnp.dot(act.astype(bf16), f1_ref[h3],
                            preferred_element_type=f32)
                if h3 == 0:
                    fc1_ref[pl.ds(cs, cn), :] = c
                else:
                    fc1_ref[pl.ds(cs, cn), :] += c

        # ---- fc1 bias + ReLU, fc2, log_softmax ----
        h = jnp.maximum(fc1_ref[...] + fc1b_ref[...], 0.0)
        z = jnp.dot(h.astype(bf16), fc2w_ref[...],
                    preferred_element_type=f32) + fc2b_ref[...]
        m = jnp.max(z, axis=1, keepdims=True)
        lse = m + jnp.log(jnp.sum(jnp.exp(z - m), axis=1, keepdims=True))
        out_ref[...] = (z - lse).astype(out_ref.dtype)

    return kernel


def prepare_params(params):
    """One-time repacking of PyTorch-layout parameters into the kernel's
    structured-matmul layouts (plain numpy, outside jit)."""
    cw1 = np.asarray(params["conv1_w"], np.float32)    # (20, 1, 3, 3)
    cb1 = np.asarray(params["conv1_b"], np.float32)    # (20,)
    cw2 = np.asarray(params["conv2_w"], np.float32)    # (50, 20, 3, 3)
    cb2 = np.asarray(params["conv2_b"], np.float32)    # (50,)
    fw1 = np.asarray(params["fc1_w"], np.float32)      # (500, 1250)
    fb1 = np.asarray(params["fc1_b"], np.float32)      # (500,)
    fw2 = np.asarray(params["fc2_w"], np.float32)      # (10, 500)
    fb2 = np.asarray(params["fc2_b"], np.float32)      # (10,)

    # conv1 as one matmul:  K = (ki, padded col j) = ki*22 + j,
    #                       N = (c1, w)            = c1*20 + w.
    m1 = np.zeros((K1, L1), np.float32)
    c1s = np.arange(C1)
    for ki in range(3):
        for kj in range(3):
            for w in range(H1):
                m1[ki * P1 + (w + kj), c1s * H1 + w] = cw1[:, 0, ki, kj]

    # conv2 as 3 matmuls (one per h-tap ki):
    #   K rows = pooled1 lanes (c1, 2*w1) = c1*20 + 2*w1 (odd-w lanes are unused
    #            pooling by-products -> zero weight rows),
    #   N cols = (c2, w2) = c2*10 + w2.  The w-taps kj are folded in here, which
    #   also implements the conv's zero-padding along w for free.
    m2 = np.zeros((3, L1 - 1, L2), np.float32)
    c2s = np.arange(C2)
    for ki in range(3):
        for kj in range(3):
            for w2 in range(H2):
                w1 = w2 + kj - 1
                if 0 <= w1 < H2:
                    for c1 in range(C1):
                        m2[ki, c1 * H1 + 2 * w1, c2s * H2 + w2] = cw2[:, c1, ki, kj]

    # fc1 as 5 matmuls (one per pooled output row h3):
    #   K rows = pooled2 lanes (c2, 2*w3) = c2*10 + 2*w3,
    #   N cols = 500 hidden units.  PyTorch NCHW flatten index = c2*25 + h3*5 + w3.
    f1 = np.zeros((H3, L2 - 1, NH), np.float32)
    for h3 in range(H3):
        for w3 in range(H3):
            for c2 in range(C2):
                f1[h3, c2 * H2 + 2 * w3, :] = fw1[:, c2 * 25 + h3 * 5 + w3]

    bf16, f32 = jnp.bfloat16, jnp.float32
    return {
        "m1": jnp.asarray(m1, bf16),
        "b1": jnp.asarray(np.repeat(cb1, H1)[None, :], f32),   # lane c1*20+w
        "m2": jnp.asarray(m2, bf16),
        "b2": jnp.asarray(np.repeat(cb2, H2)[None, :], f32),   # lane c2*10+w
        "f1": jnp.asarray(f1, bf16),
        "fc1b": jnp.asarray(fb1[None, :], f32),
        "fc2w": jnp.asarray(fw2.T, bf16),                      # (500, 10)
        "fc2b": jnp.asarray(fb2[None, :], f32),
    }


def _pick_tile_and_vmem():
    """Generation-aware batch tile / VMEM limit (v5e/v6e: 128 MiB, v7x: 64 MiB)."""
    try:
        cap = pltpu.get_tpu_info().vmem_capacity_bytes
    except Exception:
        cap = 64 * 1024 * 1024
    if cap >= 100 * 1024 * 1024:
        return 256, 64 * 1024 * 1024       # v5e / v6e
    return 128, 40 * 1024 * 1024           # v7x (64 MiB physical VMEM)


@functools.partial(jax.jit, static_argnums=(2, 3))
def _forward_impl(x, kp, b_tile, vmem_limit):
    B = x.shape[0]
    assert x.shape[1:] == (1, H1, H1)
    bt = b_tile
    T = -(-B // bt)
    Bp = T * bt

    # --- tiny per-forward input prep (~6 KiB/sample): zero-pad, pre-shift the
    #     3 h-taps onto lanes (wrapper-side "im2col" of the single channel),
    #     go (row, batch)-major inside each tile, cast to bf16.
    x2 = x.reshape(B, H1, H1).astype(jnp.float32)
    if Bp > B:
        x2 = jnp.concatenate([x2, jnp.zeros((Bp - B, H1, H1), jnp.float32)], 0)
    xq = jnp.pad(x2, ((0, 0), (2, 2), (1, 1)))                  # (Bp, 24, 22)
    xcat = jnp.concatenate([xq[:, k:k + P1, :] for k in range(3)], axis=-1)
    xcat = xcat.reshape(T, bt, P1, K1).transpose(0, 2, 1, 3)
    xcat = xcat.reshape(T, P1 * bt, K1).astype(jnp.bfloat16)

    weight_bytes = sum(int(np.prod(v.shape)) * v.dtype.itemsize
                       for v in kp.values())
    flops = T * (2 * (P1 * bt) * K1 * L1
                 + 3 * 2 * (H2 * bt) * (L1 - 1) * L2
                 + H3 * 2 * bt * (L2 - 1) * NH
                 + 2 * bt * NH * NC)
    cost = pl.CostEstimate(
        flops=flops,
        transcendentals=Bp * (NC + 1),
        bytes_accessed=int(xcat.size) * 2 + weight_bytes + Bp * NC * 4)

    out = pl.pallas_call(
        _make_kernel(bt),
        out_shape=jax.ShapeDtypeStruct((Bp, NC), jnp.float32),
        grid=(T,),
        in_specs=[
            pl.BlockSpec((1, P1 * bt, K1), lambda i: (i, 0, 0)),   # packed input
            pl.BlockSpec((K1, L1), lambda i: (0, 0)),              # M1
            pl.BlockSpec((1, L1), lambda i: (0, 0)),               # conv1 bias
            pl.BlockSpec((3, L1 - 1, L2), lambda i: (0, 0, 0)),    # M2
            pl.BlockSpec((1, L2), lambda i: (0, 0)),               # conv2 bias
            pl.BlockSpec((H3, L2 - 1, NH), lambda i: (0, 0, 0)),   # fc1 (structured)
            pl.BlockSpec((1, NH), lambda i: (0, 0)),               # fc1 bias
            pl.BlockSpec((NH, NC), lambda i: (0, 0)),              # fc2 weight
            pl.BlockSpec((1, NC), lambda i: (0, 0)),               # fc2 bias
        ],
        out_specs=pl.BlockSpec((bt, NC), lambda i: (i, 0)),
        scratch_shapes=[
            pltpu.VMEM((P1 * bt, L1), jnp.float32),               # conv1 output
            pltpu.VMEM(((H2 + 2) * bt, L1 - 1), jnp.bfloat16),    # pooled1 (+pad)
            pltpu.VMEM((H2 * bt, L2), jnp.float32),               # conv2 output
            pltpu.VMEM((bt, NH), jnp.float32),                    # fc1 accumulator
        ],
        compiler_params=pltpu.CompilerParams(
            dimension_semantics=("parallel",),
            vmem_limit_bytes=int(vmem_limit)),
        cost_estimate=cost,
    )(xcat, kp["m1"], kp["b1"], kp["m2"], kp["b2"],
      kp["f1"], kp["fc1b"], kp["fc2w"], kp["fc2b"])
    return out[:B]


def convnet_forward(x, kp, b_tile=None, vmem_limit=None):
    """x: [B, 1, 20, 20] float32; kp: output of prepare_params()."""
    bt_max, vl = _pick_tile_and_vmem()
    if b_tile is None:
        b_tile = min(bt_max, -(-x.shape[0] // 8) * 8)   # multiple of 8, <= max tile
    if vmem_limit is None:
        vmem_limit = vl
    return _forward_impl(x, kp, int(b_tile), int(vmem_limit))


# --------------------------------------------------------------------------
# Pure-JAX references for numerical cross-checks.
# --------------------------------------------------------------------------
def convnet_reference(x, params):
    """Faithful float32 re-implementation of the PyTorch module."""
    dn = ("NCHW", "OIHW", "NCHW")

    def pool(h):
        return jnp.maximum(
            jnp.maximum(h[:, :, 0::2, 0::2], h[:, :, 0::2, 1::2]),
            jnp.maximum(h[:, :, 1::2, 0::2], h[:, :, 1::2, 1::2]))

    h = jax.lax.conv_general_dilated(x, params["conv1_w"], (1, 1),
                                     ((1, 1), (1, 1)), dimension_numbers=dn)
    h = jax.nn.relu(h + params["conv1_b"].reshape(1, -1, 1, 1))
    h = pool(h)
    h = jax.lax.conv_general_dilated(h, params["conv2_w"], (1, 1),
                                     ((1, 1), (1, 1)), dimension_numbers=dn)
    h = jax.nn.relu(h + params["conv2_b"].reshape(1, -1, 1, 1))
    h = pool(h)
    h = h.reshape(h.shape[0], -1)
    h = jax.nn.relu(h @ params["fc1_w"].T + params["fc1_b"])
    h = h @ params["fc2_w"].T + params["fc2_b"]
    return jax.nn.log_softmax(h, axis=1)


def convnet_reference_matched(x, params):
    """Same module, but with bf16 operands / f32 accumulation at exactly the
    points the Pallas kernel casts -- the tight numerical reference."""
    f32, bf16 = jnp.float32, jnp.bfloat16
    dn = ("NCHW", "OIHW", "NCHW")

    def pool(h):
        return jnp.maximum(
            jnp.maximum(h[:, :, 0::2, 0::2], h[:, :, 0::2, 1::2]),
            jnp.maximum(h[:, :, 1::2, 0::2], h[:, :, 1::2, 1::2]))

    h = jax.lax.conv_general_dilated(
        x.astype(bf16), params["conv1_w"].astype(bf16), (1, 1),
        ((1, 1), (1, 1)), dimension_numbers=dn, preferred_element_type=f32)
    h = jax.nn.relu(h + params["conv1_b"].reshape(1, -1, 1, 1))
    h = pool(h).astype(bf16)
    h = jax.lax.conv_general_dilated(
        h, params["conv2_w"].astype(bf16), (1, 1),
        ((1, 1), (1, 1)), dimension_numbers=dn, preferred_element_type=f32)
    h = jax.nn.relu(h + params["conv2_b"].reshape(1, -1, 1, 1))
    h = pool(h)
    h = h.reshape(h.shape[0], -1).astype(bf16)
    h = jnp.dot(h, params["fc1_w"].T.astype(bf16), preferred_element_type=f32)
    h = jax.nn.relu(h + params["fc1_b"])
    h = jnp.dot(h.astype(bf16), params["fc2_w"].T.astype(bf16),
                preferred_element_type=f32)
    h = h + params["fc2_b"]
    return jax.nn.log_softmax(h, axis=1)


def init_params(key):
    ks = jax.random.split(key, 8)
    scale = 0.05
    return {
        "conv1_w": scale * jax.random.normal(ks[0], (20, 1, 3, 3), jnp.float32),
        "conv1_b": scale * jax.random.normal(ks[1], (20,), jnp.float32),
        "conv2_w": scale * jax.random.normal(ks[2], (50, 20, 3, 3), jnp.float32),
        "conv2_b": scale * jax.random.normal(ks[3], (50,), jnp.float32),
        "fc1_w": scale * jax.random.normal(ks[4], (500, 1250), jnp.float32),
        "fc1_b": scale * jax.random.normal(ks[5], (500,), jnp.float32),
        "fc2_w": scale * jax.random.normal(ks[6], (10, 500), jnp.float32),
        "fc2_b": scale * jax.random.normal(ks[7], (10,), jnp.float32),
    }


if __name__ == "__main__":
    key = jax.random.PRNGKey(0)
    pkey, xkey = jax.random.split(key)
    params = init_params(pkey)
    # Input consistent with the module: 1 channel, 20x20 spatial (50*5*5 = 1250).
    x = jax.random.normal(xkey, (2, 1, H1, H1), jnp.float32)

    kp = prepare_params(params)           # one-time layout prep, outside jit
    out = convnet_forward(x, kp)
    out = jax.block_until_ready(out)

    assert out.shape == (2, NC)
    # log_softmax sanity: rows sum (in prob space) to ~1
    assert jnp.allclose(jnp.sum(jnp.exp(out), axis=1), 1.0, atol=1e-4)

    # Tight check against a reference with identical (bf16-operand, f32-accum)
    # numerics -- catches any layout / structured-weight regression.
    ref_m = convnet_reference_matched(x, params)
    err_m = float(jnp.max(jnp.abs(out - ref_m)))
    assert err_m < 5e-3, err_m

    # Loose sanity check against the plain float32 reference (the kernel feeds
    # bf16 operands to the MXU by design, so a few 1e-3 of drift is expected).
    ref32 = convnet_reference(x, params)
    err32 = float(jnp.max(jnp.abs(out - ref32)))
    assert err32 < 3e-2, err32

    print("KERNEL_OK")
</pallas_src>

<mosaic_0001>
module attributes {stable_mosaic.version = 11 : i64} {
  func.func @kernel(%arg0: i32, %arg1: memref<1x176x66xbf16, #tpu.memory_space<vmem>>, %arg2: memref<66x400xbf16, #tpu.memory_space<vmem>>, %arg3: memref<1x400xf32, #tpu.memory_space<vmem>>, %arg4: memref<3x399x500xbf16, #tpu.memory_space<vmem>>, %arg5: memref<1x500xf32, #tpu.memory_space<vmem>>, %arg6: memref<5x499x500xbf16, #tpu.memory_space<vmem>>, %arg7: memref<1x500xf32, #tpu.memory_space<vmem>>, %arg8: memref<500x10xbf16, #tpu.memory_space<vmem>>, %arg9: memref<1x10xf32, #tpu.memory_space<vmem>>, %arg10: memref<8x10xf32, #tpu.memory_space<vmem>>, %arg11: memref<176x400xf32, #tpu.memory_space<vmem>>, %arg12: memref<96x399xbf16, #tpu.memory_space<vmem>>, %arg13: memref<80x500xf32, #tpu.memory_space<vmem>>, %arg14: memref<8x500xf32, #tpu.memory_space<vmem>>) attributes {dimension_semantics = [#tpu.dimension_semantics<parallel>], iteration_bounds = array<i64: 1>, scalar_prefetch = 0 : i64, scratch_operands = 4 : i64, tpu.core_type = #tpu.core_type<tc>, window_params = [{transform_indices = @transform_0, window_bounds = array<i64: 1, 176, 66>}, {pipeline_mode = #tpu.pipeline_mode<synchronous>, transform_indices = @transform_1, window_bounds = array<i64: 66, 400>}, {pipeline_mode = #tpu.pipeline_mode<synchronous>, transform_indices = @transform_2, window_bounds = array<i64: 1, 400>}, {pipeline_mode = #tpu.pipeline_mode<synchronous>, transform_indices = @transform_3, window_bounds = array<i64: 3, 399, 500>}, {pipeline_mode = #tpu.pipeline_mode<synchronous>, transform_indices = @transform_4, window_bounds = array<i64: 1, 500>}, {pipeline_mode = #tpu.pipeline_mode<synchronous>, transform_indices = @transform_5, window_bounds = array<i64: 5, 499, 500>}, {pipeline_mode = #tpu.pipeline_mode<synchronous>, transform_indices = @transform_6, window_bounds = array<i64: 1, 500>}, {pipeline_mode = #tpu.pipeline_mode<synchronous>, transform_indices = @transform_7, window_bounds = array<i64: 500, 10>}, {pipeline_mode = #tpu.pipeline_mode<synchronous>, transform_indices = @transform_8, window_bounds = array<i64: 1, 10>}, {transform_indices = @transform_9, window_bounds = array<i64: 8, 10>}]} {
    %c0 = arith.constant 0 : index
    %c0_0 = arith.constant 0 : index
    %c0_1 = arith.constant 0 : index
    %0 = vector.load %arg1[%c0, %c0_0, %c0_1] : memref<1x176x66xbf16, #tpu.memory_space<vmem>>, vector<1x176x66xbf16>
    %1 = vector.shape_cast %0 : vector<1x176x66xbf16> to vector<176x66xbf16>
    %c0_2 = arith.constant 0 : index
    %c0_3 = arith.constant 0 : index
    %2 = vector.load %arg2[%c0_2, %c0_3] : memref<66x400xbf16, #tpu.memory_space<vmem>>, vector<66x400xbf16>
    %cst = arith.constant dense<0.000000e+00> : vector<176x400xf32>
    %3 = tpu.matmul %1, %2, %cst {dimension_numbers = #tpu.dot_dimension_numbers<[1], [0], [0], [1], [0, 0, 1, 1], [], []>} : vector<176x66xbf16>, vector<66x400xbf16>, vector<176x400xf32> -> vector<176x400xf32>
    %c0_4 = arith.constant 0 : index
    %c0_5 = arith.constant 0 : index
    %4 = vector.load %arg11[%c0_4, %c0_5] : memref<176x400xf32, #tpu.memory_space<vmem>>, vector<176x400xf32>
    tpu.vector_store %arg11[%c0_4, %c0_5], %3 {strides = array<i32>} : memref<176x400xf32, #tpu.memory_space<vmem>>, vector<176x400xf32>,
    %c0_6 = arith.constant 0 : index
    %c0_7 = arith.constant 0 : index
    %5 = vector.load %arg3[%c0_6, %c0_7] : memref<1x400xf32, #tpu.memory_space<vmem>>, vector<1x400xf32>
    %cst_8 = arith.constant 0.000000e+00 : bf16
    %6 = vector.broadcast %cst_8 : bf16 to vector<8x399xbf16>
    %c0_9 = arith.constant 0 : index
    %c0_10 = arith.constant 0 : index
    %7 = vector.load %arg12[%c0_9, %c0_10] : memref<96x399xbf16, #tpu.memory_space<vmem>>, vector<8x399xbf16>
    tpu.vector_store %arg12[%c0_9, %c0_10], %6 {strides = array<i32>} : memref<96x399xbf16, #tpu.memory_space<vmem>>, vector<8x399xbf16>,
    %cst_11 = arith.constant 0.000000e+00 : bf16
    %8 = vector.broadcast %cst_11 : bf16 to vector<8x399xbf16>
    %c88 = arith.constant 88 : index
    %c0_12 = arith.constant 0 : index
    %9 = vector.load %arg12[%c88, %c0_12] : memref<96x399xbf16, #tpu.memory_space<vmem>>, vector<8x399xbf16>
    tpu.vector_store %arg12[%c88, %c0_12], %8 {strides = array<i32>} : memref<96x399xbf16, #tpu.memory_space<vmem>>, vector<8x399xbf16>,
    %c8 = arith.constant 8 : index
    %c0_13 = arith.constant 0 : index
    %10 = vector.load %arg11[%c8, %c0_13] : memref<176x400xf32, #tpu.memory_space<vmem>>, vector<8x400xf32>
    %c16 = arith.constant 16 : index
    %c0_14 = arith.constant 0 : index
    %11 = vector.load %arg11[%c16, %c0_14] : memref<176x400xf32, #tpu.memory_space<vmem>>, vector<8x400xf32>
    %12 = arith.maximumf %10, %11 : vector<8x400xf32>
    %13 = vector.extract_strided_slice %12 {offsets = [0, 0], sizes = [8, 399], strides = [1, 1]} : vector<8x400xf32> to vector<8x399xf32>
    %14 = vector.extract_strided_slice %12 {offsets = [0, 1], sizes = [8, 399], strides = [1, 1]} : vector<8x400xf32> to vector<8x399xf32>
    %15 = arith.maximumf %13, %14 : vector<8x399xf32>
    %16 = vector.extract_strided_slice %5 {offsets = [0, 0], sizes = [1, 399], strides = [1, 1]} : vector<1x400xf32> to vector<1x399xf32>
    %17 = vector.broadcast %16 : vector<1x399xf32> to vector<8x399xf32>
    %18 = arith.addf %15, %17 : vector<8x399xf32>
    %cst_15 = arith.constant 0.000000e+00 : f32
    %19 = vector.broadcast %cst_15 : f32 to vector<8x399xf32>
    %20 = arith.maximumf %18, %19 : vector<8x399xf32>
    %21 = arith.truncf %20 : vector<8x399xf32> to vector<8x399xbf16>
    %c8_16 = arith.constant 8 : index
    %c0_17 = arith.constant 0 : index
    %22 = vector.load %arg12[%c8_16, %c0_17] : memref<96x399xbf16, #tpu.memory_space<vmem>>, vector<8x399xbf16>
    tpu.vector_store %arg12[%c8_16, %c0_17], %21 {strides = array<i32>} : memref<96x399xbf16, #tpu.memory_space<vmem>>, vector<8x399xbf16>,
    %c24 = arith.constant 24 : index
    %c0_18 = arith.constant 0 : index
    %23 = vector.load %arg11[%c24, %c0_18] : memref<176x400xf32, #tpu.memory_space<vmem>>, vector<8x400xf32>
    %c32 = arith.constant 32 : index
    %c0_19 = arith.constant 0 : index
    %24 = vector.load %arg11[%c32, %c0_19] : memref<176x400xf32, #tpu.memory_space<vmem>>, vector<8x400xf32>
    %25 = arith.maximumf %23, %24 : vector<8x400xf32>
    %26 = vector.extract_strided_slice %25 {offsets = [0, 0], sizes = [8, 399], strides = [1, 1]} : vector<8x400xf32> to vector<8x399xf32>
    %27 = vector.extract_strided_slice %25 {offsets = [0, 1], sizes = [8, 399], strides = [1, 1]} : vector<8x400xf32> to vector<8x399xf32>
    %28 = arith.maximumf %26, %27 : vector<8x399xf32>
    %29 = vector.extract_strided_slice %5 {offsets = [0, 0], sizes = [1, 399], strides = [1, 1]} : vector<1x400xf32> to vector<1x399xf32>
    %30 = vector.broadcast %29 : vector<1x399xf32> to vector<8x399xf32>
    %31 = arith.addf %28, %30 : vector<8x399xf32>
    %cst_20 = arith.constant 0.000000e+00 : f32
    %32 = vector.broadcast %cst_20 : f32 to vector<8x399xf32>
    %33 = arith.maximumf %31, %32 : vector<8x399xf32>
    %34 = arith.truncf %33 : vector<8x399xf32> to vector<8x399xbf16>
    %c16_21 = arith.constant 16 : index
    %c0_22 = arith.constant 0 : index
    %35 = vector.load %arg12[%c16_21, %c0_22] : memref<96x399xbf16, #tpu.memory_space<vmem>>, vector<8x399xbf16>
    tpu.vector_store %arg12[%c16_21, %c0_22], %34 {strides = array<i32>} : memref<96x399xbf16, #tpu.memory_space<vmem>>, vector<8x399xbf16>,
    %c40 = arith.constant 40 : index
    %c0_23 = arith.constant 0 : index
    %36 = vector.load %arg11[%c40, %c0_23] : memref<176x400xf32, #tpu.memory_space<vmem>>, vector<8x400xf32>
    %c48 = arith.constant 48 : index
    %c0_24 = arith.constant 0 : index
    %37 = vector.load %arg11[%c48, %c0_24] : memref<176x400xf32, #tpu.memory_space<vmem>>, vector<8x400xf32>
    %38 = arith.maximumf %36, %37 : vector<8x400xf32>
    %39 = vector.extract_strided_slice %38 {offsets = [0, 0], sizes = [8, 399], strides = [1, 1]} : vector<8x400xf32> to vector<8x399xf32>
    %40 = vector.extract_strided_slice %38 {offsets = [0, 1], sizes = [8, 399], strides = [1, 1]} : vector<8x400xf32> to vector<8x399xf32>
    %41 = arith.maximumf %39, %40 : vector<8x399xf32>
    %42 = vector.extract_strided_slice %5 {offsets = [0, 0], sizes = [1, 399], strides = [1, 1]} : vector<1x400xf32> to vector<1x399xf32>
    %43 = vector.broadcast %42 : vector<1x399xf32> to vector<8x399xf32>
    %44 = arith.addf %41, %43 : vector<8x399xf32>
    %cst_25 = arith.constant 0.000000e+00 : f32
    %45 = vector.broadcast %cst_25 : f32 to vector<8x399xf32>
    %46 = arith.maximumf %44, %45 : vector<8x399xf32>
    %47 = arith.truncf %46 : vector<8x399xf32> to vector<8x399xbf16>
    %c24_26 = arith.constant 24 : index
    %c0_27 = arith.constant 0 : index
    %48 = vector.load %arg12[%c24_26, %c0_27] : memref<96x399xbf16, #tpu.memory_space<vmem>>, vector<8x399xbf16>
    tpu.vector_store %arg12[%c24_26, %c0_27], %47 {strides = array<i32>} : memref<96x399xbf16, #tpu.memory_space<vmem>>, vector<8x399xbf16>,
    %c56 = arith.constant 56 : index
    %c0_28 = arith.constant 0 : index
    %49 = vector.load %arg11[%c56, %c0_28] : memref<176x400xf32, #tpu.memory_space<vmem>>, vector<8x400xf32>
    %c64 = arith.constant 64 : index
    %c0_29 = arith.constant 0 : index
    %50 = vector.load %arg11[%c64, %c0_29] : memref<176x400xf32, #tpu.memory_space<vmem>>, vector<8x400xf32>
    %51 = arith.maximumf %49, %50 : vector<8x400xf32>
    %52 = vector.extract_strided_slice %51 {offsets = [0, 0], sizes = [8, 399], strides = [1, 1]} : vector<8x400xf32> to vector<8x399xf32>
    %53 = vector.extract_strided_slice %51 {offsets = [0, 1], sizes = [8, 399], strides = [1, 1]} : vector<8x400xf32> to vector<8x399xf32>
    %54 = arith.maximumf %52, %53 : vector<8x399xf32>
    %55 = vector.extract_strided_slice %5 {offsets = [0, 0], sizes = [1, 399], strides = [1, 1]} : vector<1x400xf32> to vector<1x399xf32>
    %56 = vector.broadcast %55 : vector<1x399xf32> to vector<8x399xf32>
    %57 = arith.addf %54, %56 : vector<8x399xf32>
    %cst_30 = arith.constant 0.000000e+00 : f32
    %58 = vector.broadcast %cst_30 : f32 to vector<8x399xf32>
    %59 = arith.maximumf %57, %58 : vector<8x399xf32>
    %60 = arith.truncf %59 : vector<8x399xf32> to vector<8x399xbf16>
    %c32_31 = arith.constant 32 : index
    %c0_32 = arith.constant 0 : index
    %61 = vector.load %arg12[%c32_31, %c0_32] : memref<96x399xbf16, #tpu.memory_space<vmem>>, vector<8x399xbf16>
    tpu.vector_store %arg12[%c32_31, %c0_32], %60 {strides = array<i32>} : memref<96x399xbf16, #tpu.memory_space<vmem>>, vector<8x399xbf16>,
    %c72 = arith.constant 72 : index
    %c0_33 = arith.constant 0 : index
    %62 = vector.load %arg11[%c72, %c0_33] : memref<176x400xf32, #tpu.memory_space<vmem>>, vector<8x400xf32>
    %c80 = arith.constant 80 : index
    %c0_34 = arith.constant 0 : index
    %63 = vector.load %arg11[%c80, %c0_34] : memref<176x400xf32, #tpu.memory_space<vmem>>, vector<8x400xf32>
    %64 = arith.maximumf %62, %63 : vector<8x400xf32>
    %65 = vector.extract_strided_slice %64 {offsets = [0, 0], sizes = [8, 399], strides = [1, 1]} : vector<8x400xf32> to vector<8x399xf32>
    %66 = vector.extract_strided_slice %64 {offsets = [0, 1], sizes = [8, 399], strides = [1, 1]} : vector<8x400xf32> to vector<8x399xf32>
    %67 = arith.maximumf %65, %66 : vector<8x399xf32>
    %68 = vector.extract_strided_slice %5 {offsets = [0, 0], sizes = [1, 399], strides = [1, 1]} : vector<1x400xf32> to vector<1x399xf32>
    %69 = vector.broadcast %68 : vector<1x399xf32> to vector<8x399xf32>
    %70 = arith.addf %67, %69 : vector<8x399xf32>
    %cst_35 = arith.constant 0.000000e+00 : f32
    %71 = vector.broadcast %cst_35 : f32 to vector<8x399xf32>
    %72 = arith.maximumf %70, %71 : vector<8x399xf32>
    %73 = arith.truncf %72 : vector<8x399xf32> to vector<8x399xbf16>
    %c40_36 = arith.constant 40 : index
    %c0_37 = arith.constant 0 : index
    %74 = vector.load %arg12[%c40_36, %c0_37] : memref<96x399xbf16, #tpu.memory_space<vmem>>, vector<8x399xbf16>
    tpu.vector_store %arg12[%c40_36, %c0_37], %73 {strides = array<i32>} : memref<96x399xbf16, #tpu.memory_space<vmem>>, vector<8x399xbf16>,
    %c88_38 = arith.constant 88 : index
    %c0_39 = arith.constant 0 : index
    %75 = vector.load %arg11[%c88_38, %c0_39] : memref<176x400xf32, #tpu.memory_space<vmem>>, vector<8x400xf32>
    %c96 = arith.constant 96 : index
    %c0_40 = arith.constant 0 : index
    %76 = vector.load %arg11[%c96, %c0_40] : memref<176x400xf32, #tpu.memory_space<vmem>>, vector<8x400xf32>
    %77 = arith.maximumf %75, %76 : vector<8x400xf32>
    %78 = vector.extract_strided_slice %77 {offsets = [0, 0], sizes = [8, 399], strides = [1, 1]} : vector<8x400xf32> to vector<8x399xf32>
    %79 = vector.extract_strided_slice %77 {offsets = [0, 1], sizes = [8, 399], strides = [1, 1]} : vector<8x400xf32> to vector<8x399xf32>
    %80 = arith.maximumf %78, %79 : vector<8x399xf32>
    %81 = vector.extract_strided_slice %5 {offsets = [0, 0], sizes = [1, 399], strides = [1, 1]} : vector<1x400xf32> to vector<1x399xf32>
    %82 = vector.broadcast %81 : vector<1x399xf32> to vector<8x399xf32>
    %83 = arith.addf %80, %82 : vector<8x399xf32>
    %cst_41 = arith.constant 0.000000e+00 : f32
    %84 = vector.broadcast %cst_41 : f32 to vector<8x399xf32>
    %85 = arith.maximumf %83, %84 : vector<8x399xf32>
    %86 = arith.truncf %85 : vector<8x399xf32> to vector<8x399xbf16>
    %c48_42 = arith.constant 48 : index
    %c0_43 = arith.constant 0 : index
    %87 = vector.load %arg12[%c48_42, %c0_43] : memref<96x399xbf16, #tpu.memory_space<vmem>>, vector<8x399xbf16>
    tpu.vector_store %arg12[%c48_42, %c0_43], %86 {strides = array<i32>} : memref<96x399xbf16, #tpu.memory_space<vmem>>, vector<8x399xbf16>,
    %c104 = arith.constant 104 : index
    %c0_44 = arith.constant 0 : index
    %88 = vector.load %arg11[%c104, %c0_44] : memref<176x400xf32, #tpu.memory_space<vmem>>, vector<8x400xf32>
    %c112 = arith.constant 112 : index
    %c0_45 = arith.constant 0 : index
    %89 = vector.load %arg11[%c112, %c0_45] : memref<176x400xf32, #tpu.memory_space<vmem>>, vector<8x400xf32>
    %90 = arith.maximumf %88, %89 : vector<8x400xf32>
    %91 = vector.extract_strided_slice %90 {offsets = [0, 0], sizes = [8, 399], strides = [1, 1]} : vector<8x400xf32> to vector<8x399xf32>
    %92 = vector.extract_strided_slice %90 {offsets = [0, 1], sizes = [8, 399], strides = [1, 1]} : vector<8x400xf32> to vector<8x399xf32>
    %93 = arith.maximumf %91, %92 : vector<8x399xf32>
    %94 = vector.extract_strided_slice %5 {offsets = [0, 0], sizes = [1, 399], strides = [1, 1]} : vector<1x400xf32> to vector<1x399xf32>
    %95 = vector.broadcast %94 : vector<1x399xf32> to vector<8x399xf32>
    %96 = arith.addf %93, %95 : vector<8x399xf32>
    %cst_46 = arith.constant 0.000000e+00 : f32
    %97 = vector.broadcast %cst_46 : f32 to vector<8x399xf32>
    %98 = arith.maximumf %96, %97 : vector<8x399xf32>
    %99 = arith.truncf %98 : vector<8x399xf32> to vector<8x399xbf16>
    %c56_47 = arith.constant 56 : index
    %c0_48 = arith.constant 0 : index
    %100 = vector.load %arg12[%c56_47, %c0_48] : memref<96x399xbf16, #tpu.memory_space<vmem>>, vector<8x399xbf16>
    tpu.vector_store %arg12[%c56_47, %c0_48], %99 {strides = array<i32>} : memref<96x399xbf16, #tpu.memory_space<vmem>>, vector<8x399xbf16>,
    %c120 = arith.constant 120 : index
    %c0_49 = arith.constant 0 : index
    %101 = vector.load %arg11[%c120, %c0_49] : memref<176x400xf32, #tpu.memory_space<vmem>>, vector<8x400xf32>
    %c128 = arith.constant 128 : index
    %c0_50 = arith.constant 0 : index
    %102 = vector.load %arg11[%c128, %c0_50] : memref<176x400xf32, #tpu.memory_space<vmem>>, vector<8x400xf32>
    %103 = arith.maximumf %101, %102 : vector<8x400xf32>
    %104 = vector.extract_strided_slice %103 {offsets = [0, 0], sizes = [8, 399], strides = [1, 1]} : vector<8x400xf32> to vector<8x399xf32>
    %105 = vector.extract_strided_slice %103 {offsets = [0, 1], sizes = [8, 399], strides = [1, 1]} : vector<8x400xf32> to vector<8x399xf32>
    %106 = arith.maximumf %104, %105 : vector<8x399xf32>
    %107 = vector.extract_strided_slice %5 {offsets = [0, 0], sizes = [1, 399], strides = [1, 1]} : vector<1x400xf32> to vector<1x399xf32>
    %108 = vector.broadcast %107 : vector<1x399xf32> to vector<8x399xf32>
    %109 = arith.addf %106, %108 : vector<8x399xf32>
    %cst_51 = arith.constant 0.000000e+00 : f32
    %110 = vector.broadcast %cst_51 : f32 to vector<8x399xf32>
    %111 = arith.maximumf %109, %110 : vector<8x399xf32>
    %112 = arith.truncf %111 : vector<8x399xf32> to vector<8x399xbf16>
    %c64_52 = arith.constant 64 : index
    %c0_53 = arith.constant 0 : index
    %113 = vector.load %arg12[%c64_52, %c0_53] : memref<96x399xbf16, #tpu.memory_space<vmem>>, vector<8x399xbf16>
    tpu.vector_store %arg12[%c64_52, %c0_53], %112 {strides = array<i32>} : memref<96x399xbf16, #tpu.memory_space<vmem>>, vector<8x399xbf16>,
    %c136 = arith.constant 136 : index
    %c0_54 = arith.constant 0 : index
    %114 = vector.load %arg11[%c136, %c0_54] : memref<176x400xf32, #tpu.memory_space<vmem>>, vector<8x400xf32>
    %c144 = arith.constant 144 : index
    %c0_55 = arith.constant 0 : index
    %115 = vector.load %arg11[%c144, %c0_55] : memref<176x400xf32, #tpu.memory_space<vmem>>, vector<8x400xf32>
    %116 = arith.maximumf %114, %115 : vector<8x400xf32>
    %117 = vector.extract_strided_slice %116 {offsets = [0, 0], sizes = [8, 399], strides = [1, 1]} : vector<8x400xf32> to vector<8x399xf32>
    %118 = vector.extract_strided_slice %116 {offsets = [0, 1], sizes = [8, 399], strides = [1, 1]} : vector<8x400xf32> to vector<8x399xf32>
    %119 = arith.maximumf %117, %118 : vector<8x399xf32>
    %120 = vector.extract_strided_slice %5 {offsets = [0, 0], sizes = [1, 399], strides = [1, 1]} : vector<1x400xf32> to vector<1x399xf32>
    %121 = vector.broadcast %120 : vector<1x399xf32> to vector<8x399xf32>
    %122 = arith.addf %119, %121 : vector<8x399xf32>
    %cst_56 = arith.constant 0.000000e+00 : f32
    %123 = vector.broadcast %cst_56 : f32 to vector<8x399xf32>
    %124 = arith.maximumf %122, %123 : vector<8x399xf32>
    %125 = arith.truncf %124 : vector<8x399xf32> to vector<8x399xbf16>
    %c72_57 = arith.constant 72 : index
    %c0_58 = arith.constant 0 : index
    %126 = vector.load %arg12[%c72_57, %c0_58] : memref<96x399xbf16, #tpu.memory_space<vmem>>, vector<8x399xbf16>
    tpu.vector_store %arg12[%c72_57, %c0_58], %125 {strides = array<i32>} : memref<96x399xbf16, #tpu.memory_space<vmem>>, vector<8x399xbf16>,
    %c152 = arith.constant 152 : index
    %c0_59 = arith.constant 0 : index
    %127 = vector.load %arg11[%c152, %c0_59] : memref<176x400xf32, #tpu.memory_space<vmem>>, vector<8x400xf32>
    %c160 = arith.constant 160 : index
    %c0_60 = arith.constant 0 : index
    %128 = vector.load %arg11[%c160, %c0_60] : memref<176x400xf32, #tpu.memory_space<vmem>>, vector<8x400xf32>
    %129 = arith.maximumf %127, %128 : vector<8x400xf32>
    %130 = vector.extract_strided_slice %129 {offsets = [0, 0], sizes = [8, 399], strides = [1, 1]} : vector<8x400xf32> to vector<8x399xf32>
    %131 = vector.extract_strided_slice %129 {offsets = [0, 1], sizes = [8, 399], strides = [1, 1]} : vector<8x400xf32> to vector<8x399xf32>
    %132 = arith.maximumf %130, %131 : vector<8x399xf32>
    %133 = vector.extract_strided_slice %5 {offsets = [0, 0], sizes = [1, 399], strides = [1, 1]} : vector<1x400xf32> to vector<1x399xf32>
    %134 = vector.broadcast %133 : vector<1x399xf32> to vector<8x399xf32>
    %135 = arith.addf %132, %134 : vector<8x399xf32>
    %cst_61 = arith.constant 0.000000e+00 : f32
    %136 = vector.broadcast %cst_61 : f32 to vector<8x399xf32>
    %137 = arith.maximumf %135, %136 : vector<8x399xf32>
    %138 = arith.truncf %137 : vector<8x399xf32> to vector<8x399xbf16>
    %c80_62 = arith.constant 80 : index
    %c0_63 = arith.constant 0 : index
    %139 = vector.load %arg12[%c80_62, %c0_63] : memref<96x399xbf16, #tpu.memory_space<vmem>>, vector<8x399xbf16>
    tpu.vector_store %arg12[%c80_62, %c0_63], %138 {strides = array<i32>} : memref<96x399xbf16, #tpu.memory_space<vmem>>, vector<8x399xbf16>,
    %c0_64 = arith.constant 0 : index
    %c0_65 = arith.constant 0 : index
    %140 = vector.load %arg12[%c0_64, %c0_65] : memref<96x399xbf16, #tpu.memory_space<vmem>>, vector<80x399xbf16>
    %c0_66 = arith.constant 0 : index
    %c0_67 = arith.constant 0 : index
    %c0_68 = arith.constant 0 : index
    %141 = vector.load %arg4[%c0_66, %c0_67, %c0_68] : memref<3x399x500xbf16, #tpu.memory_space<vmem>>, vector<1x399x500xbf16>
    %142 = vector.shape_cast %141 : vector<1x399x500xbf16> to vector<399x500xbf16>
    %cst_69 = arith.constant dense<0.000000e+00> : vector<80x500xf32>
    %143 = tpu.matmul %140, %142, %cst_69 {dimension_numbers = #tpu.dot_dimension_numbers<[1], [0], [0], [1], [0, 0, 1, 1], [], []>} : vector<80x399xbf16>, vector<399x500xbf16>, vector<80x500xf32> -> vector<80x500xf32>
    %c0_70 = arith.constant 0 : index
    %c0_71 = arith.constant 0 : index
    %144 = vector.load %arg13[%c0_70, %c0_71] : memref<80x500xf32, #tpu.memory_space<vmem>>, vector<80x500xf32>
    tpu.vector_store %arg13[%c0_70, %c0_71], %143 {strides = array<i32>} : memref<80x500xf32, #tpu.memory_space<vmem>>, vector<80x500xf32>,
    %c8_72 = arith.constant 8 : index
    %c0_73 = arith.constant 0 : index
    %145 = vector.load %arg12[%c8_72, %c0_73] : memref<96x399xbf16, #tpu.memory_space<vmem>>, vector<80x399xbf16>
    %c1 = arith.constant 1 : index
    %c0_74 = arith.constant 0 : index
    %c0_75 = arith.constant 0 : index
    %146 = vector.load %arg4[%c1, %c0_74, %c0_75] : memref<3x399x500xbf16, #tpu.memory_space<vmem>>, vector<1x399x500xbf16>
    %147 = vector.shape_cast %146 : vector<1x399x500xbf16> to vector<399x500xbf16>
    %cst_76 = arith.constant dense<0.000000e+00> : vector<80x500xf32>
    %148 = tpu.matmul %145, %147, %cst_76 {dimension_numbers = #tpu.dot_dimension_numbers<[1], [0], [0], [1], [0, 0, 1, 1], [], []>} : vector<80x399xbf16>, vector<399x500xbf16>, vector<80x500xf32> -> vector<80x500xf32>
    %c0_77 = arith.constant 0 : index
    %c0_78 = arith.constant 0 : index
    %149 = vector.load %arg13[%c0_77, %c0_78] : memref<80x500xf32, #tpu.memory_space<vmem>>, vector<80x500xf32>
    %150 = arith.addf %149, %148 : vector<80x500xf32>
    %c0_79 = arith.constant 0 : index
    %c0_80 = arith.constant 0 : index
    %151 = vector.load %arg13[%c0_79, %c0_80] : memref<80x500xf32, #tpu.memory_space<vmem>>, vector<80x500xf32>
    tpu.vector_store %arg13[%c0_79, %c0_80], %150 {strides = array<i32>} : memref<80x500xf32, #tpu.memory_space<vmem>>, vector<80x500xf32>,
    %c16_81 = arith.constant 16 : index
    %c0_82 = arith.constant 0 : index
    %152 = vector.load %arg12[%c16_81, %c0_82] : memref<96x399xbf16, #tpu.memory_space<vmem>>, vector<80x399xbf16>
    %c2 = arith.constant 2 : index
    %c0_83 = arith.constant 0 : index
    %c0_84 = arith.constant 0 : index
    %153 = vector.load %arg4[%c2, %c0_83, %c0_84] : memref<3x399x500xbf16, #tpu.memory_space<vmem>>, vector<1x399x500xbf16>
    %154 = vector.shape_cast %153 : vector<1x399x500xbf16> to vector<399x500xbf16>
    %cst_85 = arith.constant dense<0.000000e+00> : vector<80x500xf32>
    %155 = tpu.matmul %152, %154, %cst_85 {dimension_numbers = #tpu.dot_dimension_numbers<[1], [0], [0], [1], [0, 0, 1, 1], [], []>} : vector<80x399xbf16>, vector<399x500xbf16>, vector<80x500xf32> -> vector<80x500xf32>
    %c0_86 = arith.constant 0 : index
    %c0_87 = arith.constant 0 : index
    %156 = vector.load %arg13[%c0_86, %c0_87] : memref<80x500xf32, #tpu.memory_space<vmem>>, vector<80x500xf32>
    %157 = arith.addf %156, %155 : vector<80x500xf32>
    %c0_88 = arith.constant 0 : index
    %c0_89 = arith.constant 0 : index
    %158 = vector.load %arg13[%c0_88, %c0_89] : memref<80x500xf32, #tpu.memory_space<vmem>>, vector<80x500xf32>
    tpu.vector_store %arg13[%c0_88, %c0_89], %157 {strides = array<i32>} : memref<80x500xf32, #tpu.memory_space<vmem>>, vector<80x500xf32>,
    %c0_90 = arith.constant 0 : index
    %c0_91 = arith.constant 0 : index
    %159 = vector.load %arg5[%c0_90, %c0_91] : memref<1x500xf32, #tpu.memory_space<vmem>>, vector<1x500xf32>
    %c0_92 = arith.constant 0 : index
    %c0_93 = arith.constant 0 : index
    %160 = vector.load %arg13[%c0_92, %c0_93] : memref<80x500xf32, #tpu.memory_space<vmem>>, vector<8x500xf32>
    %c8_94 = arith.constant 8 : index
    %c0_95 = arith.constant 0 : index
    %161 = vector.load %arg13[%c8_94, %c0_95] : memref<80x500xf32, #tpu.memory_space<vmem>>, vector<8x500xf32>
    %162 = arith.maximumf %160, %161 : vector<8x500xf32>
    %163 = vector.extract_strided_slice %162 {offsets = [0, 0], sizes = [8, 499], strides = [1, 1]} : vector<8x500xf32> to vector<8x499xf32>
    %164 = vector.extract_strided_slice %162 {offsets = [0, 1], sizes = [8, 499], strides = [1, 1]} : vector<8x500xf32> to vector<8x499xf32>
    %165 = arith.maximumf %163, %164 : vector<8x499xf32>
    %166 = vector.extract_strided_slice %159 {offsets = [0, 0], sizes = [1, 499], strides = [1, 1]} : vector<1x500xf32> to vector<1x499xf32>
    %167 = vector.broadcast %166 : vector<1x499xf32> to vector<8x499xf32>
    %168 = arith.addf %165, %167 : vector<8x499xf32>
    %cst_96 = arith.constant 0.000000e+00 : f32
    %169 = vector.broadcast %cst_96 : f32 to vector<8x499xf32>
    %170 = arith.maximumf %168, %169 : vector<8x499xf32>
    %171 = arith.truncf %170 : vector<8x499xf32> to vector<8x499xbf16>
    %c0_97 = arith.constant 0 : index
    %c0_98 = arith.constant 0 : index
    %c0_99 = arith.constant 0 : index
    %172 = vector.load %arg6[%c0_97, %c0_98, %c0_99] : memref<5x499x500xbf16, #tpu.memory_space<vmem>>, vector<1x499x500xbf16>
    %173 = vector.shape_cast %172 : vector<1x499x500xbf16> to vector<499x500xbf16>
    %cst_100 = arith.constant dense<0.000000e+00> : vector<8x500xf32>
    %174 = tpu.matmul %171, %173, %cst_100 {dimension_numbers = #tpu.dot_dimension_numbers<[1], [0], [0], [1], [0, 0, 1, 1], [], []>} : vector<8x499xbf16>, vector<499x500xbf16>, vector<8x500xf32> -> vector<8x500xf32>
    %c0_101 = arith.constant 0 : index
    %c0_102 = arith.constant 0 : index
    %175 = vector.load %arg14[%c0_101, %c0_102] : memref<8x500xf32, #tpu.memory_space<vmem>>, vector<8x500xf32>
    tpu.vector_store %arg14[%c0_101, %c0_102], %174 {strides = array<i32>} : memref<8x500xf32, #tpu.memory_space<vmem>>, vector<8x500xf32>,
    %c16_103 = arith.constant 16 : index
    %c0_104 = arith.constant 0 : index
    %176 = vector.load %arg13[%c16_103, %c0_104] : memref<80x500xf32, #tpu.memory_space<vmem>>, vector<8x500xf32>
    %c24_105 = arith.constant 24 : index
    %c0_106 = arith.constant 0 : index
    %177 = vector.load %arg13[%c24_105, %c0_106] : memref<80x500xf32, #tpu.memory_space<vmem>>, vector<8x500xf32>
    %178 = arith.maximumf %176, %177 : vector<8x500xf32>
    %179 = vector.extract_strided_slice %178 {offsets = [0, 0], sizes = [8, 499], strides = [1, 1]} : vector<8x500xf32> to vector<8x499xf32>
    %180 = vector.extract_strided_slice %178 {offsets = [0, 1], sizes = [8, 499], strides = [1, 1]} : vector<8x500xf32> to vector<8x499xf32>
    %181 = arith.maximumf %179, %180 : vector<8x499xf32>
    %182 = vector.extract_strided_slice %159 {offsets = [0, 0], sizes = [1, 499], strides = [1, 1]} : vector<1x500xf32> to vector<1x499xf32>
    %183 = vector.broadcast %182 : vector<1x499xf32> to vector<8x499xf32>
    %184 = arith.addf %181, %183 : vector<8x499xf32>
    %cst_107 = arith.constant 0.000000e+00 : f32
    %185 = vector.broadcast %cst_107 : f32 to vector<8x499xf32>
    %186 = arith.maximumf %184, %185 : vector<8x499xf32>
    %187 = arith.truncf %186 : vector<8x499xf32> to vector<8x499xbf16>
    %c1_108 = arith.constant 1 : index
    %c0_109 = arith.constant 0 : index
    %c0_110 = arith.constant 0 : index
    %188 = vector.load %arg6[%c1_108, %c0_109, %c0_110] : memref<5x499x500xbf16, #tpu.memory_space<vmem>>, vector<1x499x500xbf16>
    %189 = vector.shape_cast %188 : vector<1x499x500xbf16> to vector<499x500xbf16>
    %cst_111 = arith.constant dense<0.000000e+00> : vector<8x500xf32>
    %190 = tpu.matmul %187, %189, %cst_111 {dimension_numbers = #tpu.dot_dimension_numbers<[1], [0], [0], [1], [0, 0, 1, 1], [], []>} : vector<8x499xbf16>, vector<499x500xbf16>, vector<8x500xf32> -> vector<8x500xf32>
    %c0_112 = arith.constant 0 : index
    %c0_113 = arith.constant 0 : index
    %191 = vector.load %arg14[%c0_112, %c0_113] : memref<8x500xf32, #tpu.memory_space<vmem>>, vector<8x500xf32>
    %192 = arith.addf %191, %190 : vector<8x500xf32>
    %c0_114 = arith.constant 0 : index
    %c0_115 = arith.constant 0 : index
    %193 = vector.load %arg14[%c0_114, %c0_115] : memref<8x500xf32, #tpu.memory_space<vmem>>, vector<8x500xf32>
    tpu.vector_store %arg14[%c0_114, %c0_115], %192 {strides = array<i32>} : memref<8x500xf32, #tpu.memory_space<vmem>>, vector<8x500xf32>,
    %c32_116 = arith.constant 32 : index
    %c0_117 = arith.constant 0 : index
    %194 = vector.load %arg13[%c32_116, %c0_117] : memref<80x500xf32, #tpu.memory_space<vmem>>, vector<8x500xf32>
    %c40_118 = arith.constant 40 : index
    %c0_119 = arith.constant 0 : index
    %195 = vector.load %arg13[%c40_118, %c0_119] : memref<80x500xf32, #tpu.memory_space<vmem>>, vector<8x500xf32>
    %196 = arith.maximumf %194, %195 : vector<8x500xf32>
    %197 = vector.extract_strided_slice %196 {offsets = [0, 0], sizes = [8, 499], strides = [1, 1]} : vector<8x500xf32> to vector<8x499xf32>
    %198 = vector.extract_strided_slice %196 {offsets = [0, 1], sizes = [8, 499], strides = [1, 1]} : vector<8x500xf32> to vector<8x499xf32>
    %199 = arith.maximumf %197, %198 : vector<8x499xf32>
    %200 = vector.extract_strided_slice %159 {offsets = [0, 0], sizes = [1, 499], strides = [1, 1]} : vector<1x500xf32> to vector<1x499xf32>
    %201 = vector.broadcast %200 : vector<1x499xf32> to vector<8x499xf32>
    %202 = arith.addf %199, %201 : vector<8x499xf32>
    %cst_120 = arith.constant 0.000000e+00 : f32
    %203 = vector.broadcast %cst_120 : f32 to vector<8x499xf32>
    %204 = arith.maximumf %202, %203 : vector<8x499xf32>
    %205 = arith.truncf %204 : vector<8x499xf32> to vector<8x499xbf16>
    %c2_121 = arith.constant 2 : index
    %c0_122 = arith.constant 0 : index
    %c0_123 = arith.constant 0 : index
    %206 = vector.load %arg6[%c2_121, %c0_122, %c0_123] : memref<5x499x500xbf16, #tpu.memory_space<vmem>>, vector<1x499x500xbf16>
    %207 = vector.shape_cast %206 : vector<1x499x500xbf16> to vector<499x500xbf16>
    %cst_124 = arith.constant dense<0.000000e+00> : vector<8x500xf32>
    %208 = tpu.matmul %205, %207, %cst_124 {dimension_numbers = #tpu.dot_dimension_numbers<[1], [0], [0], [1], [0, 0, 1, 1], [], []>} : vector<8x499xbf16>, vector<499x500xbf16>, vector<8x500xf32> -> vector<8x500xf32>
    %c0_125 = arith.constant 0 : index
    %c0_126 = arith.constant 0 : index
    %209 = vector.load %arg14[%c0_125, %c0_126] : memref<8x500xf32, #tpu.memory_space<vmem>>, vector<8x500xf32>
    %210 = arith.addf %209, %208 : vector<8x500xf32>
    %c0_127 = arith.constant 0 : index
    %c0_128 = arith.constant 0 : index
    %211 = vector.load %arg14[%c0_127, %c0_128] : memref<8x500xf32, #tpu.memory_space<vmem>>, vector<8x500xf32>
    tpu.vector_store %arg14[%c0_127, %c0_128], %210 {strides = array<i32>} : memref<8x500xf32, #tpu.memory_space<vmem>>, vector<8x500xf32>,
    %c48_129 = arith.constant 48 : index
    %c0_130 = arith.constant 0 : index
    %212 = vector.load %arg13[%c48_129, %c0_130] : memref<80x500xf32, #tpu.memory_space<vmem>>, vector<8x500xf32>
    %c56_131 = arith.constant 56 : index
    %c0_132 = arith.constant 0 : index
    %213 = vector.load %arg13[%c56_131, %c0_132] : memref<80x500xf32, #tpu.memory_space<vmem>>, vector<8x500xf32>
    %214 = arith.maximumf %212, %213 : vector<8x500xf32>
    %215 = vector.extract_strided_slice %214 {offsets = [0, 0], sizes = [8, 499], strides = [1, 1]} : vector<8x500xf32> to vector<8x499xf32>
    %216 = vector.extract_strided_slice %214 {offsets = [0, 1], sizes = [8, 499], strides = [1, 1]} : vector<8x500xf32> to vector<8x499xf32>
    %217 = arith.maximumf %215, %216 : vector<8x499xf32>
    %218 = vector.extract_strided_slice %159 {offsets = [0, 0], sizes = [1, 499], strides = [1, 1]} : vector<1x500xf32> to vector<1x499xf32>
    %219 = vector.broadcast %218 : vector<1x499xf32> to vector<8x499xf32>
    %220 = arith.addf %217, %219 : vector<8x499xf32>
    %cst_133 = arith.constant 0.000000e+00 : f32
    %221 = vector.broadcast %cst_133 : f32 to vector<8x499xf32>
    %222 = arith.maximumf %220, %221 : vector<8x499xf32>
    %223 = arith.truncf %222 : vector<8x499xf32> to vector<8x499xbf16>
    %c3 = arith.constant 3 : index
    %c0_134 = arith.constant 0 : index
    %c0_135 = arith.constant 0 : index
    %224 = vector.load %arg6[%c3, %c0_134, %c0_135] : memref<5x499x500xbf16, #tpu.memory_space<vmem>>, vector<1x499x500xbf16>
    %225 = vector.shape_cast %224 : vector<1x499x500xbf16> to vector<499x500xbf16>
    %cst_136 = arith.constant dense<0.000000e+00> : vector<8x500xf32>
    %226 = tpu.matmul %223, %225, %cst_136 {dimension_numbers = #tpu.dot_dimension_numbers<[1], [0], [0], [1], [0, 0, 1, 1], [], []>} : vector<8x499xbf16>, vector<499x500xbf16>, vector<8x500xf32> -> vector<8x500xf32>
    %c0_137 = arith.constant 0 : index
    %c0_138 = arith.constant 0 : index
    %227 = vector.load %arg14[%c0_137, %c0_138] : memref<8x500xf32, #tpu.memory_space<vmem>>, vector<8x500xf32>
    %228 = arith.addf %227, %226 : vector<8x500xf32>
    %c0_139 = arith.constant 0 : index
    %c0_140 = arith.constant 0 : index
    %229 = vector.load %arg14[%c0_139, %c0_140] : memref<8x500xf32, #tpu.memory_space<vmem>>, vector<8x500xf32>
    tpu.vector_store %arg14[%c0_139, %c0_140], %228 {strides = array<i32>} : memref<8x500xf32, #tpu.memory_space<vmem>>, vector<8x500xf32>,
    %c64_141 = arith.constant 64 : index
    %c0_142 = arith.constant 0 : index
    %230 = vector.load %arg13[%c64_141, %c0_142] : memref<80x500xf32, #tpu.memory_space<vmem>>, vector<8x500xf32>
    %c72_143 = arith.constant 72 : index
    %c0_144 = arith.constant 0 : index
    %231 = vector.load %arg13[%c72_143, %c0_144] : memref<80x500xf32, #tpu.memory_space<vmem>>, vector<8x500xf32>
    %232 = arith.maximumf %230, %231 : vector<8x500xf32>
    %233 = vector.extract_strided_slice %232 {offsets = [0, 0], sizes = [8, 499], strides = [1, 1]} : vector<8x500xf32> to vector<8x499xf32>
    %234 = vector.extract_strided_slice %232 {offsets = [0, 1], sizes = [8, 499], strides = [1, 1]} : vector<8x500xf32> to vector<8x499xf32>
    %235 = arith.maximumf %233, %234 : vector<8x499xf32>
    %236 = vector.extract_strided_slice %159 {offsets = [0, 0], sizes = [1, 499], strides = [1, 1]} : vector<1x500xf32> to vector<1x499xf32>
    %237 = vector.broadcast %236 : vector<1x499xf32> to vector<8x499xf32>
    %238 = arith.addf %235, %237 : vector<8x499xf32>
    %cst_145 = arith.constant 0.000000e+00 : f32
    %239 = vector.broadcast %cst_145 : f32 to vector<8x499xf32>
    %240 = arith.maximumf %238, %239 : vector<8x499xf32>
    %241 = arith.truncf %240 : vector<8x499xf32> to vector<8x499xbf16>
    %c4 = arith.constant 4 : index
    %c0_146 = arith.constant 0 : index
    %c0_147 = arith.constant 0 : index
    %242 = vector.load %arg6[%c4, %c0_146, %c0_147] : memref<5x499x500xbf16, #tpu.memory_space<vmem>>, vector<1x499x500xbf16>
    %243 = vector.shape_cast %242 : vector<1x499x500xbf16> to vector<499x500xbf16>
    %cst_148 = arith.constant dense<0.000000e+00> : vector<8x500xf32>
    %244 = tpu.matmul %241, %243, %cst_148 {dimension_numbers = #tpu.dot_dimension_numbers<[1], [0], [0], [1], [0, 0, 1, 1], [], []>} : vector<8x499xbf16>, vector<499x500xbf16>, vector<8x500xf32> -> vector<8x500xf32>
    %c0_149 = arith.constant 0 : index
    %c0_150 = arith.constant 0 : index
    %245 = vector.load %arg14[%c0_149, %c0_150] : memref<8x500xf32, #tpu.memory_space<vmem>>, vector<8x500xf32>
    %246 = arith.addf %245, %244 : vector<8x500xf32>
    %c0_151 = arith.constant 0 : index
    %c0_152 = arith.constant 0 : index
    %247 = vector.load %arg14[%c0_151, %c0_152] : memref<8x500xf32, #tpu.memory_space<vmem>>, vector<8x500xf32>
    tpu.vector_store %arg14[%c0_151, %c0_152], %246 {strides = array<i32>} : memref<8x500xf32, #tpu.memory_space<vmem>>, vector<8x500xf32>,
    %c0_153 = arith.constant 0 : index
    %c0_154 = arith.constant 0 : index
    %248 = vector.load %arg14[%c0_153, %c0_154] : memref<8x500xf32, #tpu.memory_space<vmem>>, vector<8x500xf32>
    %c0_155 = arith.constant 0 : index
    %c0_156 = arith.constant 0 : index
    %249 = vector.load %arg7[%c0_155, %c0_156] : memref<1x500xf32, #tpu.memory_space<vmem>>, vector<1x500xf32>
    %250 = vector.broadcast %249 : vector<1x500xf32> to vector<8x500xf32>
    %251 = arith.addf %248, %250 : vector<8x500xf32>
    %cst_157 = arith.constant 0.000000e+00 : f32
    %252 = vector.broadcast %cst_157 : f32 to vector<8x500xf32>
    %253 = arith.maximumf %251, %252 : vector<8x500xf32>
    %254 = arith.truncf %253 : vector<8x500xf32> to vector<8x500xbf16>
    %c0_158 = arith.constant 0 : index
    %c0_159 = arith.constant 0 : index
    %255 = vector.load %arg8[%c0_158, %c0_159] : memref<500x10xbf16, #tpu.memory_space<vmem>>, vector<500x10xbf16>
    %cst_160 = arith.constant dense<0.000000e+00> : vector<8x10xf32>
    %256 = tpu.matmul %254, %255, %cst_160 {dimension_numbers = #tpu.dot_dimension_numbers<[1], [0], [0], [1], [0, 0, 1, 1], [], []>} : vector<8x500xbf16>, vector<500x10xbf16>, vector<8x10xf32> -> vector<8x10xf32>
    %c0_161 = arith.constant 0 : index
    %c0_162 = arith.constant 0 : index
    %257 = vector.load %arg9[%c0_161, %c0_162] : memref<1x10xf32, #tpu.memory_space<vmem>>, vector<1x10xf32>
    %258 = vector.broadcast %257 : vector<1x10xf32> to vector<8x10xf32>
    %259 = arith.addf %256, %258 : vector<8x10xf32>
    %cst_163 = arith.constant dense<0xFF800000> : vector<8xf32>
    %260 = vector.multi_reduction <maximumf>, %259, %cst_163 [1] : vector<8x10xf32> to vector<8xf32>
    %261 = vector.shape_cast %260 : vector<8xf32> to vector<8x1xf32>
    %262 = vector.broadcast %261 : vector<8x1xf32> to vector<8x10xf32>
    %263 = arith.subf %259, %262 : vector<8x10xf32>
    %264 = math.exp %263 : vector<8x10xf32>
    %cst_164 = arith.constant dense<0.000000e+00> : vector<8xf32>
    %265 = vector.multi_reduction <add>, %264, %cst_164 [1] : vector<8x10xf32> to vector<8xf32>
    %266 = vector.shape_cast %265 : vector<8xf32> to vector<8x1xf32>
    %267 = math.log %266 : vector<8x1xf32>
    %268 = arith.addf %261, %267 : vector<8x1xf32>
    %269 = vector.broadcast %268 : vector<8x1xf32> to vector<8x10xf32>
    %270 = arith.subf %259, %269 : vector<8x10xf32>
    %c0_165 = arith.constant 0 : index
    %c0_166 = arith.constant 0 : index
    %271 = vector.load %arg10[%c0_165, %c0_166] : memref<8x10xf32, #tpu.memory_space<vmem>>, vector<8x10xf32>
    tpu.vector_store %arg10[%c0_165, %c0_166], %270 {strides = array<i32>} : memref<8x10xf32, #tpu.memory_space<vmem>>, vector<8x10xf32>,
    return
  }
  func.func @transform_0(%arg0: i32) -> (i32, i32, i32) {
    %c0_i32 = arith.constant 0 : i32
    %c0_i32_0 = arith.constant 0 : i32
    %c0_i32_1 = arith.constant 0 : i32
    return %arg0, %c0_i32, %c0_i32_0 : i32, i32, i32
  }
  func.func @transform_1(%arg0: i32) -> (i32, i32) {
    %c0_i32 = arith.constant 0 : i32
    %c0_i32_0 = arith.constant 0 : i32
    %c0_i32_1 = arith.constant 0 : i32
    return %c0_i32, %c0_i32_0 : i32, i32
  }
  func.func @transform_2(%arg0: i32) -> (i32, i32) {
    %c0_i32 = arith.constant 0 : i32
    %c0_i32_0 = arith.constant 0 : i32
    %c0_i32_1 = arith.constant 0 : i32
    return %c0_i32, %c0_i32_0 : i32, i32
  }
  func.func @transform_3(%arg0: i32) -> (i32, i32, i32) {
    %c0_i32 = arith.constant 0 : i32
    %c0_i32_0 = arith.constant 0 : i32
    %c0_i32_1 = arith.constant 0 : i32
    %c0_i32_2 = arith.constant 0 : i32
    return %c0_i32, %c0_i32_0, %c0_i32_1 : i32, i32, i32
  }
  func.func @transform_4(%arg0: i32) -> (i32, i32) {
    %c0_i32 = arith.constant 0 : i32
    %c0_i32_0 = arith.constant 0 : i32
    %c0_i32_1 = arith.constant 0 : i32
    return %c0_i32, %c0_i32_0 : i32, i32
  }
  func.func @transform_5(%arg0: i32) -> (i32, i32, i32) {
    %c0_i32 = arith.constant 0 : i32
    %c0_i32_0 = arith.constant 0 : i32
    %c0_i32_1 = arith.constant 0 : i32
    %c0_i32_2 = arith.constant 0 : i32
    return %c0_i32, %c0_i32_0, %c0_i32_1 : i32, i32, i32
  }
  func.func @transform_6(%arg0: i32) -> (i32, i32) {
    %c0_i32 = arith.constant 0 : i32
    %c0_i32_0 = arith.constant 0 : i32
    %c0_i32_1 = arith.constant 0 : i32
    return %c0_i32, %c0_i32_0 : i32, i32
  }
  func.func @transform_7(%arg0: i32) -> (i32, i32) {
    %c0_i32 = arith.constant 0 : i32
    %c0_i32_0 = arith.constant 0 : i32
    %c0_i32_1 = arith.constant 0 : i32
    return %c0_i32, %c0_i32_0 : i32, i32
  }
  func.func @transform_8(%arg0: i32) -> (i32, i32) {
    %c0_i32 = arith.constant 0 : i32
    %c0_i32_0 = arith.constant 0 : i32
    %c0_i32_1 = arith.constant 0 : i32
    return %c0_i32, %c0_i32_0 : i32, i32
  }
  func.func @transform_9(%arg0: i32) -> (i32, i32) {
    %c0_i32 = arith.constant 0 : i32
    %c0_i32_0 = arith.constant 0 : i32
    return %arg0, %c0_i32 : i32, i32
  }
}

</mosaic_0001>

<llo_original>
// kernel: _forward_impl.1
$region0: #{_forward_impl.1}
  #allocation0 [shape = 'u32[]', space=smem, size = 0x4, offset = 0x4, fixed_abs, tag = 'smem constant byte address 0x4 - core index']
  #allocation1 [shape = 'u32[144,128]{1,0:T(1,128)}', space=vmem, size = 0x12000, scoped, tag = 'internal scratch']
  #allocation2 [shape = 'f32[176,400]{1,0:T(8,128)}', space=vmem, size = 0x58000, scoped, tag = 'scratch operand']
  #allocation3 [shape = 'bf16[96,399]{1,0:T(16,128)(2,1)}', space=vmem, size = 0x18000, scoped, tag = 'scratch operand']
  #allocation4 [shape = 'f32[80,500]{1,0:T(8,128)}', space=vmem, size = 0x28000, scoped, tag = 'scratch operand']
  #allocation5 [shape = 'f32[8,500]{1,0:T(8,128)}', space=vmem, size = 0x4000, scoped, tag = 'scratch operand']
  %s0 = inlined_call_operand.vmem [shape: bf16[1,176,66], index: 0, kind: input, shape index: {}]
  %s1 = inlined_call_operand.hbm [shape: bf16[66,400], index: 1, kind: input, shape index: {}]
  %s2 = inlined_call_operand.hbm [shape: f32[1,400], index: 2, kind: input, shape index: {}]
  %s3 = inlined_call_operand.hbm [shape: bf16[3,399,500], index: 3, kind: input, shape index: {}]
  %s4 = inlined_call_operand.hbm [shape: f32[1,500], index: 4, kind: input, shape index: {}]
  %s5 = inlined_call_operand.hbm [shape: bf16[5,499,500], index: 5, kind: input, shape index: {}]
  %s6 = inlined_call_operand.hbm [shape: f32[1,500], index: 6, kind: input, shape index: {}]
  %s7 = inlined_call_operand.vmem [shape: bf16[500,10], index: 7, kind: input, shape index: {}]
  %s8 = inlined_call_operand.hbm [shape: f32[1,10], index: 8, kind: input, shape index: {}]
  %s9 = inlined_call_operand.vmem [shape: f32[8,10], index: 9, kind: output, shape index: {}]
  %s10 = sld [smem:[#allocation0]]
  $region74: #{_forward_impl.1} parent=0
    _
  %s12 = ssub.s32 1, %s10
  %s13 = scalar_select 0, %s12, %s10
  $region1: #{_forward_impl.1} parent=0
    #allocation6 [shape = 'u8[73728]{0}', space=vmem, size = 0x12000, scoped, tag = 'input window, operand 1, single buffered']
    #allocation7 [shape = 's32[1]{0}', space=sflag, size = 0x4, scoped, tag = 'scoped memory for _forward_impl.1']
    #allocation8 [shape = 'u8[2048]{0}', space=vmem, size = 0x800, scoped, tag = 'input window, operand 2, single buffered']
    #allocation9 [shape = 's32[1]{0}', space=sflag, size = 0x4, scoped, tag = 'scoped memory for _forward_impl.1']
    #allocation10 [shape = 'u8[1228800]{0}', space=vmem, size = 0x12c000, scoped, tag = 'input window, operand 3, single buffered']
    #allocation11 [shape = 'u8[2048]{0}', space=vmem, size = 0x800, scoped, tag = 'input window, operand 4, single buffered']
    #allocation12 [shape = 's32[1]{0}', space=sflag, size = 0x4, scoped, tag = 'scoped memory for _forward_impl.1']
    #allocation13 [shape = 'u8[2580480]{0}', space=vmem, size = 0x276000, scoped, tag = 'input window, operand 5, single buffered']
    #allocation14 [shape = 'u8[2048]{0}', space=vmem, size = 0x800, scoped, tag = 'input window, operand 6, single buffered']
    #allocation15 [shape = 's32[1]{0}', space=sflag, size = 0x4, scoped, tag = 'scoped memory for _forward_impl.1']
    #allocation16 [shape = 'u8[512]{0}', space=vmem, size = 0x400, scoped, tag = 'input window, operand 8, single buffered']
    %14 = vsyncpa [#allocation7], 0
    %15 = vsyncpa [#allocation9], 0
    %16 = vsyncpa [#allocation12], 0
    %17 = vsyncpa [#allocation15], 0
    // Predicated region
    $region2: #{_forward_impl.1} parent=1 // pred_check
      _
    $region3: #{_forward_impl.1} parent=1 // pred_check_branch
      %19 = sbr.rel (0) target = $region5
    $region4: #{_forward_impl.1} parent=1 // pred_region
      _
    $region5: #{_forward_impl.1} parent=1 // pred_fallthru
      _
    // Predicated region
    $region6: #{_forward_impl.1} parent=1 // pred_check
      _
    $region7: #{_forward_impl.1} parent=1 // pred_check_branch
      %21 = sbr.rel (0) target = $region9
    $region8: #{_forward_impl.1} parent=1 // pred_region
      %s23 = ssub.s32 2304, 2304
      %24 = vsyncadd [#allocation7], %s23
      %s25 = sshll.u32 [#allocation6], 4
      %s26 = int_to_ptr.vmem [resolvable:$true] %s25
      %31 = dma.hbm_to_vmem [thread:$0]  %s1, 2304, %s26, [#allocation7], 256, 256, 16
    $region9: #{_forward_impl.1} parent=1 // pred_fallthru
      _
    // Predicated region
    $region10: #{_forward_impl.1} parent=1 // pred_check
      _
    $region11: #{_forward_impl.1} parent=1 // pred_check_branch
      %33 = sbr.rel (0) target = $region13
    $region12: #{_forward_impl.1} parent=1 // pred_region
      %s35 = ssub.s32 64, 64
      %36 = vsyncadd [#allocation9], %s35
      %s38 = sshll.u32 [#allocation8], 4
      %s39 = int_to_ptr.vmem [resolvable:$true] %s38
      %41 = dma.hbm_to_vmem [thread:$0]  %s2, 64, %s39, [#allocation9]
    $region13: #{_forward_impl.1} parent=1 // pred_fallthru
      _
    // Predicated region
    $region14: #{_forward_impl.1} parent=1 // pred_check
      _
    $region15: #{_forward_impl.1} parent=1 // pred_check_branch
      %43 = sbr.rel (0) target = $region17
    $region16: #{_forward_impl.1} parent=1 // pred_region
      %s45 = ssub.s32 38400, 38400
      %46 = vsyncadd [#allocation9], %s45
      %s47 = sshll.u32 [#allocation10], 4
      %s48 = int_to_ptr.vmem [resolvable:$true] %s47
      %53 = dma.hbm_to_vmem [thread:$0]  %s3, 38400, %s48, [#allocation9], 256, 256, 16
    $region17: #{_forward_impl.1} parent=1 // pred_fallthru
      _
    // Predicated region
    $region18: #{_forward_impl.1} parent=1 // pred_check
      _
    $region19: #{_forward_impl.1} parent=1 // pred_check_branch
      %55 = sbr.rel (0) target = $region21
    $region20: #{_forward_impl.1} parent=1 // pred_region
      %s57 = ssub.s32 64, 64
      %58 = vsyncadd [#allocation12], %s57
      %s60 = sshll.u32 [#allocation11], 4
      %s61 = int_to_ptr.vmem [resolvable:$true] %s60
      %63 = dma.hbm_to_vmem [thread:$0]  %s4, 64, %s61, [#allocation12]
    $region21: #{_forward_impl.1} parent=1 // pred_fallthru
      _
    // Predicated region
    $region22: #{_forward_impl.1} parent=1 // pred_check
      _
    $region23: #{_forward_impl.1} parent=1 // pred_check_branch
      %65 = sbr.rel (0) target = $region25
    $region24: #{_forward_impl.1} parent=1 // pred_region
      %s67 = ssub.s32 80640, 80640
      %68 = vsyncadd [#allocation12], %s67
      %s69 = sshll.u32 [#allocation13], 4
      %s70 = int_to_ptr.vmem [resolvable:$true] %s69
      %75 = dma.hbm_to_vmem [thread:$0]  %s5, 80640, %s70, [#allocation12], 256, 256, 16
    $region25: #{_forward_impl.1} parent=1 // pred_fallthru
      _
    // Predicated region
    $region26: #{_forward_impl.1} parent=1 // pred_check
      _
    $region27: #{_forward_impl.1} parent=1 // pred_check_branch
      %77 = sbr.rel (0) target = $region29
    $region28: #{_forward_impl.1} parent=1 // pred_region
      %s79 = ssub.s32 64, 64
      %80 = vsyncadd [#allocation15], %s79
      %s82 = sshll.u32 [#allocation14], 4
      %s83 = int_to_ptr.vmem [resolvable:$true] %s82
      %85 = dma.hbm_to_vmem [thread:$0]  %s6, 64, %s83, [#allocation15]
    $region29: #{_forward_impl.1} parent=1 // pred_fallthru
      _
    // Predicated region
    $region30: #{_forward_impl.1} parent=1 // pred_check
      _
    $region31: #{_forward_impl.1} parent=1 // pred_check_branch
      %87 = sbr.rel (0) target = $region33
    $region32: #{_forward_impl.1} parent=1 // pred_region
      _
    $region33: #{_forward_impl.1} parent=1 // pred_fallthru
      _
    // Predicated region
    $region34: #{_forward_impl.1} parent=1 // pred_check
      _
    $region35: #{_forward_impl.1} parent=1 // pred_check_branch
      %89 = sbr.rel (0) target = $region37
    $region36: #{_forward_impl.1} parent=1 // pred_region
      %s91 = ssub.s32 16, 16
      %92 = vsyncadd [#allocation15], %s91
      %s94 = sshll.u32 [#allocation16], 4
      %s95 = int_to_ptr.vmem [resolvable:$true] %s94
      %97 = dma.hbm_to_vmem [thread:$0]  %s8, 16, %s95, [#allocation15]
    $region37: #{_forward_impl.1} parent=1 // pred_fallthru
      _
    // Predicated region
    $region38: #{_forward_impl.1} parent=1 // pred_check
      _
    $region39: #{_forward_impl.1} parent=1 // pred_check_branch
      %99 = sbr.rel (0) target = $region41
    $region40: #{_forward_impl.1} parent=1 // pred_region
      %100 = dma.done [#allocation7], 2304
    $region41: #{_forward_impl.1} parent=1 // pred_fallthru
      _
    // Predicated region
    $region42: #{_forward_impl.1} parent=1 // pred_check
      _
    $region43: #{_forward_impl.1} parent=1 // pred_check_branch
      %102 = sbr.rel (0) target = $region45
    $region44: #{_forward_impl.1} parent=1 // pred_region
      %103 = dma.done [#allocation9], 64
    $region45: #{_forward_impl.1} parent=1 // pred_fallthru
      _
    // Predicated region
    $region46: #{_forward_impl.1} parent=1 // pred_check
      _
    $region47: #{_forward_impl.1} parent=1 // pred_check_branch
      %105 = sbr.rel (0) target = $region49
    $region48: #{_forward_impl.1} parent=1 // pred_region
      %106 = dma.done [#allocation9], 38400
    $region49: #{_forward_impl.1} parent=1 // pred_fallthru
      _
    // Predicated region
    $region50: #{_forward_impl.1} parent=1 // pred_check
      _
    $region51: #{_forward_impl.1} parent=1 // pred_check_branch
      %108 = sbr.rel (0) target = $region53
    $region52: #{_forward_impl.1} parent=1 // pred_region
      %109 = dma.done [#allocation12], 64
    $region53: #{_forward_impl.1} parent=1 // pred_fallthru
      _
    // Predicated region
    $region54: #{_forward_impl.1} parent=1 // pred_check
      _
    $region55: #{_forward_impl.1} parent=1 // pred_check_branch
      %111 = sbr.rel (0) target = $region57
    $region56: #{_forward_impl.1} parent=1 // pred_region
      %112 = dma.done [#allocation12], 80640
    $region57: #{_forward_impl.1} parent=1 // pred_fallthru
      _
    // Predicated region
    $region58: #{_forward_impl.1} parent=1 // pred_check
      _
    $region59: #{_forward_impl.1} parent=1 // pred_check_branch
      %114 = sbr.rel (0) target = $region61
    $region60: #{_forward_impl.1} parent=1 // pred_region
      %115 = dma.done [#allocation15], 64
    $region61: #{_forward_impl.1} parent=1 // pred_fallthru
      _
    // Predicated region
    $region62: #{_forward_impl.1} parent=1 // pred_check
      _
    $region63: #{_forward_impl.1} parent=1 // pred_check_branch
      %117 = sbr.rel (0) target = $region65
    $region64: #{_forward_impl.1} parent=1 // pred_region
      %118 = dma.done [#allocation15], 16
    $region65: #{_forward_impl.1} parent=1 // pred_fallthru
      _
    %v120 = vld [vmem:[%s0] sm:$0xf]
    %v121 = vld [vmem:[%s0 + $0x4] sm:$0xf]
    %v122 = vld [vmem:[%s0 + $0x8] sm:$0xf]
    %v123 = vld [vmem:[%s0 + $0xc] sm:$0xf]
    %v124 = vld [vmem:[%s0 + $0x10] sm:$0xf]
    %v125 = vld [vmem:[%s0 + $0x14] sm:$0xf]
    %v126 = vld [vmem:[%s0 + $0x18] sm:$0xf]
    %v127 = vld [vmem:[%s0 + $0x1c] sm:$0xf]
    %v128 = vld [vmem:[%s0 + $0x20] sm:$0xf]
    %v129 = vld [vmem:[%s0 + $0x24] sm:$0xf]
    %v130 = vld [vmem:[%s0 + $0x28] sm:$0xf]
    %v131 = vld [vmem:[%s0 + $0x2c] sm:$0xf]
    %v132 = vld [vmem:[%s0 + $0x30] sm:$0xf]
    %v133 = vld [vmem:[%s0 + $0x34] sm:$0xf]
    %v134 = vld [vmem:[%s0 + $0x38] sm:$0xf]
    %v135 = vld [vmem:[%s0 + $0x3c] sm:$0xf]
    %v136 = vld [vmem:[%s0 + $0x40] sm:$0xf]
    %v137 = vld [vmem:[%s0 + $0x44] sm:$0xf]
    %v138 = vld [vmem:[%s0 + $0x48] sm:$0xf]
    %v139 = vld [vmem:[%s0 + $0x4c] sm:$0xf]
    %v140 = vld [vmem:[%s0 + $0x50] sm:$0xf]
    %v141 = vld [vmem:[%s0 + $0x54] sm:$0xf]
    %v142 = vld [vmem:[#allocation6] sm:$0xff]
    %v143 = vld [vmem:[#allocation6 + $0x8] sm:$0xff]
    %v144 = vld [vmem:[#allocation6 + $0x10] sm:$0xff]
    %v145 = vld [vmem:[#allocation6 + $0x18] sm:$0xff]
    %v146 = vld [vmem:[#allocation6 + $0x20] sm:$0xff]
    %v147 = vld [vmem:[#allocation6 + $0x28] sm:$0xff]
    %v148 = vld [vmem:[#allocation6 + $0x30] sm:$0xff]
    %v149 = vld [vmem:[#allocation6 + $0x38] sm:$0xff]
    %v150 = vld [vmem:[#allocation6 + $0x40] sm:$0xff]
    %v151 = vld [vmem:[#allocation6 + $0x48] sm:$0xff]
    %v152 = vld [vmem:[#allocation6 + $0x50] sm:$0xff]
    %v153 = vld [vmem:[#allocation6 + $0x58] sm:$0xff]
    %v154 = vld [vmem:[#allocation6 + $0x60] sm:$0xff]
    %v155 = vld [vmem:[#allocation6 + $0x68] sm:$0xff]
    %v156 = vld [vmem:[#allocation6 + $0x70] sm:$0xff]
    %v157 = vld [vmem:[#allocation6 + $0x78] sm:$0xff]
    %v158 = vld [vmem:[#allocation6 + $0x80] sm:$0x11]
    %v159 = vld [vmem:[#allocation6 + $0x88] sm:$0x11]
    %v182 = vunpack.c.l.b16 %v120
    %v183 = vunpack.c.l.b16 %v121
    %v184 = vunpack.c.l.b16 %v122
    %v185 = vunpack.c.l.b16 %v123
    %v186 = vunpack.c.l.b16 %v124
    %v187 = vunpack.c.l.b16 %v125
    %v188 = vunpack.c.l.b16 %v126
    %v189 = vunpack.c.l.b16 %v127
    %v190 = vunpack.c.l.b16 %v128
    %v191 = vunpack.c.l.b16 %v129
    %v192 = vunpack.c.l.b16 %v130
    %v193 = vunpack.c.l.b16 %v131
    %v194 = vunpack.c.l.b16 %v132
    %v195 = vunpack.c.l.b16 %v133
    %v196 = vunpack.c.l.b16 %v134
    %v197 = vunpack.c.l.b16 %v135
    %v198 = vunpack.c.l.b16 %v136
    %v199 = vunpack.c.l.b16 %v137
    %v200 = vunpack.c.l.b16 %v138
    %v201 = vunpack.c.l.b16 %v139
    %v202 = vunpack.c.l.b16 %v140
    %v203 = vunpack.c.l.b16 %v141
    %v204 = vpack.c.b16 %v183, %v182
    %v205 = vpack.c.b16 %v185, %v184
    %v206 = vpack.c.b16 %v187, %v186
    %v207 = vpack.c.b16 %v189, %v188
    %v208 = vpack.c.b16 %v191, %v190
    %v209 = vpack.c.b16 %v193, %v192
    %v210 = vpack.c.b16 %v195, %v194
    %v211 = vpack.c.b16 %v197, %v196
    %v212 = vpack.c.b16 %v199, %v198
    %v213 = vpack.c.b16 %v201, %v200
    %v214 = vpack.c.b16 %v203, %v202
    %v233 = vunpack.c.l.b16 %v142
    %v234 = vunpack.c.h.b16 %v142
    %v235 = vunpack.c.l.b16 %v143
    %v236 = vunpack.c.h.b16 %v143
    %v237 = vunpack.c.l.b16 %v144
    %v238 = vunpack.c.h.b16 %v144
    %v239 = vunpack.c.l.b16 %v145
    %v240 = vunpack.c.h.b16 %v145
    %v241 = vunpack.c.l.b16 %v146
    %v242 = vunpack.c.h.b16 %v146
    %v243 = vunpack.c.l.b16 %v147
    %v244 = vunpack.c.h.b16 %v147
    %v245 = vunpack.c.l.b16 %v148
    %v246 = vunpack.c.h.b16 %v148
    %v247 = vunpack.c.l.b16 %v149
    %v248 = vunpack.c.h.b16 %v149
    %v249 = vunpack.c.l.b16 %v150
    %v250 = vunpack.c.h.b16 %v150
    %v251 = vunpack.c.l.b16 %v151
    %v252 = vunpack.c.h.b16 %v151
    %v253 = vunpack.c.l.b16 %v152
    %v254 = vunpack.c.h.b16 %v152
    %v255 = vunpack.c.l.b16 %v153
    %v256 = vunpack.c.h.b16 %v153
    %v257 = vunpack.c.l.b16 %v154
    %v258 = vunpack.c.h.b16 %v154
    %v259 = vunpack.c.l.b16 %v155
    %v260 = vunpack.c.h.b16 %v155
    %v261 = vunpack.c.l.b16 %v156
    %v262 = vunpack.c.h.b16 %v156
    %v263 = vunpack.c.l.b16 %v157
    %v264 = vunpack.c.h.b16 %v157
    %v265 = vunpack.c.l.b16 %v158
    %v266 = vunpack.c.h.b16 %v158
    %v267 = vunpack.c.l.b16 %v159
    %v268 = vunpack.c.h.b16 %v159
    %v269 = vpack.c.b16 %v237, %v233
    %v270 = vpack.c.b16 %v238, %v234
    %v271 = vpack.c.b16 %v239, %v235
    %v272 = vpack.c.b16 %v240, %v236
    %v273 = vpack.c.b16 %v245, %v241
    %v274 = vpack.c.b16 %v246, %v242
    %v275 = vpack.c.b16 %v247, %v243
    %v276 = vpack.c.b16 %v248, %v244
    %v277 = vpack.c.b16 %v253, %v249
    %v278 = vpack.c.b16 %v254, %v250
    %v279 = vpack.c.b16 %v255, %v251
    %v280 = vpack.c.b16 %v256, %v252
    %v281 = vpack.c.b16 %v261, %v257
    %v282 = vpack.c.b16 %v262, %v258
    %v283 = vpack.c.b16 %v263, %v259
    %v284 = vpack.c.b16 %v264, %v260
    %v285 = vpack.c.b16 %v265, %v265
    %v286 = vpack.c.b16 %v266, %v266
    %v287 = vpack.c.b16 %v267, %v267
    %v288 = vpack.c.b16 %v268, %v268
    %vm305 = vcmask 539648
    %v307 = vsel %vm305, %v204, 0
    %v310 = vsel %vm305, %v205, 0
    %v313 = vsel %vm305, %v206, 0
    %v316 = vsel %vm305, %v207, 0
    %v319 = vsel %vm305, %v208, 0
    %v322 = vsel %vm305, %v209, 0
    %v325 = vsel %vm305, %v210, 0
    %v328 = vsel %vm305, %v211, 0
    %v331 = vsel %vm305, %v212, 0
    %v334 = vsel %vm305, %v213, 0
    %v337 = vsel %vm305, %v214, 0
    %vm339 = vcmask 1040384
    %v341 = vsel %vm339, %v285, 0
    %v344 = vsel %vm339, %v286, 0
    %v347 = vsel %vm339, %v287, 0
    %v350 = vsel %vm339, %v288, 0
    %352 = vmatprep.subr.bf16.mxu0 %v270
    %353 = vmatpush1.bf16.msra.mxu0 %v269
    %354 = vmatprep.subr.bf16.mxu0 %v274
    %355 = vmatpush1.bf16.msra.mxu0 %v273
    %356 = vmatprep.subr.bf16.mxu0 %v278
    %357 = vmatpush1.bf16.msra.mxu0 %v277
    %358 = vmatprep.subr.bf16.mxu0 %v282
    %359 = vmatpush1.bf16.msra.mxu0 %v281
    %360 = vmatprep.subr.bf16.mxu0 %v344
    %361 = vmatpush1.bf16.msra.mxu0 %v341
    %362 = vmatprep.subr.bf16.mxu0 0
    %363 = vmatpush1.bf16.msra.mxu0 0
    %364 = vmatprep.subr.bf16.mxu0 0
    %365 = vmatpush1.bf16.msra.mxu0 0
    %366 = vmatprep.subr.bf16.mxu0 0
    %367 = vmatpush1.bf16.msra.mxu0 0
    %368 = vmatprep.subr.bf16.mxu0 0
    %369 = vmatpush1.bf16.msra.mxu0 0
    %370 = vmatprep.subr.bf16.mxu0 0
    %371 = vmatpush1.bf16.msra.mxu0 0
    %372 = vmatprep.subr.bf16.mxu0 0
    %373 = vmatpush1.bf16.msra.mxu0 0
    %374 = vmatprep.subr.bf16.mxu0 0
    %375 = vmatpush1.bf16.msra.mxu0 0
    %376 = vmatprep.subr.bf16.mxu0 0
    %377 = vmatpush1.bf16.msra.mxu0 0
    %378 = vmatprep.subr.bf16.mxu0 0
    %379 = vmatpush1.bf16.msra.mxu0 0
    %380 = vmatprep.subr.bf16.mxu0 0
    %381 = vmatpush1.bf16.msra.mxu0 0
    %382 = vmatprep.subr.bf16.mxu0 0
    %383 = vmatpush1.bf16.msra.mxu0 0
    %384 = vmatprep.mubr.bf16.mxu0 0
    %385 = vmatmul.mubr.bf16.gmra.mrb[0].mxu0 %v307
    %v386 = vpop.f32.mrb[0].mxu0
    %v387 = vadd.f32 0.0, %v386
    %v388 = vpop.f32.mrb[0].mxu0
    %v389 = vadd.f32 0.0, %v388
    %v390 = vpop.f32.mrb[0].mxu0
    %v391 = vadd.f32 0.0, %v390
    %v392 = vpop.f32.mrb[0].mxu0
    %v393 = vadd.f32 0.0, %v392
    %394 = vmatprep.mubr.bf16.mxu0 0
    %395 = vmatmul.mubr.bf16.gmra.mrb[0].mxu0 %v310
    %v396 = vpop.f32.mrb[0].mxu0
    %v397 = vadd.f32 0.0, %v396
    %v398 = vpop.f32.mrb[0].mxu0
    %v399 = vadd.f32 0.0, %v398
    %v400 = vpop.f32.mrb[0].mxu0
    %v401 = vadd.f32 0.0, %v400
    %v402 = vpop.f32.mrb[0].mxu0
    %v403 = vadd.f32 0.0, %v402
    %404 = vmatprep.mubr.bf16.mxu0 0
    %405 = vmatmul.mubr.bf16.gmra.mrb[0].mxu0 %v313
    %v406 = vpop.f32.mrb[0].mxu0
    %v407 = vadd.f32 0.0, %v406
    %v408 = vpop.f32.mrb[0].mxu0
    %v409 = vadd.f32 0.0, %v408
    %v410 = vpop.f32.mrb[0].mxu0
    %v411 = vadd.f32 0.0, %v410
    %v412 = vpop.f32.mrb[0].mxu0
    %v413 = vadd.f32 0.0, %v412
    %414 = vmatprep.mubr.bf16.mxu0 0
    %415 = vmatmul.mubr.bf16.gmra.mrb[0].mxu0 %v316
    %v416 = vpop.f32.mrb[0].mxu0
    %v417 = vadd.f32 0.0, %v416
    %v418 = vpop.f32.mrb[0].mxu0
    %v419 = vadd.f32 0.0, %v418
    %v420 = vpop.f32.mrb[0].mxu0
    %v421 = vadd.f32 0.0, %v420
    %v422 = vpop.f32.mrb[0].mxu0
    %v423 = vadd.f32 0.0, %v422
    %424 = vmatprep.mubr.bf16.mxu0 0
    %425 = vmatmul.mubr.bf16.gmra.mrb[0].mxu0 %v319
    %v426 = vpop.f32.mrb[0].mxu0
    %v427 = vadd.f32 0.0, %v426
    %v428 = vpop.f32.mrb[0].mxu0
    %v429 = vadd.f32 0.0, %v428
    %v430 = vpop.f32.mrb[0].mxu0
    %v431 = vadd.f32 0.0, %v430
    %v432 = vpop.f32.mrb[0].mxu0
    %v433 = vadd.f32 0.0, %v432
    %434 = vmatprep.mubr.bf16.mxu0 0
    %435 = vmatmul.mubr.bf16.gmra.mrb[0].mxu0 %v322
    %v436 = vpop.f32.mrb[0].mxu0
    %v437 = vadd.f32 0.0, %v436
    %v438 = vpop.f32.mrb[0].mxu0
    %v439 = vadd.f32 0.0, %v438
    %v440 = vpop.f32.mrb[0].mxu0
    %v441 = vadd.f32 0.0, %v440
    %v442 = vpop.f32.mrb[0].mxu0
    %v443 = vadd.f32 0.0, %v442
    %444 = vmatprep.mubr.bf16.mxu0 0
    %445 = vmatmul.mubr.bf16.gmra.mrb[0].mxu0 %v325
    %v446 = vpop.f32.mrb[0].mxu0
    %v447 = vadd.f32 0.0, %v446
    %v448 = vpop.f32.mrb[0].mxu0
    %v449 = vadd.f32 0.0, %v448
    %v450 = vpop.f32.mrb[0].mxu0
    %v451 = vadd.f32 0.0, %v450
    %v452 = vpop.f32.mrb[0].mxu0
    %v453 = vadd.f32 0.0, %v452
    %454 = vmatprep.mubr.bf16.mxu0 0
    %455 = vmatmul.mubr.bf16.gmra.mrb[0].mxu0 %v328
    %v456 = vpop.f32.mrb[0].mxu0
    %v457 = vadd.f32 0.0, %v456
    %v458 = vpop.f32.mrb[0].mxu0
    %v459 = vadd.f32 0.0, %v458
    %v460 = vpop.f32.mrb[0].mxu0
    %v461 = vadd.f32 0.0, %v460
    %v462 = vpop.f32.mrb[0].mxu0
    %v463 = vadd.f32 0.0, %v462
    %464 = vmatprep.mubr.bf16.mxu0 0
    %465 = vmatmul.mubr.bf16.gmra.mrb[0].mxu0 %v331
    %v466 = vpop.f32.mrb[0].mxu0
    %v467 = vadd.f32 0.0, %v466
    %v468 = vpop.f32.mrb[0].mxu0
    %v469 = vadd.f32 0.0, %v468
    %v470 = vpop.f32.mrb[0].mxu0
    %v471 = vadd.f32 0.0, %v470
    %v472 = vpop.f32.mrb[0].mxu0
    %v473 = vadd.f32 0.0, %v472
    %474 = vmatprep.mubr.bf16.mxu0 0
    %475 = vmatmul.mubr.bf16.gmra.mrb[0].mxu0 %v334
    %v476 = vpop.f32.mrb[0].mxu0
    %v477 = vadd.f32 0.0, %v476
    %v478 = vpop.f32.mrb[0].mxu0
    %v479 = vadd.f32 0.0, %v478
    %v480 = vpop.f32.mrb[0].mxu0
    %v481 = vadd.f32 0.0, %v480
    %v482 = vpop.f32.mrb[0].mxu0
    %v483 = vadd.f32 0.0, %v482
    %484 = vmatprep.mubr.bf16.mxu0 0
    %485 = vmatmul.mubr.bf16.gmra.mrb[0].mxu0 %v337
    %v486 = vpop.f32.mrb[0].mxu0
    %v487 = vadd.f32 0.0, %v486
    %v488 = vpop.f32.mrb[0].mxu0
    %v489 = vadd.f32 0.0, %v488
    %v490 = vpop.f32.mrb[0].mxu0
    %v491 = vadd.f32 0.0, %v490
    %v492 = vpop.f32.mrb[0].mxu0
    %v493 = vadd.f32 0.0, %v492
    %494 = vdwg.mxu0
    %495 = vmatprep.subr.bf16.mxu0 %v272
    %496 = vmatpush1.bf16.msra.mxu0 %v271
    %497 = vmatprep.subr.bf16.mxu0 %v276
    %498 = vmatpush1.bf16.msra.mxu0 %v275
    %499 = vmatprep.subr.bf16.mxu0 %v280
    %500 = vmatpush1.bf16.msra.mxu0 %v279
    %501 = vmatprep.subr.bf16.mxu0 %v284
    %502 = vmatpush1.bf16.msra.mxu0 %v283
    %503 = vmatprep.subr.bf16.mxu0 %v350
    %504 = vmatpush1.bf16.msra.mxu0 %v347
    %505 = vmatprep.subr.bf16.mxu0 0
    %506 = vmatpush1.bf16.msra.mxu0 0
    %507 = vmatprep.subr.bf16.mxu0 0
    %508 = vmatpush1.bf16.msra.mxu0 0
    %509 = vmatprep.subr.bf16.mxu0 0
    %510 = vmatpush1.bf16.msra.mxu0 0
    %511 = vmatprep.subr.bf16.mxu0 0
    %512 = vmatpush1.bf16.msra.mxu0 0
    %513 = vmatprep.subr.bf16.mxu0 0
    %514 = vmatpush1.bf16.msra.mxu0 0
    %515 = vmatprep.subr.bf16.mxu0 0
    %516 = vmatpush1.bf16.msra.mxu0 0
    %517 = vmatprep.subr.bf16.mxu0 0
    %518 = vmatpush1.bf16.msra.mxu0 0
    %519 = vmatprep.subr.bf16.mxu0 0
    %520 = vmatpush1.bf16.msra.mxu0 0
    %521 = vmatprep.subr.bf16.mxu0 0
    %522 = vmatpush1.bf16.msra.mxu0 0
    %523 = vmatprep.subr.bf16.mxu0 0
    %524 = vmatpush1.bf16.msra.mxu0 0
    %525 = vmatprep.subr.bf16.mxu0 0
    %526 = vmatpush1.bf16.msra.mxu0 0
    %527 = vmatprep.mubr.bf16.mxu0 0
    %528 = vmatmul.mubr.bf16.gmra.mrb[0].mxu0 %v307
    %v529 = vpop.f32.mrb[0].mxu0
    %v530 = vadd.f32 0.0, %v529
    %v531 = vpop.f32.mrb[0].mxu0
    %v532 = vadd.f32 0.0, %v531
    %v533 = vpop.f32.mrb[0].mxu0
    %v534 = vadd.f32 0.0, %v533
    %v535 = vpop.f32.mrb[0].mxu0
    %v536 = vadd.f32 0.0, %v535
    %537 = vmatprep.mubr.bf16.mxu0 0
    %538 = vmatmul.mubr.bf16.gmra.mrb[0].mxu0 %v310
    %v539 = vpop.f32.mrb[0].mxu0
    %v540 = vadd.f32 0.0, %v539
    %v541 = vpop.f32.mrb[0].mxu0
    %v542 = vadd.f32 0.0, %v541
    %v543 = vpop.f32.mrb[0].mxu0
    %v544 = vadd.f32 0.0, %v543
    %v545 = vpop.f32.mrb[0].mxu0
    %v546 = vadd.f32 0.0, %v545
    %547 = vmatprep.mubr.bf16.mxu0 0
    %548 = vmatmul.mubr.bf16.gmra.mrb[0].mxu0 %v313
    %v549 = vpop.f32.mrb[0].mxu0
    %v550 = vadd.f32 0.0, %v549
    %v551 = vpop.f32.mrb[0].mxu0
    %v552 = vadd.f32 0.0, %v551
    %v553 = vpop.f32.mrb[0].mxu0
    %v554 = vadd.f32 0.0, %v553
    %v555 = vpop.f32.mrb[0].mxu0
    %v556 = vadd.f32 0.0, %v555
    %557 = vmatprep.mubr.bf16.mxu0 0
    %558 = vmatmul.mubr.bf16.gmra.mrb[0].mxu0 %v316
    %v559 = vpop.f32.mrb[0].mxu0
    %v560 = vadd.f32 0.0, %v559
    %v561 = vpop.f32.mrb[0].mxu0
    %v562 = vadd.f32 0.0, %v561
    %v563 = vpop.f32.mrb[0].mxu0
    %v564 = vadd.f32 0.0, %v563
    %v565 = vpop.f32.mrb[0].mxu0
    %v566 = vadd.f32 0.0, %v565
    %567 = vmatprep.mubr.bf16.mxu0 0
    %568 = vmatmul.mubr.bf16.gmra.mrb[0].mxu0 %v319
    %v569 = vpop.f32.mrb[0].mxu0
    %v570 = vadd.f32 0.0, %v569
    %v571 = vpop.f32.mrb[0].mxu0
    %v572 = vadd.f32 0.0, %v571
    %v573 = vpop.f32.mrb[0].mxu0
    %v574 = vadd.f32 0.0, %v573
    %v575 = vpop.f32.mrb[0].mxu0
    %v576 = vadd.f32 0.0, %v575
    %577 = vmatprep.mubr.bf16.mxu0 0
    %578 = vmatmul.mubr.bf16.gmra.mrb[0].mxu0 %v322
    %v579 = vpop.f32.mrb[0].mxu0
    %v580 = vadd.f32 0.0, %v579
    %v581 = vpop.f32.mrb[0].mxu0
    %v582 = vadd.f32 0.0, %v581
    %v583 = vpop.f32.mrb[0].mxu0
    %v584 = vadd.f32 0.0, %v583
    %v585 = vpop.f32.mrb[0].mxu0
    %v586 = vadd.f32 0.0, %v585
    %587 = vmatprep.mubr.bf16.mxu0 0
    %588 = vmatmul.mubr.bf16.gmra.mrb[0].mxu0 %v325
    %v589 = vpop.f32.mrb[0].mxu0
    %v590 = vadd.f32 0.0, %v589
    %v591 = vpop.f32.mrb[0].mxu0
    %v592 = vadd.f32 0.0, %v591
    %v593 = vpop.f32.mrb[0].mxu0
    %v594 = vadd.f32 0.0, %v593
    %v595 = vpop.f32.mrb[0].mxu0
    %v596 = vadd.f32 0.0, %v595
    %597 = vmatprep.mubr.bf16.mxu0 0
    %598 = vmatmul.mubr.bf16.gmra.mrb[0].mxu0 %v328
    %v599 = vpop.f32.mrb[0].mxu0
    %v600 = vadd.f32 0.0, %v599
    %v601 = vpop.f32.mrb[0].mxu0
    %v602 = vadd.f32 0.0, %v601
    %v603 = vpop.f32.mrb[0].mxu0
    %v604 = vadd.f32 0.0, %v603
    %v605 = vpop.f32.mrb[0].mxu0
    %v606 = vadd.f32 0.0, %v605
    %607 = vmatprep.mubr.bf16.mxu0 0
    %608 = vmatmul.mubr.bf16.gmra.mrb[0].mxu0 %v331
    %v609 = vpop.f32.mrb[0].mxu0
    %v610 = vadd.f32 0.0, %v609
    %v611 = vpop.f32.mrb[0].mxu0
    %v612 = vadd.f32 0.0, %v611
    %v613 = vpop.f32.mrb[0].mxu0
    %v614 = vadd.f32 0.0, %v613
    %v615 = vpop.f32.mrb[0].mxu0
    %v616 = vadd.f32 0.0, %v615
    %617 = vmatprep.mubr.bf16.mxu0 0
    %618 = vmatmul.mubr.bf16.gmra.mrb[0].mxu0 %v334
    %v619 = vpop.f32.mrb[0].mxu0
    %v620 = vadd.f32 0.0, %v619
    %v621 = vpop.f32.mrb[0].mxu0
    %v622 = vadd.f32 0.0, %v621
    %v623 = vpop.f32.mrb[0].mxu0
    %v624 = vadd.f32 0.0, %v623
    %v625 = vpop.f32.mrb[0].mxu0
    %v626 = vadd.f32 0.0, %v625
    %627 = vmatprep.mubr.bf16.mxu0 0
    %628 = vmatmul.mubr.bf16.gmra.mrb[0].mxu0 %v337
    %v629 = vpop.f32.mrb[0].mxu0
    %v630 = vadd.f32 0.0, %v629
    %v631 = vpop.f32.mrb[0].mxu0
    %v632 = vadd.f32 0.0, %v631
    %v633 = vpop.f32.mrb[0].mxu0
    %v634 = vadd.f32 0.0, %v633
    %v635 = vpop.f32.mrb[0].mxu0
    %v636 = vadd.f32 0.0, %v635
    %637 = vdwg.mxu0
    %638 = vst [vmem:[#allocation2] sm:$0xff] %v387
    %639 = vst [vmem:[#allocation2 + $0x8] sm:$0xff] %v389
    %640 = vst [vmem:[#allocation2 + $0x10] sm:$0xff] %v530
    %vm641 = vcmask 130048
    %642 = vst.msk [vmem:[#allocation2 + $0x18] sm:$0xff] %vm641, %v532
    %643 = vst [vmem:[#allocation2 + $0x20] sm:$0xff] %v391
    %644 = vst [vmem:[#allocation2 + $0x28] sm:$0xff] %v393
    %645 = vst [vmem:[#allocation2 + $0x30] sm:$0xff] %v534
    %646 = vst.msk [vmem:[#allocation2 + $0x38] sm:$0xff] %vm641, %v536
    %647 = vst [vmem:[#allocation2 + $0x40] sm:$0xff] %v397
    %648 = vst [vmem:[#allocation2 + $0x48] sm:$0xff] %v399
    %649 = vst [vmem:[#allocation2 + $0x50] sm:$0xff] %v540
    %650 = vst.msk [vmem:[#allocation2 + $0x58] sm:$0xff] %vm641, %v542
    %651 = vst [vmem:[#allocation2 + $0x60] sm:$0xff] %v401
    %652 = vst [vmem:[#allocation2 + $0x68] sm:$0xff] %v403
    %653 = vst [vmem:[#allocation2 + $0x70] sm:$0xff] %v544
    %654 = vst.msk [vmem:[#allocation2 + $0x78] sm:$0xff] %vm641, %v546
    %655 = vst [vmem:[#allocation2 + $0x80] sm:$0xff] %v407
    %656 = vst [vmem:[#allocation2 + $0x88] sm:$0xff] %v409
    %657 = vst [vmem:[#allocation2 + $0x90] sm:$0xff] %v550
    %658 = vst.msk [vmem:[#allocation2 + $0x98] sm:$0xff] %vm641, %v552
    %659 = vst [vmem:[#allocation2 + $0xa0] sm:$0xff] %v411
    %660 = vst [vmem:[#allocation2 + $0xa8] sm:$0xff] %v413
    %661 = vst [vmem:[#allocation2 + $0xb0] sm:$0xff] %v554
    %662 = vst.msk [vmem:[#allocation2 + $0xb8] sm:$0xff] %vm641, %v556
    %663 = vst [vmem:[#allocation2 + $0xc0] sm:$0xff] %v417
    %664 = vst [vmem:[#allocation2 + $0xc8] sm:$0xff] %v419
    %665 = vst [vmem:[#allocation2 + $0xd0] sm:$0xff] %v560
    %666 = vst.msk [vmem:[#allocation2 + $0xd8] sm:$0xff] %vm641, %v562
    %667 = vst [vmem:[#allocation2 + $0xe0] sm:$0xff] %v421
    %668 = vst [vmem:[#allocation2 + $0xe8] sm:$0xff] %v423
    %669 = vst [vmem:[#allocation2 + $0xf0] sm:$0xff] %v564
    %670 = vst.msk [vmem:[#allocation2 + $0xf8] sm:$0xff] %vm641, %v566
    %671 = vst [vmem:[#allocation2 + $0x100] sm:$0xff] %v427
    %672 = vst [vmem:[#allocation2 + $0x108] sm:$0xff] %v429
    %673 = vst [vmem:[#allocation2 + $0x110] sm:$0xff] %v570
    %674 = vst.msk [vmem:[#allocation2 + $0x118] sm:$0xff] %vm641, %v572
    %675 = vst [vmem:[#allocation2 + $0x120] sm:$0xff] %v431
    %676 = vst [vmem:[#allocation2 + $0x128] sm:$0xff] %v433
    %677 = vst [vmem:[#allocation2 + $0x130] sm:$0xff] %v574
    %678 = vst.msk [vmem:[#allocation2 + $0x138] sm:$0xff] %vm641, %v576
    %679 = vst [vmem:[#allocation2 + $0x140] sm:$0xff] %v437
    %680 = vst [vmem:[#allocation2 + $0x148] sm:$0xff] %v439
    %681 = vst [vmem:[#allocation2 + $0x150] sm:$0xff] %v580
    %682 = vst.msk [vmem:[#allocation2 + $0x158] sm:$0xff] %vm641, %v582
    %683 = vst [vmem:[#allocation2 + $0x160] sm:$0xff] %v441
    %684 = vst [vmem:[#allocation2 + $0x168] sm:$0xff] %v443
    %685 = vst [vmem:[#allocation2 + $0x170] sm:$0xff] %v584
    %686 = vst.msk [vmem:[#allocation2 + $0x178] sm:$0xff] %vm641, %v586
    %687 = vst [vmem:[#allocation2 + $0x180] sm:$0xff] %v447
    %688 = vst [vmem:[#allocation2 + $0x188] sm:$0xff] %v449
    %689 = vst [vmem:[#allocation2 + $0x190] sm:$0xff] %v590
    %690 = vst.msk [vmem:[#allocation2 + $0x198] sm:$0xff] %vm641, %v592
    %691 = vst [vmem:[#allocation2 + $0x1a0] sm:$0xff] %v451
    %692 = vst [vmem:[#allocation2 + $0x1a8] sm:$0xff] %v453
    %693 = vst [vmem:[#allocation2 + $0x1b0] sm:$0xff] %v594
    %694 = vst.msk [vmem:[#allocation2 + $0x1b8] sm:$0xff] %vm641, %v596
    %695 = vst [vmem:[#allocation2 + $0x1c0] sm:$0xff] %v457
    %696 = vst [vmem:[#allocation2 + $0x1c8] sm:$0xff] %v459
    %697 = vst [vmem:[#allocation2 + $0x1d0] sm:$0xff] %v600
    %698 = vst.msk [vmem:[#allocation2 + $0x1d8] sm:$0xff] %vm641, %v602
    %699 = vst [vmem:[#allocation2 + $0x1e0] sm:$0xff] %v461
    %700 = vst [vmem:[#allocation2 + $0x1e8] sm:$0xff] %v463
    %701 = vst [vmem:[#allocation2 + $0x1f0] sm:$0xff] %v604
    %702 = vst.msk [vmem:[#allocation2 + $0x1f8] sm:$0xff] %vm641, %v606
    %703 = vst [vmem:[#allocation2 + $0x200] sm:$0xff] %v467
    %704 = vst [vmem:[#allocation2 + $0x208] sm:$0xff] %v469
    %705 = vst [vmem:[#allocation2 + $0x210] sm:$0xff] %v610
    %706 = vst.msk [vmem:[#allocation2 + $0x218] sm:$0xff] %vm641, %v612
    %707 = vst [vmem:[#allocation2 + $0x220] sm:$0xff] %v471
    %708 = vst [vmem:[#allocation2 + $0x228] sm:$0xff] %v473
    %709 = vst [vmem:[#allocation2 + $0x230] sm:$0xff] %v614
    %710 = vst.msk [vmem:[#allocation2 + $0x238] sm:$0xff] %vm641, %v616
    %711 = vst [vmem:[#allocation2 + $0x240] sm:$0xff] %v477
    %712 = vst [vmem:[#allocation2 + $0x248] sm:$0xff] %v479
    %713 = vst [vmem:[#allocation2 + $0x250] sm:$0xff] %v620
    %714 = vst.msk [vmem:[#allocation2 + $0x258] sm:$0xff] %vm641, %v622
    %715 = vst [vmem:[#allocation2 + $0x260] sm:$0xff] %v481
    %716 = vst [vmem:[#allocation2 + $0x268] sm:$0xff] %v483
    %717 = vst [vmem:[#allocation2 + $0x270] sm:$0xff] %v624
    %718 = vst.msk [vmem:[#allocation2 + $0x278] sm:$0xff] %vm641, %v626
    %719 = vst [vmem:[#allocation2 + $0x280] sm:$0xff] %v487
    %720 = vst [vmem:[#allocation2 + $0x288] sm:$0xff] %v489
    %721 = vst [vmem:[#allocation2 + $0x290] sm:$0xff] %v630
    %722 = vst.msk [vmem:[#allocation2 + $0x298] sm:$0xff] %vm641, %v632
    %723 = vst [vmem:[#allocation2 + $0x2a0] sm:$0xff] %v491
    %724 = vst [vmem:[#allocation2 + $0x2a8] sm:$0xff] %v493
    %725 = vst [vmem:[#allocation2 + $0x2b0] sm:$0xff] %v634
    %726 = vst.msk [vmem:[#allocation2 + $0x2b8] sm:$0xff] %vm641, %v636
    %v727 = vld [vmem:[#allocation8] sm:$0xf]
    %728 = vst [vmem:[#allocation3] sm:$0xf] 0
    %729 = vst [vmem:[#allocation3 + $0x8] sm:$0xf] 0
    %730 = vst [vmem:[#allocation3 + $0x10] sm:$0xf] 0
    %vm731 = vcmask 117760
    %732 = vst.msk [vmem:[#allocation3 + $0x18] sm:$0xf] %vm731, 0
    %733 = vst [vmem:[#allocation3 + $0xa0] sm:$0xf0] 0
    %734 = vst [vmem:[#allocation3 + $0xa8] sm:$0xf0] 0
    %735 = vst [vmem:[#allocation3 + $0xb0] sm:$0xf0] 0
    %vm736 = vcmask 121860
    %737 = vst.msk [vmem:[#allocation3 + $0xb8] sm:$0xf0] %vm736, 0
    %v738 = vld [vmem:[#allocation2 + $0x20] sm:$0xff]
    %v739 = vld [vmem:[#allocation2 + $0x28] sm:$0xff]
    %v740 = vld [vmem:[#allocation2 + $0x30] sm:$0xff]
    %v741 = vld [vmem:[#allocation2 + $0x38] sm:$0xff]
    %v742 = vld [vmem:[#allocation2 + $0x40] sm:$0xff]
    %v743 = vld [vmem:[#allocation2 + $0x48] sm:$0xff]
    %v744 = vld [vmem:[#allocation2 + $0x50] sm:$0xff]
    %v745 = vld [vmem:[#allocation2 + $0x58] sm:$0xff]
    %v746 = vmax.f32 %v738, %v742
    %v747 = vmax.f32 %v739, %v743
    %v748 = vmax.f32 %v740, %v744
    %v749 = vmax.f32 %v741, %v745
    %754 = vrot.lane.b32.xlu0 %v746, 127
    %v755 = vpop.permute.xlu0 %754
    %756 = vrot.lane.b32.xlu0 %v747, 127
    %v757 = vpop.permute.xlu0 %756
    %758 = vrot.lane.b32.xlu0 %v748, 127
    %v759 = vpop.permute.xlu0 %758
    %760 = vrot.lane.b32.xlu0 %v749, 127
    %v761 = vpop.permute.xlu0 %760
    %vm762 = vcmask 1039360
    %v763 = vsel %vm762, %v755, %v757
    %v764 = vsel %vm762, %v757, %v759
    %v765 = vsel %vm762, %v759, %v761
    %v770 = vmax.f32 %v746, %v763
    %v771 = vmax.f32 %v747, %v764
    %v772 = vmax.f32 %v748, %v765
    %v773 = vmax.f32 %v749, %v761
    %v775 = vlaneseq
    %v776 = vshrl.u32 %v775, 7
    %v777 = vsub.s32 0, %v776
    %v778 = vrot.slane %v727, %v777
    %v779 = vlaneseq
    %v780 = vshrl.u32 %v779, 7
    %v781 = vsub.s32 1, %v780
    %v782 = vrot.slane %v727, %v781
    %v783 = vlaneseq
    %v784 = vshrl.u32 %v783, 7
    %v785 = vsub.s32 2, %v784
    %v786 = vrot.slane %v727, %v785
    %v787 = vlaneseq
    %v788 = vshrl.u32 %v787, 7
    %v789 = vsub.s32 3, %v788
    %v790 = vrot.slane %v727, %v789
    %v795 = vadd.f32 %v770, %v778
    %v796 = vadd.f32 %v771, %v782
    %v797 = vadd.f32 %v772, %v786
    %v798 = vadd.f32 %v773, %v790
    %v799 = vmax.f32 %v795, 0.0
    %v800 = vmax.f32 %v796, 0.0
    %v801 = vmax.f32 %v797, 0.0
    %v802 = vmax.f32 %v798, 0.0
    %v803 = vpack.c.bf16 %v799, %v799
    %v804 = vpack.c.bf16 %v800, %v800
    %v805 = vpack.c.bf16 %v801, %v801
    %v806 = vpack.c.bf16 %v802, %v802
    %v811 = vrot.slane %v803, 4
    %v812 = vrot.slane %v804, 4
    %v813 = vrot.slane %v805, 4
    %v814 = vrot.slane %v806, 4
    %819 = vst [vmem:[#allocation3] sm:$0xf0] %v811
    %820 = vst [vmem:[#allocation3 + $0x8] sm:$0xf0] %v812
    %821 = vst [vmem:[#allocation3 + $0x10] sm:$0xf0] %v813
    %822 = vst.msk [vmem:[#allocation3 + $0x18] sm:$0xf0] %vm736, %v814
    %v823 = vld [vmem:[#allocation2 + $0x60] sm:$0xff]
    %v824 = vld [vmem:[#allocation2 + $0x68] sm:$0xff]
    %v825 = vld [vmem:[#allocation2 + $0x70] sm:$0xff]
    %v826 = vld [vmem:[#allocation2 + $0x78] sm:$0xff]
    %v827 = vld [vmem:[#allocation2 + $0x80] sm:$0xff]
    %v828 = vld [vmem:[#allocation2 + $0x88] sm:$0xff]
    %v829 = vld [vmem:[#allocation2 + $0x90] sm:$0xff]
    %v830 = vld [vmem:[#allocation2 + $0x98] sm:$0xff]
    %v831 = vmax.f32 %v823, %v827
    %v832 = vmax.f32 %v824, %v828
    %v833 = vmax.f32 %v825, %v829
    %v834 = vmax.f32 %v826, %v830
    %839 = vrot.lane.b32.xlu0 %v831, 127
    %v840 = vpop.permute.xlu0 %839
    %841 = vrot.lane.b32.xlu0 %v832, 127
    %v842 = vpop.permute.xlu0 %841
    %843 = vrot.lane.b32.xlu0 %v833, 127
    %v844 = vpop.permute.xlu0 %843
    %845 = vrot.lane.b32.xlu0 %v834, 127
    %v846 = vpop.permute.xlu0 %845
    %v847 = vsel %vm762, %v840, %v842
    %v848 = vsel %vm762, %v842, %v844
    %v849 = vsel %vm762, %v844, %v846
    %v854 = vmax.f32 %v831, %v847
    %v855 = vmax.f32 %v832, %v848
    %v856 = vmax.f32 %v833, %v849
    %v857 = vmax.f32 %v834, %v846
    %v858 = vadd.f32 %v854, %v778
    %v859 = vadd.f32 %v855, %v782
    %v860 = vadd.f32 %v856, %v786
    %v861 = vadd.f32 %v857, %v790
    %v862 = vmax.f32 %v858, 0.0
    %v863 = vmax.f32 %v859, 0.0
    %v864 = vmax.f32 %v860, 0.0
    %v865 = vmax.f32 %v861, 0.0
    %v866 = vpack.c.bf16 %v862, %v862
    %v867 = vpack.c.bf16 %v863, %v863
    %v868 = vpack.c.bf16 %v864, %v864
    %v869 = vpack.c.bf16 %v865, %v865
    %870 = vst [vmem:[#allocation3 + $0x20] sm:$0xf] %v866
    %871 = vst [vmem:[#allocation3 + $0x28] sm:$0xf] %v867
    %872 = vst [vmem:[#allocation3 + $0x30] sm:$0xf] %v868
    %873 = vst.msk [vmem:[#allocation3 + $0x38] sm:$0xf] %vm731, %v869
    %v874 = vld [vmem:[#allocation2 + $0xa0] sm:$0xff]
    %v875 = vld [vmem:[#allocation2 + $0xa8] sm:$0xff]
    %v876 = vld [vmem:[#allocation2 + $0xb0] sm:$0xff]
    %v877 = vld [vmem:[#allocation2 + $0xb8] sm:$0xff]
    %v878 = vld [vmem:[#allocation2 + $0xc0] sm:$0xff]
    %v879 = vld [vmem:[#allocation2 + $0xc8] sm:$0xff]
    %v880 = vld [vmem:[#allocation2 + $0xd0] sm:$0xff]
    %v881 = vld [vmem:[#allocation2 + $0xd8] sm:$0xff]
    %v882 = vmax.f32 %v874, %v878
    %v883 = vmax.f32 %v875, %v879
    %v884 = vmax.f32 %v876, %v880
    %v885 = vmax.f32 %v877, %v881
    %890 = vrot.lane.b32.xlu0 %v882, 127
    %v891 = vpop.permute.xlu0 %890
    %892 = vrot.lane.b32.xlu0 %v883, 127
    %v893 = vpop.permute.xlu0 %892
    %894 = vrot.lane.b32.xlu0 %v884, 127
    %v895 = vpop.permute.xlu0 %894
    %896 = vrot.lane.b32.xlu0 %v885, 127
    %v897 = vpop.permute.xlu0 %896
    %v898 = vsel %vm762, %v891, %v893
    %v899 = vsel %vm762, %v893, %v895
    %v900 = vsel %vm762, %v895, %v897
    %v905 = vmax.f32 %v882, %v898
    %v906 = vmax.f32 %v883, %v899
    %v907 = vmax.f32 %v884, %v900
    %v908 = vmax.f32 %v885, %v897
    %v909 = vadd.f32 %v905, %v778
    %v910 = vadd.f32 %v906, %v782
    %v911 = vadd.f32 %v907, %v786
    %v912 = vadd.f32 %v908, %v790
    %v913 = vmax.f32 %v909, 0.0
    %v914 = vmax.f32 %v910, 0.0
    %v915 = vmax.f32 %v911, 0.0
    %v916 = vmax.f32 %v912, 0.0
    %v917 = vpack.c.bf16 %v913, %v913
    %v918 = vpack.c.bf16 %v914, %v914
    %v919 = vpack.c.bf16 %v915, %v915
    %v920 = vpack.c.bf16 %v916, %v916
    %v925 = vrot.slane %v917, 4
    %v926 = vrot.slane %v918, 4
    %v927 = vrot.slane %v919, 4
    %v928 = vrot.slane %v920, 4
    %933 = vst [vmem:[#allocation3 + $0x20] sm:$0xf0] %v925
    %934 = vst [vmem:[#allocation3 + $0x28] sm:$0xf0] %v926
    %935 = vst [vmem:[#allocation3 + $0x30] sm:$0xf0] %v927
    %936 = vst.msk [vmem:[#allocation3 + $0x38] sm:$0xf0] %vm736, %v928
    %v937 = vld [vmem:[#allocation2 + $0xe0] sm:$0xff]
    %v938 = vld [vmem:[#allocation2 + $0xe8] sm:$0xff]
    %v939 = vld [vmem:[#allocation2 + $0xf0] sm:$0xff]
    %v940 = vld [vmem:[#allocation2 + $0xf8] sm:$0xff]
    %v941 = vld [vmem:[#allocation2 + $0x100] sm:$0xff]
    %v942 = vld [vmem:[#allocation2 + $0x108] sm:$0xff]
    %v943 = vld [vmem:[#allocation2 + $0x110] sm:$0xff]
    %v944 = vld [vmem:[#allocation2 + $0x118] sm:$0xff]
    %v945 = vmax.f32 %v937, %v941
    %v946 = vmax.f32 %v938, %v942
    %v947 = vmax.f32 %v939, %v943
    %v948 = vmax.f32 %v940, %v944
    %953 = vrot.lane.b32.xlu0 %v945, 127
    %v954 = vpop.permute.xlu0 %953
    %955 = vrot.lane.b32.xlu0 %v946, 127
    %v956 = vpop.permute.xlu0 %955
    %957 = vrot.lane.b32.xlu0 %v947, 127
    %v958 = vpop.permute.xlu0 %957
    %959 = vrot.lane.b32.xlu0 %v948, 127
    %v960 = vpop.permute.xlu0 %959
    %v961 = vsel %vm762, %v954, %v956
    %v962 = vsel %vm762, %v956, %v958
    %v963 = vsel %vm762, %v958, %v960
    %v968 = vmax.f32 %v945, %v961
    %v969 = vmax.f32 %v946, %v962
    %v970 = vmax.f32 %v947, %v963
    %v971 = vmax.f32 %v948, %v960
    %v972 = vadd.f32 %v968, %v778
    %v973 = vadd.f32 %v969, %v782
    %v974 = vadd.f32 %v970, %v786
    %v975 = vadd.f32 %v971, %v790
    %v976 = vmax.f32 %v972, 0.0
    %v977 = vmax.f32 %v973, 0.0
    %v978 = vmax.f32 %v974, 0.0
    %v979 = vmax.f32 %v975, 0.0
    %v980 = vpack.c.bf16 %v976, %v976
    %v981 = vpack.c.bf16 %v977, %v977
    %v982 = vpack.c.bf16 %v978, %v978
    %v983 = vpack.c.bf16 %v979, %v979
    %984 = vst [vmem:[#allocation3 + $0x40] sm:$0xf] %v980
    %985 = vst [vmem:[#allocation3 + $0x48] sm:$0xf] %v981
    %986 = vst [vmem:[#allocation3 + $0x50] sm:$0xf] %v982
    %987 = vst.msk [vmem:[#allocation3 + $0x58] sm:$0xf] %vm731, %v983
    %v988 = vld [vmem:[#allocation2 + $0x120] sm:$0xff]
    %v989 = vld [vmem:[#allocation2 + $0x128] sm:$0xff]
    %v990 = vld [vmem:[#allocation2 + $0x130] sm:$0xff]
    %v991 = vld [vmem:[#allocation2 + $0x138] sm:$0xff]
    %v992 = vld [vmem:[#allocation2 + $0x140] sm:$0xff]
    %v993 = vld [vmem:[#allocation2 + $0x148] sm:$0xff]
    %v994 = vld [vmem:[#allocation2 + $0x150] sm:$0xff]
    %v995 = vld [vmem:[#allocation2 + $0x158] sm:$0xff]
    %v996 = vmax.f32 %v988, %v992
    %v997 = vmax.f32 %v989, %v993
    %v998 = vmax.f32 %v990, %v994
    %v999 = vmax.f32 %v991, %v995
    %1004 = vrot.lane.b32.xlu0 %v996, 127
    %v1005 = vpop.permute.xlu0 %1004
    %1006 = vrot.lane.b32.xlu0 %v997, 127
    %v1007 = vpop.permute.xlu0 %1006
    %1008 = vrot.lane.b32.xlu0 %v998, 127
    %v1009 = vpop.permute.xlu0 %1008
    %1010 = vrot.lane.b32.xlu0 %v999, 127
    %v1011 = vpop.permute.xlu0 %1010
    %v1012 = vsel %vm762, %v1005, %v1007
    %v1013 = vsel %vm762, %v1007, %v1009
    %v1014 = vsel %vm762, %v1009, %v1011
    %v1019 = vmax.f32 %v996, %v1012
    %v1020 = vmax.f32 %v997, %v1013
    %v1021 = vmax.f32 %v998, %v1014
    %v1022 = vmax.f32 %v999, %v1011
    %v1023 = vadd.f32 %v1019, %v778
    %v1024 = vadd.f32 %v1020, %v782
    %v1025 = vadd.f32 %v1021, %v786
    %v1026 = vadd.f32 %v1022, %v790
    %v1027 = vmax.f32 %v1023, 0.0
    %v1028 = vmax.f32 %v1024, 0.0
    %v1029 = vmax.f32 %v1025, 0.0
    %v1030 = vmax.f32 %v1026, 0.0
    %v1031 = vpack.c.bf16 %v1027, %v1027
    %v1032 = vpack.c.bf16 %v1028, %v1028
    %v1033 = vpack.c.bf16 %v1029, %v1029
    %v1034 = vpack.c.bf16 %v1030, %v1030
    %v1039 = vrot.slane %v1031, 4
    %v1040 = vrot.slane %v1032, 4
    %v1041 = vrot.slane %v1033, 4
    %v1042 = vrot.slane %v1034, 4
    %1047 = vst [vmem:[#allocation3 + $0x40] sm:$0xf0] %v1039
    %1048 = vst [vmem:[#allocation3 + $0x48] sm:$0xf0] %v1040
    %1049 = vst [vmem:[#allocation3 + $0x50] sm:$0xf0] %v1041
    %1050 = vst.msk [vmem:[#allocation3 + $0x58] sm:$0xf0] %vm736, %v1042
    %v1051 = vld [vmem:[#allocation2 + $0x160] sm:$0xff]
    %v1052 = vld [vmem:[#allocation2 + $0x168] sm:$0xff]
    %v1053 = vld [vmem:[#allocation2 + $0x170] sm:$0xff]
    %v1054 = vld [vmem:[#allocation2 + $0x178] sm:$0xff]
    %v1055 = vld [vmem:[#allocation2 + $0x180] sm:$0xff]
    %v1056 = vld [vmem:[#allocation2 + $0x188] sm:$0xff]
    %v1057 = vld [vmem:[#allocation2 + $0x190] sm:$0xff]
    %v1058 = vld [vmem:[#allocation2 + $0x198] sm:$0xff]
    %v1059 = vmax.f32 %v1051, %v1055
    %v1060 = vmax.f32 %v1052, %v1056
    %v1061 = vmax.f32 %v1053, %v1057
    %v1062 = vmax.f32 %v1054, %v1058
    %1067 = vrot.lane.b32.xlu0 %v1059, 127
    %v1068 = vpop.permute.xlu0 %1067
    %1069 = vrot.lane.b32.xlu0 %v1060, 127
    %v1070 = vpop.permute.xlu0 %1069
    %1071 = vrot.lane.b32.xlu0 %v1061, 127
    %v1072 = vpop.permute.xlu0 %1071
    %1073 = vrot.lane.b32.xlu0 %v1062, 127
    %v1074 = vpop.permute.xlu0 %1073
    %v1075 = vsel %vm762, %v1068, %v1070
    %v1076 = vsel %vm762, %v1070, %v1072
    %v1077 = vsel %vm762, %v1072, %v1074
    %v1082 = vmax.f32 %v1059, %v1075
    %v1083 = vmax.f32 %v1060, %v1076
    %v1084 = vmax.f32 %v1061, %v1077
    %v1085 = vmax.f32 %v1062, %v1074
    %v1086 = vadd.f32 %v1082, %v778
    %v1087 = vadd.f32 %v1083, %v782
    %v1088 = vadd.f32 %v1084, %v786
    %v1089 = vadd.f32 %v1085, %v790
    %v1090 = vmax.f32 %v1086, 0.0
    %v1091 = vmax.f32 %v1087, 0.0
    %v1092 = vmax.f32 %v1088, 0.0
    %v1093 = vmax.f32 %v1089, 0.0
    %v1094 = vpack.c.bf16 %v1090, %v1090
    %v1095 = vpack.c.bf16 %v1091, %v1091
    %v1096 = vpack.c.bf16 %v1092, %v1092
    %v1097 = vpack.c.bf16 %v1093, %v1093
    %1098 = vst [vmem:[#allocation3 + $0x60] sm:$0xf] %v1094
    %1099 = vst [vmem:[#allocation3 + $0x68] sm:$0xf] %v1095
    %1100 = vst [vmem:[#allocation3 + $0x70] sm:$0xf] %v1096
    %1101 = vst.msk [vmem:[#allocation3 + $0x78] sm:$0xf] %vm731, %v1097
    %v1102 = vld [vmem:[#allocation2 + $0x1a0] sm:$0xff]
    %v1103 = vld [vmem:[#allocation2 + $0x1a8] sm:$0xff]
    %v1104 = vld [vmem:[#allocation2 + $0x1b0] sm:$0xff]
    %v1105 = vld [vmem:[#allocation2 + $0x1b8] sm:$0xff]
    %v1106 = vld [vmem:[#allocation2 + $0x1c0] sm:$0xff]
    %v1107 = vld [vmem:[#allocation2 + $0x1c8] sm:$0xff]
    %v1108 = vld [vmem:[#allocation2 + $0x1d0] sm:$0xff]
    %v1109 = vld [vmem:[#allocation2 + $0x1d8] sm:$0xff]
    %v1110 = vmax.f32 %v1102, %v1106
    %v1111 = vmax.f32 %v1103, %v1107
    %v1112 = vmax.f32 %v1104, %v1108
    %v1113 = vmax.f32 %v1105, %v1109
    %1118 = vrot.lane.b32.xlu0 %v1110, 127
    %v1119 = vpop.permute.xlu0 %1118
    %1120 = vrot.lane.b32.xlu0 %v1111, 127
    %v1121 = vpop.permute.xlu0 %1120
    %1122 = vrot.lane.b32.xlu0 %v1112, 127
    %v1123 = vpop.permute.xlu0 %1122
    %1124 = vrot.lane.b32.xlu0 %v1113, 127
    %v1125 = vpop.permute.xlu0 %1124
    %v1126 = vsel %vm762, %v1119, %v1121
    %v1127 = vsel %vm762, %v1121, %v1123
    %v1128 = vsel %vm762, %v1123, %v1125
    %v1133 = vmax.f32 %v1110, %v1126
    %v1134 = vmax.f32 %v1111, %v1127
    %v1135 = vmax.f32 %v1112, %v1128
    %v1136 = vmax.f32 %v1113, %v1125
    %v1137 = vadd.f32 %v1133, %v778
    %v1138 = vadd.f32 %v1134, %v782
    %v1139 = vadd.f32 %v1135, %v786
    %v1140 = vadd.f32 %v1136, %v790
    %v1141 = vmax.f32 %v1137, 0.0
    %v1142 = vmax.f32 %v1138, 0.0
    %v1143 = vmax.f32 %v1139, 0.0
    %v1144 = vmax.f32 %v1140, 0.0
    %v1145 = vpack.c.bf16 %v1141, %v1141
    %v1146 = vpack.c.bf16 %v1142, %v1142
    %v1147 = vpack.c.bf16 %v1143, %v1143
    %v1148 = vpack.c.bf16 %v1144, %v1144
    %v1153 = vrot.slane %v1145, 4
    %v1154 = vrot.slane %v1146, 4
    %v1155 = vrot.slane %v1147, 4
    %v1156 = vrot.slane %v1148, 4
    %1161 = vst [vmem:[#allocation3 + $0x60] sm:$0xf0] %v1153
    %1162 = vst [vmem:[#allocation3 + $0x68] sm:$0xf0] %v1154
    %1163 = vst [vmem:[#allocation3 + $0x70] sm:$0xf0] %v1155
    %1164 = vst.msk [vmem:[#allocation3 + $0x78] sm:$0xf0] %vm736, %v1156
    %v1165 = vld [vmem:[#allocation2 + $0x1e0] sm:$0xff]
    %v1166 = vld [vmem:[#allocation2 + $0x1e8] sm:$0xff]
    %v1167 = vld [vmem:[#allocation2 + $0x1f0] sm:$0xff]
    %v1168 = vld [vmem:[#allocation2 + $0x1f8] sm:$0xff]
    %v1169 = vld [vmem:[#allocation2 + $0x200] sm:$0xff]
    %v1170 = vld [vmem:[#allocation2 + $0x208] sm:$0xff]
    %v1171 = vld [vmem:[#allocation2 + $0x210] sm:$0xff]
    %v1172 = vld [vmem:[#allocation2 + $0x218] sm:$0xff]
    %v1173 = vmax.f32 %v1165, %v1169
    %v1174 = vmax.f32 %v1166, %v1170
    %v1175 = vmax.f32 %v1167, %v1171
    %v1176 = vmax.f32 %v1168, %v1172
    %1181 = vrot.lane.b32.xlu0 %v1173, 127
    %v1182 = vpop.permute.xlu0 %1181
    %1183 = vrot.lane.b32.xlu0 %v1174, 127
    %v1184 = vpop.permute.xlu0 %1183
    %1185 = vrot.lane.b32.xlu0 %v1175, 127
    %v1186 = vpop.permute.xlu0 %1185
    %1187 = vrot.lane.b32.xlu0 %v1176, 127
    %v1188 = vpop.permute.xlu0 %1187
    %v1189 = vsel %vm762, %v1182, %v1184
    %v1190 = vsel %vm762, %v1184, %v1186
    %v1191 = vsel %vm762, %v1186, %v1188
    %v1196 = vmax.f32 %v1173, %v1189
    %v1197 = vmax.f32 %v1174, %v1190
    %v1198 = vmax.f32 %v1175, %v1191
    %v1199 = vmax.f32 %v1176, %v1188
    %v1200 = vadd.f32 %v1196, %v778
    %v1201 = vadd.f32 %v1197, %v782
    %v1202 = vadd.f32 %v1198, %v786
    %v1203 = vadd.f32 %v1199, %v790
    %v1204 = vmax.f32 %v1200, 0.0
    %v1205 = vmax.f32 %v1201, 0.0
    %v1206 = vmax.f32 %v1202, 0.0
    %v1207 = vmax.f32 %v1203, 0.0
    %v1208 = vpack.c.bf16 %v1204, %v1204
    %v1209 = vpack.c.bf16 %v1205, %v1205
    %v1210 = vpack.c.bf16 %v1206, %v1206
    %v1211 = vpack.c.bf16 %v1207, %v1207
    %1212 = vst [vmem:[#allocation3 + $0x80] sm:$0xf] %v1208
    %1213 = vst [vmem:[#allocation3 + $0x88] sm:$0xf] %v1209
    %1214 = vst [vmem:[#allocation3 + $0x90] sm:$0xf] %v1210
    %1215 = vst.msk [vmem:[#allocation3 + $0x98] sm:$0xf] %vm731, %v1211
    %v1216 = vld [vmem:[#allocation2 + $0x220] sm:$0xff]
    %v1217 = vld [vmem:[#allocation2 + $0x228] sm:$0xff]
    %v1218 = vld [vmem:[#allocation2 + $0x230] sm:$0xff]
    %v1219 = vld [vmem:[#allocation2 + $0x238] sm:$0xff]
    %v1220 = vld [vmem:[#allocation2 + $0x240] sm:$0xff]
    %v1221 = vld [vmem:[#allocation2 + $0x248] sm:$0xff]
    %v1222 = vld [vmem:[#allocation2 + $0x250] sm:$0xff]
    %v1223 = vld [vmem:[#allocation2 + $0x258] sm:$0xff]
    %v1224 = vmax.f32 %v1216, %v1220
    %v1225 = vmax.f32 %v1217, %v1221
    %v1226 = vmax.f32 %v1218, %v1222
    %v1227 = vmax.f32 %v1219, %v1223
    %1232 = vrot.lane.b32.xlu0 %v1224, 127
    %v1233 = vpop.permute.xlu0 %1232
    %1234 = vrot.lane.b32.xlu0 %v1225, 127
    %v1235 = vpop.permute.xlu0 %1234
    %1236 = vrot.lane.b32.xlu0 %v1226, 127
    %v1237 = vpop.permute.xlu0 %1236
    %1238 = vrot.lane.b32.xlu0 %v1227, 127
    %v1239 = vpop.permute.xlu0 %1238
    %v1240 = vsel %vm762, %v1233, %v1235
    %v1241 = vsel %vm762, %v1235, %v1237
    %v1242 = vsel %vm762, %v1237, %v1239
    %v1247 = vmax.f32 %v1224, %v1240
    %v1248 = vmax.f32 %v1225, %v1241
    %v1249 = vmax.f32 %v1226, %v1242
    %v1250 = vmax.f32 %v1227, %v1239
    %v1251 = vadd.f32 %v1247, %v778
    %v1252 = vadd.f32 %v1248, %v782
    %v1253 = vadd.f32 %v1249, %v786
    %v1254 = vadd.f32 %v1250, %v790
    %v1255 = vmax.f32 %v1251, 0.0
    %v1256 = vmax.f32 %v1252, 0.0
    %v1257 = vmax.f32 %v1253, 0.0
    %v1258 = vmax.f32 %v1254, 0.0
    %v1259 = vpack.c.bf16 %v1255, %v1255
    %v1260 = vpack.c.bf16 %v1256, %v1256
    %v1261 = vpack.c.bf16 %v1257, %v1257
    %v1262 = vpack.c.bf16 %v1258, %v1258
    %v1267 = vrot.slane %v1259, 4
    %v1268 = vrot.slane %v1260, 4
    %v1269 = vrot.slane %v1261, 4
    %v1270 = vrot.slane %v1262, 4
    %1275 = vst [vmem:[#allocation3 + $0x80] sm:$0xf0] %v1267
    %1276 = vst [vmem:[#allocation3 + $0x88] sm:$0xf0] %v1268
    %1277 = vst [vmem:[#allocation3 + $0x90] sm:$0xf0] %v1269
    %1278 = vst.msk [vmem:[#allocation3 + $0x98] sm:$0xf0] %vm736, %v1270
    %v1279 = vld [vmem:[#allocation2 + $0x260] sm:$0xff]
    %v1280 = vld [vmem:[#allocation2 + $0x268] sm:$0xff]
    %v1281 = vld [vmem:[#allocation2 + $0x270] sm:$0xff]
    %v1282 = vld [vmem:[#allocation2 + $0x278] sm:$0xff]
    %v1283 = vld [vmem:[#allocation2 + $0x280] sm:$0xff]
    %v1284 = vld [vmem:[#allocation2 + $0x288] sm:$0xff]
    %v1285 = vld [vmem:[#allocation2 + $0x290] sm:$0xff]
    %v1286 = vld [vmem:[#allocation2 + $0x298] sm:$0xff]
    %v1287 = vmax.f32 %v1279, %v1283
    %v1288 = vmax.f32 %v1280, %v1284
    %v1289 = vmax.f32 %v1281, %v1285
    %v1290 = vmax.f32 %v1282, %v1286
    %1295 = vrot.lane.b32.xlu0 %v1287, 127
    %v1296 = vpop.permute.xlu0 %1295
    %1297 = vrot.lane.b32.xlu0 %v1288, 127
    %v1298 = vpop.permute.xlu0 %1297
    %1299 = vrot.lane.b32.xlu0 %v1289, 127
    %v1300 = vpop.permute.xlu0 %1299
    %1301 = vrot.lane.b32.xlu0 %v1290, 127
    %v1302 = vpop.permute.xlu0 %1301
    %v1303 = vsel %vm762, %v1296, %v1298
    %v1304 = vsel %vm762, %v1298, %v1300
    %v1305 = vsel %vm762, %v1300, %v1302
    %v1310 = vmax.f32 %v1287, %v1303
    %v1311 = vmax.f32 %v1288, %v1304
    %v1312 = vmax.f32 %v1289, %v1305
    %v1313 = vmax.f32 %v1290, %v1302
    %v1314 = vadd.f32 %v1310, %v778
    %v1315 = vadd.f32 %v1311, %v782
    %v1316 = vadd.f32 %v1312, %v786
    %v1317 = vadd.f32 %v1313, %v790
    %v1318 = vmax.f32 %v1314, 0.0
    %v1319 = vmax.f32 %v1315, 0.0
    %v1320 = vmax.f32 %v1316, 0.0
    %v1321 = vmax.f32 %v1317, 0.0
    %v1322 = vpack.c.bf16 %v1318, %v1318
    %v1323 = vpack.c.bf16 %v1319, %v1319
    %v1324 = vpack.c.bf16 %v1320, %v1320
    %v1325 = vpack.c.bf16 %v1321, %v1321
    %1326 = vst [vmem:[#allocation3 + $0xa0] sm:$0xf] %v1322
    %1327 = vst [vmem:[#allocation3 + $0xa8] sm:$0xf] %v1323
    %1328 = vst [vmem:[#allocation3 + $0xb0] sm:$0xf] %v1324
    %1329 = vst.msk [vmem:[#allocation3 + $0xb8] sm:$0xf] %vm731, %v1325
    %v1330 = vld [vmem:[#allocation3] sm:$0xff]
    %v1331 = vld [vmem:[#allocation3 + $0x8] sm:$0xff]
    %v1332 = vld [vmem:[#allocation3 + $0x10] sm:$0xff]
    %v1333 = vld [vmem:[#allocation3 + $0x18] sm:$0xff]
    %v1334 = vld [vmem:[#allocation3 + $0x20] sm:$0xff]
    %v1335 = vld [vmem:[#allocation3 + $0x28] sm:$0xff]
    %v1336 = vld [vmem:[#allocation3 + $0x30] sm:$0xff]
    %v1337 = vld [vmem:[#allocation3 + $0x38] sm:$0xff]
    %v1338 = vld [vmem:[#allocation3 + $0x40] sm:$0xff]
    %v1339 = vld [vmem:[#allocation3 + $0x48] sm:$0xff]
    %v1340 = vld [vmem:[#allocation3 + $0x50] sm:$0xff]
    %v1341 = vld [vmem:[#allocation3 + $0x58] sm:$0xff]
    %v1342 = vld [vmem:[#allocation3 + $0x60] sm:$0xff]
    %v1343 = vld [vmem:[#allocation3 + $0x68] sm:$0xff]
    %v1344 = vld [vmem:[#allocation3 + $0x70] sm:$0xff]
    %v1345 = vld [vmem:[#allocation3 + $0x78] sm:$0xff]
    %v1346 = vld [vmem:[#allocation3 + $0x80] sm:$0xff]
    %v1347 = vld [vmem:[#allocation3 + $0x88] sm:$0xff]
    %v1348 = vld [vmem:[#allocation3 + $0x90] sm:$0xff]
    %v1349 = vld [vmem:[#allocation3 + $0x98] sm:$0xff]
    %v1350 = vld [vmem:[#allocation10] sm:$0xff]
    %v1351 = vld [vmem:[#allocation10 + $0x8] sm:$0xff]
    %v1352 = vld [vmem:[#allocation10 + $0x10] sm:$0xff]
    %v1353 = vld [vmem:[#allocation10 + $0x18] sm:$0xff]
    %v1354 = vld [vmem:[#allocation10 + $0x20] sm:$0xff]
    %v1355 = vld [vmem:[#allocation10 + $0x28] sm:$0xff]
    %v1356 = vld [vmem:[#allocation10 + $0x30] sm:$0xff]
    %v1357 = vld [vmem:[#allocation10 + $0x38] sm:$0xff]
    %v1358 = vld [vmem:[#allocation10 + $0x40] sm:$0xff]
    %v1359 = vld [vmem:[#allocation10 + $0x48] sm:$0xff]
    %v1360 = vld [vmem:[#allocation10 + $0x50] sm:$0xff]
    %v1361 = vld [vmem:[#allocation10 + $0x58] sm:$0xff]
    %v1362 = vld [vmem:[#allocation10 + $0x60] sm:$0xff]
    %v1363 = vld [vmem:[#allocation10 + $0x68] sm:$0xff]
    %v1364 = vld [vmem:[#allocation10 + $0x70] sm:$0xff]
    %v1365 = vld [vmem:[#allocation10 + $0x78] sm:$0xff]
    %v1366 = vld [vmem:[#allocation10 + $0x80] sm:$0xff]
    %v1367 = vld [vmem:[#allocation10 + $0x88] sm:$0xff]
    %v1368 = vld [vmem:[#allocation10 + $0x90] sm:$0xff]
    %v1369 = vld [vmem:[#allocation10 + $0x98] sm:$0xff]
    %v1370 = vld [vmem:[#allocation10 + $0xa0] sm:$0xff]
    %v1371 = vld [vmem:[#allocation10 + $0xa8] sm:$0xff]
    %v1372 = vld [vmem:[#allocation10 + $0xb0] sm:$0xff]
    %v1373 = vld [vmem:[#allocation10 + $0xb8] sm:$0xff]
    %v1374 = vld [vmem:[#allocation10 + $0xc0] sm:$0xff]
    %v1375 = vld [vmem:[#allocation10 + $0xc8] sm:$0xff]
    %v1376 = vld [vmem:[#allocation10 + $0xd0] sm:$0xff]
    %v1377 = vld [vmem:[#allocation10 + $0xd8] sm:$0xff]
    %v1378 = vld [vmem:[#allocation10 + $0xe0] sm:$0xff]
    %v1379 = vld [vmem:[#allocation10 + $0xe8] sm:$0xff]
    %v1380 = vld [vmem:[#allocation10 + $0xf0] sm:$0xff]
    %v1381 = vld [vmem:[#allocation10 + $0xf8] sm:$0xff]
    %v1382 = vld [vmem:[#allocation10 + $0x100] sm:$0xff]
    %v1383 = vld [vmem:[#allocation10 + $0x108] sm:$0xff]
    %v1384 = vld [vmem:[#allocation10 + $0x110] sm:$0xff]
    %v1385 = vld [vmem:[#allocation10 + $0x118] sm:$0xff]
    %v1386 = vld [vmem:[#allocation10 + $0x120] sm:$0xff]
    %v1387 = vld [vmem:[#allocation10 + $0x128] sm:$0xff]
    %v1388 = vld [vmem:[#allocation10 + $0x130] sm:$0xff]
    %v1389 = vld [vmem:[#allocation10 + $0x138] sm:$0xff]
    %v1390 = vld [vmem:[#allocation10 + $0x140] sm:$0xff]
    %v1391 = vld [vmem:[#allocation10 + $0x148] sm:$0xff]
    %v1392 = vld [vmem:[#allocation10 + $0x150] sm:$0xff]
    %v1393 = vld [vmem:[#allocation10 + $0x158] sm:$0xff]
    %v1394 = vld [vmem:[#allocation10 + $0x160] sm:$0xff]
    %v1395 = vld [vmem:[#allocation10 + $0x168] sm:$0xff]
    %v1396 = vld [vmem:[#allocation10 + $0x170] sm:$0xff]
    %v1397 = vld [vmem:[#allocation10 + $0x178] sm:$0xff]
    %v1398 = vld [vmem:[#allocation10 + $0x180] sm:$0xff]
    %v1399 = vld [vmem:[#allocation10 + $0x188] sm:$0xff]
    %v1400 = vld [vmem:[#allocation10 + $0x190] sm:$0xff]
    %v1401 = vld [vmem:[#allocation10 + $0x198] sm:$0xff]
    %v1402 = vld [vmem:[#allocation10 + $0x1a0] sm:$0xff]
    %v1403 = vld [vmem:[#allocation10 + $0x1a8] sm:$0xff]
    %v1404 = vld [vmem:[#allocation10 + $0x1b0] sm:$0xff]
    %v1405 = vld [vmem:[#allocation10 + $0x1b8] sm:$0xff]
    %v1406 = vld [vmem:[#allocation10 + $0x1c0] sm:$0xff]
    %v1407 = vld [vmem:[#allocation10 + $0x1c8] sm:$0xff]
    %v1408 = vld [vmem:[#allocation10 + $0x1d0] sm:$0xff]
    %v1409 = vld [vmem:[#allocation10 + $0x1d8] sm:$0xff]
    %v1410 = vld [vmem:[#allocation10 + $0x1e0] sm:$0xff]
    %v1411 = vld [vmem:[#allocation10 + $0x1e8] sm:$0xff]
    %v1412 = vld [vmem:[#allocation10 + $0x1f0] sm:$0xff]
    %v1413 = vld [vmem:[#allocation10 + $0x1f8] sm:$0xff]
    %v1414 = vld [vmem:[#allocation10 + $0x200] sm:$0xff]
    %v1415 = vld [vmem:[#allocation10 + $0x208] sm:$0xff]
    %v1416 = vld [vmem:[#allocation10 + $0x210] sm:$0xff]
    %v1417 = vld [vmem:[#allocation10 + $0x218] sm:$0xff]
    %v1418 = vld [vmem:[#allocation10 + $0x220] sm:$0xff]
    %v1419 = vld [vmem:[#allocation10 + $0x228] sm:$0xff]
    %v1420 = vld [vmem:[#allocation10 + $0x230] sm:$0xff]
    %v1421 = vld [vmem:[#allocation10 + $0x238] sm:$0xff]
    %v1422 = vld [vmem:[#allocation10 + $0x240] sm:$0xff]
    %v1423 = vld [vmem:[#allocation10 + $0x248] sm:$0xff]
    %v1424 = vld [vmem:[#allocation10 + $0x250] sm:$0xff]
    %v1425 = vld [vmem:[#allocation10 + $0x258] sm:$0xff]
    %v1426 = vld [vmem:[#allocation10 + $0x260] sm:$0xff]
    %v1427 = vld [vmem:[#allocation10 + $0x268] sm:$0xff]
    %v1428 = vld [vmem:[#allocation10 + $0x270] sm:$0xff]
    %v1429 = vld [vmem:[#allocation10 + $0x278] sm:$0xff]
    %v1430 = vld [vmem:[#allocation10 + $0x280] sm:$0xff]
    %v1431 = vld [vmem:[#allocation10 + $0x288] sm:$0xff]
    %v1432 = vld [vmem:[#allocation10 + $0x290] sm:$0xff]
    %v1433 = vld [vmem:[#allocation10 + $0x298] sm:$0xff]
    %v1434 = vld [vmem:[#allocation10 + $0x2a0] sm:$0xff]
    %v1435 = vld [vmem:[#allocation10 + $0x2a8] sm:$0xff]
    %v1436 = vld [vmem:[#allocation10 + $0x2b0] sm:$0xff]
    %v1437 = vld [vmem:[#allocation10 + $0x2b8] sm:$0xff]
    %v1438 = vld [vmem:[#allocation10 + $0x2c0] sm:$0xff]
    %v1439 = vld [vmem:[#allocation10 + $0x2c8] sm:$0xff]
    %v1440 = vld [vmem:[#allocation10 + $0x2d0] sm:$0xff]
    %v1441 = vld [vmem:[#allocation10 + $0x2d8] sm:$0xff]
    %v1442 = vld [vmem:[#allocation10 + $0x2e0] sm:$0xff]
    %v1443 = vld [vmem:[#allocation10 + $0x2e8] sm:$0xff]
    %v1444 = vld [vmem:[#allocation10 + $0x2f0] sm:$0xff]
    %v1445 = vld [vmem:[#allocation10 + $0x2f8] sm:$0xff]
    %v1446 = vld [vmem:[#allocation10 + $0x300] sm:$0xff]
    %v1447 = vld [vmem:[#allocation10 + $0x308] sm:$0xff]
    %v1448 = vld [vmem:[#allocation10 + $0x310] sm:$0xff]
    %v1449 = vld [vmem:[#allocation10 + $0x318] sm:$0xff]
    %v1550 = vunpack.c.l.b16 %v1350
    %v1551 = vunpack.c.h.b16 %v1350
    %v1552 = vunpack.c.l.b16 %v1351
    %v1553 = vunpack.c.h.b16 %v1351
    %v1554 = vunpack.c.l.b16 %v1352
    %v1555 = vunpack.c.h.b16 %v1352
    %v1556 = vunpack.c.l.b16 %v1353
    %v1557 = vunpack.c.h.b16 %v1353
    %v1558 = vunpack.c.l.b16 %v1354
    %v1559 = vunpack.c.h.b16 %v1354
    %v1560 = vunpack.c.l.b16 %v1355
    %v1561 = vunpack.c.h.b16 %v1355
    %v1562 = vunpack.c.l.b16 %v1356
    %v1563 = vunpack.c.h.b16 %v1356
    %v1564 = vunpack.c.l.b16 %v1357
    %v1565 = vunpack.c.h.b16 %v1357
    %v1566 = vunpack.c.l.b16 %v1358
    %v1567 = vunpack.c.h.b16 %v1358
    %v1568 = vunpack.c.l.b16 %v1359
    %v1569 = vunpack.c.h.b16 %v1359
    %v1570 = vunpack.c.l.b16 %v1360
    %v1571 = vunpack.c.h.b16 %v1360
    %v1572 = vunpack.c.l.b16 %v1361
    %v1573 = vunpack.c.h.b16 %v1361
    %v1574 = vunpack.c.l.b16 %v1362
    %v1575 = vunpack.c.h.b16 %v1362
    %v1576 = vunpack.c.l.b16 %v1363
    %v1577 = vunpack.c.h.b16 %v1363
    %v1578 = vunpack.c.l.b16 %v1364
    %v1579 = vunpack.c.h.b16 %v1364
    %v1580 = vunpack.c.l.b16 %v1365
    %v1581 = vunpack.c.h.b16 %v1365
    %v1582 = vunpack.c.l.b16 %v1366
    %v1583 = vunpack.c.h.b16 %v1366
    %v1584 = vunpack.c.l.b16 %v1367
    %v1585 = vunpack.c.h.b16 %v1367
    %v1586 = vunpack.c.l.b16 %v1368
    %v1587 = vunpack.c.h.b16 %v1368
    %v1588 = vunpack.c.l.b16 %v1369
    %v1589 = vunpack.c.h.b16 %v1369
    %v1590 = vunpack.c.l.b16 %v1370
    %v1591 = vunpack.c.h.b16 %v1370
    %v1592 = vunpack.c.l.b16 %v1371
    %v1593 = vunpack.c.h.b16 %v1371
    %v1594 = vunpack.c.l.b16 %v1372
    %v1595 = vunpack.c.h.b16 %v1372
    %v1596 = vunpack.c.l.b16 %v1373
    %v1597 = vunpack.c.h.b16 %v1373
    %v1598 = vunpack.c.l.b16 %v1374
    %v1599 = vunpack.c.h.b16 %v1374
    %v1600 = vunpack.c.l.b16 %v1375
    %v1601 = vunpack.c.h.b16 %v1375
    %v1602 = vunpack.c.l.b16 %v1376
    %v1603 = vunpack.c.h.b16 %v1376
    %v1604 = vunpack.c.l.b16 %v1377
    %v1605 = vunpack.c.h.b16 %v1377
    %v1606 = vunpack.c.l.b16 %v1378
    %v1607 = vunpack.c.h.b16 %v1378
    %v1608 = vunpack.c.l.b16 %v1379
    %v1609 = vunpack.c.h.b16 %v1379
    %v1610 = vunpack.c.l.b16 %v1380
    %v1611 = vunpack.c.h.b16 %v1380
    %v1612 = vunpack.c.l.b16 %v1381
    %v1613 = vunpack.c.h.b16 %v1381
    %v1614 = vunpack.c.l.b16 %v1382
    %v1615 = vunpack.c.h.b16 %v1382
    %v1616 = vunpack.c.l.b16 %v1383
    %v1617 = vunpack.c.h.b16 %v1383
    %v1618 = vunpack.c.l.b16 %v1384
    %v1619 = vunpack.c.h.b16 %v1384
    %v1620 = vunpack.c.l.b16 %v1385
    %v1621 = vunpack.c.h.b16 %v1385
    %v1622 = vunpack.c.l.b16 %v1386
    %v1623 = vunpack.c.h.b16 %v1386
    %v1624 = vunpack.c.l.b16 %v1387
    %v1625 = vunpack.c.h.b16 %v1387
    %v1626 = vunpack.c.l.b16 %v1388
    %v1627 = vunpack.c.h.b16 %v1388
    %v1628 = vunpack.c.l.b16 %v1389
    %v1629 = vunpack.c.h.b16 %v1389
    %v1630 = vunpack.c.l.b16 %v1390
    %v1631 = vunpack.c.h.b16 %v1390
    %v1632 = vunpack.c.l.b16 %v1391
    %v1633 = vunpack.c.h.b16 %v1391
    %v1634 = vunpack.c.l.b16 %v1392
    %v1635 = vunpack.c.h.b16 %v1392
    %v1636 = vunpack.c.l.b16 %v1393
    %v1637 = vunpack.c.h.b16 %v1393
    %v1638 = vunpack.c.l.b16 %v1394
    %v1639 = vunpack.c.h.b16 %v1394
    %v1640 = vunpack.c.l.b16 %v1395
    %v1641 = vunpack.c.h.b16 %v1395
    %v1642 = vunpack.c.l.b16 %v1396
    %v1643 = vunpack.c.h.b16 %v1396
    %v1644 = vunpack.c.l.b16 %v1397
    %v1645 = vunpack.c.h.b16 %v1397
    %v1646 = vunpack.c.l.b16 %v1398
    %v1647 = vunpack.c.h.b16 %v1398
    %v1648 = vunpack.c.l.b16 %v1399
    %v1649 = vunpack.c.h.b16 %v1399
    %v1650 = vunpack.c.l.b16 %v1400
    %v1651 = vunpack.c.h.b16 %v1400
    %v1652 = vunpack.c.l.b16 %v1401
    %v1653 = vunpack.c.h.b16 %v1401
    %v1654 = vunpack.c.l.b16 %v1402
    %v1655 = vunpack.c.h.b16 %v1402
    %v1656 = vunpack.c.l.b16 %v1403
    %v1657 = vunpack.c.h.b16 %v1403
    %v1658 = vunpack.c.l.b16 %v1404
    %v1659 = vunpack.c.h.b16 %v1404
    %v1660 = vunpack.c.l.b16 %v1405
    %v1661 = vunpack.c.h.b16 %v1405
    %v1662 = vunpack.c.l.b16 %v1406
    %v1663 = vunpack.c.h.b16 %v1406
    %v1664 = vunpack.c.l.b16 %v1407
    %v1665 = vunpack.c.h.b16 %v1407
    %v1666 = vunpack.c.l.b16 %v1408
    %v1667 = vunpack.c.h.b16 %v1408
    %v1668 = vunpack.c.l.b16 %v1409
    %v1669 = vunpack.c.h.b16 %v1409
    %v1670 = vunpack.c.l.b16 %v1410
    %v1671 = vunpack.c.h.b16 %v1410
    %v1672 = vunpack.c.l.b16 %v1411
    %v1673 = vunpack.c.h.b16 %v1411
    %v1674 = vunpack.c.l.b16 %v1412
    %v1675 = vunpack.c.h.b16 %v1412
    %v1676 = vunpack.c.l.b16 %v1413
    %v1677 = vunpack.c.h.b16 %v1413
    %v1678 = vunpack.c.l.b16 %v1414
    %v1679 = vunpack.c.h.b16 %v1414
    %v1680 = vunpack.c.l.b16 %v1415
    %v1681 = vunpack.c.h.b16 %v1415
    %v1682 = vunpack.c.l.b16 %v1416
    %v1683 = vunpack.c.h.b16 %v1416
    %v1684 = vunpack.c.l.b16 %v1417
    %v1685 = vunpack.c.h.b16 %v1417
    %v1686 = vunpack.c.l.b16 %v1418
    %v1687 = vunpack.c.h.b16 %v1418
    %v1688 = vunpack.c.l.b16 %v1419
    %v1689 = vunpack.c.h.b16 %v1419
    %v1690 = vunpack.c.l.b16 %v1420
    %v1691 = vunpack.c.h.b16 %v1420
    %v1692 = vunpack.c.l.b16 %v1421
    %v1693 = vunpack.c.h.b16 %v1421
    %v1694 = vunpack.c.l.b16 %v1422
    %v1695 = vunpack.c.h.b16 %v1422
    %v1696 = vunpack.c.l.b16 %v1423
    %v1697 = vunpack.c.h.b16 %v1423
    %v1698 = vunpack.c.l.b16 %v1424
    %v1699 = vunpack.c.h.b16 %v1424
    %v1700 = vunpack.c.l.b16 %v1425
    %v1701 = vunpack.c.h.b16 %v1425
    %v1702 = vunpack.c.l.b16 %v1426
    %v1703 = vunpack.c.h.b16 %v1426
    %v1704 = vunpack.c.l.b16 %v1427
    %v1705 = vunpack.c.h.b16 %v1427
    %v1706 = vunpack.c.l.b16 %v1428
    %v1707 = vunpack.c.h.b16 %v1428
    %v1708 = vunpack.c.l.b16 %v1429
    %v1709 = vunpack.c.h.b16 %v1429
    %v1710 = vunpack.c.l.b16 %v1430
    %v1711 = vunpack.c.h.b16 %v1430
    %v1712 = vunpack.c.l.b16 %v1431
    %v1713 = vunpack.c.h.b16 %v1431
    %v1714 = vunpack.c.l.b16 %v1432
    %v1715 = vunpack.c.h.b16 %v1432
    %v1716 = vunpack.c.l.b16 %v1433
    %v1717 = vunpack.c.h.b16 %v1433
    %v1718 = vunpack.c.l.b16 %v1434
    %v1719 = vunpack.c.h.b16 %v1434
    %v1720 = vunpack.c.l.b16 %v1435
    %v1721 = vunpack.c.h.b16 %v1435
    %v1722 = vunpack.c.l.b16 %v1436
    %v1723 = vunpack.c.h.b16 %v1436
    %v1724 = vunpack.c.l.b16 %v1437
    %v1725 = vunpack.c.h.b16 %v1437
    %v1726 = vunpack.c.l.b16 %v1438
    %v1727 = vunpack.c.h.b16 %v1438
    %v1728 = vunpack.c.l.b16 %v1439
    %v1729 = vunpack.c.h.b16 %v1439
    %v1730 = vunpack.c.l.b16 %v1440
    %v1731 = vunpack.c.h.b16 %v1440
    %v1732 = vunpack.c.l.b16 %v1441
    %v1733 = vunpack.c.h.b16 %v1441
    %v1734 = vunpack.c.l.b16 %v1442
    %v1735 = vunpack.c.h.b16 %v1442
    %v1736 = vunpack.c.l.b16 %v1443
    %v1737 = vunpack.c.h.b16 %v1443
    %v1738 = vunpack.c.l.b16 %v1444
    %v1739 = vunpack.c.h.b16 %v1444
    %v1740 = vunpack.c.l.b16 %v1445
    %v1741 = vunpack.c.h.b16 %v1445
    %v1742 = vunpack.c.l.b16 %v1446
    %v1743 = vunpack.c.h.b16 %v1446
    %v1744 = vunpack.c.l.b16 %v1447
    %v1745 = vunpack.c.h.b16 %v1447
    %v1746 = vunpack.c.l.b16 %v1448
    %v1747 = vunpack.c.h.b16 %v1448
    %v1748 = vunpack.c.l.b16 %v1449
    %v1749 = vunpack.c.h.b16 %v1449
    %v1750 = vpack.c.b16 %v1554, %v1550
    %v1751 = vpack.c.b16 %v1555, %v1551
    %v1752 = vpack.c.b16 %v1556, %v1552
    %v1753 = vpack.c.b16 %v1557, %v1553
    %v1754 = vpack.c.b16 %v1562, %v1558
    %v1755 = vpack.c.b16 %v1563, %v1559
    %v1756 = vpack.c.b16 %v1564, %v1560
    %v1757 = vpack.c.b16 %v1565, %v1561
    %v1758 = vpack.c.b16 %v1570, %v1566
    %v1759 = vpack.c.b16 %v1571, %v1567
    %v1760 = vpack.c.b16 %v1572, %v1568
    %v1761 = vpack.c.b16 %v1573, %v1569
    %v1762 = vpack.c.b16 %v1578, %v1574
    %v1763 = vpack.c.b16 %v1579, %v1575
    %v1764 = vpack.c.b16 %v1580, %v1576
    %v1765 = vpack.c.b16 %v1581, %v1577
    %v1766 = vpack.c.b16 %v1586, %v1582
    %v1767 = vpack.c.b16 %v1587, %v1583
    %v1768 = vpack.c.b16 %v1588, %v1584
    %v1769 = vpack.c.b16 %v1589, %v1585
    %v1770 = vpack.c.b16 %v1594, %v1590
    %v1771 = vpack.c.b16 %v1595, %v1591
    %v1772 = vpack.c.b16 %v1596, %v1592
    %v1773 = vpack.c.b16 %v1597, %v1593
    %v1774 = vpack.c.b16 %v1602, %v1598
    %v1775 = vpack.c.b16 %v1603, %v1599
    %v1776 = vpack.c.b16 %v1604, %v1600
    %v1777 = vpack.c.b16 %v1605, %v1601
    %v1778 = vpack.c.b16 %v1610, %v1606
    %v1779 = vpack.c.b16 %v1611, %v1607
    %v1780 = vpack.c.b16 %v1612, %v1608
    %v1781 = vpack.c.b16 %v1613, %v1609
    %v1782 = vpack.c.b16 %v1618, %v1614
    %v1783 = vpack.c.b16 %v1619, %v1615
    %v1784 = vpack.c.b16 %v1620, %v1616
    %v1785 = vpack.c.b16 %v1621, %v1617
    %v1786 = vpack.c.b16 %v1626, %v1622
    %v1787 = vpack.c.b16 %v1627, %v1623
    %v1788 = vpack.c.b16 %v1628, %v1624
    %v1789 = vpack.c.b16 %v1629, %v1625
    %v1790 = vpack.c.b16 %v1634, %v1630
    %v1791 = vpack.c.b16 %v1635, %v1631
    %v1792 = vpack.c.b16 %v1636, %v1632
    %v1793 = vpack.c.b16 %v1637, %v1633
    %v1794 = vpack.c.b16 %v1642, %v1638
    %v1795 = vpack.c.b16 %v1643, %v1639
    %v1796 = vpack.c.b16 %v1644, %v1640
    %v1797 = vpack.c.b16 %v1645, %v1641
    %v1798 = vpack.c.b16 %v1650, %v1646
    %v1799 = vpack.c.b16 %v1651, %v1647
    %v1800 = vpack.c.b16 %v1652, %v1648
    %v1801 = vpack.c.b16 %v1653, %v1649
    %v1802 = vpack.c.b16 %v1658, %v1654
    %v1803 = vpack.c.b16 %v1659, %v1655
    %v1804 = vpack.c.b16 %v1660, %v1656
    %v1805 = vpack.c.b16 %v1661, %v1657
    %v1806 = vpack.c.b16 %v1666, %v1662
    %v1807 = vpack.c.b16 %v1667, %v1663
    %v1808 = vpack.c.b16 %v1668, %v1664
    %v1809 = vpack.c.b16 %v1669, %v1665
    %v1810 = vpack.c.b16 %v1674, %v1670
    %v1811 = vpack.c.b16 %v1675, %v1671
    %v1812 = vpack.c.b16 %v1676, %v1672
    %v1813 = vpack.c.b16 %v1677, %v1673
    %v1814 = vpack.c.b16 %v1682, %v1678
    %v1815 = vpack.c.b16 %v1683, %v1679
    %v1816 = vpack.c.b16 %v1684, %v1680
    %v1817 = vpack.c.b16 %v1685, %v1681
    %v1818 = vpack.c.b16 %v1690, %v1686
    %v1819 = vpack.c.b16 %v1691, %v1687
    %v1820 = vpack.c.b16 %v1692, %v1688
    %v1821 = vpack.c.b16 %v1693, %v1689
    %v1822 = vpack.c.b16 %v1698, %v1694
    %v1823 = vpack.c.b16 %v1699, %v1695
    %v1824 = vpack.c.b16 %v1700, %v1696
    %v1825 = vpack.c.b16 %v1701, %v1697
    %v1826 = vpack.c.b16 %v1706, %v1702
    %v1827 = vpack.c.b16 %v1707, %v1703
    %v1828 = vpack.c.b16 %v1708, %v1704
    %v1829 = vpack.c.b16 %v1709, %v1705
    %v1830 = vpack.c.b16 %v1714, %v1710
    %v1831 = vpack.c.b16 %v1715, %v1711
    %v1832 = vpack.c.b16 %v1716, %v1712
    %v1833 = vpack.c.b16 %v1717, %v1713
    %v1834 = vpack.c.b16 %v1722, %v1718
    %v1835 = vpack.c.b16 %v1723, %v1719
    %v1836 = vpack.c.b16 %v1724, %v1720
    %v1837 = vpack.c.b16 %v1725, %v1721
    %v1838 = vpack.c.b16 %v1730, %v1726
    %v1839 = vpack.c.b16 %v1731, %v1727
    %v1840 = vpack.c.b16 %v1732, %v1728
    %v1841 = vpack.c.b16 %v1733, %v1729
    %v1842 = vpack.c.b16 %v1738, %v1734
    %v1843 = vpack.c.b16 %v1739, %v1735
    %v1844 = vpack.c.b16 %v1740, %v1736
    %v1845 = vpack.c.b16 %v1741, %v1737
    %v1846 = vpack.c.b16 %v1746, %v1742
    %v1847 = vpack.c.b16 %v1747, %v1743
    %v1848 = vpack.c.b16 %v1748, %v1744
    %v1849 = vpack.c.b16 %v1749, %v1745
    %vm1946 = vcmask 121856
    %v1948 = vsel %vm1946, %v1333, 0
    %v1951 = vsel %vm1946, %v1337, 0
    %v1954 = vsel %vm1946, %v1341, 0
    %v1957 = vsel %vm1946, %v1345, 0
    %v1960 = vsel %vm1946, %v1349, 0
    %vm1962 = vcmask 1046528
    %vm1963 = vcmask 1047552
    %v1964 = vsel %vm1962, 4294967295, 65535
    %v1965 = vsel %vm1963, %v1964, 0
    %v1967 = vand.u32 %v1846, %v1965
    %v1970 = vand.u32 %v1847, %v1965
    %v1973 = vand.u32 %v1848, %v1965
    %v1976 = vand.u32 %v1849, %v1965
    %1978 = vmatprep.subr.bf16.mxu0 %v1751
    %1979 = vmatpush1.bf16.msra.mxu0 %v1750
    %1980 = vmatprep.subr.bf16.mxu0 %v1755
    %1981 = vmatpush1.bf16.msra.mxu0 %v1754
    %1982 = vmatprep.subr.bf16.mxu0 %v1759
    %1983 = vmatpush1.bf16.msra.mxu0 %v1758
    %1984 = vmatprep.subr.bf16.mxu0 %v1763
    %1985 = vmatpush1.bf16.msra.mxu0 %v1762
    %1986 = vmatprep.subr.bf16.mxu0 %v1767
    %1987 = vmatpush1.bf16.msra.mxu0 %v1766
    %1988 = vmatprep.subr.bf16.mxu0 %v1771
    %1989 = vmatpush1.bf16.msra.mxu0 %v1770
    %1990 = vmatprep.subr.bf16.mxu0 %v1775
    %1991 = vmatpush1.bf16.msra.mxu0 %v1774
    %1992 = vmatprep.subr.bf16.mxu0 %v1779
    %1993 = vmatpush1.bf16.msra.mxu0 %v1778
    %1994 = vmatprep.subr.bf16.mxu0 %v1783
    %1995 = vmatpush1.bf16.msra.mxu0 %v1782
    %1996 = vmatprep.subr.bf16.mxu0 %v1787
    %1997 = vmatpush1.bf16.msra.mxu0 %v1786
    %1998 = vmatprep.subr.bf16.mxu0 %v1791
    %1999 = vmatpush1.bf16.msra.mxu0 %v1790
    %2000 = vmatprep.subr.bf16.mxu0 %v1795
    %2001 = vmatpush1.bf16.msra.mxu0 %v1794
    %2002 = vmatprep.subr.bf16.mxu0 %v1799
    %2003 = vmatpush1.bf16.msra.mxu0 %v1798
    %2004 = vmatprep.subr.bf16.mxu0 %v1803
    %2005 = vmatpush1.bf16.msra.mxu0 %v1802
    %2006 = vmatprep.subr.bf16.mxu0 %v1807
    %2007 = vmatpush1.bf16.msra.mxu0 %v1806
    %2008 = vmatprep.subr.bf16.mxu0 %v1811
    %2009 = vmatpush1.bf16.msra.mxu0 %v1810
    %2010 = vmatprep.mubr.bf16.mxu0 %v1331
    %2011 = vmatmul.mubr.bf16.gmra.mrb[0].mxu0 %v1330
    %v2012 = vpop.f32.mrb[0].mxu0
    %v2013 = vadd.f32 0.0, %v2012
    %v2014 = vpop.f32.mrb[0].mxu0
    %v2015 = vadd.f32 0.0, %v2014
    %v2016 = vpop.f32.mrb[0].mxu0
    %v2017 = vadd.f32 0.0, %v2016
    %v2018 = vpop.f32.mrb[0].mxu0
    %v2019 = vadd.f32 0.0, %v2018
    %2020 = vmatprep.mubr.bf16.mxu0 %v1335
    %2021 = vmatmul.mubr.bf16.gmra.mrb[0].mxu0 %v1334
    %v2022 = vpop.f32.mrb[0].mxu0
    %v2023 = vadd.f32 0.0, %v2022
    %v2024 = vpop.f32.mrb[0].mxu0
    %v2025 = vadd.f32 0.0, %v2024
    %v2026 = vpop.f32.mrb[0].mxu0
    %v2027 = vadd.f32 0.0, %v2026
    %v2028 = vpop.f32.mrb[0].mxu0
    %v2029 = vadd.f32 0.0, %v2028
    %2030 = vmatprep.mubr.bf16.mxu0 %v1339
    %2031 = vmatmul.mubr.bf16.gmra.mrb[0].mxu0 %v1338
    %v2032 = vpop.f32.mrb[0].mxu0
    %v2033 = vadd.f32 0.0, %v2032
    %v2034 = vpop.f32.mrb[0].mxu0
    %v2035 = vadd.f32 0.0, %v2034
    %v2036 = vpop.f32.mrb[0].mxu0
    %v2037 = vadd.f32 0.0, %v2036
    %v2038 = vpop.f32.mrb[0].mxu0
    %v2039 = vadd.f32 0.0, %v2038
    %2040 = vmatprep.mubr.bf16.mxu0 %v1343
    %2041 = vmatmul.mubr.bf16.gmra.mrb[0].mxu0 %v1342
    %v2042 = vpop.f32.mrb[0].mxu0
    %v2043 = vadd.f32 0.0, %v2042
    %v2044 = vpop.f32.mrb[0].mxu0
    %v2045 = vadd.f32 0.0, %v2044
    %v2046 = vpop.f32.mrb[0].mxu0
    %v2047 = vadd.f32 0.0, %v2046
    %v2048 = vpop.f32.mrb[0].mxu0
    %v2049 = vadd.f32 0.0, %v2048
    %2050 = vmatprep.mubr.bf16.mxu0 %v1347
    %2051 = vmatmul.mubr.bf16.gmra.mrb[0].mxu0 %v1346
    %v2052 = vpop.f32.mrb[0].mxu0
    %v2053 = vadd.f32 0.0, %v2052
    %v2054 = vpop.f32.mrb[0].mxu0
    %v2055 = vadd.f32 0.0, %v2054
    %v2056 = vpop.f32.mrb[0].mxu0
    %v2057 = vadd.f32 0.0, %v2056
    %v2058 = vpop.f32.mrb[0].mxu0
    %v2059 = vadd.f32 0.0, %v2058
    %2060 = vdwg.mxu0
    %2061 = vmatprep.subr.bf16.mxu0 %v1815
    %2062 = vmatpush1.bf16.msra.mxu0 %v1814
    %2063 = vmatprep.subr.bf16.mxu0 %v1819
    %2064 = vmatpush1.bf16.msra.mxu0 %v1818
    %2065 = vmatprep.subr.bf16.mxu0 %v1823
    %2066 = vmatpush1.bf16.msra.mxu0 %v1822
    %2067 = vmatprep.subr.bf16.mxu0 %v1827
    %2068 = vmatpush1.bf16.msra.mxu0 %v1826
    %2069 = vmatprep.subr.bf16.mxu0 %v1831
    %2070 = vmatpush1.bf16.msra.mxu0 %v1830
    %2071 = vmatprep.subr.bf16.mxu0 %v1835
    %2072 = vmatpush1.bf16.msra.mxu0 %v1834
    %2073 = vmatprep.subr.bf16.mxu0 %v1839
    %2074 = vmatpush1.bf16.msra.mxu0 %v1838
    %2075 = vmatprep.subr.bf16.mxu0 %v1843
    %2076 = vmatpush1.bf16.msra.mxu0 %v1842
    %2077 = vmatprep.subr.bf16.mxu0 %v1970
    %2078 = vmatpush1.bf16.msra.mxu0 %v1967
    %2079 = vmatprep.subr.bf16.mxu0 0
    %2080 = vmatpush1.bf16.msra.mxu0 0
    %2081 = vmatprep.subr.bf16.mxu0 0
    %2082 = vmatpush1.bf16.msra.mxu0 0
    %2083 = vmatprep.subr.bf16.mxu0 0
    %2084 = vmatpush1.bf16.msra.mxu0 0
    %2085 = vmatprep.subr.bf16.mxu0 0
    %2086 = vmatpush1.bf16.msra.mxu0 0
    %2087 = vmatprep.subr.bf16.mxu0 0
    %2088 = vmatpush1.bf16.msra.mxu0 0
    %2089 = vmatprep.subr.bf16.mxu0 0
    %2090 = vmatpush1.bf16.msra.mxu0 0
    %2091 = vmatprep.subr.bf16.mxu0 0
    %2092 = vmatpush1.bf16.msra.mxu0 0
    %2093 = vmatprep.mubr.bf16.mxu0 %v1948
    %2094 = vmatmul.mubr.bf16.gmra.mrb[0].mxu0 %v1332
    %v2095 = vpop.f32.mrb[0].mxu0
    %v2096 = vadd.f32 %v2013, %v2095
    %v2097 = vpop.f32.mrb[0].mxu0
    %v2098 = vadd.f32 %v2015, %v2097
    %v2099 = vpop.f32.mrb[0].mxu0
    %v2100 = vadd.f32 %v2017, %v2099
    %v2101 = vpop.f32.mrb[0].mxu0
    %v2102 = vadd.f32 %v2019, %v2101
    %2103 = vmatprep.mubr.bf16.mxu0 %v1951
    %2104 = vmatmul.mubr.bf16.gmra.mrb[0].mxu0 %v1336
    %v2105 = vpop.f32.mrb[0].mxu0
    %v2106 = vadd.f32 %v2023, %v2105
    %v2107 = vpop.f32.mrb[0].mxu0
    %v2108 = vadd.f32 %v2025, %v2107
    %v2109 = vpop.f32.mrb[0].mxu0
    %v2110 = vadd.f32 %v2027, %v2109
    %v2111 = vpop.f32.mrb[0].mxu0
    %v2112 = vadd.f32 %v2029, %v2111
    %2113 = vmatprep.mubr.bf16.mxu0 %v1954
    %2114 = vmatmul.mubr.bf16.gmra.mrb[0].mxu0 %v1340
    %v2115 = vpop.f32.mrb[0].mxu0
    %v2116 = vadd.f32 %v2033, %v2115
    %v2117 = vpop.f32.mrb[0].mxu0
    %v2118 = vadd.f32 %v2035, %v2117
    %v2119 = vpop.f32.mrb[0].mxu0
    %v2120 = vadd.f32 %v2037, %v2119
    %v2121 = vpop.f32.mrb[0].mxu0
    %v2122 = vadd.f32 %v2039, %v2121
    %2123 = vmatprep.mubr.bf16.mxu0 %v1957
    %2124 = vmatmul.mubr.bf16.gmra.mrb[0].mxu0 %v1344
    %v2125 = vpop.f32.mrb[0].mxu0
    %v2126 = vadd.f32 %v2043, %v2125
    %v2127 = vpop.f32.mrb[0].mxu0
    %v2128 = vadd.f32 %v2045, %v2127
    %v2129 = vpop.f32.mrb[0].mxu0
    %v2130 = vadd.f32 %v2047, %v2129
    %v2131 = vpop.f32.mrb[0].mxu0
    %v2132 = vadd.f32 %v2049, %v2131
    %2133 = vmatprep.mubr.bf16.mxu0 %v1960
    %2134 = vmatmul.mubr.bf16.gmra.mrb[0].mxu0 %v1348
    %v2135 = vpop.f32.mrb[0].mxu0
    %v2136 = vadd.f32 %v2053, %v2135
    %v2137 = vpop.f32.mrb[0].mxu0
    %v2138 = vadd.f32 %v2055, %v2137
    %v2139 = vpop.f32.mrb[0].mxu0
    %v2140 = vadd.f32 %v2057, %v2139
    %v2141 = vpop.f32.mrb[0].mxu0
    %v2142 = vadd.f32 %v2059, %v2141
    %2143 = vdwg.mxu0
    %2144 = vmatprep.subr.bf16.mxu0 %v1753
    %2145 = vmatpush1.bf16.msra.mxu0 %v1752
    %2146 = vmatprep.subr.bf16.mxu0 %v1757
    %2147 = vmatpush1.bf16.msra.mxu0 %v1756
    %2148 = vmatprep.subr.bf16.mxu0 %v1761
    %2149 = vmatpush1.bf16.msra.mxu0 %v1760
    %2150 = vmatprep.subr.bf16.mxu0 %v1765
    %2151 = vmatpush1.bf16.msra.mxu0 %v1764
    %2152 = vmatprep.subr.bf16.mxu0 %v1769
    %2153 = vmatpush1.bf16.msra.mxu0 %v1768
    %2154 = vmatprep.subr.bf16.mxu0 %v1773
    %2155 = vmatpush1.bf16.msra.mxu0 %v1772
    %2156 = vmatprep.subr.bf16.mxu0 %v1777
    %2157 = vmatpush1.bf16.msra.mxu0 %v1776
    %2158 = vmatprep.subr.bf16.mxu0 %v1781
    %2159 = vmatpush1.bf16.msra.mxu0 %v1780
    %2160 = vmatprep.subr.bf16.mxu0 %v1785
    %2161 = vmatpush1.bf16.msra.mxu0 %v1784
    %2162 = vmatprep.subr.bf16.mxu0 %v1789
    %2163 = vmatpush1.bf16.msra.mxu0 %v1788
    %2164 = vmatprep.subr.bf16.mxu0 %v1793
    %2165 = vmatpush1.bf16.msra.mxu0 %v1792
    %2166 = vmatprep.subr.bf16.mxu0 %v1797
    %2167 = vmatpush1.bf16.msra.mxu0 %v1796
    %2168 = vmatprep.subr.bf16.mxu0 %v1801
    %2169 = vmatpush1.bf16.msra.mxu0 %v1800
    %2170 = vmatprep.subr.bf16.mxu0 %v1805
    %2171 = vmatpush1.bf16.msra.mxu0 %v1804
    %2172 = vmatprep.subr.bf16.mxu0 %v1809
    %2173 = vmatpush1.bf16.msra.mxu0 %v1808
    %2174 = vmatprep.subr.bf16.mxu0 %v1813
    %2175 = vmatpush1.bf16.msra.mxu0 %v1812
    %2176 = vmatprep.mubr.bf16.mxu0 %v1331
    %2177 = vmatmul.mubr.bf16.gmra.mrb[0].mxu0 %v1330
    %v2178 = vpop.f32.mrb[0].mxu0
    %v2179 = vadd.f32 0.0, %v2178
    %v2180 = vpop.f32.mrb[0].mxu0
    %v2181 = vadd.f32 0.0, %v2180
    %v2182 = vpop.f32.mrb[0].mxu0
    %v2183 = vadd.f32 0.0, %v2182
    %v2184 = vpop.f32.mrb[0].mxu0
    %v2185 = vadd.f32 0.0, %v2184
    %2186 = vmatprep.mubr.bf16.mxu0 %v1335
    %2187 = vmatmul.mubr.bf16.gmra.mrb[0].mxu0 %v1334
    %v2188 = vpop.f32.mrb[0].mxu0
    %v2189 = vadd.f32 0.0, %v2188
    %v2190 = vpop.f32.mrb[0].mxu0
    %v2191 = vadd.f32 0.0, %v2190
    %v2192 = vpop.f32.mrb[0].mxu0
    %v2193 = vadd.f32 0.0, %v2192
    %v2194 = vpop.f32.mrb[0].mxu0
    %v2195 = vadd.f32 0.0, %v2194
    %2196 = vmatprep.mubr.bf16.mxu0 %v1339
    %2197 = vmatmul.mubr.bf16.gmra.mrb[0].mxu0 %v1338
    %v2198 = vpop.f32.mrb[0].mxu0
    %v2199 = vadd.f32 0.0, %v2198
    %v2200 = vpop.f32.mrb[0].mxu0
    %v2201 = vadd.f32 0.0, %v2200
    %v2202 = vpop.f32.mrb[0].mxu0
    %v2203 = vadd.f32 0.0, %v2202
    %v2204 = vpop.f32.mrb[0].mxu0
    %v2205 = vadd.f32 0.0, %v2204
    %2206 = vmatprep.mubr.bf16.mxu0 %v1343
    %2207 = vmatmul.mubr.bf16.gmra.mrb[0].mxu0 %v1342
    %v2208 = vpop.f32.mrb[0].mxu0
    %v2209 = vadd.f32 0.0, %v2208
    %v2210 = vpop.f32.mrb[0].mxu0
    %v2211 = vadd.f32 0.0, %v2210
    %v2212 = vpop.f32.mrb[0].mxu0
    %v2213 = vadd.f32 0.0, %v2212
    %v2214 = vpop.f32.mrb[0].mxu0
    %v2215 = vadd.f32 0.0, %v2214
    %2216 = vmatprep.mubr.bf16.mxu0 %v1347
    %2217 = vmatmul.mubr.bf16.gmra.mrb[0].mxu0 %v1346
    %v2218 = vpop.f32.mrb[0].mxu0
    %v2219 = vadd.f32 0.0, %v2218
    %v2220 = vpop.f32.mrb[0].mxu0
    %v2221 = vadd.f32 0.0, %v2220
    %v2222 = vpop.f32.mrb[0].mxu0
    %v2223 = vadd.f32 0.0, %v2222
    %v2224 = vpop.f32.mrb[0].mxu0
    %v2225 = vadd.f32 0.0, %v2224
    %2226 = vdwg.mxu0
    %2227 = vmatprep.subr.bf16.mxu0 %v1817
    %2228 = vmatpush1.bf16.msra.mxu0 %v1816
    %2229 = vmatprep.subr.bf16.mxu0 %v1821
    %2230 = vmatpush1.bf16.msra.mxu0 %v1820
    %2231 = vmatprep.subr.bf16.mxu0 %v1825
    %2232 = vmatpush1.bf16.msra.mxu0 %v1824
    %2233 = vmatprep.subr.bf16.mxu0 %v1829
    %2234 = vmatpush1.bf16.msra.mxu0 %v1828
    %2235 = vmatprep.subr.bf16.mxu0 %v1833
    %2236 = vmatpush1.bf16.msra.mxu0 %v1832
    %2237 = vmatprep.subr.bf16.mxu0 %v1837
    %2238 = vmatpush1.bf16.msra.mxu0 %v1836
    %2239 = vmatprep.subr.bf16.mxu0 %v1841
    %2240 = vmatpush1.bf16.msra.mxu0 %v1840
    %2241 = vmatprep.subr.bf16.mxu0 %v1845
    %2242 = vmatpush1.bf16.msra.mxu0 %v1844
    %2243 = vmatprep.subr.bf16.mxu0 %v1976
    %2244 = vmatpush1.bf16.msra.mxu0 %v1973
    %2245 = vmatprep.subr.bf16.mxu0 0
    %2246 = vmatpush1.bf16.msra.mxu0 0
    %2247 = vmatprep.subr.bf16.mxu0 0
    %2248 = vmatpush1.bf16.msra.mxu0 0
    %2249 = vmatprep.subr.bf16.mxu0 0
    %2250 = vmatpush1.bf16.msra.mxu0 0
    %2251 = vmatprep.subr.bf16.mxu0 0
    %2252 = vmatpush1.bf16.msra.mxu0 0
    %2253 = vmatprep.subr.bf16.mxu0 0
    %2254 = vmatpush1.bf16.msra.mxu0 0
    %2255 = vmatprep.subr.bf16.mxu0 0
    %2256 = vmatpush1.bf16.msra.mxu0 0
    %2257 = vmatprep.subr.bf16.mxu0 0
    %2258 = vmatpush1.bf16.msra.mxu0 0
    %2259 = vmatprep.mubr.bf16.mxu0 %v1948
    %2260 = vmatmul.mubr.bf16.gmra.mrb[0].mxu0 %v1332
    %v2261 = vpop.f32.mrb[0].mxu0
    %v2262 = vadd.f32 %v2179, %v2261
    %v2263 = vpop.f32.mrb[0].mxu0
    %v2264 = vadd.f32 %v2181, %v2263
    %v2265 = vpop.f32.mrb[0].mxu0
    %v2266 = vadd.f32 %v2183, %v2265
    %v2267 = vpop.f32.mrb[0].mxu0
    %v2268 = vadd.f32 %v2185, %v2267
    %2269 = vmatprep.mubr.bf16.mxu0 %v1951
    %2270 = vmatmul.mubr.bf16.gmra.mrb[0].mxu0 %v1336
    %v2271 = vpop.f32.mrb[0].mxu0
    %v2272 = vadd.f32 %v2189, %v2271
    %v2273 = vpop.f32.mrb[0].mxu0
    %v2274 = vadd.f32 %v2191, %v2273
    %v2275 = vpop.f32.mrb[0].mxu0
    %v2276 = vadd.f32 %v2193, %v2275
    %v2277 = vpop.f32.mrb[0].mxu0
    %v2278 = vadd.f32 %v2195, %v2277
    %2279 = vmatprep.mubr.bf16.mxu0 %v1954
    %2280 = vmatmul.mubr.bf16.gmra.mrb[0].mxu0 %v1340
    %v2281 = vpop.f32.mrb[0].mxu0
    %v2282 = vadd.f32 %v2199, %v2281
    %v2283 = vpop.f32.mrb[0].mxu0
    %v2284 = vadd.f32 %v2201, %v2283
    %v2285 = vpop.f32.mrb[0].mxu0
    %v2286 = vadd.f32 %v2203, %v2285
    %v2287 = vpop.f32.mrb[0].mxu0
    %v2288 = vadd.f32 %v2205, %v2287
    %2289 = vmatprep.mubr.bf16.mxu0 %v1957
    %2290 = vmatmul.mubr.bf16.gmra.mrb[0].mxu0 %v1344
    %v2291 = vpop.f32.mrb[0].mxu0
    %v2292 = vadd.f32 %v2209, %v2291
    %v2293 = vpop.f32.mrb[0].mxu0
    %v2294 = vadd.f32 %v2211, %v2293
    %v2295 = vpop.f32.mrb[0].mxu0
    %v2296 = vadd.f32 %v2213, %v2295
    %v2297 = vpop.f32.mrb[0].mxu0
    %v2298 = vadd.f32 %v2215, %v2297
    %2299 = vmatprep.mubr.bf16.mxu0 %v1960
    %2300 = vmatmul.mubr.bf16.gmra.mrb[0].mxu0 %v1348
    %v2301 = vpop.f32.mrb[0].mxu0
    %v2302 = vadd.f32 %v2219, %v2301
    %v2303 = vpop.f32.mrb[0].mxu0
    %v2304 = vadd.f32 %v2221, %v2303
    %v2305 = vpop.f32.mrb[0].mxu0
    %v2306 = vadd.f32 %v2223, %v2305
    %v2307 = vpop.f32.mrb[0].mxu0
    %v2308 = vadd.f32 %v2225, %v2307
    %2309 = vdwg.mxu0
    %2310 = vst [vmem:[#allocation4] sm:$0xff] %v2096
    %2311 = vst [vmem:[#allocation4 + $0x8] sm:$0xff] %v2098
    %2312 = vst [vmem:[#allocation4 + $0x10] sm:$0xff] %v2262
    %vm2313 = vcmask 949248
    %2314 = vst.msk [vmem:[#allocation4 + $0x18] sm:$0xff] %vm2313, %v2264
    %2315 = vst [vmem:[#allocation4 + $0x20] sm:$0xff] %v2100
    %2316 = vst [vmem:[#allocation4 + $0x28] sm:$0xff] %v2102
    %2317 = vst [vmem:[#allocation4 + $0x30] sm:$0xff] %v2266
    %2318 = vst.msk [vmem:[#allocation4 + $0x38] sm:$0xff] %vm2313, %v2268
    %2319 = vst [vmem:[#allocation4 + $0x40] sm:$0xff] %v2106
    %2320 = vst [vmem:[#allocation4 + $0x48] sm:$0xff] %v2108
    %2321 = vst [vmem:[#allocation4 + $0x50] sm:$0xff] %v2272
    %2322 = vst.msk [vmem:[#allocation4 + $0x58] sm:$0xff] %vm2313, %v2274
    %2323 = vst [vmem:[#allocation4 + $0x60] sm:$0xff] %v2110
    %2324 = vst [vmem:[#allocation4 + $0x68] sm:$0xff] %v2112
    %2325 = vst [vmem:[#allocation4 + $0x70] sm:$0xff] %v2276
    %2326 = vst.msk [vmem:[#allocation4 + $0x78] sm:$0xff] %vm2313, %v2278
    %2327 = vst [vmem:[#allocation4 + $0x80] sm:$0xff] %v2116
    %2328 = vst [vmem:[#allocation4 + $0x88] sm:$0xff] %v2118
    %2329 = vst [vmem:[#allocation4 + $0x90] sm:$0xff] %v2282
    %2330 = vst.msk [vmem:[#allocation4 + $0x98] sm:$0xff] %vm2313, %v2284
    %2331 = vst [vmem:[#allocation4 + $0xa0] sm:$0xff] %v2120
    %2332 = vst [vmem:[#allocation4 + $0xa8] sm:$0xff] %v2122
    %2333 = vst [vmem:[#allocation4 + $0xb0] sm:$0xff] %v2286
    %2334 = vst.msk [vmem:[#allocation4 + $0xb8] sm:$0xff] %vm2313, %v2288
    %2335 = vst [vmem:[#allocation4 + $0xc0] sm:$0xff] %v2126
    %2336 = vst [vmem:[#allocation4 + $0xc8] sm:$0xff] %v2128
    %2337 = vst [vmem:[#allocation4 + $0xd0] sm:$0xff] %v2292
    %2338 = vst.msk [vmem:[#allocation4 + $0xd8] sm:$0xff] %vm2313, %v2294
    %2339 = vst [vmem:[#allocation4 + $0xe0] sm:$0xff] %v2130
    %2340 = vst [vmem:[#allocation4 + $0xe8] sm:$0xff] %v2132
    %2341 = vst [vmem:[#allocation4 + $0xf0] sm:$0xff] %v2296
    %2342 = vst.msk [vmem:[#allocation4 + $0xf8] sm:$0xff] %vm2313, %v2298
    %2343 = vst [vmem:[#allocation4 + $0x100] sm:$0xff] %v2136
    %2344 = vst [vmem:[#allocation4 + $0x108] sm:$0xff] %v2138
    %2345 = vst [vmem:[#allocation4 + $0x110] sm:$0xff] %v2302
    %2346 = vst.msk [vmem:[#allocation4 + $0x118] sm:$0xff] %vm2313, %v2304
    %2347 = vst [vmem:[#allocation4 + $0x120] sm:$0xff] %v2140
    %2348 = vst [vmem:[#allocation4 + $0x128] sm:$0xff] %v2142
    %2349 = vst [vmem:[#allocation4 + $0x130] sm:$0xff] %v2306
    %2350 = vst.msk [vmem:[#allocation4 + $0x138] sm:$0xff] %vm2313, %v2308
    %v2351 = vld [vmem:[#allocation3] sm:$0xf0]
    %v2352 = vld [vmem:[#allocation3 + $0x8] sm:$0xf0]
    %v2353 = vld [vmem:[#allocation3 + $0x10] sm:$0xf0]
    %v2354 = vld [vmem:[#allocation3 + $0x18] sm:$0xf0]
    %v2355 = vld [vmem:[#allocation3 + $0x20] sm:$0xff]
    %v2356 = vld [vmem:[#allocation3 + $0x28] sm:$0xff]
    %v2357 = vld [vmem:[#allocation3 + $0x30] sm:$0xff]
    %v2358 = vld [vmem:[#allocation3 + $0x38] sm:$0xff]
    %v2359 = vld [vmem:[#allocation3 + $0x40] sm:$0xff]
    %v2360 = vld [vmem:[#allocation3 + $0x48] sm:$0xff]
    %v2361 = vld [vmem:[#allocation3 + $0x50] sm:$0xff]
    %v2362 = vld [vmem:[#allocation3 + $0x58] sm:$0xff]
    %v2363 = vld [vmem:[#allocation3 + $0x60] sm:$0xff]
    %v2364 = vld [vmem:[#allocation3 + $0x68] sm:$0xff]
    %v2365 = vld [vmem:[#allocation3 + $0x70] sm:$0xff]
    %v2366 = vld [vmem:[#allocation3 + $0x78] sm:$0xff]
    %v2367 = vld [vmem:[#allocation3 + $0x80] sm:$0xff]
    %v2368 = vld [vmem:[#allocation3 + $0x88] sm:$0xff]
    %v2369 = vld [vmem:[#allocation3 + $0x90] sm:$0xff]
    %v2370 = vld [vmem:[#allocation3 + $0x98] sm:$0xff]
    %v2371 = vld [vmem:[#allocation3 + $0xa0] sm:$0xf]
    %v2372 = vld [vmem:[#allocation3 + $0xa8] sm:$0xf]
    %v2373 = vld [vmem:[#allocation3 + $0xb0] sm:$0xf]
    %v2374 = vld [vmem:[#allocation3 + $0xb8] sm:$0xf]
    %s2375 = scalar_lea.vmem [#allocation10], 800
    %v2376 = vld [vmem:[%s2375] sm:$0xff]
    %v2377 = vld [vmem:[%s2375 + $0x8] sm:$0xff]
    %v2378 = vld [vmem:[%s2375 + $0x10] sm:$0xff]
    %v2379 = vld [vmem:[%s2375 + $0x18] sm:$0xff]
    %v2380 = vld [vmem:[%s2375 + $0x20] sm:$0xff]
    %v2381 = vld [vmem:[%s2375 + $0x28] sm:$0xff]
    %v2382 = vld [vmem:[%s2375 + $0x30] sm:$0xff]
    %v2383 = vld [vmem:[%s2375 + $0x38] sm:$0xff]
    %v2384 = vld [vmem:[%s2375 + $0x40] sm:$0xff]
    %v2385 = vld [vmem:[%s2375 + $0x48] sm:$0xff]
    %v2386 = vld [vmem:[%s2375 + $0x50] sm:$0xff]
    %v2387 = vld [vmem:[%s2375 + $0x58] sm:$0xff]
    %v2388 = vld [vmem:[%s2375 + $0x60] sm:$0xff]
    %v2389 = vld [vmem:[%s2375 + $0x68] sm:$0xff]
    %v2390 = vld [vmem:[%s2375 + $0x70] sm:$0xff]
    %v2391 = vld [vmem:[%s2375 + $0x78] sm:$0xff]
    %v2392 = vld [vmem:[%s2375 + $0x80] sm:$0xff]
    %v2393 = vld [vmem:[%s2375 + $0x88] sm:$0xff]
    %v2394 = vld [vmem:[%s2375 + $0x90] sm:$0xff]
    %v2395 = vld [vmem:[%s2375 + $0x98] sm:$0xff]
    %v2396 = vld [vmem:[%s2375 + $0xa0] sm:$0xff]
    %v2397 = vld [vmem:[%s2375 + $0xa8] sm:$0xff]
    %v2398 = vld [vmem:[%s2375 + $0xb0] sm:$0xff]
    %v2399 = vld [vmem:[%s2375 + $0xb8] sm:$0xff]
    %v2400 = vld [vmem:[%s2375 + $0xc0] sm:$0xff]
    %v2401 = vld [vmem:[%s2375 + $0xc8] sm:$0xff]
    %v2402 = vld [vmem:[%s2375 + $0xd0] sm:$0xff]
    %v2403 = vld [vmem:[%s2375 + $0xd8] sm:$0xff]
    %v2404 = vld [vmem:[%s2375 + $0xe0] sm:$0xff]
    %v2405 = vld [vmem:[%s2375 + $0xe8] sm:$0xff]
    %v2406 = vld [vmem:[%s2375 + $0xf0] sm:$0xff]
    %v2407 = vld [vmem:[%s2375 + $0xf8] sm:$0xff]
    %v2408 = vld [vmem:[%s2375 + $0x100] sm:$0xff]
    %v2409 = vld [vmem:[%s2375 + $0x108] sm:$0xff]
    %v2410 = vld [vmem:[%s2375 + $0x110] sm:$0xff]
    %v2411 = vld [vmem:[%s2375 + $0x118] sm:$0xff]
    %v2412 = vld [vmem:[%s2375 + $0x120] sm:$0xff]
    %v2413 = vld [vmem:[%s2375 + $0x128] sm:$0xff]
    %v2414 = vld [vmem:[%s2375 + $0x130] sm:$0xff]
    %v2415 = vld [vmem:[%s2375 + $0x138] sm:$0xff]
    %v2416 = vld [vmem:[%s2375 + $0x140] sm:$0xff]
    %v2417 = vld [vmem:[%s2375 + $0x148] sm:$0xff]
    %v2418 = vld [vmem:[%s2375 + $0x150] sm:$0xff]
    %v2419 = vld [vmem:[%s2375 + $0x158] sm:$0xff]
    %v2420 = vld [vmem:[%s2375 + $0x160] sm:$0xff]
    %v2421 = vld [vmem:[%s2375 + $0x168] sm:$0xff]
    %v2422 = vld [vmem:[%s2375 + $0x170] sm:$0xff]
    %v2423 = vld [vmem:[%s2375 + $0x178] sm:$0xff]
    %v2424 = vld [vmem:[%s2375 + $0x180] sm:$0xff]
    %v2425 = vld [vmem:[%s2375 + $0x188] sm:$0xff]
    %v2426 = vld [vmem:[%s2375 + $0x190] sm:$0xff]
    %v2427 = vld [vmem:[%s2375 + $0x198] sm:$0xff]
    %v2428 = vld [vmem:[%s2375 + $0x1a0] sm:$0xff]
    %v2429 = vld [vmem:[%s2375 + $0x1a8] sm:$0xff]
    %v2430 = vld [vmem:[%s2375 + $0x1b0] sm:$0xff]
    %v2431 = vld [vmem:[%s2375 + $0x1b8] sm:$0xff]
    %v2432 = vld [vmem:[%s2375 + $0x1c0] sm:$0xff]
    %v2433 = vld [vmem:[%s2375 + $0x1c8] sm:$0xff]
    %v2434 = vld [vmem:[%s2375 + $0x1d0] sm:$0xff]
    %v2435 = vld [vmem:[%s2375 + $0x1d8] sm:$0xff]
    %v2436 = vld [vmem:[%s2375 + $0x1e0] sm:$0xff]
    %v2437 = vld [vmem:[%s2375 + $0x1e8] sm:$0xff]
    %v2438 = vld [vmem:[%s2375 + $0x1f0] sm:$0xff]
    %v2439 = vld [vmem:[%s2375 + $0x1f8] sm:$0xff]
    %v2440 = vld [vmem:[%s2375 + $0x200] sm:$0xff]
    %v2441 = vld [vmem:[%s2375 + $0x208] sm:$0xff]
    %v2442 = vld [vmem:[%s2375 + $0x210] sm:$0xff]
    %v2443 = vld [vmem:[%s2375 + $0x218] sm:$0xff]
    %v2444 = vld [vmem:[%s2375 + $0x220] sm:$0xff]
    %v2445 = vld [vmem:[%s2375 + $0x228] sm:$0xff]
    %v2446 = vld [vmem:[%s2375 + $0x230] sm:$0xff]
    %v2447 = vld [vmem:[%s2375 + $0x238] sm:$0xff]
    %v2448 = vld [vmem:[%s2375 + $0x240] sm:$0xff]
    %v2449 = vld [vmem:[%s2375 + $0x248] sm:$0xff]
    %v2450 = vld [vmem:[%s2375 + $0x250] sm:$0xff]
    %v2451 = vld [vmem:[%s2375 + $0x258] sm:$0xff]
    %v2452 = vld [vmem:[%s2375 + $0x260] sm:$0xff]
    %v2453 = vld [vmem:[%s2375 + $0x268] sm:$0xff]
    %v2454 = vld [vmem:[%s2375 + $0x270] sm:$0xff]
    %v2455 = vld [vmem:[%s2375 + $0x278] sm:$0xff]
    %v2456 = vld [vmem:[%s2375 + $0x280] sm:$0xff]
    %v2457 = vld [vmem:[%s2375 + $0x288] sm:$0xff]
    %v2458 = vld [vmem:[%s2375 + $0x290] sm:$0xff]
    %v2459 = vld [vmem:[%s2375 + $0x298] sm:$0xff]
    %v2460 = vld [vmem:[%s2375 + $0x2a0] sm:$0xff]
    %v2461 = vld [vmem:[%s2375 + $0x2a8] sm:$0xff]
    %v2462 = vld [vmem:[%s2375 + $0x2b0] sm:$0xff]
    %v2463 = vld [vmem:[%s2375 + $0x2b8] sm:$0xff]
    %v2464 = vld [vmem:[%s2375 + $0x2c0] sm:$0xff]
    %v2465 = vld [vmem:[%s2375 + $0x2c8] sm:$0xff]
    %v2466 = vld [vmem:[%s2375 + $0x2d0] sm:$0xff]
    %v2467 = vld [vmem:[%s2375 + $0x2d8] sm:$0xff]
    %v2468 = vld [vmem:[%s2375 + $0x2e0] sm:$0xff]
    %v2469 = vld [vmem:[%s2375 + $0x2e8] sm:$0xff]
    %v2470 = vld [vmem:[%s2375 + $0x2f0] sm:$0xff]
    %v2471 = vld [vmem:[%s2375 + $0x2f8] sm:$0xff]
    %v2472 = vld [vmem:[%s2375 + $0x300] sm:$0xff]
    %v2473 = vld [vmem:[%s2375 + $0x308] sm:$0xff]
    %v2474 = vld [vmem:[%s2375 + $0x310] sm:$0xff]
    %v2475 = vld [vmem:[%s2375 + $0x318] sm:$0xff]
    %vm2500 = vcmask 1043456
    %v2501 = vrot.slane %v2351, 4
    %v2502 = vrot.slane %v2355, 4
    %v2503 = vsel %vm2500, %v2501, %v2502
    %v2504 = vrot.slane %v2352, 4
    %v2505 = vrot.slane %v2356, 4
    %v2506 = vsel %vm2500, %v2504, %v2505
    %v2507 = vrot.slane %v2353, 4
    %v2508 = vrot.slane %v2357, 4
    %v2509 = vsel %vm2500, %v2507, %v2508
    %v2510 = vrot.slane %v2354, 4
    %v2511 = vrot.slane %v2358, 4
    %v2512 = vsel %vm2500, %v2510, %v2511
    %v2513 = vrot.slane %v2359, 4
    %v2514 = vsel %vm2500, %v2502, %v2513
    %v2515 = vrot.slane %v2360, 4
    %v2516 = vsel %vm2500, %v2505, %v2515
    %v2517 = vrot.slane %v2361, 4
    %v2518 = vsel %vm2500, %v2508, %v2517
    %v2519 = vrot.slane %v2362, 4
    %v2520 = vsel %vm2500, %v2511, %v2519
    %v2521 = vrot.slane %v2363, 4
    %v2522 = vsel %vm2500, %v2513, %v2521
    %v2523 = vrot.slane %v2364, 4
    %v2524 = vsel %vm2500, %v2515, %v2523
    %v2525 = vrot.slane %v2365, 4
    %v2526 = vsel %vm2500, %v2517, %v2525
    %v2527 = vrot.slane %v2366, 4
    %v2528 = vsel %vm2500, %v2519, %v2527
    %v2529 = vrot.slane %v2367, 4
    %v2530 = vsel %vm2500, %v2521, %v2529
    %v2531 = vrot.slane %v2368, 4
    %v2532 = vsel %vm2500, %v2523, %v2531
    %v2533 = vrot.slane %v2369, 4
    %v2534 = vsel %vm2500, %v2525, %v2533
    %v2535 = vrot.slane %v2370, 4
    %v2536 = vsel %vm2500, %v2527, %v2535
    %v2537 = vrot.slane %v2371, 4
    %v2538 = vsel %vm2500, %v2529, %v2537
    %v2539 = vrot.slane %v2372, 4
    %v2540 = vsel %vm2500, %v2531, %v2539
    %v2541 = vrot.slane %v2373, 4
    %v2542 = vsel %vm2500, %v2533, %v2541
    %v2543 = vrot.slane %v2374, 4
    %v2544 = vsel %vm2500, %v2535, %v2543
    %v2660 = vunpack.c.l.b16 %v2376
    %v2661 = vunpack.c.h.b16 %v2376
    %v2662 = vunpack.c.l.b16 %v2377
    %v2663 = vunpack.c.h.b16 %v2377
    %v2664 = vunpack.c.l.b16 %v2378
    %v2665 = vunpack.c.h.b16 %v2378
    %v2666 = vunpack.c.l.b16 %v2379
    %v2667 = vunpack.c.h.b16 %v2379
    %v2668 = vunpack.c.l.b16 %v2380
    %v2669 = vunpack.c.h.b16 %v2380
    %v2670 = vunpack.c.l.b16 %v2381
    %v2671 = vunpack.c.h.b16 %v2381
    %v2672 = vunpack.c.l.b16 %v2382
    %v2673 = vunpack.c.h.b16 %v2382
    %v2674 = vunpack.c.l.b16 %v2383
    %v2675 = vunpack.c.h.b16 %v2383
    %v2676 = vunpack.c.l.b16 %v2384
    %v2677 = vunpack.c.h.b16 %v2384
    %v2678 = vunpack.c.l.b16 %v2385
    %v2679 = vunpack.c.h.b16 %v2385
    %v2680 = vunpack.c.l.b16 %v2386
    %v2681 = vunpack.c.h.b16 %v2386
    %v2682 = vunpack.c.l.b16 %v2387
    %v2683 = vunpack.c.h.b16 %v2387
    %v2684 = vunpack.c.l.b16 %v2388
    %v2685 = vunpack.c.h.b16 %v2388
    %v2686 = vunpack.c.l.b16 %v2389
    %v2687 = vunpack.c.h.b16 %v2389
    %v2688 = vunpack.c.l.b16 %v2390
    %v2689 = vunpack.c.h.b16 %v2390
    %v2690 = vunpack.c.l.b16 %v2391
    %v2691 = vunpack.c.h.b16 %v2391
    %v2692 = vunpack.c.l.b16 %v2392
    %v2693 = vunpack.c.h.b16 %v2392
    %v2694 = vunpack.c.l.b16 %v2393
    %v2695 = vunpack.c.h.b16 %v2393
    %v2696 = vunpack.c.l.b16 %v2394
    %v2697 = vunpack.c.h.b16 %v2394
    %v2698 = vunpack.c.l.b16 %v2395
    %v2699 = vunpack.c.h.b16 %v2395
    %v2700 = vunpack.c.l.b16 %v2396
    %v2701 = vunpack.c.h.b16 %v2396
    %v2702 = vunpack.c.l.b16 %v2397
    %v2703 = vunpack.c.h.b16 %v2397
    %v2704 = vunpack.c.l.b16 %v2398
    %v2705 = vunpack.c.h.b16 %v2398
    %v2706 = vunpack.c.l.b16 %v2399
    %v2707 = vunpack.c.h.b16 %v2399
    %v2708 = vunpack.c.l.b16 %v2400
    %v2709 = vunpack.c.h.b16 %v2400
    %v2710 = vunpack.c.l.b16 %v2401
    %v2711 = vunpack.c.h.b16 %v2401
    %v2712 = vunpack.c.l.b16 %v2402
    %v2713 = vunpack.c.h.b16 %v2402
    %v2714 = vunpack.c.l.b16 %v2403
    %v2715 = vunpack.c.h.b16 %v2403
    %v2716 = vunpack.c.l.b16 %v2404
    %v2717 = vunpack.c.h.b16 %v2404
    %v2718 = vunpack.c.l.b16 %v2405
    %v2719 = vunpack.c.h.b16 %v2405
    %v2720 = vunpack.c.l.b16 %v2406
    %v2721 = vunpack.c.h.b16 %v2406
    %v2722 = vunpack.c.l.b16 %v2407
    %v2723 = vunpack.c.h.b16 %v2407
    %v2724 = vunpack.c.l.b16 %v2408
    %v2725 = vunpack.c.h.b16 %v2408
    %v2726 = vunpack.c.l.b16 %v2409
    %v2727 = vunpack.c.h.b16 %v2409
    %v2728 = vunpack.c.l.b16 %v2410
    %v2729 = vunpack.c.h.b16 %v2410
    %v2730 = vunpack.c.l.b16 %v2411
    %v2731 = vunpack.c.h.b16 %v2411
    %v2732 = vunpack.c.l.b16 %v2412
    %v2733 = vunpack.c.h.b16 %v2412
    %v2734 = vunpack.c.l.b16 %v2413
    %v2735 = vunpack.c.h.b16 %v2413
    %v2736 = vunpack.c.l.b16 %v2414
    %v2737 = vunpack.c.h.b16 %v2414
    %v2738 = vunpack.c.l.b16 %v2415
    %v2739 = vunpack.c.h.b16 %v2415
    %v2740 = vunpack.c.l.b16 %v2416
    %v2741 = vunpack.c.h.b16 %v2416
    %v2742 = vunpack.c.l.b16 %v2417
    %v2743 = vunpack.c.h.b16 %v2417
    %v2744 = vunpack.c.l.b16 %v2418
    %v2745 = vunpack.c.h.b16 %v2418
    %v2746 = vunpack.c.l.b16 %v2419
    %v2747 = vunpack.c.h.b16 %v2419
    %v2748 = vunpack.c.l.b16 %v2420
    %v2749 = vunpack.c.h.b16 %v2420
    %v2750 = vunpack.c.l.b16 %v2421
    %v2751 = vunpack.c.h.b16 %v2421
    %v2752 = vunpack.c.l.b16 %v2422
    %v2753 = vunpack.c.h.b16 %v2422
    %v2754 = vunpack.c.l.b16 %v2423
    %v2755 = vunpack.c.h.b16 %v2423
    %v2756 = vunpack.c.l.b16 %v2424
    %v2757 = vunpack.c.h.b16 %v2424
    %v2758 = vunpack.c.l.b16 %v2425
    %v2759 = vunpack.c.h.b16 %v2425
    %v2760 = vunpack.c.l.b16 %v2426
    %v2761 = vunpack.c.h.b16 %v2426
    %v2762 = vunpack.c.l.b16 %v2427
    %v2763 = vunpack.c.h.b16 %v2427
    %v2764 = vunpack.c.l.b16 %v2428
    %v2765 = vunpack.c.h.b16 %v2428
    %v2766 = vunpack.c.l.b16 %v2429
    %v2767 = vunpack.c.h.b16 %v2429
    %v2768 = vunpack.c.l.b16 %v2430
    %v2769 = vunpack.c.h.b16 %v2430
    %v2770 = vunpack.c.l.b16 %v2431
    %v2771 = vunpack.c.h.b16 %v2431
    %v2772 = vunpack.c.l.b16 %v2432
    %v2773 = vunpack.c.h.b16 %v2432
    %v2774 = vunpack.c.l.b16 %v2433
    %v2775 = vunpack.c.h.b16 %v2433
    %v2776 = vunpack.c.l.b16 %v2434
    %v2777 = vunpack.c.h.b16 %v2434
    %v2778 = vunpack.c.l.b16 %v2435
    %v2779 = vunpack.c.h.b16 %v2435
    %v2780 = vunpack.c.l.b16 %v2436
    %v2781 = vunpack.c.h.b16 %v2436
    %v2782 = vunpack.c.l.b16 %v2437
    %v2783 = vunpack.c.h.b16 %v2437
    %v2784 = vunpack.c.l.b16 %v2438
    %v2785 = vunpack.c.h.b16 %v2438
    %v2786 = vunpack.c.l.b16 %v2439
    %v2787 = vunpack.c.h.b16 %v2439
    %v2788 = vunpack.c.l.b16 %v2440
    %v2789 = vunpack.c.h.b16 %v2440
    %v2790 = vunpack.c.l.b16 %v2441
    %v2791 = vunpack.c.h.b16 %v2441
    %v2792 = vunpack.c.l.b16 %v2442
    %v2793 = vunpack.c.h.b16 %v2442
    %v2794 = vunpack.c.l.b16 %v2443
    %v2795 = vunpack.c.h.b16 %v2443
    %v2796 = vunpack.c.l.b16 %v2444
    %v2797 = vunpack.c.h.b16 %v2444
    %v2798 = vunpack.c.l.b16 %v2445
    %v2799 = vunpack.c.h.b16 %v2445
    %v2800 = vunpack.c.l.b16 %v2446
    %v2801 = vunpack.c.h.b16 %v2446
    %v2802 = vunpack.c.l.b16 %v2447
    %v2803 = vunpack.c.h.b16 %v2447
    %v2804 = vunpack.c.l.b16 %v2448
    %v2805 = vunpack.c.h.b16 %v2448
    %v2806 = vunpack.c.l.b16 %v2449
    %v2807 = vunpack.c.h.b16 %v2449
    %v2808 = vunpack.c.l.b16 %v2450
    %v2809 = vunpack.c.h.b16 %v2450
    %v2810 = vunpack.c.l.b16 %v2451
    %v2811 = vunpack.c.h.b16 %v2451
    %v2812 = vunpack.c.l.b16 %v2452
    %v2813 = vunpack.c.h.b16 %v2452
    %v2814 = vunpack.c.l.b16 %v2453
    %v2815 = vunpack.c.h.b16 %v2453
    %v2816 = vunpack.c.l.b16 %v2454
    %v2817 = vunpack.c.h.b16 %v2454
    %v2818 = vunpack.c.l.b16 %v2455
    %v2819 = vunpack.c.h.b16 %v2455
    %v2820 = vunpack.c.l.b16 %v2456
    %v2821 = vunpack.c.h.b16 %v2456
    %v2822 = vunpack.c.l.b16 %v2457
    %v2823 = vunpack.c.h.b16 %v2457
    %v2824 = vunpack.c.l.b16 %v2458
    %v2825 = vunpack.c.h.b16 %v2458
    %v2826 = vunpack.c.l.b16 %v2459
    %v2827 = vunpack.c.h.b16 %v2459
    %v2828 = vunpack.c.l.b16 %v2460
    %v2829 = vunpack.c.h.b16 %v2460
    %v2830 = vunpack.c.l.b16 %v2461
    %v2831 = vunpack.c.h.b16 %v2461
    %v2832 = vunpack.c.l.b16 %v2462
    %v2833 = vunpack.c.h.b16 %v2462
    %v2834 = vunpack.c.l.b16 %v2463
    %v2835 = vunpack.c.h.b16 %v2463
    %v2836 = vunpack.c.l.b16 %v2464
    %v2837 = vunpack.c.h.b16 %v2464
    %v2838 = vunpack.c.l.b16 %v2465
    %v2839 = vunpack.c.h.b16 %v2465
    %v2840 = vunpack.c.l.b16 %v2466
    %v2841 = vunpack.c.h.b16 %v2466
    %v2842 = vunpack.c.l.b16 %v2467
    %v2843 = vunpack.c.h.b16 %v2467
    %v2844 = vunpack.c.l.b16 %v2468
    %v2845 = vunpack.c.h.b16 %v2468
    %v2846 = vunpack.c.l.b16 %v2469
    %v2847 = vunpack.c.h.b16 %v2469
    %v2848 = vunpack.c.l.b16 %v2470
    %v2849 = vunpack.c.h.b16 %v2470
    %v2850 = vunpack.c.l.b16 %v2471
    %v2851 = vunpack.c.h.b16 %v2471
    %v2852 = vunpack.c.l.b16 %v2472
    %v2853 = vunpack.c.h.b16 %v2472
    %v2854 = vunpack.c.l.b16 %v2473
    %v2855 = vunpack.c.h.b16 %v2473
    %v2856 = vunpack.c.l.b16 %v2474
    %v2857 = vunpack.c.h.b16 %v2474
    %v2858 = vunpack.c.l.b16 %v2475
    %v2859 = vunpack.c.h.b16 %v2475
    %v2860 = vpack.c.b16 %v2664, %v2660
    %v2861 = vpack.c.b16 %v2665, %v2661
    %v2862 = vpack.c.b16 %v2666, %v2662
    %v2863 = vpack.c.b16 %v2667, %v2663
    %v2864 = vpack.c.b16 %v2672, %v2668
    %v2865 = vpack.c.b16 %v2673, %v2669
    %v2866 = vpack.c.b16 %v2674, %v2670
    %v2867 = vpack.c.b16 %v2675, %v2671
    %v2868 = vpack.c.b16 %v2680, %v2676
    %v2869 = vpack.c.b16 %v2681, %v2677
    %v2870 = vpack.c.b16 %v2682, %v2678
    %v2871 = vpack.c.b16 %v2683, %v2679
    %v2872 = vpack.c.b16 %v2688, %v2684
    %v2873 = vpack.c.b16 %v2689, %v2685
    %v2874 = vpack.c.b16 %v2690, %v2686
    %v2875 = vpack.c.b16 %v2691, %v2687
    %v2876 = vpack.c.b16 %v2696, %v2692
    %v2877 = vpack.c.b16 %v2697, %v2693
    %v2878 = vpack.c.b16 %v2698, %v2694
    %v2879 = vpack.c.b16 %v2699, %v2695
    %v2880 = vpack.c.b16 %v2704, %v2700
    %v2881 = vpack.c.b16 %v2705, %v2701
    %v2882 = vpack.c.b16 %v2706, %v2702
    %v2883 = vpack.c.b16 %v2707, %v2703
    %v2884 = vpack.c.b16 %v2712, %v2708
    %v2885 = vpack.c.b16 %v2713, %v2709
    %v2886 = vpack.c.b16 %v2714, %v2710
    %v2887 = vpack.c.b16 %v2715, %v2711
    %v2888 = vpack.c.b16 %v2720, %v2716
    %v2889 = vpack.c.b16 %v2721, %v2717
    %v2890 = vpack.c.b16 %v2722, %v2718
    %v2891 = vpack.c.b16 %v2723, %v2719
    %v2892 = vpack.c.b16 %v2728, %v2724
    %v2893 = vpack.c.b16 %v2729, %v2725
    %v2894 = vpack.c.b16 %v2730, %v2726
    %v2895 = vpack.c.b16 %v2731, %v2727
    %v2896 = vpack.c.b16 %v2736, %v2732
    %v2897 = vpack.c.b16 %v2737, %v2733
    %v2898 = vpack.c.b16 %v2738, %v2734
    %v2899 = vpack.c.b16 %v2739, %v2735
    %v2900 = vpack.c.b16 %v2744, %v2740
    %v2901 = vpack.c.b16 %v2745, %v2741
    %v2902 = vpack.c.b16 %v2746, %v2742
    %v2903 = vpack.c.b16 %v2747, %v2743
    %v2904 = vpack.c.b16 %v2752, %v2748
    %v2905 = vpack.c.b16 %v2753, %v2749
    %v2906 = vpack.c.b16 %v2754, %v2750
    %v2907 = vpack.c.b16 %v2755, %v2751
    %v2908 = vpack.c.b16 %v2760, %v2756
    %v2909 = vpack.c.b16 %v2761, %v2757
    %v2910 = vpack.c.b16 %v2762, %v2758
    %v2911 = vpack.c.b16 %v2763, %v2759
    %v2912 = vpack.c.b16 %v2768, %v2764
    %v2913 = vpack.c.b16 %v2769, %v2765
    %v2914 = vpack.c.b16 %v2770, %v2766
    %v2915 = vpack.c.b16 %v2771, %v2767
    %v2916 = vpack.c.b16 %v2776, %v2772
    %v2917 = vpack.c.b16 %v2777, %v2773
    %v2918 = vpack.c.b16 %v2778, %v2774
    %v2919 = vpack.c.b16 %v2779, %v2775
    %v2920 = vpack.c.b16 %v2784, %v2780
    %v2921 = vpack.c.b16 %v2785, %v2781
    %v2922 = vpack.c.b16 %v2786, %v2782
    %v2923 = vpack.c.b16 %v2787, %v2783
    %v2924 = vpack.c.b16 %v2792, %v2788
    %v2925 = vpack.c.b16 %v2793, %v2789
    %v2926 = vpack.c.b16 %v2794, %v2790
    %v2927 = vpack.c.b16 %v2795, %v2791
    %v2928 = vpack.c.b16 %v2800, %v2796
    %v2929 = vpack.c.b16 %v2801, %v2797
    %v2930 = vpack.c.b16 %v2802, %v2798
    %v2931 = vpack.c.b16 %v2803, %v2799
    %v2932 = vpack.c.b16 %v2808, %v2804
    %v2933 = vpack.c.b16 %v2809, %v2805
    %v2934 = vpack.c.b16 %v2810, %v2806
    %v2935 = vpack.c.b16 %v2811, %v2807
    %v2936 = vpack.c.b16 %v2816, %v2812
    %v2937 = vpack.c.b16 %v2817, %v2813
    %v2938 = vpack.c.b16 %v2818, %v2814
    %v2939 = vpack.c.b16 %v2819, %v2815
    %v2940 = vpack.c.b16 %v2824, %v2820
    %v2941 = vpack.c.b16 %v2825, %v2821
    %v2942 = vpack.c.b16 %v2826, %v2822
    %v2943 = vpack.c.b16 %v2827, %v2823
    %v2944 = vpack.c.b16 %v2832, %v2828
    %v2945 = vpack.c.b16 %v2833, %v2829
    %v2946 = vpack.c.b16 %v2834, %v2830
    %v2947 = vpack.c.b16 %v2835, %v2831
    %v2948 = vpack.c.b16 %v2840, %v2836
    %v2949 = vpack.c.b16 %v2841, %v2837
    %v2950 = vpack.c.b16 %v2842, %v2838
    %v2951 = vpack.c.b16 %v2843, %v2839
    %v2952 = vpack.c.b16 %v2848, %v2844
    %v2953 = vpack.c.b16 %v2849, %v2845
    %v2954 = vpack.c.b16 %v2850, %v2846
    %v2955 = vpack.c.b16 %v2851, %v2847
    %v2956 = vpack.c.b16 %v2856, %v2852
    %v2957 = vpack.c.b16 %v2857, %v2853
    %v2958 = vpack.c.b16 %v2858, %v2854
    %v2959 = vpack.c.b16 %v2859, %v2855
    %v3057 = vsel %vm1946, %v2512, 0
    %v3060 = vsel %vm1946, %v2520, 0
    %v3063 = vsel %vm1946, %v2528, 0
    %v3066 = vsel %vm1946, %v2536, 0
    %v3069 = vsel %vm1946, %v2544, 0
    %v3072 = vand.u32 %v2956, %v1965
    %v3075 = vand.u32 %v2957, %v1965
    %v3078 = vand.u32 %v2958, %v1965
    %v3081 = vand.u32 %v2959, %v1965
    %3083 = vmatprep.subr.bf16.mxu0 %v2861
    %3084 = vmatpush1.bf16.msra.mxu0 %v2860
    %3085 = vmatprep.subr.bf16.mxu0 %v2865
    %3086 = vmatpush1.bf16.msra.mxu0 %v2864
    %3087 = vmatprep.subr.bf16.mxu0 %v2869
    %3088 = vmatpush1.bf16.msra.mxu0 %v2868
    %3089 = vmatprep.subr.bf16.mxu0 %v2873
    %3090 = vmatpush1.bf16.msra.mxu0 %v2872
    %3091 = vmatprep.subr.bf16.mxu0 %v2877
    %3092 = vmatpush1.bf16.msra.mxu0 %v2876
    %3093 = vmatprep.subr.bf16.mxu0 %v2881
    %3094 = vmatpush1.bf16.msra.mxu0 %v2880
    %3095 = vmatprep.subr.bf16.mxu0 %v2885
    %3096 = vmatpush1.bf16.msra.mxu0 %v2884
    %3097 = vmatprep.subr.bf16.mxu0 %v2889
    %3098 = vmatpush1.bf16.msra.mxu0 %v2888
    %3099 = vmatprep.subr.bf16.mxu0 %v2893
    %3100 = vmatpush1.bf16.msra.mxu0 %v2892
    %3101 = vmatprep.subr.bf16.mxu0 %v2897
    %3102 = vmatpush1.bf16.msra.mxu0 %v2896
    %3103 = vmatprep.subr.bf16.mxu0 %v2901
    %3104 = vmatpush1.bf16.msra.mxu0 %v2900
    %3105 = vmatprep.subr.bf16.mxu0 %v2905
    %3106 = vmatpush1.bf16.msra.mxu0 %v2904
    %3107 = vmatprep.subr.bf16.mxu0 %v2909
    %3108 = vmatpush1.bf16.msra.mxu0 %v2908
    %3109 = vmatprep.subr.bf16.mxu0 %v2913
    %3110 = vmatpush1.bf16.msra.mxu0 %v2912
    %3111 = vmatprep.subr.bf16.mxu0 %v2917
    %3112 = vmatpush1.bf16.msra.mxu0 %v2916
    %3113 = vmatprep.subr.bf16.mxu0 %v2921
    %3114 = vmatpush1.bf16.msra.mxu0 %v2920
    %3115 = vmatprep.mubr.bf16.mxu0 %v2506
    %3116 = vmatmul.mubr.bf16.gmra.mrb[0].mxu0 %v2503
    %v3117 = vpop.f32.mrb[0].mxu0
    %v3118 = vadd.f32 0.0, %v3117
    %v3119 = vpop.f32.mrb[0].mxu0
    %v3120 = vadd.f32 0.0, %v3119
    %v3121 = vpop.f32.mrb[0].mxu0
    %v3122 = vadd.f32 0.0, %v3121
    %v3123 = vpop.f32.mrb[0].mxu0
    %v3124 = vadd.f32 0.0, %v3123
    %3125 = vmatprep.mubr.bf16.mxu0 %v2516
    %3126 = vmatmul.mubr.bf16.gmra.mrb[0].mxu0 %v2514
    %v3127 = vpop.f32.mrb[0].mxu0
    %v3128 = vadd.f32 0.0, %v3127
    %v3129 = vpop.f32.mrb[0].mxu0
    %v3130 = vadd.f32 0.0, %v3129
    %v3131 = vpop.f32.mrb[0].mxu0
    %v3132 = vadd.f32 0.0, %v3131
    %v3133 = vpop.f32.mrb[0].mxu0
    %v3134 = vadd.f32 0.0, %v3133
    %3135 = vmatprep.mubr.bf16.mxu0 %v2524
    %3136 = vmatmul.mubr.bf16.gmra.mrb[0].mxu0 %v2522
    %v3137 = vpop.f32.mrb[0].mxu0
    %v3138 = vadd.f32 0.0, %v3137
    %v3139 = vpop.f32.mrb[0].mxu0
    %v3140 = vadd.f32 0.0, %v3139
    %v3141 = vpop.f32.mrb[0].mxu0
    %v3142 = vadd.f32 0.0, %v3141
    %v3143 = vpop.f32.mrb[0].mxu0
    %v3144 = vadd.f32 0.0, %v3143
    %3145 = vmatprep.mubr.bf16.mxu0 %v2532
    %3146 = vmatmul.mubr.bf16.gmra.mrb[0].mxu0 %v2530
    %v3147 = vpop.f32.mrb[0].mxu0
    %v3148 = vadd.f32 0.0, %v3147
    %v3149 = vpop.f32.mrb[0].mxu0
    %v3150 = vadd.f32 0.0, %v3149
    %v3151 = vpop.f32.mrb[0].mxu0
    %v3152 = vadd.f32 0.0, %v3151
    %v3153 = vpop.f32.mrb[0].mxu0
    %v3154 = vadd.f32 0.0, %v3153
    %3155 = vmatprep.mubr.bf16.mxu0 %v2540
    %3156 = vmatmul.mubr.bf16.gmra.mrb[0].mxu0 %v2538
    %v3157 = vpop.f32.mrb[0].mxu0
    %v3158 = vadd.f32 0.0, %v3157
    %v3159 = vpop.f32.mrb[0].mxu0
    %v3160 = vadd.f32 0.0, %v3159
    %v3161 = vpop.f32.mrb[0].mxu0
    %v3162 = vadd.f32 0.0, %v3161
    %v3163 = vpop.f32.mrb[0].mxu0
    %v3164 = vadd.f32 0.0, %v3163
    %3165 = vdwg.mxu0
    %3166 = vmatprep.subr.bf16.mxu0 %v2925
    %3167 = vmatpush1.bf16.msra.mxu0 %v2924
    %3168 = vmatprep.subr.bf16.mxu0 %v2929
    %3169 = vmatpush1.bf16.msra.mxu0 %v2928
    %3170 = vmatprep.subr.bf16.mxu0 %v2933
    %3171 = vmatpush1.bf16.msra.mxu0 %v2932
    %3172 = vmatprep.subr.bf16.mxu0 %v2937
    %3173 = vmatpush1.bf16.msra.mxu0 %v2936
    %3174 = vmatprep.subr.bf16.mxu0 %v2941
    %3175 = vmatpush1.bf16.msra.mxu0 %v2940
    %3176 = vmatprep.subr.bf16.mxu0 %v2945
    %3177 = vmatpush1.bf16.msra.mxu0 %v2944
    %3178 = vmatprep.subr.bf16.mxu0 %v2949
    %3179 = vmatpush1.bf16.msra.mxu0 %v2948
    %3180 = vmatprep.subr.bf16.mxu0 %v2953
    %3181 = vmatpush1.bf16.msra.mxu0 %v2952
    %3182 = vmatprep.subr.bf16.mxu0 %v3075
    %3183 = vmatpush1.bf16.msra.mxu0 %v3072
    %3184 = vmatprep.subr.bf16.mxu0 0
    %3185 = vmatpush1.bf16.msra.mxu0 0
    %3186 = vmatprep.subr.bf16.mxu0 0
    %3187 = vmatpush1.bf16.msra.mxu0 0
    %3188 = vmatprep.subr.bf16.mxu0 0
    %3189 = vmatpush1.bf16.msra.mxu0 0
    %3190 = vmatprep.subr.bf16.mxu0 0
    %3191 = vmatpush1.bf16.msra.mxu0 0
    %3192 = vmatprep.subr.bf16.mxu0 0
    %3193 = vmatpush1.bf16.msra.mxu0 0
    %3194 = vmatprep.subr.bf16.mxu0 0
    %3195 = vmatpush1.bf16.msra.mxu0 0
    %3196 = vmatprep.subr.bf16.mxu0 0
    %3197 = vmatpush1.bf16.msra.mxu0 0
    %3198 = vmatprep.mubr.bf16.mxu0 %v3057
    %3199 = vmatmul.mubr.bf16.gmra.mrb[0].mxu0 %v2509
    %v3200 = vpop.f32.mrb[0].mxu0
    %v3201 = vadd.f32 %v3118, %v3200
    %v3202 = vpop.f32.mrb[0].mxu0
    %v3203 = vadd.f32 %v3120, %v3202
    %v3204 = vpop.f32.mrb[0].mxu0
    %v3205 = vadd.f32 %v3122, %v3204
    %v3206 = vpop.f32.mrb[0].mxu0
    %v3207 = vadd.f32 %v3124, %v3206
    %3208 = vmatprep.mubr.bf16.mxu0 %v3060
    %3209 = vmatmul.mubr.bf16.gmra.mrb[0].mxu0 %v2518
    %v3210 = vpop.f32.mrb[0].mxu0
    %v3211 = vadd.f32 %v3128, %v3210
    %v3212 = vpop.f32.mrb[0].mxu0
    %v3213 = vadd.f32 %v3130, %v3212
    %v3214 = vpop.f32.mrb[0].mxu0
    %v3215 = vadd.f32 %v3132, %v3214
    %v3216 = vpop.f32.mrb[0].mxu0
    %v3217 = vadd.f32 %v3134, %v3216
    %3218 = vmatprep.mubr.bf16.mxu0 %v3063
    %3219 = vmatmul.mubr.bf16.gmra.mrb[0].mxu0 %v2526
    %v3220 = vpop.f32.mrb[0].mxu0
    %v3221 = vadd.f32 %v3138, %v3220
    %v3222 = vpop.f32.mrb[0].mxu0
    %v3223 = vadd.f32 %v3140, %v3222
    %v3224 = vpop.f32.mrb[0].mxu0
    %v3225 = vadd.f32 %v3142, %v3224
    %v3226 = vpop.f32.mrb[0].mxu0
    %v3227 = vadd.f32 %v3144, %v3226
    %3228 = vmatprep.mubr.bf16.mxu0 %v3066
    %3229 = vmatmul.mubr.bf16.gmra.mrb[0].mxu0 %v2534
    %v3230 = vpop.f32.mrb[0].mxu0
    %v3231 = vadd.f32 %v3148, %v3230
    %v3232 = vpop.f32.mrb[0].mxu0
    %v3233 = vadd.f32 %v3150, %v3232
    %v3234 = vpop.f32.mrb[0].mxu0
    %v3235 = vadd.f32 %v3152, %v3234
    %v3236 = vpop.f32.mrb[0].mxu0
    %v3237 = vadd.f32 %v3154, %v3236
    %3238 = vmatprep.mubr.bf16.mxu0 %v3069
    %3239 = vmatmul.mubr.bf16.gmra.mrb[0].mxu0 %v2542
    %v3240 = vpop.f32.mrb[0].mxu0
    %v3241 = vadd.f32 %v3158, %v3240
    %v3242 = vpop.f32.mrb[0].mxu0
    %v3243 = vadd.f32 %v3160, %v3242
    %v3244 = vpop.f32.mrb[0].mxu0
    %v3245 = vadd.f32 %v3162, %v3244
    %v3246 = vpop.f32.mrb[0].mxu0
    %v3247 = vadd.f32 %v3164, %v3246
    %3248 = vdwg.mxu0
    %3249 = vmatprep.subr.bf16.mxu0 %v2863
    %3250 = vmatpush1.bf16.msra.mxu0 %v2862
    %3251 = vmatprep.subr.bf16.mxu0 %v2867
    %3252 = vmatpush1.bf16.msra.mxu0 %v2866
    %3253 = vmatprep.subr.bf16.mxu0 %v2871
    %3254 = vmatpush1.bf16.msra.mxu0 %v2870
    %3255 = vmatprep.subr.bf16.mxu0 %v2875
    %3256 = vmatpush1.bf16.msra.mxu0 %v2874
    %3257 = vmatprep.subr.bf16.mxu0 %v2879
    %3258 = vmatpush1.bf16.msra.mxu0 %v2878
    %3259 = vmatprep.subr.bf16.mxu0 %v2883
    %3260 = vmatpush1.bf16.msra.mxu0 %v2882
    %3261 = vmatprep.subr.bf16.mxu0 %v2887
    %3262 = vmatpush1.bf16.msra.mxu0 %v2886
    %3263 = vmatprep.subr.bf16.mxu0 %v2891
    %3264 = vmatpush1.bf16.msra.mxu0 %v2890
    %3265 = vmatprep.subr.bf16.mxu0 %v2895
    %3266 = vmatpush1.bf16.msra.mxu0 %v2894
    %3267 = vmatprep.subr.bf16.mxu0 %v2899
    %3268 = vmatpush1.bf16.msra.mxu0 %v2898
    %3269 = vmatprep.subr.bf16.mxu0 %v2903
    %3270 = vmatpush1.bf16.msra.mxu0 %v2902
    %3271 = vmatprep.subr.bf16.mxu0 %v2907
    %3272 = vmatpush1.bf16.msra.mxu0 %v2906
    %3273 = vmatprep.subr.bf16.mxu0 %v2911
    %3274 = vmatpush1.bf16.msra.mxu0 %v2910
    %3275 = vmatprep.subr.bf16.mxu0 %v2915
    %3276 = vmatpush1.bf16.msra.mxu0 %v2914
    %3277 = vmatprep.subr.bf16.mxu0 %v2919
    %3278 = vmatpush1.bf16.msra.mxu0 %v2918
    %3279 = vmatprep.subr.bf16.mxu0 %v2923
    %3280 = vmatpush1.bf16.msra.mxu0 %v2922
    %3281 = vmatprep.mubr.bf16.mxu0 %v2506
    %3282 = vmatmul.mubr.bf16.gmra.mrb[0].mxu0 %v2503
    %v3283 = vpop.f32.mrb[0].mxu0
    %v3284 = vadd.f32 0.0, %v3283
    %v3285 = vpop.f32.mrb[0].mxu0
    %v3286 = vadd.f32 0.0, %v3285
    %v3287 = vpop.f32.mrb[0].mxu0
    %v3288 = vadd.f32 0.0, %v3287
    %v3289 = vpop.f32.mrb[0].mxu0
    %v3290 = vadd.f32 0.0, %v3289
    %3291 = vmatprep.mubr.bf16.mxu0 %v2516
    %3292 = vmatmul.mubr.bf16.gmra.mrb[0].mxu0 %v2514
    %v3293 = vpop.f32.mrb[0].mxu0
    %v3294 = vadd.f32 0.0, %v3293
    %v3295 = vpop.f32.mrb[0].mxu0
    %v3296 = vadd.f32 0.0, %v3295
    %v3297 = vpop.f32.mrb[0].mxu0
    %v3298 = vadd.f32 0.0, %v3297
    %v3299 = vpop.f32.mrb[0].mxu0
    %v3300 = vadd.f32 0.0, %v3299
    %3301 = vmatprep.mubr.bf16.mxu0 %v2524
    %3302 = vmatmul.mubr.bf16.gmra.mrb[0].mxu0 %v2522
    %v3303 = vpop.f32.mrb[0].mxu0
    %v3304 = vadd.f32 0.0, %v3303
    %v3305 = vpop.f32.mrb[0].mxu0
    %v3306 = vadd.f32 0.0, %v3305
    %v3307 = vpop.f32.mrb[0].mxu0
    %v3308 = vadd.f32 0.0, %v3307
    %v3309 = vpop.f32.mrb[0].mxu0
    %v3310 = vadd.f32 0.0, %v3309
    %3311 = vmatprep.mubr.bf16.mxu0 %v2532
    %3312 = vmatmul.mubr.bf16.gmra.mrb[0].mxu0 %v2530
    %v3313 = vpop.f32.mrb[0].mxu0
    %v3314 = vadd.f32 0.0, %v3313
    %v3315 = vpop.f32.mrb[0].mxu0
    %v3316 = vadd.f32 0.0, %v3315
    %v3317 = vpop.f32.mrb[0].mxu0
    %v3318 = vadd.f32 0.0, %v3317
    %v3319 = vpop.f32.mrb[0].mxu0
    %v3320 = vadd.f32 0.0, %v3319
    %3321 = vmatprep.mubr.bf16.mxu0 %v2540
    %3322 = vmatmul.mubr.bf16.gmra.mrb[0].mxu0 %v2538
    %v3323 = vpop.f32.mrb[0].mxu0
    %v3324 = vadd.f32 0.0, %v3323
    %v3325 = vpop.f32.mrb[0].mxu0
    %v3326 = vadd.f32 0.0, %v3325
    %v3327 = vpop.f32.mrb[0].mxu0
    %v3328 = vadd.f32 0.0, %v3327
    %v3329 = vpop.f32.mrb[0].mxu0
    %v3330 = vadd.f32 0.0, %v3329
    %3331 = vdwg.mxu0
    %3332 = vmatprep.subr.bf16.mxu0 %v2927
    %3333 = vmatpush1.bf16.msra.mxu0 %v2926
    %3334 = vmatprep.subr.bf16.mxu0 %v2931
    %3335 = vmatpush1.bf16.msra.mxu0 %v2930
    %3336 = vmatprep.subr.bf16.mxu0 %v2935
    %3337 = vmatpush1.bf16.msra.mxu0 %v2934
    %3338 = vmatprep.subr.bf16.mxu0 %v2939
    %3339 = vmatpush1.bf16.msra.mxu0 %v2938
    %3340 = vmatprep.subr.bf16.mxu0 %v2943
    %3341 = vmatpush1.bf16.msra.mxu0 %v2942
    %3342 = vmatprep.subr.bf16.mxu0 %v2947
    %3343 = vmatpush1.bf16.msra.mxu0 %v2946
    %3344 = vmatprep.subr.bf16.mxu0 %v2951
    %3345 = vmatpush1.bf16.msra.mxu0 %v2950
    %3346 = vmatprep.subr.bf16.mxu0 %v2955
    %3347 = vmatpush1.bf16.msra.mxu0 %v2954
    %3348 = vmatprep.subr.bf16.mxu0 %v3081
    %3349 = vmatpush1.bf16.msra.mxu0 %v3078
    %3350 = vmatprep.subr.bf16.mxu0 0
    %3351 = vmatpush1.bf16.msra.mxu0 0
    %3352 = vmatprep.subr.bf16.mxu0 0
    %3353 = vmatpush1.bf16.msra.mxu0 0
    %3354 = vmatprep.subr.bf16.mxu0 0
    %3355 = vmatpush1.bf16.msra.mxu0 0
    %3356 = vmatprep.subr.bf16.mxu0 0
    %3357 = vmatpush1.bf16.msra.mxu0 0
    %3358 = vmatprep.subr.bf16.mxu0 0
    %3359 = vmatpush1.bf16.msra.mxu0 0
    %3360 = vmatprep.subr.bf16.mxu0 0
    %3361 = vmatpush1.bf16.msra.mxu0 0
    %3362 = vmatprep.subr.bf16.mxu0 0
    %3363 = vmatpush1.bf16.msra.mxu0 0
    %3364 = vmatprep.mubr.bf16.mxu0 %v3057
    %3365 = vmatmul.mubr.bf16.gmra.mrb[0].mxu0 %v2509
    %v3366 = vpop.f32.mrb[0].mxu0
    %v3367 = vadd.f32 %v3284, %v3366
    %v3368 = vpop.f32.mrb[0].mxu0
    %v3369 = vadd.f32 %v3286, %v3368
    %v3370 = vpop.f32.mrb[0].mxu0
    %v3371 = vadd.f32 %v3288, %v3370
    %v3372 = vpop.f32.mrb[0].mxu0
    %v3373 = vadd.f32 %v3290, %v3372
    %3374 = vmatprep.mubr.bf16.mxu0 %v3060
    %3375 = vmatmul.mubr.bf16.gmra.mrb[0].mxu0 %v2518
    %v3376 = vpop.f32.mrb[0].mxu0
    %v3377 = vadd.f32 %v3294, %v3376
    %v3378 = vpop.f32.mrb[0].mxu0
    %v3379 = vadd.f32 %v3296, %v3378
    %v3380 = vpop.f32.mrb[0].mxu0
    %v3381 = vadd.f32 %v3298, %v3380
    %v3382 = vpop.f32.mrb[0].mxu0
    %v3383 = vadd.f32 %v3300, %v3382
    %3384 = vmatprep.mubr.bf16.mxu0 %v3063
    %3385 = vmatmul.mubr.bf16.gmra.mrb[0].mxu0 %v2526
    %v3386 = vpop.f32.mrb[0].mxu0
    %v3387 = vadd.f32 %v3304, %v3386
    %v3388 = vpop.f32.mrb[0].mxu0
    %v3389 = vadd.f32 %v3306, %v3388
    %v3390 = vpop.f32.mrb[0].mxu0
    %v3391 = vadd.f32 %v3308, %v3390
    %v3392 = vpop.f32.mrb[0].mxu0
    %v3393 = vadd.f32 %v3310, %v3392
    %3394 = vmatprep.mubr.bf16.mxu0 %v3066
    %3395 = vmatmul.mubr.bf16.gmra.mrb[0].mxu0 %v2534
    %v3396 = vpop.f32.mrb[0].mxu0
    %v3397 = vadd.f32 %v3314, %v3396
    %v3398 = vpop.f32.mrb[0].mxu0
    %v3399 = vadd.f32 %v3316, %v3398
    %v3400 = vpop.f32.mrb[0].mxu0
    %v3401 = vadd.f32 %v3318, %v3400
    %v3402 = vpop.f32.mrb[0].mxu0
    %v3403 = vadd.f32 %v3320, %v3402
    %3404 = vmatprep.mubr.bf16.mxu0 %v3069
    %3405 = vmatmul.mubr.bf16.gmra.mrb[0].mxu0 %v2542
    %v3406 = vpop.f32.mrb[0].mxu0
    %v3407 = vadd.f32 %v3324, %v3406
    %v3408 = vpop.f32.mrb[0].mxu0
    %v3409 = vadd.f32 %v3326, %v3408
    %v3410 = vpop.f32.mrb[0].mxu0
    %v3411 = vadd.f32 %v3328, %v3410
    %v3412 = vpop.f32.mrb[0].mxu0
    %v3413 = vadd.f32 %v3330, %v3412
    %3414 = vdwg.mxu0
    %v3415 = vld [vmem:[#allocation4] sm:$0xff]
    %v3416 = vld [vmem:[#allocation4 + $0x8] sm:$0xff]
    %v3417 = vld [vmem:[#allocation4 + $0x10] sm:$0xff]
    %v3418 = vld [vmem:[#allocation4 + $0x18] sm:$0xff]
    %v3419 = vld [vmem:[#allocation4 + $0x20] sm:$0xff]
    %v3420 = vld [vmem:[#allocation4 + $0x28] sm:$0xff]
    %v3421 = vld [vmem:[#allocation4 + $0x30] sm:$0xff]
    %v3422 = vld [vmem:[#allocation4 + $0x38] sm:$0xff]
    %v3423 = vld [vmem:[#allocation4 + $0x40] sm:$0xff]
    %v3424 = vld [vmem:[#allocation4 + $0x48] sm:$0xff]
    %v3425 = vld [vmem:[#allocation4 + $0x50] sm:$0xff]
    %v3426 = vld [vmem:[#allocation4 + $0x58] sm:$0xff]
    %v3427 = vld [vmem:[#allocation4 + $0x60] sm:$0xff]
    %v3428 = vld [vmem:[#allocation4 + $0x68] sm:$0xff]
    %v3429 = vld [vmem:[#allocation4 + $0x70] sm:$0xff]
    %v3430 = vld [vmem:[#allocation4 + $0x78] sm:$0xff]
    %v3431 = vld [vmem:[#allocation4 + $0x80] sm:$0xff]
    %v3432 = vld [vmem:[#allocation4 + $0x88] sm:$0xff]
    %v3433 = vld [vmem:[#allocation4 + $0x90] sm:$0xff]
    %v3434 = vld [vmem:[#allocation4 + $0x98] sm:$0xff]
    %v3435 = vld [vmem:[#allocation4 + $0xa0] sm:$0xff]
    %v3436 = vld [vmem:[#allocation4 + $0xa8] sm:$0xff]
    %v3437 = vld [vmem:[#allocation4 + $0xb0] sm:$0xff]
    %v3438 = vld [vmem:[#allocation4 + $0xb8] sm:$0xff]
    %v3439 = vld [vmem:[#allocation4 + $0xc0] sm:$0xff]
    %v3440 = vld [vmem:[#allocation4 + $0xc8] sm:$0xff]
    %v3441 = vld [vmem:[#allocation4 + $0xd0] sm:$0xff]
    %v3442 = vld [vmem:[#allocation4 + $0xd8] sm:$0xff]
    %v3443 = vld [vmem:[#allocation4 + $0xe0] sm:$0xff]
    %v3444 = vld [vmem:[#allocation4 + $0xe8] sm:$0xff]
    %v3445 = vld [vmem:[#allocation4 + $0xf0] sm:$0xff]
    %v3446 = vld [vmem:[#allocation4 + $0xf8] sm:$0xff]
    %v3447 = vld [vmem:[#allocation4 + $0x100] sm:$0xff]
    %v3448 = vld [vmem:[#allocation4 + $0x108] sm:$0xff]
    %v3449 = vld [vmem:[#allocation4 + $0x110] sm:$0xff]
    %v3450 = vld [vmem:[#allocation4 + $0x118] sm:$0xff]
    %v3451 = vld [vmem:[#allocation4 + $0x120] sm:$0xff]
    %v3452 = vld [vmem:[#allocation4 + $0x128] sm:$0xff]
    %v3453 = vld [vmem:[#allocation4 + $0x130] sm:$0xff]
    %v3454 = vld [vmem:[#allocation4 + $0x138] sm:$0xff]
    %v3455 = vadd.f32 %v3415, %v3201
    %v3456 = vadd.f32 %v3416, %v3203
    %v3457 = vadd.f32 %v3417, %v3367
    %v3458 = vadd.f32 %v3418, %v3369
    %v3459 = vadd.f32 %v3419, %v3205
    %v3460 = vadd.f32 %v3420, %v3207
    %v3461 = vadd.f32 %v3421, %v3371
    %v3462 = vadd.f32 %v3422, %v3373
    %v3463 = vadd.f32 %v3423, %v3211
    %v3464 = vadd.f32 %v3424, %v3213
    %v3465 = vadd.f32 %v3425, %v3377
    %v3466 = vadd.f32 %v3426, %v3379
    %v3467 = vadd.f32 %v3427, %v3215
    %v3468 = vadd.f32 %v3428, %v3217
    %v3469 = vadd.f32 %v3429, %v3381
    %v3470 = vadd.f32 %v3430, %v3383
    %v3471 = vadd.f32 %v3431, %v3221
    %v3472 = vadd.f32 %v3432, %v3223
    %v3473 = vadd.f32 %v3433, %v3387
    %v3474 = vadd.f32 %v3434, %v3389
    %v3475 = vadd.f32 %v3435, %v3225
    %v3476 = vadd.f32 %v3436, %v3227
    %v3477 = vadd.f32 %v3437, %v3391
    %v3478 = vadd.f32 %v3438, %v3393
    %v3479 = vadd.f32 %v3439, %v3231
    %v3480 = vadd.f32 %v3440, %v3233
    %v3481 = vadd.f32 %v3441, %v3397
    %v3482 = vadd.f32 %v3442, %v3399
    %v3483 = vadd.f32 %v3443, %v3235
    %v3484 = vadd.f32 %v3444, %v3237
    %v3485 = vadd.f32 %v3445, %v3401
    %v3486 = vadd.f32 %v3446, %v3403
    %v3487 = vadd.f32 %v3447, %v3241
    %v3488 = vadd.f32 %v3448, %v3243
    %v3489 = vadd.f32 %v3449, %v3407
    %v3490 = vadd.f32 %v3450, %v3409
    %v3491 = vadd.f32 %v3451, %v3245
    %v3492 = vadd.f32 %v3452, %v3247
    %v3493 = vadd.f32 %v3453, %v3411
    %v3494 = vadd.f32 %v3454, %v3413
    %3495 = vst [vmem:[#allocation4] sm:$0xff] %v3455
    %3496 = vst [vmem:[#allocation4 + $0x8] sm:$0xff] %v3456
    %3497 = vst [vmem:[#allocation4 + $0x10] sm:$0xff] %v3457
    %3498 = vst.msk [vmem:[#allocation4 + $0x18] sm:$0xff] %vm2313, %v3458
    %3499 = vst [vmem:[#allocation4 + $0x20] sm:$0xff] %v3459
    %3500 = vst [vmem:[#allocation4 + $0x28] sm:$0xff] %v3460
    %3501 = vst [vmem:[#allocation4 + $0x30] sm:$0xff] %v3461
    %3502 = vst.msk [vmem:[#allocation4 + $0x38] sm:$0xff] %vm2313, %v3462
    %3503 = vst [vmem:[#allocation4 + $0x40] sm:$0xff] %v3463
    %3504 = vst [vmem:[#allocation4 + $0x48] sm:$0xff] %v3464
    %3505 = vst [vmem:[#allocation4 + $0x50] sm:$0xff] %v3465
    %3506 = vst.msk [vmem:[#allocation4 + $0x58] sm:$0xff] %vm2313, %v3466
    %3507 = vst [vmem:[#allocation4 + $0x60] sm:$0xff] %v3467
    %3508 = vst [vmem:[#allocation4 + $0x68] sm:$0xff] %v3468
    %3509 = vst [vmem:[#allocation4 + $0x70] sm:$0xff] %v3469
    %3510 = vst.msk [vmem:[#allocation4 + $0x78] sm:$0xff] %vm2313, %v3470
    %3511 = vst [vmem:[#allocation4 + $0x80] sm:$0xff] %v3471
    %3512 = vst [vmem:[#allocation4 + $0x88] sm:$0xff] %v3472
    %3513 = vst [vmem:[#allocation4 + $0x90] sm:$0xff] %v3473
    %3514 = vst.msk [vmem:[#allocation4 + $0x98] sm:$0xff] %vm2313, %v3474
    %3515 = vst [vmem:[#allocation4 + $0xa0] sm:$0xff] %v3475
    %3516 = vst [vmem:[#allocation4 + $0xa8] sm:$0xff] %v3476
    %3517 = vst [vmem:[#allocation4 + $0xb0] sm:$0xff] %v3477
    %3518 = vst.msk [vmem:[#allocation4 + $0xb8] sm:$0xff] %vm2313, %v3478
    %3519 = vst [vmem:[#allocation4 + $0xc0] sm:$0xff] %v3479
    %3520 = vst [vmem:[#allocation4 + $0xc8] sm:$0xff] %v3480
    %3521 = vst [vmem:[#allocation4 + $0xd0] sm:$0xff] %v3481
    %3522 = vst.msk [vmem:[#allocation4 + $0xd8] sm:$0xff] %vm2313, %v3482
    %3523 = vst [vmem:[#allocation4 + $0xe0] sm:$0xff] %v3483
    %3524 = vst [vmem:[#allocation4 + $0xe8] sm:$0xff] %v3484
    %3525 = vst [vmem:[#allocation4 + $0xf0] sm:$0xff] %v3485
    %3526 = vst.msk [vmem:[#allocation4 + $0xf8] sm:$0xff] %vm2313, %v3486
    %3527 = vst [vmem:[#allocation4 + $0x100] sm:$0xff] %v3487
    %3528 = vst [vmem:[#allocation4 + $0x108] sm:$0xff] %v3488
    %3529 = vst [vmem:[#allocation4 + $0x110] sm:$0xff] %v3489
    %3530 = vst.msk [vmem:[#allocation4 + $0x118] sm:$0xff] %vm2313, %v3490
    %3531 = vst [vmem:[#allocation4 + $0x120] sm:$0xff] %v3491
    %3532 = vst [vmem:[#allocation4 + $0x128] sm:$0xff] %v3492
    %3533 = vst [vmem:[#allocation4 + $0x130] sm:$0xff] %v3493
    %3534 = vst.msk [vmem:[#allocation4 + $0x138] sm:$0xff] %vm2313, %v3494
    %v3535 = vld [vmem:[#allocation3 + $0x20] sm:$0xff]
    %v3536 = vld [vmem:[#allocation3 + $0x28] sm:$0xff]
    %v3537 = vld [vmem:[#allocation3 + $0x30] sm:$0xff]
    %v3538 = vld [vmem:[#allocation3 + $0x38] sm:$0xff]
    %v3539 = vld [vmem:[#allocation3 + $0x40] sm:$0xff]
    %v3540 = vld [vmem:[#allocation3 + $0x48] sm:$0xff]
    %v3541 = vld [vmem:[#allocation3 + $0x50] sm:$0xff]
    %v3542 = vld [vmem:[#allocation3 + $0x58] sm:$0xff]
    %v3543 = vld [vmem:[#allocation3 + $0x60] sm:$0xff]
    %v3544 = vld [vmem:[#allocation3 + $0x68] sm:$0xff]
    %v3545 = vld [vmem:[#allocation3 + $0x70] sm:$0xff]
    %v3546 = vld [vmem:[#allocation3 + $0x78] sm:$0xff]
    %v3547 = vld [vmem:[#allocation3 + $0x80] sm:$0xff]
    %v3548 = vld [vmem:[#allocation3 + $0x88] sm:$0xff]
    %v3549 = vld [vmem:[#allocation3 + $0x90] sm:$0xff]
    %v3550 = vld [vmem:[#allocation3 + $0x98] sm:$0xff]
    %v3551 = vld [vmem:[#allocation3 + $0xa0] sm:$0xff]
    %v3552 = vld [vmem:[#allocation3 + $0xa8] sm:$0xff]
    %v3553 = vld [vmem:[#allocation3 + $0xb0] sm:$0xff]
    %v3554 = vld [vmem:[#allocation3 + $0xb8] sm:$0xff]
    %s3555 = scalar_lea.vmem [#allocation10], 1600
    %v3556 = vld [vmem:[%s3555] sm:$0xff]
    %v3557 = vld [vmem:[%s3555 + $0x8] sm:$0xff]
    %v3558 = vld [vmem:[%s3555 + $0x10] sm:$0xff]
    %v3559 = vld [vmem:[%s3555 + $0x18] sm:$0xff]
    %v3560 = vld [vmem:[%s3555 + $0x20] sm:$0xff]
    %v3561 = vld [vmem:[%s3555 + $0x28] sm:$0xff]
    %v3562 = vld [vmem:[%s3555 + $0x30] sm:$0xff]
    %v3563 = vld [vmem:[%s3555 + $0x38] sm:$0xff]
    %v3564 = vld [vmem:[%s3555 + $0x40] sm:$0xff]
    %v3565 = vld [vmem:[%s3555 + $0x48] sm:$0xff]
    %v3566 = vld [vmem:[%s3555 + $0x50] sm:$0xff]
    %v3567 = vld [vmem:[%s3555 + $0x58] sm:$0xff]
    %v3568 = vld [vmem:[%s3555 + $0x60] sm:$0xff]
    %v3569 = vld [vmem:[%s3555 + $0x68] sm:$0xff]
    %v3570 = vld [vmem:[%s3555 + $0x70] sm:$0xff]
    %v3571 = vld [vmem:[%s3555 + $0x78] sm:$0xff]
    %v3572 = vld [vmem:[%s3555 + $0x80] sm:$0xff]
    %v3573 = vld [vmem:[%s3555 + $0x88] sm:$0xff]
    %v3574 = vld [vmem:[%s3555 + $0x90] sm:$0xff]
    %v3575 = vld [vmem:[%s3555 + $0x98] sm:$0xff]
    %v3576 = vld [vmem:[%s3555 + $0xa0] sm:$0xff]
    %v3577 = vld [vmem:[%s3555 + $0xa8] sm:$0xff]
    %v3578 = vld [vmem:[%s3555 + $0xb0] sm:$0xff]
    %v3579 = vld [vmem:[%s3555 + $0xb8] sm:$0xff]
    %v3580 = vld [vmem:[%s3555 + $0xc0] sm:$0xff]
    %v3581 = vld [vmem:[%s3555 + $0xc8] sm:$0xff]
    %v3582 = vld [vmem:[%s3555 + $0xd0] sm:$0xff]
    %v3583 = vld [vmem:[%s3555 + $0xd8] sm:$0xff]
    %v3584 = vld [vmem:[%s3555 + $0xe0] sm:$0xff]
    %v3585 = vld [vmem:[%s3555 + $0xe8] sm:$0xff]
    %v3586 = vld [vmem:[%s3555 + $0xf0] sm:$0xff]
    %v3587 = vld [vmem:[%s3555 + $0xf8] sm:$0xff]
    %v3588 = vld [vmem:[%s3555 + $0x100] sm:$0xff]
    %v3589 = vld [vmem:[%s3555 + $0x108] sm:$0xff]
    %v3590 = vld [vmem:[%s3555 + $0x110] sm:$0xff]
    %v3591 = vld [vmem:[%s3555 + $0x118] sm:$0xff]
    %v3592 = vld [vmem:[%s3555 + $0x120] sm:$0xff]
    %v3593 = vld [vmem:[%s3555 + $0x128] sm:$0xff]
    %v3594 = vld [vmem:[%s3555 + $0x130] sm:$0xff]
    %v3595 = vld [vmem:[%s3555 + $0x138] sm:$0xff]
    %v3596 = vld [vmem:[%s3555 + $0x140] sm:$0xff]
    %v3597 = vld [vmem:[%s3555 + $0x148] sm:$0xff]
    %v3598 = vld [vmem:[%s3555 + $0x150] sm:$0xff]
    %v3599 = vld [vmem:[%s3555 + $0x158] sm:$0xff]
    %v3600 = vld [vmem:[%s3555 + $0x160] sm:$0xff]
    %v3601 = vld [vmem:[%s3555 + $0x168] sm:$0xff]
    %v3602 = vld [vmem:[%s3555 + $0x170] sm:$0xff]
    %v3603 = vld [vmem:[%s3555 + $0x178] sm:$0xff]
    %v3604 = vld [vmem:[%s3555 + $0x180] sm:$0xff]
    %v3605 = vld [vmem:[%s3555 + $0x188] sm:$0xff]
    %v3606 = vld [vmem:[%s3555 + $0x190] sm:$0xff]
    %v3607 = vld [vmem:[%s3555 + $0x198] sm:$0xff]
    %v3608 = vld [vmem:[%s3555 + $0x1a0] sm:$0xff]
    %v3609 = vld [vmem:[%s3555 + $0x1a8] sm:$0xff]
    %v3610 = vld [vmem:[%s3555 + $0x1b0] sm:$0xff]
    %v3611 = vld [vmem:[%s3555 + $0x1b8] sm:$0xff]
    %v3612 = vld [vmem:[%s3555 + $0x1c0] sm:$0xff]
    %v3613 = vld [vmem:[%s3555 + $0x1c8] sm:$0xff]
    %v3614 = vld [vmem:[%s3555 + $0x1d0] sm:$0xff]
    %v3615 = vld [vmem:[%s3555 + $0x1d8] sm:$0xff]
    %v3616 = vld [vmem:[%s3555 + $0x1e0] sm:$0xff]
    %v3617 = vld [vmem:[%s3555 + $0x1e8] sm:$0xff]
    %v3618 = vld [vmem:[%s3555 + $0x1f0] sm:$0xff]
    %v3619 = vld [vmem:[%s3555 + $0x1f8] sm:$0xff]
    %v3620 = vld [vmem:[%s3555 + $0x200] sm:$0xff]
    %v3621 = vld [vmem:[%s3555 + $0x208] sm:$0xff]
    %v3622 = vld [vmem:[%s3555 + $0x210] sm:$0xff]
    %v3623 = vld [vmem:[%s3555 + $0x218] sm:$0xff]
    %v3624 = vld [vmem:[%s3555 + $0x220] sm:$0xff]
    %v3625 = vld [vmem:[%s3555 + $0x228] sm:$0xff]
    %v3626 = vld [vmem:[%s3555 + $0x230] sm:$0xff]
    %v3627 = vld [vmem:[%s3555 + $0x238] sm:$0xff]
    %v3628 = vld [vmem:[%s3555 + $0x240] sm:$0xff]
    %v3629 = vld [vmem:[%s3555 + $0x248] sm:$0xff]
    %v3630 = vld [vmem:[%s3555 + $0x250] sm:$0xff]
    %v3631 = vld [vmem:[%s3555 + $0x258] sm:$0xff]
    %v3632 = vld [vmem:[%s3555 + $0x260] sm:$0xff]
    %v3633 = vld [vmem:[%s3555 + $0x268] sm:$0xff]
    %v3634 = vld [vmem:[%s3555 + $0x270] sm:$0xff]
    %v3635 = vld [vmem:[%s3555 + $0x278] sm:$0xff]
    %v3636 = vld [vmem:[%s3555 + $0x280] sm:$0xff]
    %v3637 = vld [vmem:[%s3555 + $0x288] sm:$0xff]
    %v3638 = vld [vmem:[%s3555 + $0x290] sm:$0xff]
    %v3639 = vld [vmem:[%s3555 + $0x298] sm:$0xff]
    %v3640 = vld [vmem:[%s3555 + $0x2a0] sm:$0xff]
    %v3641 = vld [vmem:[%s3555 + $0x2a8] sm:$0xff]
    %v3642 = vld [vmem:[%s3555 + $0x2b0] sm:$0xff]
    %v3643 = vld [vmem:[%s3555 + $0x2b8] sm:$0xff]
    %v3644 = vld [vmem:[%s3555 + $0x2c0] sm:$0xff]
    %v3645 = vld [vmem:[%s3555 + $0x2c8] sm:$0xff]
    %v3646 = vld [vmem:[%s3555 + $0x2d0] sm:$0xff]
    %v3647 = vld [vmem:[%s3555 + $0x2d8] sm:$0xff]
    %v3648 = vld [vmem:[%s3555 + $0x2e0] sm:$0xff]
    %v3649 = vld [vmem:[%s3555 + $0x2e8] sm:$0xff]
    %v3650 = vld [vmem:[%s3555 + $0x2f0] sm:$0xff]
    %v3651 = vld [vmem:[%s3555 + $0x2f8] sm:$0xff]
    %v3652 = vld [vmem:[%s3555 + $0x300] sm:$0xff]
    %v3653 = vld [vmem:[%s3555 + $0x308] sm:$0xff]
    %v3654 = vld [vmem:[%s3555 + $0x310] sm:$0xff]
    %v3655 = vld [vmem:[%s3555 + $0x318] sm:$0xff]
    %v3756 = vunpack.c.l.b16 %v3556
    %v3757 = vunpack.c.h.b16 %v3556
    %v3758 = vunpack.c.l.b16 %v3557
    %v3759 = vunpack.c.h.b16 %v3557
    %v3760 = vunpack.c.l.b16 %v3558
    %v3761 = vunpack.c.h.b16 %v3558
    %v3762 = vunpack.c.l.b16 %v3559
    %v3763 = vunpack.c.h.b16 %v3559
    %v3764 = vunpack.c.l.b16 %v3560
    %v3765 = vunpack.c.h.b16 %v3560
    %v3766 = vunpack.c.l.b16 %v3561
    %v3767 = vunpack.c.h.b16 %v3561
    %v3768 = vunpack.c.l.b16 %v3562
    %v3769 = vunpack.c.h.b16 %v3562
    %v3770 = vunpack.c.l.b16 %v3563
    %v3771 = vunpack.c.h.b16 %v3563
    %v3772 = vunpack.c.l.b16 %v3564
    %v3773 = vunpack.c.h.b16 %v3564
    %v3774 = vunpack.c.l.b16 %v3565
    %v3775 = vunpack.c.h.b16 %v3565
    %v3776 = vunpack.c.l.b16 %v3566
    %v3777 = vunpack.c.h.b16 %v3566
    %v3778 = vunpack.c.l.b16 %v3567
    %v3779 = vunpack.c.h.b16 %v3567
    %v3780 = vunpack.c.l.b16 %v3568
    %v3781 = vunpack.c.h.b16 %v3568
    %v3782 = vunpack.c.l.b16 %v3569
    %v3783 = vunpack.c.h.b16 %v3569
    %v3784 = vunpack.c.l.b16 %v3570
    %v3785 = vunpack.c.h.b16 %v3570
    %v3786 = vunpack.c.l.b16 %v3571
    %v3787 = vunpack.c.h.b16 %v3571
    %v3788 = vunpack.c.l.b16 %v3572
    %v3789 = vunpack.c.h.b16 %v3572
    %v3790 = vunpack.c.l.b16 %v3573
    %v3791 = vunpack.c.h.b16 %v3573
    %v3792 = vunpack.c.l.b16 %v3574
    %v3793 = vunpack.c.h.b16 %v3574
    %v3794 = vunpack.c.l.b16 %v3575
    %v3795 = vunpack.c.h.b16 %v3575
    %v3796 = vunpack.c.l.b16 %v3576
    %v3797 = vunpack.c.h.b16 %v3576
    %v3798 = vunpack.c.l.b16 %v3577
    %v3799 = vunpack.c.h.b16 %v3577
    %v3800 = vunpack.c.l.b16 %v3578
    %v3801 = vunpack.c.h.b16 %v3578
    %v3802 = vunpack.c.l.b16 %v3579
    %v3803 = vunpack.c.h.b16 %v3579
    %v3804 = vunpack.c.l.b16 %v3580
    %v3805 = vunpack.c.h.b16 %v3580
    %v3806 = vunpack.c.l.b16 %v3581
    %v3807 = vunpack.c.h.b16 %v3581
    %v3808 = vunpack.c.l.b16 %v3582
    %v3809 = vunpack.c.h.b16 %v3582
    %v3810 = vunpack.c.l.b16 %v3583
    %v3811 = vunpack.c.h.b16 %v3583
    %v3812 = vunpack.c.l.b16 %v3584
    %v3813 = vunpack.c.h.b16 %v3584
    %v3814 = vunpack.c.l.b16 %v3585
    %v3815 = vunpack.c.h.b16 %v3585
    %v3816 = vunpack.c.l.b16 %v3586
    %v3817 = vunpack.c.h.b16 %v3586
    %v3818 = vunpack.c.l.b16 %v3587
    %v3819 = vunpack.c.h.b16 %v3587
    %v3820 = vunpack.c.l.b16 %v3588
    %v3821 = vunpack.c.h.b16 %v3588
    %v3822 = vunpack.c.l.b16 %v3589
    %v3823 = vunpack.c.h.b16 %v3589
    %v3824 = vunpack.c.l.b16 %v3590
    %v3825 = vunpack.c.h.b16 %v3590
    %v3826 = vunpack.c.l.b16 %v3591
    %v3827 = vunpack.c.h.b16 %v3591
    %v3828 = vunpack.c.l.b16 %v3592
    %v3829 = vunpack.c.h.b16 %v3592
    %v3830 = vunpack.c.l.b16 %v3593
    %v3831 = vunpack.c.h.b16 %v3593
    %v3832 = vunpack.c.l.b16 %v3594
    %v3833 = vunpack.c.h.b16 %v3594
    %v3834 = vunpack.c.l.b16 %v3595
    %v3835 = vunpack.c.h.b16 %v3595
    %v3836 = vunpack.c.l.b16 %v3596
    %v3837 = vunpack.c.h.b16 %v3596
    %v3838 = vunpack.c.l.b16 %v3597
    %v3839 = vunpack.c.h.b16 %v3597
    %v3840 = vunpack.c.l.b16 %v3598
    %v3841 = vunpack.c.h.b16 %v3598
    %v3842 = vunpack.c.l.b16 %v3599
    %v3843 = vunpack.c.h.b16 %v3599
    %v3844 = vunpack.c.l.b16 %v3600
    %v3845 = vunpack.c.h.b16 %v3600
    %v3846 = vunpack.c.l.b16 %v3601
    %v3847 = vunpack.c.h.b16 %v3601
    %v3848 = vunpack.c.l.b16 %v3602
    %v3849 = vunpack.c.h.b16 %v3602
    %v3850 = vunpack.c.l.b16 %v3603
    %v3851 = vunpack.c.h.b16 %v3603
    %v3852 = vunpack.c.l.b16 %v3604
    %v3853 = vunpack.c.h.b16 %v3604
    %v3854 = vunpack.c.l.b16 %v3605
    %v3855 = vunpack.c.h.b16 %v3605
    %v3856 = vunpack.c.l.b16 %v3606
    %v3857 = vunpack.c.h.b16 %v3606
    %v3858 = vunpack.c.l.b16 %v3607
    %v3859 = vunpack.c.h.b16 %v3607
    %v3860 = vunpack.c.l.b16 %v3608
    %v3861 = vunpack.c.h.b16 %v3608
    %v3862 = vunpack.c.l.b16 %v3609
    %v3863 = vunpack.c.h.b16 %v3609
    %v3864 = vunpack.c.l.b16 %v3610
    %v3865 = vunpack.c.h.b16 %v3610
    %v3866 = vunpack.c.l.b16 %v3611
    %v3867 = vunpack.c.h.b16 %v3611
    %v3868 = vunpack.c.l.b16 %v3612
    %v3869 = vunpack.c.h.b16 %v3612
    %v3870 = vunpack.c.l.b16 %v3613
    %v3871 = vunpack.c.h.b16 %v3613
    %v3872 = vunpack.c.l.b16 %v3614
    %v3873 = vunpack.c.h.b16 %v3614
    %v3874 = vunpack.c.l.b16 %v3615
    %v3875 = vunpack.c.h.b16 %v3615
    %v3876 = vunpack.c.l.b16 %v3616
    %v3877 = vunpack.c.h.b16 %v3616
    %v3878 = vunpack.c.l.b16 %v3617
    %v3879 = vunpack.c.h.b16 %v3617
    %v3880 = vunpack.c.l.b16 %v3618
    %v3881 = vunpack.c.h.b16 %v3618
    %v3882 = vunpack.c.l.b16 %v3619
    %v3883 = vunpack.c.h.b16 %v3619
    %v3884 = vunpack.c.l.b16 %v3620
    %v3885 = vunpack.c.h.b16 %v3620
    %v3886 = vunpack.c.l.b16 %v3621
    %v3887 = vunpack.c.h.b16 %v3621
    %v3888 = vunpack.c.l.b16 %v3622
    %v3889 = vunpack.c.h.b16 %v3622
    %v3890 = vunpack.c.l.b16 %v3623
    %v3891 = vunpack.c.h.b16 %v3623
    %v3892 = vunpack.c.l.b16 %v3624
    %v3893 = vunpack.c.h.b16 %v3624
    %v3894 = vunpack.c.l.b16 %v3625
    %v3895 = vunpack.c.h.b16 %v3625
    %v3896 = vunpack.c.l.b16 %v3626
    %v3897 = vunpack.c.h.b16 %v3626
    %v3898 = vunpack.c.l.b16 %v3627
    %v3899 = vunpack.c.h.b16 %v3627
    %v3900 = vunpack.c.l.b16 %v3628
    %v3901 = vunpack.c.h.b16 %v3628
    %v3902 = vunpack.c.l.b16 %v3629
    %v3903 = vunpack.c.h.b16 %v3629
    %v3904 = vunpack.c.l.b16 %v3630
    %v3905 = vunpack.c.h.b16 %v3630
    %v3906 = vunpack.c.l.b16 %v3631
    %v3907 = vunpack.c.h.b16 %v3631
    %v3908 = vunpack.c.l.b16 %v3632
    %v3909 = vunpack.c.h.b16 %v3632
    %v3910 = vunpack.c.l.b16 %v3633
    %v3911 = vunpack.c.h.b16 %v3633
    %v3912 = vunpack.c.l.b16 %v3634
    %v3913 = vunpack.c.h.b16 %v3634
    %v3914 = vunpack.c.l.b16 %v3635
    %v3915 = vunpack.c.h.b16 %v3635
    %v3916 = vunpack.c.l.b16 %v3636
    %v3917 = vunpack.c.h.b16 %v3636
    %v3918 = vunpack.c.l.b16 %v3637
    %v3919 = vunpack.c.h.b16 %v3637
    %v3920 = vunpack.c.l.b16 %v3638
    %v3921 = vunpack.c.h.b16 %v3638
    %v3922 = vunpack.c.l.b16 %v3639
    %v3923 = vunpack.c.h.b16 %v3639
    %v3924 = vunpack.c.l.b16 %v3640
    %v3925 = vunpack.c.h.b16 %v3640
    %v3926 = vunpack.c.l.b16 %v3641
    %v3927 = vunpack.c.h.b16 %v3641
    %v3928 = vunpack.c.l.b16 %v3642
    %v3929 = vunpack.c.h.b16 %v3642
    %v3930 = vunpack.c.l.b16 %v3643
    %v3931 = vunpack.c.h.b16 %v3643
    %v3932 = vunpack.c.l.b16 %v3644
    %v3933 = vunpack.c.h.b16 %v3644
    %v3934 = vunpack.c.l.b16 %v3645
    %v3935 = vunpack.c.h.b16 %v3645
    %v3936 = vunpack.c.l.b16 %v3646
    %v3937 = vunpack.c.h.b16 %v3646
    %v3938 = vunpack.c.l.b16 %v3647
    %v3939 = vunpack.c.h.b16 %v3647
    %v3940 = vunpack.c.l.b16 %v3648
    %v3941 = vunpack.c.h.b16 %v3648
    %v3942 = vunpack.c.l.b16 %v3649
    %v3943 = vunpack.c.h.b16 %v3649
    %v3944 = vunpack.c.l.b16 %v3650
    %v3945 = vunpack.c.h.b16 %v3650
    %v3946 = vunpack.c.l.b16 %v3651
    %v3947 = vunpack.c.h.b16 %v3651
    %v3948 = vunpack.c.l.b16 %v3652
    %v3949 = vunpack.c.h.b16 %v3652
    %v3950 = vunpack.c.l.b16 %v3653
    %v3951 = vunpack.c.h.b16 %v3653
    %v3952 = vunpack.c.l.b16 %v3654
    %v3953 = vunpack.c.h.b16 %v3654
    %v3954 = vunpack.c.l.b16 %v3655
    %v3955 = vunpack.c.h.b16 %v3655
    %v3956 = vpack.c.b16 %v3760, %v3756
    %v3957 = vpack.c.b16 %v3761, %v3757
    %v3958 = vpack.c.b16 %v3762, %v3758
    %v3959 = vpack.c.b16 %v3763, %v3759
    %v3960 = vpack.c.b16 %v3768, %v3764
    %v3961 = vpack.c.b16 %v3769, %v3765
    %v3962 = vpack.c.b16 %v3770, %v3766
    %v3963 = vpack.c.b16 %v3771, %v3767
    %v3964 = vpack.c.b16 %v3776, %v3772
    %v3965 = vpack.c.b16 %v3777, %v3773
    %v3966 = vpack.c.b16 %v3778, %v3774
    %v3967 = vpack.c.b16 %v3779, %v3775
    %v3968 = vpack.c.b16 %v3784, %v3780
    %v3969 = vpack.c.b16 %v3785, %v3781
    %v3970 = vpack.c.b16 %v3786, %v3782
    %v3971 = vpack.c.b16 %v3787, %v3783
    %v3972 = vpack.c.b16 %v3792, %v3788
    %v3973 = vpack.c.b16 %v3793, %v3789
    %v3974 = vpack.c.b16 %v3794, %v3790
    %v3975 = vpack.c.b16 %v3795, %v3791
    %v3976 = vpack.c.b16 %v3800, %v3796
    %v3977 = vpack.c.b16 %v3801, %v3797
    %v3978 = vpack.c.b16 %v3802, %v3798
    %v3979 = vpack.c.b16 %v3803, %v3799
    %v3980 = vpack.c.b16 %v3808, %v3804
    %v3981 = vpack.c.b16 %v3809, %v3805
    %v3982 = vpack.c.b16 %v3810, %v3806
    %v3983 = vpack.c.b16 %v3811, %v3807
    %v3984 = vpack.c.b16 %v3816, %v3812
    %v3985 = vpack.c.b16 %v3817, %v3813
    %v3986 = vpack.c.b16 %v3818, %v3814
    %v3987 = vpack.c.b16 %v3819, %v3815
    %v3988 = vpack.c.b16 %v3824, %v3820
    %v3989 = vpack.c.b16 %v3825, %v3821
    %v3990 = vpack.c.b16 %v3826, %v3822
    %v3991 = vpack.c.b16 %v3827, %v3823
    %v3992 = vpack.c.b16 %v3832, %v3828
    %v3993 = vpack.c.b16 %v3833, %v3829
    %v3994 = vpack.c.b16 %v3834, %v3830
    %v3995 = vpack.c.b16 %v3835, %v3831
    %v3996 = vpack.c.b16 %v3840, %v3836
    %v3997 = vpack.c.b16 %v3841, %v3837
    %v3998 = vpack.c.b16 %v3842, %v3838
    %v3999 = vpack.c.b16 %v3843, %v3839
    %v4000 = vpack.c.b16 %v3848, %v3844
    %v4001 = vpack.c.b16 %v3849, %v3845
    %v4002 = vpack.c.b16 %v3850, %v3846
    %v4003 = vpack.c.b16 %v3851, %v3847
    %v4004 = vpack.c.b16 %v3856, %v3852
    %v4005 = vpack.c.b16 %v3857, %v3853
    %v4006 = vpack.c.b16 %v3858, %v3854
    %v4007 = vpack.c.b16 %v3859, %v3855
    %v4008 = vpack.c.b16 %v3864, %v3860
    %v4009 = vpack.c.b16 %v3865, %v3861
    %v4010 = vpack.c.b16 %v3866, %v3862
    %v4011 = vpack.c.b16 %v3867, %v3863
    %v4012 = vpack.c.b16 %v3872, %v3868
    %v4013 = vpack.c.b16 %v3873, %v3869
    %v4014 = vpack.c.b16 %v3874, %v3870
    %v4015 = vpack.c.b16 %v3875, %v3871
    %v4016 = vpack.c.b16 %v3880, %v3876
    %v4017 = vpack.c.b16 %v3881, %v3877
    %v4018 = vpack.c.b16 %v3882, %v3878
    %v4019 = vpack.c.b16 %v3883, %v3879
    %v4020 = vpack.c.b16 %v3888, %v3884
    %v4021 = vpack.c.b16 %v3889, %v3885
    %v4022 = vpack.c.b16 %v3890, %v3886
    %v4023 = vpack.c.b16 %v3891, %v3887
    %v4024 = vpack.c.b16 %v3896, %v3892
    %v4025 = vpack.c.b16 %v3897, %v3893
    %v4026 = vpack.c.b16 %v3898, %v3894
    %v4027 = vpack.c.b16 %v3899, %v3895
    %v4028 = vpack.c.b16 %v3904, %v3900
    %v4029 = vpack.c.b16 %v3905, %v3901
    %v4030 = vpack.c.b16 %v3906, %v3902
    %v4031 = vpack.c.b16 %v3907, %v3903
    %v4032 = vpack.c.b16 %v3912, %v3908
    %v4033 = vpack.c.b16 %v3913, %v3909
    %v4034 = vpack.c.b16 %v3914, %v3910
    %v4035 = vpack.c.b16 %v3915, %v3911
    %v4036 = vpack.c.b16 %v3920, %v3916
    %v4037 = vpack.c.b16 %v3921, %v3917
    %v4038 = vpack.c.b16 %v3922, %v3918
    %v4039 = vpack.c.b16 %v3923, %v3919
    %v4040 = vpack.c.b16 %v3928, %v3924
    %v4041 = vpack.c.b16 %v3929, %v3925
    %v4042 = vpack.c.b16 %v3930, %v3926
    %v4043 = vpack.c.b16 %v3931, %v3927
    %v4044 = vpack.c.b16 %v3936, %v3932
    %v4045 = vpack.c.b16 %v3937, %v3933
    %v4046 = vpack.c.b16 %v3938, %v3934
    %v4047 = vpack.c.b16 %v3939, %v3935
    %v4048 = vpack.c.b16 %v3944, %v3940
    %v4049 = vpack.c.b16 %v3945, %v3941
    %v4050 = vpack.c.b16 %v3946, %v3942
    %v4051 = vpack.c.b16 %v3947, %v3943
    %v4052 = vpack.c.b16 %v3952, %v3948
    %v4053 = vpack.c.b16 %v3953, %v3949
    %v4054 = vpack.c.b16 %v3954, %v3950
    %v4055 = vpack.c.b16 %v3955, %v3951
    %v4153 = vsel %vm1946, %v3538, 0
    %v4156 = vsel %vm1946, %v3542, 0
    %v4159 = vsel %vm1946, %v3546, 0
    %v4162 = vsel %vm1946, %v3550, 0
    %v4165 = vsel %vm1946, %v3554, 0
    %v4168 = vand.u32 %v4052, %v1965
    %v4171 = vand.u32 %v4053, %v1965
    %v4174 = vand.u32 %v4054, %v1965
    %v4177 = vand.u32 %v4055, %v1965
    %4179 = vmatprep.subr.bf16.mxu0 %v3957
    %4180 = vmatpush1.bf16.msra.mxu0 %v3956
    %4181 = vmatprep.subr.bf16.mxu0 %v3961
    %4182 = vmatpush1.bf16.msra.mxu0 %v3960
    %4183 = vmatprep.subr.bf16.mxu0 %v3965
    %4184 = vmatpush1.bf16.msra.mxu0 %v3964
    %4185 = vmatprep.subr.bf16.mxu0 %v3969
    %4186 = vmatpush1.bf16.msra.mxu0 %v3968
    %4187 = vmatprep.subr.bf16.mxu0 %v3973
    %4188 = vmatpush1.bf16.msra.mxu0 %v3972
    %4189 = vmatprep.subr.bf16.mxu0 %v3977
    %4190 = vmatpush1.bf16.msra.mxu0 %v3976
    %4191 = vmatprep.subr.bf16.mxu0 %v3981
    %4192 = vmatpush1.bf16.msra.mxu0 %v3980
    %4193 = vmatprep.subr.bf16.mxu0 %v3985
    %4194 = vmatpush1.bf16.msra.mxu0 %v3984
    %4195 = vmatprep.subr.bf16.mxu0 %v3989
    %4196 = vmatpush1.bf16.msra.mxu0 %v3988
    %4197 = vmatprep.subr.bf16.mxu0 %v3993
    %4198 = vmatpush1.bf16.msra.mxu0 %v3992
    %4199 = vmatprep.subr.bf16.mxu0 %v3997
    %4200 = vmatpush1.bf16.msra.mxu0 %v3996
    %4201 = vmatprep.subr.bf16.mxu0 %v4001
    %4202 = vmatpush1.bf16.msra.mxu0 %v4000
    %4203 = vmatprep.subr.bf16.mxu0 %v4005
    %4204 = vmatpush1.bf16.msra.mxu0 %v4004
    %4205 = vmatprep.subr.bf16.mxu0 %v4009
    %4206 = vmatpush1.bf16.msra.mxu0 %v4008
    %4207 = vmatprep.subr.bf16.mxu0 %v4013
    %4208 = vmatpush1.bf16.msra.mxu0 %v4012
    %4209 = vmatprep.subr.bf16.mxu0 %v4017
    %4210 = vmatpush1.bf16.msra.mxu0 %v4016
    %4211 = vmatprep.mubr.bf16.mxu0 %v3536
    %4212 = vmatmul.mubr.bf16.gmra.mrb[0].mxu0 %v3535
    %v4213 = vpop.f32.mrb[0].mxu0
    %v4214 = vadd.f32 0.0, %v4213
    %v4215 = vpop.f32.mrb[0].mxu0
    %v4216 = vadd.f32 0.0, %v4215
    %v4217 = vpop.f32.mrb[0].mxu0
    %v4218 = vadd.f32 0.0, %v4217
    %v4219 = vpop.f32.mrb[0].mxu0
    %v4220 = vadd.f32 0.0, %v4219
    %4221 = vmatprep.mubr.bf16.mxu0 %v3540
    %4222 = vmatmul.mubr.bf16.gmra.mrb[0].mxu0 %v3539
    %v4223 = vpop.f32.mrb[0].mxu0
    %v4224 = vadd.f32 0.0, %v4223
    %v4225 = vpop.f32.mrb[0].mxu0
    %v4226 = vadd.f32 0.0, %v4225
    %v4227 = vpop.f32.mrb[0].mxu0
    %v4228 = vadd.f32 0.0, %v4227
    %v4229 = vpop.f32.mrb[0].mxu0
    %v4230 = vadd.f32 0.0, %v4229
    %4231 = vmatprep.mubr.bf16.mxu0 %v3544
    %4232 = vmatmul.mubr.bf16.gmra.mrb[0].mxu0 %v3543
    %v4233 = vpop.f32.mrb[0].mxu0
    %v4234 = vadd.f32 0.0, %v4233
    %v4235 = vpop.f32.mrb[0].mxu0
    %v4236 = vadd.f32 0.0, %v4235
    %v4237 = vpop.f32.mrb[0].mxu0
    %v4238 = vadd.f32 0.0, %v4237
    %v4239 = vpop.f32.mrb[0].mxu0
    %v4240 = vadd.f32 0.0, %v4239
    %4241 = vmatprep.mubr.bf16.mxu0 %v3548
    %4242 = vmatmul.mubr.bf16.gmra.mrb[0].mxu0 %v3547
    %v4243 = vpop.f32.mrb[0].mxu0
    %v4244 = vadd.f32 0.0, %v4243
    %v4245 = vpop.f32.mrb[0].mxu0
    %v4246 = vadd.f32 0.0, %v4245
    %v4247 = vpop.f32.mrb[0].mxu0
    %v4248 = vadd.f32 0.0, %v4247
    %v4249 = vpop.f32.mrb[0].mxu0
    %v4250 = vadd.f32 0.0, %v4249
    %4251 = vmatprep.mubr.bf16.mxu0 %v3552
    %4252 = vmatmul.mubr.bf16.gmra.mrb[0].mxu0 %v3551
    %v4253 = vpop.f32.mrb[0].mxu0
    %v4254 = vadd.f32 0.0, %v4253
    %v4255 = vpop.f32.mrb[0].mxu0
    %v4256 = vadd.f32 0.0, %v4255
    %v4257 = vpop.f32.mrb[0].mxu0
    %v4258 = vadd.f32 0.0, %v4257
    %v4259 = vpop.f32.mrb[0].mxu0
    %v4260 = vadd.f32 0.0, %v4259
    %4261 = vdwg.mxu0
    %4262 = vmatprep.subr.bf16.mxu0 %v4021
    %4263 = vmatpush1.bf16.msra.mxu0 %v4020
    %4264 = vmatprep.subr.bf16.mxu0 %v4025
    %4265 = vmatpush1.bf16.msra.mxu0 %v4024
    %4266 = vmatprep.subr.bf16.mxu0 %v4029
    %4267 = vmatpush1.bf16.msra.mxu0 %v4028
    %4268 = vmatprep.subr.bf16.mxu0 %v4033
    %4269 = vmatpush1.bf16.msra.mxu0 %v4032
    %4270 = vmatprep.subr.bf16.mxu0 %v4037
    %4271 = vmatpush1.bf16.msra.mxu0 %v4036
    %4272 = vmatprep.subr.bf16.mxu0 %v4041
    %4273 = vmatpush1.bf16.msra.mxu0 %v4040
    %4274 = vmatprep.subr.bf16.mxu0 %v4045
    %4275 = vmatpush1.bf16.msra.mxu0 %v4044
    %4276 = vmatprep.subr.bf16.mxu0 %v4049
    %4277 = vmatpush1.bf16.msra.mxu0 %v4048
    %4278 = vmatprep.subr.bf16.mxu0 %v4171
    %4279 = vmatpush1.bf16.msra.mxu0 %v4168
    %4280 = vmatprep.subr.bf16.mxu0 0
    %4281 = vmatpush1.bf16.msra.mxu0 0
    %4282 = vmatprep.subr.bf16.mxu0 0
    %4283 = vmatpush1.bf16.msra.mxu0 0
    %4284 = vmatprep.subr.bf16.mxu0 0
    %4285 = vmatpush1.bf16.msra.mxu0 0
    %4286 = vmatprep.subr.bf16.mxu0 0
    %4287 = vmatpush1.bf16.msra.mxu0 0
    %4288 = vmatprep.subr.bf16.mxu0 0
    %4289 = vmatpush1.bf16.msra.mxu0 0
    %4290 = vmatprep.subr.bf16.mxu0 0
    %4291 = vmatpush1.bf16.msra.mxu0 0
    %4292 = vmatprep.subr.bf16.mxu0 0
    %4293 = vmatpush1.bf16.msra.mxu0 0
    %4294 = vmatprep.mubr.bf16.mxu0 %v4153
    %4295 = vmatmul.mubr.bf16.gmra.mrb[0].mxu0 %v3537
    %v4296 = vpop.f32.mrb[0].mxu0
    %v4297 = vadd.f32 %v4214, %v4296
    %v4298 = vpop.f32.mrb[0].mxu0
    %v4299 = vadd.f32 %v4216, %v4298
    %v4300 = vpop.f32.mrb[0].mxu0
    %v4301 = vadd.f32 %v4218, %v4300
    %v4302 = vpop.f32.mrb[0].mxu0
    %v4303 = vadd.f32 %v4220, %v4302
    %4304 = vmatprep.mubr.bf16.mxu0 %v4156
    %4305 = vmatmul.mubr.bf16.gmra.mrb[0].mxu0 %v3541
    %v4306 = vpop.f32.mrb[0].mxu0
    %v4307 = vadd.f32 %v4224, %v4306
    %v4308 = vpop.f32.mrb[0].mxu0
    %v4309 = vadd.f32 %v4226, %v4308
    %v4310 = vpop.f32.mrb[0].mxu0
    %v4311 = vadd.f32 %v4228, %v4310
    %v4312 = vpop.f32.mrb[0].mxu0
    %v4313 = vadd.f32 %v4230, %v4312
    %4314 = vmatprep.mubr.bf16.mxu0 %v4159
    %4315 = vmatmul.mubr.bf16.gmra.mrb[0].mxu0 %v3545
    %v4316 = vpop.f32.mrb[0].mxu0
    %v4317 = vadd.f32 %v4234, %v4316
    %v4318 = vpop.f32.mrb[0].mxu0
    %v4319 = vadd.f32 %v4236, %v4318
    %v4320 = vpop.f32.mrb[0].mxu0
    %v4321 = vadd.f32 %v4238, %v4320
    %v4322 = vpop.f32.mrb[0].mxu0
    %v4323 = vadd.f32 %v4240, %v4322
    %4324 = vmatprep.mubr.bf16.mxu0 %v4162
    %4325 = vmatmul.mubr.bf16.gmra.mrb[0].mxu0 %v3549
    %v4326 = vpop.f32.mrb[0].mxu0
    %v4327 = vadd.f32 %v4244, %v4326
    %v4328 = vpop.f32.mrb[0].mxu0
    %v4329 = vadd.f32 %v4246, %v4328
    %v4330 = vpop.f32.mrb[0].mxu0
    %v4331 = vadd.f32 %v4248, %v4330
    %v4332 = vpop.f32.mrb[0].mxu0
    %v4333 = vadd.f32 %v4250, %v4332
    %4334 = vmatprep.mubr.bf16.mxu0 %v4165
    %4335 = vmatmul.mubr.bf16.gmra.mrb[0].mxu0 %v3553
    %v4336 = vpop.f32.mrb[0].mxu0
    %v4337 = vadd.f32 %v4254, %v4336
    %v4338 = vpop.f32.mrb[0].mxu0
    %v4339 = vadd.f32 %v4256, %v4338
    %v4340 = vpop.f32.mrb[0].mxu0
    %v4341 = vadd.f32 %v4258, %v4340
    %v4342 = vpop.f32.mrb[0].mxu0
    %v4343 = vadd.f32 %v4260, %v4342
    %4344 = vdwg.mxu0
    %4345 = vmatprep.subr.bf16.mxu0 %v3959
    %4346 = vmatpush1.bf16.msra.mxu0 %v3958
    %4347 = vmatprep.subr.bf16.mxu0 %v3963
    %4348 = vmatpush1.bf16.msra.mxu0 %v3962
    %4349 = vmatprep.subr.bf16.mxu0 %v3967
    %4350 = vmatpush1.bf16.msra.mxu0 %v3966
    %4351 = vmatprep.subr.bf16.mxu0 %v3971
    %4352 = vmatpush1.bf16.msra.mxu0 %v3970
    %4353 = vmatprep.subr.bf16.mxu0 %v3975
    %4354 = vmatpush1.bf16.msra.mxu0 %v3974
    %4355 = vmatprep.subr.bf16.mxu0 %v3979
    %4356 = vmatpush1.bf16.msra.mxu0 %v3978
    %4357 = vmatprep.subr.bf16.mxu0 %v3983
    %4358 = vmatpush1.bf16.msra.mxu0 %v3982
    %4359 = vmatprep.subr.bf16.mxu0 %v3987
    %4360 = vmatpush1.bf16.msra.mxu0 %v3986
    %4361 = vmatprep.subr.bf16.mxu0 %v3991
    %4362 = vmatpush1.bf16.msra.mxu0 %v3990
    %4363 = vmatprep.subr.bf16.mxu0 %v3995
    %4364 = vmatpush1.bf16.msra.mxu0 %v3994
    %4365 = vmatprep.subr.bf16.mxu0 %v3999
    %4366 = vmatpush1.bf16.msra.mxu0 %v3998
    %4367 = vmatprep.subr.bf16.mxu0 %v4003
    %4368 = vmatpush1.bf16.msra.mxu0 %v4002
    %4369 = vmatprep.subr.bf16.mxu0 %v4007
    %4370 = vmatpush1.bf16.msra.mxu0 %v4006
    %4371 = vmatprep.subr.bf16.mxu0 %v4011
    %4372 = vmatpush1.bf16.msra.mxu0 %v4010
    %4373 = vmatprep.subr.bf16.mxu0 %v4015
    %4374 = vmatpush1.bf16.msra.mxu0 %v4014
    %4375 = vmatprep.subr.bf16.mxu0 %v4019
    %4376 = vmatpush1.bf16.msra.mxu0 %v4018
    %4377 = vmatprep.mubr.bf16.mxu0 %v3536
    %4378 = vmatmul.mubr.bf16.gmra.mrb[0].mxu0 %v3535
    %v4379 = vpop.f32.mrb[0].mxu0
    %v4380 = vadd.f32 0.0, %v4379
    %v4381 = vpop.f32.mrb[0].mxu0
    %v4382 = vadd.f32 0.0, %v4381
    %v4383 = vpop.f32.mrb[0].mxu0
    %v4384 = vadd.f32 0.0, %v4383
    %v4385 = vpop.f32.mrb[0].mxu0
    %v4386 = vadd.f32 0.0, %v4385
    %4387 = vmatprep.mubr.bf16.mxu0 %v3540
    %4388 = vmatmul.mubr.bf16.gmra.mrb[0].mxu0 %v3539
    %v4389 = vpop.f32.mrb[0].mxu0
    %v4390 = vadd.f32 0.0, %v4389
    %v4391 = vpop.f32.mrb[0].mxu0
    %v4392 = vadd.f32 0.0, %v4391
    %v4393 = vpop.f32.mrb[0].mxu0
    %v4394 = vadd.f32 0.0, %v4393
    %v4395 = vpop.f32.mrb[0].mxu0
    %v4396 = vadd.f32 0.0, %v4395
    %4397 = vmatprep.mubr.bf16.mxu0 %v3544
    %4398 = vmatmul.mubr.bf16.gmra.mrb[0].mxu0 %v3543
    %v4399 = vpop.f32.mrb[0].mxu0
    %v4400 = vadd.f32 0.0, %v4399
    %v4401 = vpop.f32.mrb[0].mxu0
    %v4402 = vadd.f32 0.0, %v4401
    %v4403 = vpop.f32.mrb[0].mxu0
    %v4404 = vadd.f32 0.0, %v4403
    %v4405 = vpop.f32.mrb[0].mxu0
    %v4406 = vadd.f32 0.0, %v4405
    %4407 = vmatprep.mubr.bf16.mxu0 %v3548
    %4408 = vmatmul.mubr.bf16.gmra.mrb[0].mxu0 %v3547
    %v4409 = vpop.f32.mrb[0].mxu0
    %v4410 = vadd.f32 0.0, %v4409
    %v4411 = vpop.f32.mrb[0].mxu0
    %v4412 = vadd.f32 0.0, %v4411
    %v4413 = vpop.f32.mrb[0].mxu0
    %v4414 = vadd.f32 0.0, %v4413
    %v4415 = vpop.f32.mrb[0].mxu0
    %v4416 = vadd.f32 0.0, %v4415
    %4417 = vmatprep.mubr.bf16.mxu0 %v3552
    %4418 = vmatmul.mubr.bf16.gmra.mrb[0].mxu0 %v3551
    %v4419 = vpop.f32.mrb[0].mxu0
    %v4420 = vadd.f32 0.0, %v4419
    %v4421 = vpop.f32.mrb[0].mxu0
    %v4422 = vadd.f32 0.0, %v4421
    %v4423 = vpop.f32.mrb[0].mxu0
    %v4424 = vadd.f32 0.0, %v4423
    %v4425 = vpop.f32.mrb[0].mxu0
    %v4426 = vadd.f32 0.0, %v4425
    %4427 = vdwg.mxu0
    %4428 = vmatprep.subr.bf16.mxu0 %v4023
    %4429 = vmatpush1.bf16.msra.mxu0 %v4022
    %4430 = vmatprep.subr.bf16.mxu0 %v4027
    %4431 = vmatpush1.bf16.msra.mxu0 %v4026
    %4432 = vmatprep.subr.bf16.mxu0 %v4031
    %4433 = vmatpush1.bf16.msra.mxu0 %v4030
    %4434 = vmatprep.subr.bf16.mxu0 %v4035
    %4435 = vmatpush1.bf16.msra.mxu0 %v4034
    %4436 = vmatprep.subr.bf16.mxu0 %v4039
    %4437 = vmatpush1.bf16.msra.mxu0 %v4038
    %4438 = vmatprep.subr.bf16.mxu0 %v4043
    %4439 = vmatpush1.bf16.msra.mxu0 %v4042
    %4440 = vmatprep.subr.bf16.mxu0 %v4047
    %4441 = vmatpush1.bf16.msra.mxu0 %v4046
    %4442 = vmatprep.subr.bf16.mxu0 %v4051
    %4443 = vmatpush1.bf16.msra.mxu0 %v4050
    %4444 = vmatprep.subr.bf16.mxu0 %v4177
    %4445 = vmatpush1.bf16.msra.mxu0 %v4174
    %4446 = vmatprep.subr.bf16.mxu0 0
    %4447 = vmatpush1.bf16.msra.mxu0 0
    %4448 = vmatprep.subr.bf16.mxu0 0
    %4449 = vmatpush1.bf16.msra.mxu0 0
    %4450 = vmatprep.subr.bf16.mxu0 0
    %4451 = vmatpush1.bf16.msra.mxu0 0
    %4452 = vmatprep.subr.bf16.mxu0 0
    %4453 = vmatpush1.bf16.msra.mxu0 0
    %4454 = vmatprep.subr.bf16.mxu0 0
    %4455 = vmatpush1.bf16.msra.mxu0 0
    %4456 = vmatprep.subr.bf16.mxu0 0
    %4457 = vmatpush1.bf16.msra.mxu0 0
    %4458 = vmatprep.subr.bf16.mxu0 0
    %4459 = vmatpush1.bf16.msra.mxu0 0
    %4460 = vmatprep.mubr.bf16.mxu0 %v4153
    %4461 = vmatmul.mubr.bf16.gmra.mrb[0].mxu0 %v3537
    %v4462 = vpop.f32.mrb[0].mxu0
    %v4463 = vadd.f32 %v4380, %v4462
    %v4464 = vpop.f32.mrb[0].mxu0
    %v4465 = vadd.f32 %v4382, %v4464
    %v4466 = vpop.f32.mrb[0].mxu0
    %v4467 = vadd.f32 %v4384, %v4466
    %v4468 = vpop.f32.mrb[0].mxu0
    %v4469 = vadd.f32 %v4386, %v4468
    %4470 = vmatprep.mubr.bf16.mxu0 %v4156
    %4471 = vmatmul.mubr.bf16.gmra.mrb[0].mxu0 %v3541
    %v4472 = vpop.f32.mrb[0].mxu0
    %v4473 = vadd.f32 %v4390, %v4472
    %v4474 = vpop.f32.mrb[0].mxu0
    %v4475 = vadd.f32 %v4392, %v4474
    %v4476 = vpop.f32.mrb[0].mxu0
    %v4477 = vadd.f32 %v4394, %v4476
    %v4478 = vpop.f32.mrb[0].mxu0
    %v4479 = vadd.f32 %v4396, %v4478
    %4480 = vmatprep.mubr.bf16.mxu0 %v4159
    %4481 = vmatmul.mubr.bf16.gmra.mrb[0].mxu0 %v3545
    %v4482 = vpop.f32.mrb[0].mxu0
    %v4483 = vadd.f32 %v4400, %v4482
    %v4484 = vpop.f32.mrb[0].mxu0
    %v4485 = vadd.f32 %v4402, %v4484
    %v4486 = vpop.f32.mrb[0].mxu0
    %v4487 = vadd.f32 %v4404, %v4486
    %v4488 = vpop.f32.mrb[0].mxu0
    %v4489 = vadd.f32 %v4406, %v4488
    %4490 = vmatprep.mubr.bf16.mxu0 %v4162
    %4491 = vmatmul.mubr.bf16.gmra.mrb[0].mxu0 %v3549
    %v4492 = vpop.f32.mrb[0].mxu0
    %v4493 = vadd.f32 %v4410, %v4492
    %v4494 = vpop.f32.mrb[0].mxu0
    %v4495 = vadd.f32 %v4412, %v4494
    %v4496 = vpop.f32.mrb[0].mxu0
    %v4497 = vadd.f32 %v4414, %v4496
    %v4498 = vpop.f32.mrb[0].mxu0
    %v4499 = vadd.f32 %v4416, %v4498
    %4500 = vmatprep.mubr.bf16.mxu0 %v4165
    %4501 = vmatmul.mubr.bf16.gmra.mrb[0].mxu0 %v3553
    %v4502 = vpop.f32.mrb[0].mxu0
    %v4503 = vadd.f32 %v4420, %v4502
    %v4504 = vpop.f32.mrb[0].mxu0
    %v4505 = vadd.f32 %v4422, %v4504
    %v4506 = vpop.f32.mrb[0].mxu0
    %v4507 = vadd.f32 %v4424, %v4506
    %v4508 = vpop.f32.mrb[0].mxu0
    %v4509 = vadd.f32 %v4426, %v4508
    %4510 = vdwg.mxu0
    %v4511 = vld [vmem:[#allocation4] sm:$0xff]
    %v4512 = vld [vmem:[#allocation4 + $0x8] sm:$0xff]
    %v4513 = vld [vmem:[#allocation4 + $0x10] sm:$0xff]
    %v4514 = vld [vmem:[#allocation4 + $0x18] sm:$0xff]
    %v4515 = vld [vmem:[#allocation4 + $0x20] sm:$0xff]
    %v4516 = vld [vmem:[#allocation4 + $0x28] sm:$0xff]
    %v4517 = vld [vmem:[#allocation4 + $0x30] sm:$0xff]
    %v4518 = vld [vmem:[#allocation4 + $0x38] sm:$0xff]
    %v4519 = vld [vmem:[#allocation4 + $0x40] sm:$0xff]
    %v4520 = vld [vmem:[#allocation4 + $0x48] sm:$0xff]
    %v4521 = vld [vmem:[#allocation4 + $0x50] sm:$0xff]
    %v4522 = vld [vmem:[#allocation4 + $0x58] sm:$0xff]
    %v4523 = vld [vmem:[#allocation4 + $0x60] sm:$0xff]
    %v4524 = vld [vmem:[#allocation4 + $0x68] sm:$0xff]
    %v4525 = vld [vmem:[#allocation4 + $0x70] sm:$0xff]
    %v4526 = vld [vmem:[#allocation4 + $0x78] sm:$0xff]
    %v4527 = vld [vmem:[#allocation4 + $0x80] sm:$0xff]
    %v4528 = vld [vmem:[#allocation4 + $0x88] sm:$0xff]
    %v4529 = vld [vmem:[#allocation4 + $0x90] sm:$0xff]
    %v4530 = vld [vmem:[#allocation4 + $0x98] sm:$0xff]
    %v4531 = vld [vmem:[#allocation4 + $0xa0] sm:$0xff]
    %v4532 = vld [vmem:[#allocation4 + $0xa8] sm:$0xff]
    %v4533 = vld [vmem:[#allocation4 + $0xb0] sm:$0xff]
    %v4534 = vld [vmem:[#allocation4 + $0xb8] sm:$0xff]
    %v4535 = vld [vmem:[#allocation4 + $0xc0] sm:$0xff]
    %v4536 = vld [vmem:[#allocation4 + $0xc8] sm:$0xff]
    %v4537 = vld [vmem:[#allocation4 + $0xd0] sm:$0xff]
    %v4538 = vld [vmem:[#allocation4 + $0xd8] sm:$0xff]
    %v4539 = vld [vmem:[#allocation4 + $0xe0] sm:$0xff]
    %v4540 = vld [vmem:[#allocation4 + $0xe8] sm:$0xff]
    %v4541 = vld [vmem:[#allocation4 + $0xf0] sm:$0xff]
    %v4542 = vld [vmem:[#allocation4 + $0xf8] sm:$0xff]
    %v4543 = vld [vmem:[#allocation4 + $0x100] sm:$0xff]
    %v4544 = vld [vmem:[#allocation4 + $0x108] sm:$0xff]
    %v4545 = vld [vmem:[#allocation4 + $0x110] sm:$0xff]
    %v4546 = vld [vmem:[#allocation4 + $0x118] sm:$0xff]
    %v4547 = vld [vmem:[#allocation4 + $0x120] sm:$0xff]
    %v4548 = vld [vmem:[#allocation4 + $0x128] sm:$0xff]
    %v4549 = vld [vmem:[#allocation4 + $0x130] sm:$0xff]
    %v4550 = vld [vmem:[#allocation4 + $0x138] sm:$0xff]
    %v4551 = vadd.f32 %v4511, %v4297
    %v4552 = vadd.f32 %v4512, %v4299
    %v4553 = vadd.f32 %v4513, %v4463
    %v4554 = vadd.f32 %v4514, %v4465
    %v4555 = vadd.f32 %v4515, %v4301
    %v4556 = vadd.f32 %v4516, %v4303
    %v4557 = vadd.f32 %v4517, %v4467
    %v4558 = vadd.f32 %v4518, %v4469
    %v4559 = vadd.f32 %v4519, %v4307
    %v4560 = vadd.f32 %v4520, %v4309
    %v4561 = vadd.f32 %v4521, %v4473
    %v4562 = vadd.f32 %v4522, %v4475
    %v4563 = vadd.f32 %v4523, %v4311
    %v4564 = vadd.f32 %v4524, %v4313
    %v4565 = vadd.f32 %v4525, %v4477
    %v4566 = vadd.f32 %v4526, %v4479
    %v4567 = vadd.f32 %v4527, %v4317
    %v4568 = vadd.f32 %v4528, %v4319
    %v4569 = vadd.f32 %v4529, %v4483
    %v4570 = vadd.f32 %v4530, %v4485
    %v4571 = vadd.f32 %v4531, %v4321
    %v4572 = vadd.f32 %v4532, %v4323
    %v4573 = vadd.f32 %v4533, %v4487
    %v4574 = vadd.f32 %v4534, %v4489
    %v4575 = vadd.f32 %v4535, %v4327
    %v4576 = vadd.f32 %v4536, %v4329
    %v4577 = vadd.f32 %v4537, %v4493
    %v4578 = vadd.f32 %v4538, %v4495
    %v4579 = vadd.f32 %v4539, %v4331
    %v4580 = vadd.f32 %v4540, %v4333
    %v4581 = vadd.f32 %v4541, %v4497
    %v4582 = vadd.f32 %v4542, %v4499
    %v4583 = vadd.f32 %v4543, %v4337
    %v4584 = vadd.f32 %v4544, %v4339
    %v4585 = vadd.f32 %v4545, %v4503
    %v4586 = vadd.f32 %v4546, %v4505
    %v4587 = vadd.f32 %v4547, %v4341
    %v4588 = vadd.f32 %v4548, %v4343
    %v4589 = vadd.f32 %v4549, %v4507
    %v4590 = vadd.f32 %v4550, %v4509
    %4591 = vst [vmem:[#allocation4] sm:$0xff] %v4551
    %4592 = vst [vmem:[#allocation4 + $0x8] sm:$0xff] %v4552
    %4593 = vst [vmem:[#allocation4 + $0x10] sm:$0xff] %v4553
    %4594 = vst.msk [vmem:[#allocation4 + $0x18] sm:$0xff] %vm2313, %v4554
    %4595 = vst [vmem:[#allocation4 + $0x20] sm:$0xff] %v4555
    %4596 = vst [vmem:[#allocation4 + $0x28] sm:$0xff] %v4556
    %4597 = vst [vmem:[#allocation4 + $0x30] sm:$0xff] %v4557
    %4598 = vst.msk [vmem:[#allocation4 + $0x38] sm:$0xff] %vm2313, %v4558
    %4599 = vst [vmem:[#allocation4 + $0x40] sm:$0xff] %v4559
    %4600 = vst [vmem:[#allocation4 + $0x48] sm:$0xff] %v4560
    %4601 = vst [vmem:[#allocation4 + $0x50] sm:$0xff] %v4561
    %4602 = vst.msk [vmem:[#allocation4 + $0x58] sm:$0xff] %vm2313, %v4562
    %4603 = vst [vmem:[#allocation4 + $0x60] sm:$0xff] %v4563
    %4604 = vst [vmem:[#allocation4 + $0x68] sm:$0xff] %v4564
    %4605 = vst [vmem:[#allocation4 + $0x70] sm:$0xff] %v4565
    %4606 = vst.msk [vmem:[#allocation4 + $0x78] sm:$0xff] %vm2313, %v4566
    %4607 = vst [vmem:[#allocation4 + $0x80] sm:$0xff] %v4567
    %4608 = vst [vmem:[#allocation4 + $0x88] sm:$0xff] %v4568
    %4609 = vst [vmem:[#allocation4 + $0x90] sm:$0xff] %v4569
    %4610 = vst.msk [vmem:[#allocation4 + $0x98] sm:$0xff] %vm2313, %v4570
    %4611 = vst [vmem:[#allocation4 + $0xa0] sm:$0xff] %v4571
    %4612 = vst [vmem:[#allocation4 + $0xa8] sm:$0xff] %v4572
    %4613 = vst [vmem:[#allocation4 + $0xb0] sm:$0xff] %v4573
    %4614 = vst.msk [vmem:[#allocation4 + $0xb8] sm:$0xff] %vm2313, %v4574
    %4615 = vst [vmem:[#allocation4 + $0xc0] sm:$0xff] %v4575
    %4616 = vst [vmem:[#allocation4 + $0xc8] sm:$0xff] %v4576
    %4617 = vst [vmem:[#allocation4 + $0xd0] sm:$0xff] %v4577
    %4618 = vst.msk [vmem:[#allocation4 + $0xd8] sm:$0xff] %vm2313, %v4578
    %4619 = vst [vmem:[#allocation4 + $0xe0] sm:$0xff] %v4579
    %4620 = vst [vmem:[#allocation4 + $0xe8] sm:$0xff] %v4580
    %4621 = vst [vmem:[#allocation4 + $0xf0] sm:$0xff] %v4581
    %4622 = vst.msk [vmem:[#allocation4 + $0xf8] sm:$0xff] %vm2313, %v4582
    %4623 = vst [vmem:[#allocation4 + $0x100] sm:$0xff] %v4583
    %4624 = vst [vmem:[#allocation4 + $0x108] sm:$0xff] %v4584
    %4625 = vst [vmem:[#allocation4 + $0x110] sm:$0xff] %v4585
    %4626 = vst.msk [vmem:[#allocation4 + $0x118] sm:$0xff] %vm2313, %v4586
    %4627 = vst [vmem:[#allocation4 + $0x120] sm:$0xff] %v4587
    %4628 = vst [vmem:[#allocation4 + $0x128] sm:$0xff] %v4588
    %4629 = vst [vmem:[#allocation4 + $0x130] sm:$0xff] %v4589
    %4630 = vst.msk [vmem:[#allocation4 + $0x138] sm:$0xff] %vm2313, %v4590
    %v4631 = vld [vmem:[#allocation11] sm:$0xf]
    %v4632 = vld [vmem:[#allocation4] sm:$0xff]
    %v4633 = vld [vmem:[#allocation4 + $0x8] sm:$0xff]
    %v4634 = vld [vmem:[#allocation4 + $0x10] sm:$0xff]
    %v4635 = vld [vmem:[#allocation4 + $0x18] sm:$0xff]
    %v4636 = vld [vmem:[#allocation4 + $0x20] sm:$0xff]
    %v4637 = vld [vmem:[#allocation4 + $0x28] sm:$0xff]
    %v4638 = vld [vmem:[#allocation4 + $0x30] sm:$0xff]
    %v4639 = vld [vmem:[#allocation4 + $0x38] sm:$0xff]
    %v4640 = vmax.f32 %v4632, %v4636
    %v4641 = vmax.f32 %v4633, %v4637
    %v4642 = vmax.f32 %v4634, %v4638
    %v4643 = vmax.f32 %v4635, %v4639
    %4648 = vrot.lane.b32.xlu0 %v4640, 127
    %v4649 = vpop.permute.xlu0 %4648
    %4650 = vrot.lane.b32.xlu0 %v4641, 127
    %v4651 = vpop.permute.xlu0 %4650
    %4652 = vrot.lane.b32.xlu0 %v4642, 127
    %v4653 = vpop.permute.xlu0 %4652
    %4654 = vrot.lane.b32.xlu0 %v4643, 127
    %v4655 = vpop.permute.xlu0 %4654
    %v4656 = vsel %vm762, %v4649, %v4651
    %v4657 = vsel %vm762, %v4651, %v4653
    %v4658 = vsel %vm762, %v4653, %v4655
    %v4663 = vmax.f32 %v4640, %v4656
    %v4664 = vmax.f32 %v4641, %v4657
    %v4665 = vmax.f32 %v4642, %v4658
    %v4666 = vmax.f32 %v4643, %v4655
    %v4668 = vlaneseq
    %v4669 = vshrl.u32 %v4668, 7
    %v4670 = vsub.s32 0, %v4669
    %v4671 = vrot.slane %v4631, %v4670
    %v4672 = vlaneseq
    %v4673 = vshrl.u32 %v4672, 7
    %v4674 = vsub.s32 1, %v4673
    %v4675 = vrot.slane %v4631, %v4674
    %v4676 = vlaneseq
    %v4677 = vshrl.u32 %v4676, 7
    %v4678 = vsub.s32 2, %v4677
    %v4679 = vrot.slane %v4631, %v4678
    %v4680 = vlaneseq
    %v4681 = vshrl.u32 %v4680, 7
    %v4682 = vsub.s32 3, %v4681
    %v4683 = vrot.slane %v4631, %v4682
    %v4688 = vadd.f32 %v4663, %v4671
    %v4689 = vadd.f32 %v4664, %v4675
    %v4690 = vadd.f32 %v4665, %v4679
    %v4691 = vadd.f32 %v4666, %v4683
    %v4692 = vmax.f32 %v4688, 0.0
    %v4693 = vmax.f32 %v4689, 0.0
    %v4694 = vmax.f32 %v4690, 0.0
    %v4695 = vmax.f32 %v4691, 0.0
    %v4696 = vpack.c.bf16 %v4692, %v4692
    %v4697 = vpack.c.bf16 %v4693, %v4693
    %v4698 = vpack.c.bf16 %v4694, %v4694
    %v4699 = vpack.c.bf16 %v4695, %v4695
    %v4700 = vld [vmem:[#allocation13] sm:$0xff]
    %v4701 = vld [vmem:[#allocation13 + $0x8] sm:$0xff]
    %v4702 = vld [vmem:[#allocation13 + $0x10] sm:$0xff]
    %v4703 = vld [vmem:[#allocation13 + $0x18] sm:$0xff]
    %v4704 = vld [vmem:[#allocation13 + $0x20] sm:$0xff]
    %v4705 = vld [vmem:[#allocation13 + $0x28] sm:$0xff]
    %v4706 = vld [vmem:[#allocation13 + $0x30] sm:$0xff]
    %v4707 = vld [vmem:[#allocation13 + $0x38] sm:$0xff]
    %v4708 = vld [vmem:[#allocation13 + $0x40] sm:$0xff]
    %v4709 = vld [vmem:[#allocation13 + $0x48] sm:$0xff]
    %v4710 = vld [vmem:[#allocation13 + $0x50] sm:$0xff]
    %v4711 = vld [vmem:[#allocation13 + $0x58] sm:$0xff]
    %v4712 = vld [vmem:[#allocation13 + $0x60] sm:$0xff]
    %v4713 = vld [vmem:[#allocation13 + $0x68] sm:$0xff]
    %v4714 = vld [vmem:[#allocation13 + $0x70] sm:$0xff]
    %v4715 = vld [vmem:[#allocation13 + $0x78] sm:$0xff]
    %v4716 = vld [vmem:[#allocation13 + $0x80] sm:$0xff]
    %v4717 = vld [vmem:[#allocation13 + $0x88] sm:$0xff]
    %v4718 = vld [vmem:[#allocation13 + $0x90] sm:$0xff]
    %v4719 = vld [vmem:[#allocation13 + $0x98] sm:$0xff]
    %v4720 = vld [vmem:[#allocation13 + $0xa0] sm:$0xff]
    %v4721 = vld [vmem:[#allocation13 + $0xa8] sm:$0xff]
    %v4722 = vld [vmem:[#allocation13 + $0xb0] sm:$0xff]
    %v4723 = vld [vmem:[#allocation13 + $0xb8] sm:$0xff]
    %v4724 = vld [vmem:[#allocation13 + $0xc0] sm:$0xff]
    %v4725 = vld [vmem:[#allocation13 + $0xc8] sm:$0xff]
    %v4726 = vld [vmem:[#allocation13 + $0xd0] sm:$0xff]
    %v4727 = vld [vmem:[#allocation13 + $0xd8] sm:$0xff]
    %v4728 = vld [vmem:[#allocation13 + $0xe0] sm:$0xff]
    %v4729 = vld [vmem:[#allocation13 + $0xe8] sm:$0xff]
    %v4730 = vld [vmem:[#allocation13 + $0xf0] sm:$0xff]
    %v4731 = vld [vmem:[#allocation13 + $0xf8] sm:$0xff]
    %v4732 = vld [vmem:[#allocation13 + $0x100] sm:$0xff]
    %v4733 = vld [vmem:[#allocation13 + $0x108] sm:$0xff]
    %v4734 = vld [vmem:[#allocation13 + $0x110] sm:$0xff]
    %v4735 = vld [vmem:[#allocation13 + $0x118] sm:$0xff]
    %v4736 = vld [vmem:[#allocation13 + $0x120] sm:$0xff]
    %v4737 = vld [vmem:[#allocation13 + $0x128] sm:$0xff]
    %v4738 = vld [vmem:[#allocation13 + $0x130] sm:$0xff]
    %v4739 = vld [vmem:[#allocation13 + $0x138] sm:$0xff]
    %v4740 = vld [vmem:[#allocation13 + $0x140] sm:$0xff]
    %v4741 = vld [vmem:[#allocation13 + $0x148] sm:$0xff]
    %v4742 = vld [vmem:[#allocation13 + $0x150] sm:$0xff]
    %v4743 = vld [vmem:[#allocation13 + $0x158] sm:$0xff]
    %v4744 = vld [vmem:[#allocation13 + $0x160] sm:$0xff]
    %v4745 = vld [vmem:[#allocation13 + $0x168] sm:$0xff]
    %v4746 = vld [vmem:[#allocation13 + $0x170] sm:$0xff]
    %v4747 = vld [vmem:[#allocation13 + $0x178] sm:$0xff]
    %v4748 = vld [vmem:[#allocation13 + $0x180] sm:$0xff]
    %v4749 = vld [vmem:[#allocation13 + $0x188] sm:$0xff]
    %v4750 = vld [vmem:[#allocation13 + $0x190] sm:$0xff]
    %v4751 = vld [vmem:[#allocation13 + $0x198] sm:$0xff]
    %v4752 = vld [vmem:[#allocation13 + $0x1a0] sm:$0xff]
    %v4753 = vld [vmem:[#allocation13 + $0x1a8] sm:$0xff]
    %v4754 = vld [vmem:[#allocation13 + $0x1b0] sm:$0xff]
    %v4755 = vld [vmem:[#allocation13 + $0x1b8] sm:$0xff]
    %v4756 = vld [vmem:[#allocation13 + $0x1c0] sm:$0xff]
    %v4757 = vld [vmem:[#allocation13 + $0x1c8] sm:$0xff]
    %v4758 = vld [vmem:[#allocation13 + $0x1d0] sm:$0xff]
    %v4759 = vld [vmem:[#allocation13 + $0x1d8] sm:$0xff]
    %v4760 = vld [vmem:[#allocation13 + $0x1e0] sm:$0xff]
    %v4761 = vld [vmem:[#allocation13 + $0x1e8] sm:$0xff]
    %v4762 = vld [vmem:[#allocation13 + $0x1f0] sm:$0xff]
    %v4763 = vld [vmem:[#allocation13 + $0x1f8] sm:$0xff]
    %v4764 = vld [vmem:[#allocation13 + $0x200] sm:$0xff]
    %v4765 = vld [vmem:[#allocation13 + $0x208] sm:$0xff]
    %v4766 = vld [vmem:[#allocation13 + $0x210] sm:$0xff]
    %v4767 = vld [vmem:[#allocation13 + $0x218] sm:$0xff]
    %v4768 = vld [vmem:[#allocation13 + $0x220] sm:$0xff]
    %v4769 = vld [vmem:[#allocation13 + $0x228] sm:$0xff]
    %v4770 = vld [vmem:[#allocation13 + $0x230] sm:$0xff]
    %v4771 = vld [vmem:[#allocation13 + $0x238] sm:$0xff]
    %v4772 = vld [vmem:[#allocation13 + $0x240] sm:$0xff]
    %v4773 = vld [vmem:[#allocation13 + $0x248] sm:$0xff]
    %v4774 = vld [vmem:[#allocation13 + $0x250] sm:$0xff]
    %v4775 = vld [vmem:[#allocation13 + $0x258] sm:$0xff]
    %v4776 = vld [vmem:[#allocation13 + $0x260] sm:$0xff]
    %v4777 = vld [vmem:[#allocation13 + $0x268] sm:$0xff]
    %v4778 = vld [vmem:[#allocation13 + $0x270] sm:$0xff]
    %v4779 = vld [vmem:[#allocation13 + $0x278] sm:$0xff]
    %v4780 = vld [vmem:[#allocation13 + $0x280] sm:$0xff]
    %v4781 = vld [vmem:[#allocation13 + $0x288] sm:$0xff]
    %v4782 = vld [vmem:[#allocation13 + $0x290] sm:$0xff]
    %v4783 = vld [vmem:[#allocation13 + $0x298] sm:$0xff]
    %v4784 = vld [vmem:[#allocation13 + $0x2a0] sm:$0xff]
    %v4785 = vld [vmem:[#allocation13 + $0x2a8] sm:$0xff]
    %v4786 = vld [vmem:[#allocation13 + $0x2b0] sm:$0xff]
    %v4787 = vld [vmem:[#allocation13 + $0x2b8] sm:$0xff]
    %v4788 = vld [vmem:[#allocation13 + $0x2c0] sm:$0xff]
    %v4789 = vld [vmem:[#allocation13 + $0x2c8] sm:$0xff]
    %v4790 = vld [vmem:[#allocation13 + $0x2d0] sm:$0xff]
    %v4791 = vld [vmem:[#allocation13 + $0x2d8] sm:$0xff]
    %v4792 = vld [vmem:[#allocation13 + $0x2e0] sm:$0xff]
    %v4793 = vld [vmem:[#allocation13 + $0x2e8] sm:$0xff]
    %v4794 = vld [vmem:[#allocation13 + $0x2f0] sm:$0xff]
    %v4795 = vld [vmem:[#allocation13 + $0x2f8] sm:$0xff]
    %v4796 = vld [vmem:[#allocation13 + $0x300] sm:$0xff]
    %v4797 = vld [vmem:[#allocation13 + $0x308] sm:$0xff]
    %v4798 = vld [vmem:[#allocation13 + $0x310] sm:$0xff]
    %v4799 = vld [vmem:[#allocation13 + $0x318] sm:$0xff]
    %v4800 = vld [vmem:[#allocation13 + $0x320] sm:$0xff]
    %v4801 = vld [vmem:[#allocation13 + $0x328] sm:$0xff]
    %v4802 = vld [vmem:[#allocation13 + $0x330] sm:$0xff]
    %v4803 = vld [vmem:[#allocation13 + $0x338] sm:$0xff]
    %v4804 = vld [vmem:[#allocation13 + $0x340] sm:$0xff]
    %v4805 = vld [vmem:[#allocation13 + $0x348] sm:$0xff]
    %v4806 = vld [vmem:[#allocation13 + $0x350] sm:$0xff]
    %v4807 = vld [vmem:[#allocation13 + $0x358] sm:$0xff]
    %v4808 = vld [vmem:[#allocation13 + $0x360] sm:$0xff]
    %v4809 = vld [vmem:[#allocation13 + $0x368] sm:$0xff]
    %v4810 = vld [vmem:[#allocation13 + $0x370] sm:$0xff]
    %v4811 = vld [vmem:[#allocation13 + $0x378] sm:$0xff]
    %v4812 = vld [vmem:[#allocation13 + $0x380] sm:$0xff]
    %v4813 = vld [vmem:[#allocation13 + $0x388] sm:$0xff]
    %v4814 = vld [vmem:[#allocation13 + $0x390] sm:$0xff]
    %v4815 = vld [vmem:[#allocation13 + $0x398] sm:$0xff]
    %v4816 = vld [vmem:[#allocation13 + $0x3a0] sm:$0xff]
    %v4817 = vld [vmem:[#allocation13 + $0x3a8] sm:$0xff]
    %v4818 = vld [vmem:[#allocation13 + $0x3b0] sm:$0xff]
    %v4819 = vld [vmem:[#allocation13 + $0x3b8] sm:$0xff]
    %v4820 = vld [vmem:[#allocation13 + $0x3c0] sm:$0xff]
    %v4821 = vld [vmem:[#allocation13 + $0x3c8] sm:$0xff]
    %v4822 = vld [vmem:[#allocation13 + $0x3d0] sm:$0xff]
    %v4823 = vld [vmem:[#allocation13 + $0x3d8] sm:$0xff]
    %v4824 = vld [vmem:[#allocation13 + $0x3e0] sm:$0x33]
    %v4825 = vld [vmem:[#allocation13 + $0x3e8] sm:$0x33]
    %v4952 = vunpack.c.l.b16 %v4700
    %v4953 = vunpack.c.h.b16 %v4700
    %v4954 = vunpack.c.l.b16 %v4701
    %v4955 = vunpack.c.h.b16 %v4701
    %v4956 = vunpack.c.l.b16 %v4702
    %v4957 = vunpack.c.h.b16 %v4702
    %v4958 = vunpack.c.l.b16 %v4703
    %v4959 = vunpack.c.h.b16 %v4703
    %v4960 = vunpack.c.l.b16 %v4704
    %v4961 = vunpack.c.h.b16 %v4704
    %v4962 = vunpack.c.l.b16 %v4705
    %v4963 = vunpack.c.h.b16 %v4705
    %v4964 = vunpack.c.l.b16 %v4706
    %v4965 = vunpack.c.h.b16 %v4706
    %v4966 = vunpack.c.l.b16 %v4707
    %v4967 = vunpack.c.h.b16 %v4707
    %v4968 = vunpack.c.l.b16 %v4708
    %v4969 = vunpack.c.h.b16 %v4708
    %v4970 = vunpack.c.l.b16 %v4709
    %v4971 = vunpack.c.h.b16 %v4709
    %v4972 = vunpack.c.l.b16 %v4710
    %v4973 = vunpack.c.h.b16 %v4710
    %v4974 = vunpack.c.l.b16 %v4711
    %v4975 = vunpack.c.h.b16 %v4711
    %v4976 = vunpack.c.l.b16 %v4712
    %v4977 = vunpack.c.h.b16 %v4712
    %v4978 = vunpack.c.l.b16 %v4713
    %v4979 = vunpack.c.h.b16 %v4713
    %v4980 = vunpack.c.l.b16 %v4714
    %v4981 = vunpack.c.h.b16 %v4714
    %v4982 = vunpack.c.l.b16 %v4715
    %v4983 = vunpack.c.h.b16 %v4715
    %v4984 = vunpack.c.l.b16 %v4716
    %v4985 = vunpack.c.h.b16 %v4716
    %v4986 = vunpack.c.l.b16 %v4717
    %v4987 = vunpack.c.h.b16 %v4717
    %v4988 = vunpack.c.l.b16 %v4718
    %v4989 = vunpack.c.h.b16 %v4718
    %v4990 = vunpack.c.l.b16 %v4719
    %v4991 = vunpack.c.h.b16 %v4719
    %v4992 = vunpack.c.l.b16 %v4720
    %v4993 = vunpack.c.h.b16 %v4720
    %v4994 = vunpack.c.l.b16 %v4721
    %v4995 = vunpack.c.h.b16 %v4721
    %v4996 = vunpack.c.l.b16 %v4722
    %v4997 = vunpack.c.h.b16 %v4722
    %v4998 = vunpack.c.l.b16 %v4723
    %v4999 = vunpack.c.h.b16 %v4723
    %v5000 = vunpack.c.l.b16 %v4724
    %v5001 = vunpack.c.h.b16 %v4724
    %v5002 = vunpack.c.l.b16 %v4725
    %v5003 = vunpack.c.h.b16 %v4725
    %v5004 = vunpack.c.l.b16 %v4726
    %v5005 = vunpack.c.h.b16 %v4726
    %v5006 = vunpack.c.l.b16 %v4727
    %v5007 = vunpack.c.h.b16 %v4727
    %v5008 = vunpack.c.l.b16 %v4728
    %v5009 = vunpack.c.h.b16 %v4728
    %v5010 = vunpack.c.l.b16 %v4729
    %v5011 = vunpack.c.h.b16 %v4729
    %v5012 = vunpack.c.l.b16 %v4730
    %v5013 = vunpack.c.h.b16 %v4730
    %v5014 = vunpack.c.l.b16 %v4731
    %v5015 = vunpack.c.h.b16 %v4731
    %v5016 = vunpack.c.l.b16 %v4732
    %v5017 = vunpack.c.h.b16 %v4732
    %v5018 = vunpack.c.l.b16 %v4733
    %v5019 = vunpack.c.h.b16 %v4733
    %v5020 = vunpack.c.l.b16 %v4734
    %v5021 = vunpack.c.h.b16 %v4734
    %v5022 = vunpack.c.l.b16 %v4735
    %v5023 = vunpack.c.h.b16 %v4735
    %v5024 = vunpack.c.l.b16 %v4736
    %v5025 = vunpack.c.h.b16 %v4736
    %v5026 = vunpack.c.l.b16 %v4737
    %v5027 = vunpack.c.h.b16 %v4737
    %v5028 = vunpack.c.l.b16 %v4738
    %v5029 = vunpack.c.h.b16 %v4738
    %v5030 = vunpack.c.l.b16 %v4739
    %v5031 = vunpack.c.h.b16 %v4739
    %v5032 = vunpack.c.l.b16 %v4740
    %v5033 = vunpack.c.h.b16 %v4740
    %v5034 = vunpack.c.l.b16 %v4741
    %v5035 = vunpack.c.h.b16 %v4741
    %v5036 = vunpack.c.l.b16 %v4742
    %v5037 = vunpack.c.h.b16 %v4742
    %v5038 = vunpack.c.l.b16 %v4743
    %v5039 = vunpack.c.h.b16 %v4743
    %v5040 = vunpack.c.l.b16 %v4744
    %v5041 = vunpack.c.h.b16 %v4744
    %v5042 = vunpack.c.l.b16 %v4745
    %v5043 = vunpack.c.h.b16 %v4745
    %v5044 = vunpack.c.l.b16 %v4746
    %v5045 = vunpack.c.h.b16 %v4746
    %v5046 = vunpack.c.l.b16 %v4747
    %v5047 = vunpack.c.h.b16 %v4747
    %v5048 = vunpack.c.l.b16 %v4748
    %v5049 = vunpack.c.h.b16 %v4748
    %v5050 = vunpack.c.l.b16 %v4749
    %v5051 = vunpack.c.h.b16 %v4749
    %v5052 = vunpack.c.l.b16 %v4750
    %v5053 = vunpack.c.h.b16 %v4750
    %v5054 = vunpack.c.l.b16 %v4751
    %v5055 = vunpack.c.h.b16 %v4751
    %v5056 = vunpack.c.l.b16 %v4752
    %v5057 = vunpack.c.h.b16 %v4752
    %v5058 = vunpack.c.l.b16 %v4753
    %v5059 = vunpack.c.h.b16 %v4753
    %v5060 = vunpack.c.l.b16 %v4754
    %v5061 = vunpack.c.h.b16 %v4754
    %v5062 = vunpack.c.l.b16 %v4755
    %v5063 = vunpack.c.h.b16 %v4755
    %v5064 = vunpack.c.l.b16 %v4756
    %v5065 = vunpack.c.h.b16 %v4756
    %v5066 = vunpack.c.l.b16 %v4757
    %v5067 = vunpack.c.h.b16 %v4757
    %v5068 = vunpack.c.l.b16 %v4758
    %v5069 = vunpack.c.h.b16 %v4758
    %v5070 = vunpack.c.l.b16 %v4759
    %v5071 = vunpack.c.h.b16 %v4759
    %v5072 = vunpack.c.l.b16 %v4760
    %v5073 = vunpack.c.h.b16 %v4760
    %v5074 = vunpack.c.l.b16 %v4761
    %v5075 = vunpack.c.h.b16 %v4761
    %v5076 = vunpack.c.l.b16 %v4762
    %v5077 = vunpack.c.h.b16 %v4762
    %v5078 = vunpack.c.l.b16 %v4763
    %v5079 = vunpack.c.h.b16 %v4763
    %v5080 = vunpack.c.l.b16 %v4764
    %v5081 = vunpack.c.h.b16 %v4764
    %v5082 = vunpack.c.l.b16 %v4765
    %v5083 = vunpack.c.h.b16 %v4765
    %v5084 = vunpack.c.l.b16 %v4766
    %v5085 = vunpack.c.h.b16 %v4766
    %v5086 = vunpack.c.l.b16 %v4767
    %v5087 = vunpack.c.h.b16 %v4767
    %v5088 = vunpack.c.l.b16 %v4768
    %v5089 = vunpack.c.h.b16 %v4768
    %v5090 = vunpack.c.l.b16 %v4769
    %v5091 = vunpack.c.h.b16 %v4769
    %v5092 = vunpack.c.l.b16 %v4770
    %v5093 = vunpack.c.h.b16 %v4770
    %v5094 = vunpack.c.l.b16 %v4771
    %v5095 = vunpack.c.h.b16 %v4771
    %v5096 = vunpack.c.l.b16 %v4772
    %v5097 = vunpack.c.h.b16 %v4772
    %v5098 = vunpack.c.l.b16 %v4773
    %v5099 = vunpack.c.h.b16 %v4773
    %v5100 = vunpack.c.l.b16 %v4774
    %v5101 = vunpack.c.h.b16 %v4774
    %v5102 = vunpack.c.l.b16 %v4775
    %v5103 = vunpack.c.h.b16 %v4775
    %v5104 = vunpack.c.l.b16 %v4776
    %v5105 = vunpack.c.h.b16 %v4776
    %v5106 = vunpack.c.l.b16 %v4777
    %v5107 = vunpack.c.h.b16 %v4777
    %v5108 = vunpack.c.l.b16 %v4778
    %v5109 = vunpack.c.h.b16 %v4778
    %v5110 = vunpack.c.l.b16 %v4779
    %v5111 = vunpack.c.h.b16 %v4779
    %v5112 = vunpack.c.l.b16 %v4780
    %v5113 = vunpack.c.h.b16 %v4780
    %v5114 = vunpack.c.l.b16 %v4781
    %v5115 = vunpack.c.h.b16 %v4781
    %v5116 = vunpack.c.l.b16 %v4782
    %v5117 = vunpack.c.h.b16 %v4782
    %v5118 = vunpack.c.l.b16 %v4783
    %v5119 = vunpack.c.h.b16 %v4783
    %v5120 = vunpack.c.l.b16 %v4784
    %v5121 = vunpack.c.h.b16 %v4784
    %v5122 = vunpack.c.l.b16 %v4785
    %v5123 = vunpack.c.h.b16 %v4785
    %v5124 = vunpack.c.l.b16 %v4786
    %v5125 = vunpack.c.h.b16 %v4786
    %v5126 = vunpack.c.l.b16 %v4787
    %v5127 = vunpack.c.h.b16 %v4787
    %v5128 = vunpack.c.l.b16 %v4788
    %v5129 = vunpack.c.h.b16 %v4788
    %v5130 = vunpack.c.l.b16 %v4789
    %v5131 = vunpack.c.h.b16 %v4789
    %v5132 = vunpack.c.l.b16 %v4790
    %v5133 = vunpack.c.h.b16 %v4790
    %v5134 = vunpack.c.l.b16 %v4791
    %v5135 = vunpack.c.h.b16 %v4791
    %v5136 = vunpack.c.l.b16 %v4792
    %v5137 = vunpack.c.h.b16 %v4792
    %v5138 = vunpack.c.l.b16 %v4793
    %v5139 = vunpack.c.h.b16 %v4793
    %v5140 = vunpack.c.l.b16 %v4794
    %v5141 = vunpack.c.h.b16 %v4794
    %v5142 = vunpack.c.l.b16 %v4795
    %v5143 = vunpack.c.h.b16 %v4795
    %v5144 = vunpack.c.l.b16 %v4796
    %v5145 = vunpack.c.h.b16 %v4796
    %v5146 = vunpack.c.l.b16 %v4797
    %v5147 = vunpack.c.h.b16 %v4797
    %v5148 = vunpack.c.l.b16 %v4798
    %v5149 = vunpack.c.h.b16 %v4798
    %v5150 = vunpack.c.l.b16 %v4799
    %v5151 = vunpack.c.h.b16 %v4799
    %v5152 = vunpack.c.l.b16 %v4800
    %v5153 = vunpack.c.h.b16 %v4800
    %v5154 = vunpack.c.l.b16 %v4801
    %v5155 = vunpack.c.h.b16 %v4801
    %v5156 = vunpack.c.l.b16 %v4802
    %v5157 = vunpack.c.h.b16 %v4802
    %v5158 = vunpack.c.l.b16 %v4803
    %v5159 = vunpack.c.h.b16 %v4803
    %v5160 = vunpack.c.l.b16 %v4804
    %v5161 = vunpack.c.h.b16 %v4804
    %v5162 = vunpack.c.l.b16 %v4805
    %v5163 = vunpack.c.h.b16 %v4805
    %v5164 = vunpack.c.l.b16 %v4806
    %v5165 = vunpack.c.h.b16 %v4806
    %v5166 = vunpack.c.l.b16 %v4807
    %v5167 = vunpack.c.h.b16 %v4807
    %v5168 = vunpack.c.l.b16 %v4808
    %v5169 = vunpack.c.h.b16 %v4808
    %v5170 = vunpack.c.l.b16 %v4809
    %v5171 = vunpack.c.h.b16 %v4809
    %v5172 = vunpack.c.l.b16 %v4810
    %v5173 = vunpack.c.h.b16 %v4810
    %v5174 = vunpack.c.l.b16 %v4811
    %v5175 = vunpack.c.h.b16 %v4811
    %v5176 = vunpack.c.l.b16 %v4812
    %v5177 = vunpack.c.h.b16 %v4812
    %v5178 = vunpack.c.l.b16 %v4813
    %v5179 = vunpack.c.h.b16 %v4813
    %v5180 = vunpack.c.l.b16 %v4814
    %v5181 = vunpack.c.h.b16 %v4814
    %v5182 = vunpack.c.l.b16 %v4815
    %v5183 = vunpack.c.h.b16 %v4815
    %v5184 = vunpack.c.l.b16 %v4816
    %v5185 = vunpack.c.h.b16 %v4816
    %v5186 = vunpack.c.l.b16 %v4817
    %v5187 = vunpack.c.h.b16 %v4817
    %v5188 = vunpack.c.l.b16 %v4818
    %v5189 = vunpack.c.h.b16 %v4818
    %v5190 = vunpack.c.l.b16 %v4819
    %v5191 = vunpack.c.h.b16 %v4819
    %v5192 = vunpack.c.l.b16 %v4820
    %v5193 = vunpack.c.h.b16 %v4820
    %v5194 = vunpack.c.l.b16 %v4821
    %v5195 = vunpack.c.h.b16 %v4821
    %v5196 = vunpack.c.l.b16 %v4822
    %v5197 = vunpack.c.h.b16 %v4822
    %v5198 = vunpack.c.l.b16 %v4823
    %v5199 = vunpack.c.h.b16 %v4823
    %v5200 = vunpack.c.l.b16 %v4824
    %v5201 = vunpack.c.h.b16 %v4824
    %v5202 = vunpack.c.l.b16 %v4825
    %v5203 = vunpack.c.h.b16 %v4825
    %v5204 = vpack.c.b16 %v4956, %v4952
    %v5205 = vpack.c.b16 %v4957, %v4953
    %v5206 = vpack.c.b16 %v4958, %v4954
    %v5207 = vpack.c.b16 %v4959, %v4955
    %v5208 = vpack.c.b16 %v4964, %v4960
    %v5209 = vpack.c.b16 %v4965, %v4961
    %v5210 = vpack.c.b16 %v4966, %v4962
    %v5211 = vpack.c.b16 %v4967, %v4963
    %v5212 = vpack.c.b16 %v4972, %v4968
    %v5213 = vpack.c.b16 %v4973, %v4969
    %v5214 = vpack.c.b16 %v4974, %v4970
    %v5215 = vpack.c.b16 %v4975, %v4971
    %v5216 = vpack.c.b16 %v4980, %v4976
    %v5217 = vpack.c.b16 %v4981, %v4977
    %v5218 = vpack.c.b16 %v4982, %v4978
    %v5219 = vpack.c.b16 %v4983, %v4979
    %v5220 = vpack.c.b16 %v4988, %v4984
    %v5221 = vpack.c.b16 %v4989, %v4985
    %v5222 = vpack.c.b16 %v4990, %v4986
    %v5223 = vpack.c.b16 %v4991, %v4987
    %v5224 = vpack.c.b16 %v4996, %v4992
    %v5225 = vpack.c.b16 %v4997, %v4993
    %v5226 = vpack.c.b16 %v4998, %v4994
    %v5227 = vpack.c.b16 %v4999, %v4995
    %v5228 = vpack.c.b16 %v5004, %v5000
    %v5229 = vpack.c.b16 %v5005, %v5001
    %v5230 = vpack.c.b16 %v5006, %v5002
    %v5231 = vpack.c.b16 %v5007, %v5003
    %v5232 = vpack.c.b16 %v5012, %v5008
    %v5233 = vpack.c.b16 %v5013, %v5009
    %v5234 = vpack.c.b16 %v5014, %v5010
    %v5235 = vpack.c.b16 %v5015, %v5011
    %v5236 = vpack.c.b16 %v5020, %v5016
    %v5237 = vpack.c.b16 %v5021, %v5017
    %v5238 = vpack.c.b16 %v5022, %v5018
    %v5239 = vpack.c.b16 %v5023, %v5019
    %v5240 = vpack.c.b16 %v5028, %v5024
    %v5241 = vpack.c.b16 %v5029, %v5025
    %v5242 = vpack.c.b16 %v5030, %v5026
    %v5243 = vpack.c.b16 %v5031, %v5027
    %v5244 = vpack.c.b16 %v5036, %v5032
    %v5245 = vpack.c.b16 %v5037, %v5033
    %v5246 = vpack.c.b16 %v5038, %v5034
    %v5247 = vpack.c.b16 %v5039, %v5035
    %v5248 = vpack.c.b16 %v5044, %v5040
    %v5249 = vpack.c.b16 %v5045, %v5041
    %v5250 = vpack.c.b16 %v5046, %v5042
    %v5251 = vpack.c.b16 %v5047, %v5043
    %v5252 = vpack.c.b16 %v5052, %v5048
    %v5253 = vpack.c.b16 %v5053, %v5049
    %v5254 = vpack.c.b16 %v5054, %v5050
    %v5255 = vpack.c.b16 %v5055, %v5051
    %v5256 = vpack.c.b16 %v5060, %v5056
    %v5257 = vpack.c.b16 %v5061, %v5057
    %v5258 = vpack.c.b16 %v5062, %v5058
    %v5259 = vpack.c.b16 %v5063, %v5059
    %v5260 = vpack.c.b16 %v5068, %v5064
    %v5261 = vpack.c.b16 %v5069, %v5065
    %v5262 = vpack.c.b16 %v5070, %v5066
    %v5263 = vpack.c.b16 %v5071, %v5067
    %v5264 = vpack.c.b16 %v5076, %v5072
    %v5265 = vpack.c.b16 %v5077, %v5073
    %v5266 = vpack.c.b16 %v5078, %v5074
    %v5267 = vpack.c.b16 %v5079, %v5075
    %v5268 = vpack.c.b16 %v5084, %v5080
    %v5269 = vpack.c.b16 %v5085, %v5081
    %v5270 = vpack.c.b16 %v5086, %v5082
    %v5271 = vpack.c.b16 %v5087, %v5083
    %v5272 = vpack.c.b16 %v5092, %v5088
    %v5273 = vpack.c.b16 %v5093, %v5089
    %v5274 = vpack.c.b16 %v5094, %v5090
    %v5275 = vpack.c.b16 %v5095, %v5091
    %v5276 = vpack.c.b16 %v5100, %v5096
    %v5277 = vpack.c.b16 %v5101, %v5097
    %v5278 = vpack.c.b16 %v5102, %v5098
    %v5279 = vpack.c.b16 %v5103, %v5099
    %v5280 = vpack.c.b16 %v5108, %v5104
    %v5281 = vpack.c.b16 %v5109, %v5105
    %v5282 = vpack.c.b16 %v5110, %v5106
    %v5283 = vpack.c.b16 %v5111, %v5107
    %v5284 = vpack.c.b16 %v5116, %v5112
    %v5285 = vpack.c.b16 %v5117, %v5113
    %v5286 = vpack.c.b16 %v5118, %v5114
    %v5287 = vpack.c.b16 %v5119, %v5115
    %v5288 = vpack.c.b16 %v5124, %v5120
    %v5289 = vpack.c.b16 %v5125, %v5121
    %v5290 = vpack.c.b16 %v5126, %v5122
    %v5291 = vpack.c.b16 %v5127, %v5123
    %v5292 = vpack.c.b16 %v5132, %v5128
    %v5293 = vpack.c.b16 %v5133, %v5129
    %v5294 = vpack.c.b16 %v5134, %v5130
    %v5295 = vpack.c.b16 %v5135, %v5131
    %v5296 = vpack.c.b16 %v5140, %v5136
    %v5297 = vpack.c.b16 %v5141, %v5137
    %v5298 = vpack.c.b16 %v5142, %v5138
    %v5299 = vpack.c.b16 %v5143, %v5139
    %v5300 = vpack.c.b16 %v5148, %v5144
    %v5301 = vpack.c.b16 %v5149, %v5145
    %v5302 = vpack.c.b16 %v5150, %v5146
    %v5303 = vpack.c.b16 %v5151, %v5147
    %v5304 = vpack.c.b16 %v5156, %v5152
    %v5305 = vpack.c.b16 %v5157, %v5153
    %v5306 = vpack.c.b16 %v5158, %v5154
    %v5307 = vpack.c.b16 %v5159, %v5155
    %v5308 = vpack.c.b16 %v5164, %v5160
    %v5309 = vpack.c.b16 %v5165, %v5161
    %v5310 = vpack.c.b16 %v5166, %v5162
    %v5311 = vpack.c.b16 %v5167, %v5163
    %v5312 = vpack.c.b16 %v5172, %v5168
    %v5313 = vpack.c.b16 %v5173, %v5169
    %v5314 = vpack.c.b16 %v5174, %v5170
    %v5315 = vpack.c.b16 %v5175, %v5171
    %v5316 = vpack.c.b16 %v5180, %v5176
    %v5317 = vpack.c.b16 %v5181, %v5177
    %v5318 = vpack.c.b16 %v5182, %v5178
    %v5319 = vpack.c.b16 %v5183, %v5179
    %v5320 = vpack.c.b16 %v5188, %v5184
    %v5321 = vpack.c.b16 %v5189, %v5185
    %v5322 = vpack.c.b16 %v5190, %v5186
    %v5323 = vpack.c.b16 %v5191, %v5187
    %v5324 = vpack.c.b16 %v5196, %v5192
    %v5325 = vpack.c.b16 %v5197, %v5193
    %v5326 = vpack.c.b16 %v5198, %v5194
    %v5327 = vpack.c.b16 %v5199, %v5195
    %v5328 = vpack.c.b16 %v5200, %v5200
    %v5329 = vpack.c.b16 %v5201, %v5201
    %v5330 = vpack.c.b16 %v5202, %v5202
    %v5331 = vpack.c.b16 %v5203, %v5203
    %vm5456 = vcmask 941056
    %v5458 = vsel %vm5456, %v4699, 0
    %vm5460 = vcmask 1041408
    %v5461 = vsel %vm339, 4294967295, 65535
    %v5462 = vsel %vm5460, %v5461, 0
    %v5464 = vand.u32 %v5328, %v5462
    %v5467 = vand.u32 %v5329, %v5462
    %v5470 = vand.u32 %v5330, %v5462
    %v5473 = vand.u32 %v5331, %v5462
    %5475 = vmatprep.subr.bf16.mxu0 %v5205
    %5476 = vmatpush1.bf16.msra.mxu0 %v5204
    %5477 = vmatprep.subr.bf16.mxu0 %v5209
    %5478 = vmatpush1.bf16.msra.mxu0 %v5208
    %5479 = vmatprep.subr.bf16.mxu0 %v5213
    %5480 = vmatpush1.bf16.msra.mxu0 %v5212
    %5481 = vmatprep.subr.bf16.mxu0 %v5217
    %5482 = vmatpush1.bf16.msra.mxu0 %v5216
    %5483 = vmatprep.subr.bf16.mxu0 %v5221
    %5484 = vmatpush1.bf16.msra.mxu0 %v5220
    %5485 = vmatprep.subr.bf16.mxu0 %v5225
    %5486 = vmatpush1.bf16.msra.mxu0 %v5224
    %5487 = vmatprep.subr.bf16.mxu0 %v5229
    %5488 = vmatpush1.bf16.msra.mxu0 %v5228
    %5489 = vmatprep.subr.bf16.mxu0 %v5233
    %5490 = vmatpush1.bf16.msra.mxu0 %v5232
    %5491 = vmatprep.subr.bf16.mxu0 %v5237
    %5492 = vmatpush1.bf16.msra.mxu0 %v5236
    %5493 = vmatprep.subr.bf16.mxu0 %v5241
    %5494 = vmatpush1.bf16.msra.mxu0 %v5240
    %5495 = vmatprep.subr.bf16.mxu0 %v5245
    %5496 = vmatpush1.bf16.msra.mxu0 %v5244
    %5497 = vmatprep.subr.bf16.mxu0 %v5249
    %5498 = vmatpush1.bf16.msra.mxu0 %v5248
    %5499 = vmatprep.subr.bf16.mxu0 %v5253
    %5500 = vmatpush1.bf16.msra.mxu0 %v5252
    %5501 = vmatprep.subr.bf16.mxu0 %v5257
    %5502 = vmatpush1.bf16.msra.mxu0 %v5256
    %5503 = vmatprep.subr.bf16.mxu0 %v5261
    %5504 = vmatpush1.bf16.msra.mxu0 %v5260
    %5505 = vmatprep.subr.bf16.mxu0 %v5265
    %5506 = vmatpush1.bf16.msra.mxu0 %v5264
    %5507 = vmatprep.mubr.bf16.mxu0 %v4697
    %5508 = vmatmul.mubr.bf16.gmra.mrb[0].mxu0 %v4696
    %v5509 = vpop.f32.mrb[0].mxu0
    %v5510 = vadd.f32 0.0, %v5509
    %v5511 = vpop.f32.mrb[0].mxu0
    %v5512 = vadd.f32 0.0, %v5511
    %v5513 = vpop.f32.mrb[0].mxu0
    %v5514 = vpop.f32.mrb[0].mxu0
    %5515 = vdwg.mxu0
    %5516 = vmatprep.subr.bf16.mxu0 %v5269
    %5517 = vmatpush1.bf16.msra.mxu0 %v5268
    %5518 = vmatprep.subr.bf16.mxu0 %v5273
    %5519 = vmatpush1.bf16.msra.mxu0 %v5272
    %5520 = vmatprep.subr.bf16.mxu0 %v5277
    %5521 = vmatpush1.bf16.msra.mxu0 %v5276
    %5522 = vmatprep.subr.bf16.mxu0 %v5281
    %5523 = vmatpush1.bf16.msra.mxu0 %v5280
    %5524 = vmatprep.subr.bf16.mxu0 %v5285
    %5525 = vmatpush1.bf16.msra.mxu0 %v5284
    %5526 = vmatprep.subr.bf16.mxu0 %v5289
    %5527 = vmatpush1.bf16.msra.mxu0 %v5288
    %5528 = vmatprep.subr.bf16.mxu0 %v5293
    %5529 = vmatpush1.bf16.msra.mxu0 %v5292
    %5530 = vmatprep.subr.bf16.mxu0 %v5297
    %5531 = vmatpush1.bf16.msra.mxu0 %v5296
    %5532 = vmatprep.subr.bf16.mxu0 %v5301
    %5533 = vmatpush1.bf16.msra.mxu0 %v5300
    %5534 = vmatprep.subr.bf16.mxu0 %v5305
    %5535 = vmatpush1.bf16.msra.mxu0 %v5304
    %5536 = vmatprep.subr.bf16.mxu0 %v5309
    %5537 = vmatpush1.bf16.msra.mxu0 %v5308
    %5538 = vmatprep.subr.bf16.mxu0 %v5313
    %5539 = vmatpush1.bf16.msra.mxu0 %v5312
    %5540 = vmatprep.subr.bf16.mxu0 %v5317
    %5541 = vmatpush1.bf16.msra.mxu0 %v5316
    %5542 = vmatprep.subr.bf16.mxu0 %v5321
    %5543 = vmatpush1.bf16.msra.mxu0 %v5320
    %5544 = vmatprep.subr.bf16.mxu0 %v5325
    %5545 = vmatpush1.bf16.msra.mxu0 %v5324
    %5546 = vmatprep.subr.bf16.mxu0 %v5467
    %5547 = vmatpush1.bf16.msra.mxu0 %v5464
    %5548 = vmatprep.mubr.bf16.mxu0 %v5458
    %5549 = vmatmul.mubr.bf16.gmra.mrb[0].mxu0 %v4698
    %v5550 = vpop.f32.mrb[0].mxu0
    %v5551 = vadd.f32 %v5510, %v5550
    %v5552 = vpop.f32.mrb[0].mxu0
    %v5553 = vadd.f32 %v5512, %v5552
    %v5554 = vpop.f32.mrb[0].mxu0
    %v5555 = vpop.f32.mrb[0].mxu0
    %5556 = vdwg.mxu0
    %5557 = vmatprep.subr.bf16.mxu0 %v5207
    %5558 = vmatpush1.bf16.msra.mxu0 %v5206
    %5559 = vmatprep.subr.bf16.mxu0 %v5211
    %5560 = vmatpush1.bf16.msra.mxu0 %v5210
    %5561 = vmatprep.subr.bf16.mxu0 %v5215
    %5562 = vmatpush1.bf16.msra.mxu0 %v5214
    %5563 = vmatprep.subr.bf16.mxu0 %v5219
    %5564 = vmatpush1.bf16.msra.mxu0 %v5218
    %5565 = vmatprep.subr.bf16.mxu0 %v5223
    %5566 = vmatpush1.bf16.msra.mxu0 %v5222
    %5567 = vmatprep.subr.bf16.mxu0 %v5227
    %5568 = vmatpush1.bf16.msra.mxu0 %v5226
    %5569 = vmatprep.subr.bf16.mxu0 %v5231
    %5570 = vmatpush1.bf16.msra.mxu0 %v5230
    %5571 = vmatprep.subr.bf16.mxu0 %v5235
    %5572 = vmatpush1.bf16.msra.mxu0 %v5234
    %5573 = vmatprep.subr.bf16.mxu0 %v5239
    %5574 = vmatpush1.bf16.msra.mxu0 %v5238
    %5575 = vmatprep.subr.bf16.mxu0 %v5243
    %5576 = vmatpush1.bf16.msra.mxu0 %v5242
    %5577 = vmatprep.subr.bf16.mxu0 %v5247
    %5578 = vmatpush1.bf16.msra.mxu0 %v5246
    %5579 = vmatprep.subr.bf16.mxu0 %v5251
    %5580 = vmatpush1.bf16.msra.mxu0 %v5250
    %5581 = vmatprep.subr.bf16.mxu0 %v5255
    %5582 = vmatpush1.bf16.msra.mxu0 %v5254
    %5583 = vmatprep.subr.bf16.mxu0 %v5259
    %5584 = vmatpush1.bf16.msra.mxu0 %v5258
    %5585 = vmatprep.subr.bf16.mxu0 %v5263
    %5586 = vmatpush1.bf16.msra.mxu0 %v5262
    %5587 = vmatprep.subr.bf16.mxu0 %v5267
    %5588 = vmatpush1.bf16.msra.mxu0 %v5266
    %5589 = vmatprep.mubr.bf16.mxu0 %v4697
    %5590 = vmatmul.mubr.bf16.gmra.mrb[0].mxu0 %v4696
    %v5591 = vpop.f32.mrb[0].mxu0
    %v5592 = vadd.f32 0.0, %v5591
    %v5593 = vpop.f32.mrb[0].mxu0
    %v5594 = vadd.f32 0.0, %v5593
    %v5595 = vpop.f32.mrb[0].mxu0
    %v5596 = vpop.f32.mrb[0].mxu0
    %5597 = vdwg.mxu0
    %5598 = vmatprep.subr.bf16.mxu0 %v5271
    %5599 = vmatpush1.bf16.msra.mxu0 %v5270
    %5600 = vmatprep.subr.bf16.mxu0 %v5275
    %5601 = vmatpush1.bf16.msra.mxu0 %v5274
    %5602 = vmatprep.subr.bf16.mxu0 %v5279
    %5603 = vmatpush1.bf16.msra.mxu0 %v5278
    %5604 = vmatprep.subr.bf16.mxu0 %v5283
    %5605 = vmatpush1.bf16.msra.mxu0 %v5282
    %5606 = vmatprep.subr.bf16.mxu0 %v5287
    %5607 = vmatpush1.bf16.msra.mxu0 %v5286
    %5608 = vmatprep.subr.bf16.mxu0 %v5291
    %5609 = vmatpush1.bf16.msra.mxu0 %v5290
    %5610 = vmatprep.subr.bf16.mxu0 %v5295
    %5611 = vmatpush1.bf16.msra.mxu0 %v5294
    %5612 = vmatprep.subr.bf16.mxu0 %v5299
    %5613 = vmatpush1.bf16.msra.mxu0 %v5298
    %5614 = vmatprep.subr.bf16.mxu0 %v5303
    %5615 = vmatpush1.bf16.msra.mxu0 %v5302
    %5616 = vmatprep.subr.bf16.mxu0 %v5307
    %5617 = vmatpush1.bf16.msra.mxu0 %v5306
    %5618 = vmatprep.subr.bf16.mxu0 %v5311
    %5619 = vmatpush1.bf16.msra.mxu0 %v5310
    %5620 = vmatprep.subr.bf16.mxu0 %v5315
    %5621 = vmatpush1.bf16.msra.mxu0 %v5314
    %5622 = vmatprep.subr.bf16.mxu0 %v5319
    %5623 = vmatpush1.bf16.msra.mxu0 %v5318
    %5624 = vmatprep.subr.bf16.mxu0 %v5323
    %5625 = vmatpush1.bf16.msra.mxu0 %v5322
    %5626 = vmatprep.subr.bf16.mxu0 %v5327
    %5627 = vmatpush1.bf16.msra.mxu0 %v5326
    %5628 = vmatprep.subr.bf16.mxu0 %v5473
    %5629 = vmatpush1.bf16.msra.mxu0 %v5470
    %5630 = vmatprep.mubr.bf16.mxu0 %v5458
    %5631 = vmatmul.mubr.bf16.gmra.mrb[0].mxu0 %v4698
    %v5632 = vpop.f32.mrb[0].mxu0
    %v5633 = vadd.f32 %v5592, %v5632
    %v5634 = vpop.f32.mrb[0].mxu0
    %v5635 = vadd.f32 %v5594, %v5634
    %v5636 = vpop.f32.mrb[0].mxu0
    %v5637 = vpop.f32.mrb[0].mxu0
    %5638 = vdwg.mxu0
    %5639 = vst [vmem:[#allocation5] sm:$0xff] %v5551
    %5640 = vst [vmem:[#allocation5 + $0x8] sm:$0xff] %v5553
    %5641 = vst [vmem:[#allocation5 + $0x10] sm:$0xff] %v5633
    %5642 = vst.msk [vmem:[#allocation5 + $0x18] sm:$0xff] %vm2313, %v5635
    %v5643 = vld [vmem:[#allocation4 + $0x40] sm:$0xff]
    %v5644 = vld [vmem:[#allocation4 + $0x48] sm:$0xff]
    %v5645 = vld [vmem:[#allocation4 + $0x50] sm:$0xff]
    %v5646 = vld [vmem:[#allocation4 + $0x58] sm:$0xff]
    %v5647 = vld [vmem:[#allocation4 + $0x60] sm:$0xff]
    %v5648 = vld [vmem:[#allocation4 + $0x68] sm:$0xff]
    %v5649 = vld [vmem:[#allocation4 + $0x70] sm:$0xff]
    %v5650 = vld [vmem:[#allocation4 + $0x78] sm:$0xff]
    %v5651 = vmax.f32 %v5643, %v5647
    %v5652 = vmax.f32 %v5644, %v5648
    %v5653 = vmax.f32 %v5645, %v5649
    %v5654 = vmax.f32 %v5646, %v5650
    %5659 = vrot.lane.b32.xlu0 %v5651, 127
    %v5660 = vpop.permute.xlu0 %5659
    %5661 = vrot.lane.b32.xlu0 %v5652, 127
    %v5662 = vpop.permute.xlu0 %5661
    %5663 = vrot.lane.b32.xlu0 %v5653, 127
    %v5664 = vpop.permute.xlu0 %5663
    %5665 = vrot.lane.b32.xlu0 %v5654, 127
    %v5666 = vpop.permute.xlu0 %5665
    %v5667 = vsel %vm762, %v5660, %v5662
    %v5668 = vsel %vm762, %v5662, %v5664
    %v5669 = vsel %vm762, %v5664, %v5666
    %v5674 = vmax.f32 %v5651, %v5667
    %v5675 = vmax.f32 %v5652, %v5668
    %v5676 = vmax.f32 %v5653, %v5669
    %v5677 = vmax.f32 %v5654, %v5666
    %v5678 = vadd.f32 %v5674, %v4671
    %v5679 = vadd.f32 %v5675, %v4675
    %v5680 = vadd.f32 %v5676, %v4679
    %v5681 = vadd.f32 %v5677, %v4683
    %v5682 = vmax.f32 %v5678, 0.0
    %v5683 = vmax.f32 %v5679, 0.0
    %v5684 = vmax.f32 %v5680, 0.0
    %v5685 = vmax.f32 %v5681, 0.0
    %v5686 = vpack.c.bf16 %v5682, %v5682
    %v5687 = vpack.c.bf16 %v5683, %v5683
    %v5688 = vpack.c.bf16 %v5684, %v5684
    %v5689 = vpack.c.bf16 %v5685, %v5685
    %s5690 = scalar_lea.vmem [#allocation13], 1008
    %v5691 = vld [vmem:[%s5690] sm:$0xff]
    %v5692 = vld [vmem:[%s5690 + $0x8] sm:$0xff]
    %v5693 = vld [vmem:[%s5690 + $0x10] sm:$0xff]
    %v5694 = vld [vmem:[%s5690 + $0x18] sm:$0xff]
    %v5695 = vld [vmem:[%s5690 + $0x20] sm:$0xff]
    %v5696 = vld [vmem:[%s5690 + $0x28] sm:$0xff]
    %v5697 = vld [vmem:[%s5690 + $0x30] sm:$0xff]
    %v5698 = vld [vmem:[%s5690 + $0x38] sm:$0xff]
    %v5699 = vld [vmem:[%s5690 + $0x40] sm:$0xff]
    %v5700 = vld [vmem:[%s5690 + $0x48] sm:$0xff]
    %v5701 = vld [vmem:[%s5690 + $0x50] sm:$0xff]
    %v5702 = vld [vmem:[%s5690 + $0x58] sm:$0xff]
    %v5703 = vld [vmem:[%s5690 + $0x60] sm:$0xff]
    %v5704 = vld [vmem:[%s5690 + $0x68] sm:$0xff]
    %v5705 = vld [vmem:[%s5690 + $0x70] sm:$0xff]
    %v5706 = vld [vmem:[%s5690 + $0x78] sm:$0xff]
    %v5707 = vld [vmem:[%s5690 + $0x80] sm:$0xff]
    %v5708 = vld [vmem:[%s5690 + $0x88] sm:$0xff]
    %v5709 = vld [vmem:[%s5690 + $0x90] sm:$0xff]
    %v5710 = vld [vmem:[%s5690 + $0x98] sm:$0xff]
    %v5711 = vld [vmem:[%s5690 + $0xa0] sm:$0xff]
    %v5712 = vld [vmem:[%s5690 + $0xa8] sm:$0xff]
    %v5713 = vld [vmem:[%s5690 + $0xb0] sm:$0xff]
    %v5714 = vld [vmem:[%s5690 + $0xb8] sm:$0xff]
    %v5715 = vld [vmem:[%s5690 + $0xc0] sm:$0xff]
    %v5716 = vld [vmem:[%s5690 + $0xc8] sm:$0xff]
    %v5717 = vld [vmem:[%s5690 + $0xd0] sm:$0xff]
    %v5718 = vld [vmem:[%s5690 + $0xd8] sm:$0xff]
    %v5719 = vld [vmem:[%s5690 + $0xe0] sm:$0xff]
    %v5720 = vld [vmem:[%s5690 + $0xe8] sm:$0xff]
    %v5721 = vld [vmem:[%s5690 + $0xf0] sm:$0xff]
    %v5722 = vld [vmem:[%s5690 + $0xf8] sm:$0xff]
    %v5723 = vld [vmem:[%s5690 + $0x100] sm:$0xff]
    %v5724 = vld [vmem:[%s5690 + $0x108] sm:$0xff]
    %v5725 = vld [vmem:[%s5690 + $0x110] sm:$0xff]
    %v5726 = vld [vmem:[%s5690 + $0x118] sm:$0xff]
    %v5727 = vld [vmem:[%s5690 + $0x120] sm:$0xff]
    %v5728 = vld [vmem:[%s5690 + $0x128] sm:$0xff]
    %v5729 = vld [vmem:[%s5690 + $0x130] sm:$0xff]
    %v5730 = vld [vmem:[%s5690 + $0x138] sm:$0xff]
    %v5731 = vld [vmem:[%s5690 + $0x140] sm:$0xff]
    %v5732 = vld [vmem:[%s5690 + $0x148] sm:$0xff]
    %v5733 = vld [vmem:[%s5690 + $0x150] sm:$0xff]
    %v5734 = vld [vmem:[%s5690 + $0x158] sm:$0xff]
    %v5735 = vld [vmem:[%s5690 + $0x160] sm:$0xff]
    %v5736 = vld [vmem:[%s5690 + $0x168] sm:$0xff]
    %v5737 = vld [vmem:[%s5690 + $0x170] sm:$0xff]
    %v5738 = vld [vmem:[%s5690 + $0x178] sm:$0xff]
    %v5739 = vld [vmem:[%s5690 + $0x180] sm:$0xff]
    %v5740 = vld [vmem:[%s5690 + $0x188] sm:$0xff]
    %v5741 = vld [vmem:[%s5690 + $0x190] sm:$0xff]
    %v5742 = vld [vmem:[%s5690 + $0x198] sm:$0xff]
    %v5743 = vld [vmem:[%s5690 + $0x1a0] sm:$0xff]
    %v5744 = vld [vmem:[%s5690 + $0x1a8] sm:$0xff]
    %v5745 = vld [vmem:[%s5690 + $0x1b0] sm:$0xff]
    %v5746 = vld [vmem:[%s5690 + $0x1b8] sm:$0xff]
    %v5747 = vld [vmem:[%s5690 + $0x1c0] sm:$0xff]
    %v5748 = vld [vmem:[%s5690 + $0x1c8] sm:$0xff]
    %v5749 = vld [vmem:[%s5690 + $0x1d0] sm:$0xff]
    %v5750 = vld [vmem:[%s5690 + $0x1d8] sm:$0xff]
    %v5751 = vld [vmem:[%s5690 + $0x1e0] sm:$0xff]
    %v5752 = vld [vmem:[%s5690 + $0x1e8] sm:$0xff]
    %v5753 = vld [vmem:[%s5690 + $0x1f0] sm:$0xff]
    %v5754 = vld [vmem:[%s5690 + $0x1f8] sm:$0xff]
    %v5755 = vld [vmem:[%s5690 + $0x200] sm:$0xff]
    %v5756 = vld [vmem:[%s5690 + $0x208] sm:$0xff]
    %v5757 = vld [vmem:[%s5690 + $0x210] sm:$0xff]
    %v5758 = vld [vmem:[%s5690 + $0x218] sm:$0xff]
    %v5759 = vld [vmem:[%s5690 + $0x220] sm:$0xff]
    %v5760 = vld [vmem:[%s5690 + $0x228] sm:$0xff]
    %v5761 = vld [vmem:[%s5690 + $0x230] sm:$0xff]
    %v5762 = vld [vmem:[%s5690 + $0x238] sm:$0xff]
    %v5763 = vld [vmem:[%s5690 + $0x240] sm:$0xff]
    %v5764 = vld [vmem:[%s5690 + $0x248] sm:$0xff]
    %v5765 = vld [vmem:[%s5690 + $0x250] sm:$0xff]
    %v5766 = vld [vmem:[%s5690 + $0x258] sm:$0xff]
    %v5767 = vld [vmem:[%s5690 + $0x260] sm:$0xff]
    %v5768 = vld [vmem:[%s5690 + $0x268] sm:$0xff]
    %v5769 = vld [vmem:[%s5690 + $0x270] sm:$0xff]
    %v5770 = vld [vmem:[%s5690 + $0x278] sm:$0xff]
    %v5771 = vld [vmem:[%s5690 + $0x280] sm:$0xff]
    %v5772 = vld [vmem:[%s5690 + $0x288] sm:$0xff]
    %v5773 = vld [vmem:[%s5690 + $0x290] sm:$0xff]
    %v5774 = vld [vmem:[%s5690 + $0x298] sm:$0xff]
    %v5775 = vld [vmem:[%s5690 + $0x2a0] sm:$0xff]
    %v5776 = vld [vmem:[%s5690 + $0x2a8] sm:$0xff]
    %v5777 = vld [vmem:[%s5690 + $0x2b0] sm:$0xff]
    %v5778 = vld [vmem:[%s5690 + $0x2b8] sm:$0xff]
    %v5779 = vld [vmem:[%s5690 + $0x2c0] sm:$0xff]
    %v5780 = vld [vmem:[%s5690 + $0x2c8] sm:$0xff]
    %v5781 = vld [vmem:[%s5690 + $0x2d0] sm:$0xff]
    %v5782 = vld [vmem:[%s5690 + $0x2d8] sm:$0xff]
    %v5783 = vld [vmem:[%s5690 + $0x2e0] sm:$0xff]
    %v5784 = vld [vmem:[%s5690 + $0x2e8] sm:$0xff]
    %v5785 = vld [vmem:[%s5690 + $0x2f0] sm:$0xff]
    %v5786 = vld [vmem:[%s5690 + $0x2f8] sm:$0xff]
    %v5787 = vld [vmem:[%s5690 + $0x300] sm:$0xff]
    %v5788 = vld [vmem:[%s5690 + $0x308] sm:$0xff]
    %v5789 = vld [vmem:[%s5690 + $0x310] sm:$0xff]
    %v5790 = vld [vmem:[%s5690 + $0x318] sm:$0xff]
    %v5791 = vld [vmem:[%s5690 + $0x320] sm:$0xff]
    %v5792 = vld [vmem:[%s5690 + $0x328] sm:$0xff]
    %v5793 = vld [vmem:[%s5690 + $0x330] sm:$0xff]
    %v5794 = vld [vmem:[%s5690 + $0x338] sm:$0xff]
    %v5795 = vld [vmem:[%s5690 + $0x340] sm:$0xff]
    %v5796 = vld [vmem:[%s5690 + $0x348] sm:$0xff]
    %v5797 = vld [vmem:[%s5690 + $0x350] sm:$0xff]
    %v5798 = vld [vmem:[%s5690 + $0x358] sm:$0xff]
    %v5799 = vld [vmem:[%s5690 + $0x360] sm:$0xff]
    %v5800 = vld [vmem:[%s5690 + $0x368] sm:$0xff]
    %v5801 = vld [vmem:[%s5690 + $0x370] sm:$0xff]
    %v5802 = vld [vmem:[%s5690 + $0x378] sm:$0xff]
    %v5803 = vld [vmem:[%s5690 + $0x380] sm:$0xff]
    %v5804 = vld [vmem:[%s5690 + $0x388] sm:$0xff]
    %v5805 = vld [vmem:[%s5690 + $0x390] sm:$0xff]
    %v5806 = vld [vmem:[%s5690 + $0x398] sm:$0xff]
    %v5807 = vld [vmem:[%s5690 + $0x3a0] sm:$0xff]
    %v5808 = vld [vmem:[%s5690 + $0x3a8] sm:$0xff]
    %v5809 = vld [vmem:[%s5690 + $0x3b0] sm:$0xff]
    %v5810 = vld [vmem:[%s5690 + $0x3b8] sm:$0xff]
    %v5811 = vld [vmem:[%s5690 + $0x3c0] sm:$0xff]
    %v5812 = vld [vmem:[%s5690 + $0x3c8] sm:$0xff]
    %v5813 = vld [vmem:[%s5690 + $0x3d0] sm:$0xff]
    %v5814 = vld [vmem:[%s5690 + $0x3d8] sm:$0xff]
    %v5815 = vld [vmem:[%s5690 + $0x3e0] sm:$0x33]
    %v5816 = vld [vmem:[%s5690 + $0x3e8] sm:$0x33]
    %v5943 = vunpack.c.l.b16 %v5691
    %v5944 = vunpack.c.h.b16 %v5691
    %v5945 = vunpack.c.l.b16 %v5692
    %v5946 = vunpack.c.h.b16 %v5692
    %v5947 = vunpack.c.l.b16 %v5693
    %v5948 = vunpack.c.h.b16 %v5693
    %v5949 = vunpack.c.l.b16 %v5694
    %v5950 = vunpack.c.h.b16 %v5694
    %v5951 = vunpack.c.l.b16 %v5695
    %v5952 = vunpack.c.h.b16 %v5695
    %v5953 = vunpack.c.l.b16 %v5696
    %v5954 = vunpack.c.h.b16 %v5696
    %v5955 = vunpack.c.l.b16 %v5697
    %v5956 = vunpack.c.h.b16 %v5697
    %v5957 = vunpack.c.l.b16 %v5698
    %v5958 = vunpack.c.h.b16 %v5698
    %v5959 = vunpack.c.l.b16 %v5699
    %v5960 = vunpack.c.h.b16 %v5699
    %v5961 = vunpack.c.l.b16 %v5700
    %v5962 = vunpack.c.h.b16 %v5700
    %v5963 = vunpack.c.l.b16 %v5701
    %v5964 = vunpack.c.h.b16 %v5701
    %v5965 = vunpack.c.l.b16 %v5702
    %v5966 = vunpack.c.h.b16 %v5702
    %v5967 = vunpack.c.l.b16 %v5703
    %v5968 = vunpack.c.h.b16 %v5703
    %v5969 = vunpack.c.l.b16 %v5704
    %v5970 = vunpack.c.h.b16 %v5704
    %v5971 = vunpack.c.l.b16 %v5705
    %v5972 = vunpack.c.h.b16 %v5705
    %v5973 = vunpack.c.l.b16 %v5706
    %v5974 = vunpack.c.h.b16 %v5706
    %v5975 = vunpack.c.l.b16 %v5707
    %v5976 = vunpack.c.h.b16 %v5707
    %v5977 = vunpack.c.l.b16 %v5708
    %v5978 = vunpack.c.h.b16 %v5708
    %v5979 = vunpack.c.l.b16 %v5709
    %v5980 = vunpack.c.h.b16 %v5709
    %v5981 = vunpack.c.l.b16 %v5710
    %v5982 = vunpack.c.h.b16 %v5710
    %v5983 = vunpack.c.l.b16 %v5711
    %v5984 = vunpack.c.h.b16 %v5711
    %v5985 = vunpack.c.l.b16 %v5712
    %v5986 = vunpack.c.h.b16 %v5712
    %v5987 = vunpack.c.l.b16 %v5713
    %v5988 = vunpack.c.h.b16 %v5713
    %v5989 = vunpack.c.l.b16 %v5714
    %v5990 = vunpack.c.h.b16 %v5714
    %v5991 = vunpack.c.l.b16 %v5715
    %v5992 = vunpack.c.h.b16 %v5715
    %v5993 = vunpack.c.l.b16 %v5716
    %v5994 = vunpack.c.h.b16 %v5716
    %v5995 = vunpack.c.l.b16 %v5717
    %v5996 = vunpack.c.h.b16 %v5717
    %v5997 = vunpack.c.l.b16 %v5718
    %v5998 = vunpack.c.h.b16 %v5718
    %v5999 = vunpack.c.l.b16 %v5719
    %v6000 = vunpack.c.h.b16 %v5719
    %v6001 = vunpack.c.l.b16 %v5720
    %v6002 = vunpack.c.h.b16 %v5720
    %v6003 = vunpack.c.l.b16 %v5721
    %v6004 = vunpack.c.h.b16 %v5721
    %v6005 = vunpack.c.l.b16 %v5722
    %v6006 = vunpack.c.h.b16 %v5722
    %v6007 = vunpack.c.l.b16 %v5723
    %v6008 = vunpack.c.h.b16 %v5723
    %v6009 = vunpack.c.l.b16 %v5724
    %v6010 = vunpack.c.h.b16 %v5724
    %v6011 = vunpack.c.l.b16 %v5725
    %v6012 = vunpack.c.h.b16 %v5725
    %v6013 = vunpack.c.l.b16 %v5726
    %v6014 = vunpack.c.h.b16 %v5726
    %v6015 = vunpack.c.l.b16 %v5727
    %v6016 = vunpack.c.h.b16 %v5727
    %v6017 = vunpack.c.l.b16 %v5728
    %v6018 = vunpack.c.h.b16 %v5728
    %v6019 = vunpack.c.l.b16 %v5729
    %v6020 = vunpack.c.h.b16 %v5729
    %v6021 = vunpack.c.l.b16 %v5730
    %v6022 = vunpack.c.h.b16 %v5730
    %v6023 = vunpack.c.l.b16 %v5731
    %v6024 = vunpack.c.h.b16 %v5731
    %v6025 = vunpack.c.l.b16 %v5732
    %v6026 = vunpack.c.h.b16 %v5732
    %v6027 = vunpack.c.l.b16 %v5733
    %v6028 = vunpack.c.h.b16 %v5733
    %v6029 = vunpack.c.l.b16 %v5734
    %v6030 = vunpack.c.h.b16 %v5734
    %v6031 = vunpack.c.l.b16 %v5735
    %v6032 = vunpack.c.h.b16 %v5735
    %v6033 = vunpack.c.l.b16 %v5736
    %v6034 = vunpack.c.h.b16 %v5736
    %v6035 = vunpack.c.l.b16 %v5737
    %v6036 = vunpack.c.h.b16 %v5737
    %v6037 = vunpack.c.l.b16 %v5738
    %v6038 = vunpack.c.h.b16 %v5738
    %v6039 = vunpack.c.l.b16 %v5739
    %v6040 = vunpack.c.h.b16 %v5739
    %v6041 = vunpack.c.l.b16 %v5740
    %v6042 = vunpack.c.h.b16 %v5740
    %v6043 = vunpack.c.l.b16 %v5741
    %v6044 = vunpack.c.h.b16 %v5741
    %v6045 = vunpack.c.l.b16 %v5742
    %v6046 = vunpack.c.h.b16 %v5742
    %v6047 = vunpack.c.l.b16 %v5743
    %v6048 = vunpack.c.h.b16 %v5743
    %v6049 = vunpack.c.l.b16 %v5744
    %v6050 = vunpack.c.h.b16 %v5744
    %v6051 = vunpack.c.l.b16 %v5745
    %v6052 = vunpack.c.h.b16 %v5745
    %v6053 = vunpack.c.l.b16 %v5746
    %v6054 = vunpack.c.h.b16 %v5746
    %v6055 = vunpack.c.l.b16 %v5747
    %v6056 = vunpack.c.h.b16 %v5747
    %v6057 = vunpack.c.l.b16 %v5748
    %v6058 = vunpack.c.h.b16 %v5748
    %v6059 = vunpack.c.l.b16 %v5749
    %v6060 = vunpack.c.h.b16 %v5749
    %v6061 = vunpack.c.l.b16 %v5750
    %v6062 = vunpack.c.h.b16 %v5750
    %v6063 = vunpack.c.l.b16 %v5751
    %v6064 = vunpack.c.h.b16 %v5751
    %v6065 = vunpack.c.l.b16 %v5752
    %v6066 = vunpack.c.h.b16 %v5752
    %v6067 = vunpack.c.l.b16 %v5753
    %v6068 = vunpack.c.h.b16 %v5753
    %v6069 = vunpack.c.l.b16 %v5754
    %v6070 = vunpack.c.h.b16 %v5754
    %v6071 = vunpack.c.l.b16 %v5755
    %v6072 = vunpack.c.h.b16 %v5755
    %v6073 = vunpack.c.l.b16 %v5756
    %v6074 = vunpack.c.h.b16 %v5756
    %v6075 = vunpack.c.l.b16 %v5757
    %v6076 = vunpack.c.h.b16 %v5757
    %v6077 = vunpack.c.l.b16 %v5758
    %v6078 = vunpack.c.h.b16 %v5758
    %v6079 = vunpack.c.l.b16 %v5759
    %v6080 = vunpack.c.h.b16 %v5759
    %v6081 = vunpack.c.l.b16 %v5760
    %v6082 = vunpack.c.h.b16 %v5760
    %v6083 = vunpack.c.l.b16 %v5761
    %v6084 = vunpack.c.h.b16 %v5761
    %v6085 = vunpack.c.l.b16 %v5762
    %v6086 = vunpack.c.h.b16 %v5762
    %v6087 = vunpack.c.l.b16 %v5763
    %v6088 = vunpack.c.h.b16 %v5763
    %v6089 = vunpack.c.l.b16 %v5764
    %v6090 = vunpack.c.h.b16 %v5764
    %v6091 = vunpack.c.l.b16 %v5765
    %v6092 = vunpack.c.h.b16 %v5765
    %v6093 = vunpack.c.l.b16 %v5766
    %v6094 = vunpack.c.h.b16 %v5766
    %v6095 = vunpack.c.l.b16 %v5767
    %v6096 = vunpack.c.h.b16 %v5767
    %v6097 = vunpack.c.l.b16 %v5768
    %v6098 = vunpack.c.h.b16 %v5768
    %v6099 = vunpack.c.l.b16 %v5769
    %v6100 = vunpack.c.h.b16 %v5769
    %v6101 = vunpack.c.l.b16 %v5770
    %v6102 = vunpack.c.h.b16 %v5770
    %v6103 = vunpack.c.l.b16 %v5771
    %v6104 = vunpack.c.h.b16 %v5771
    %v6105 = vunpack.c.l.b16 %v5772
    %v6106 = vunpack.c.h.b16 %v5772
    %v6107 = vunpack.c.l.b16 %v5773
    %v6108 = vunpack.c.h.b16 %v5773
    %v6109 = vunpack.c.l.b16 %v5774
    %v6110 = vunpack.c.h.b16 %v5774
    %v6111 = vunpack.c.l.b16 %v5775
    %v6112 = vunpack.c.h.b16 %v5775
    %v6113 = vunpack.c.l.b16 %v5776
    %v6114 = vunpack.c.h.b16 %v5776
    %v6115 = vunpack.c.l.b16 %v5777
    %v6116 = vunpack.c.h.b16 %v5777
    %v6117 = vunpack.c.l.b16 %v5778
    %v6118 = vunpack.c.h.b16 %v5778
    %v6119 = vunpack.c.l.b16 %v5779
    %v6120 = vunpack.c.h.b16 %v5779
    %v6121 = vunpack.c.l.b16 %v5780
    %v6122 = vunpack.c.h.b16 %v5780
    %v6123 = vunpack.c.l.b16 %v5781
    %v6124 = vunpack.c.h.b16 %v5781
    %v6125 = vunpack.c.l.b16 %v5782
    %v6126 = vunpack.c.h.b16 %v5782
    %v6127 = vunpack.c.l.b16 %v5783
    %v6128 = vunpack.c.h.b16 %v5783
    %v6129 = vunpack.c.l.b16 %v5784
    %v6130 = vunpack.c.h.b16 %v5784
    %v6131 = vunpack.c.l.b16 %v5785
    %v6132 = vunpack.c.h.b16 %v5785
    %v6133 = vunpack.c.l.b16 %v5786
    %v6134 = vunpack.c.h.b16 %v5786
    %v6135 = vunpack.c.l.b16 %v5787
    %v6136 = vunpack.c.h.b16 %v5787
    %v6137 = vunpack.c.l.b16 %v5788
    %v6138 = vunpack.c.h.b16 %v5788
    %v6139 = vunpack.c.l.b16 %v5789
    %v6140 = vunpack.c.h.b16 %v5789
    %v6141 = vunpack.c.l.b16 %v5790
    %v6142 = vunpack.c.h.b16 %v5790
    %v6143 = vunpack.c.l.b16 %v5791
    %v6144 = vunpack.c.h.b16 %v5791
    %v6145 = vunpack.c.l.b16 %v5792
    %v6146 = vunpack.c.h.b16 %v5792
    %v6147 = vunpack.c.l.b16 %v5793
    %v6148 = vunpack.c.h.b16 %v5793
    %v6149 = vunpack.c.l.b16 %v5794
    %v6150 = vunpack.c.h.b16 %v5794
    %v6151 = vunpack.c.l.b16 %v5795
    %v6152 = vunpack.c.h.b16 %v5795
    %v6153 = vunpack.c.l.b16 %v5796
    %v6154 = vunpack.c.h.b16 %v5796
    %v6155 = vunpack.c.l.b16 %v5797
    %v6156 = vunpack.c.h.b16 %v5797
    %v6157 = vunpack.c.l.b16 %v5798
    %v6158 = vunpack.c.h.b16 %v5798
    %v6159 = vunpack.c.l.b16 %v5799
    %v6160 = vunpack.c.h.b16 %v5799
    %v6161 = vunpack.c.l.b16 %v5800
    %v6162 = vunpack.c.h.b16 %v5800
    %v6163 = vunpack.c.l.b16 %v5801
    %v6164 = vunpack.c.h.b16 %v5801
    %v6165 = vunpack.c.l.b16 %v5802
    %v6166 = vunpack.c.h.b16 %v5802
    %v6167 = vunpack.c.l.b16 %v5803
    %v6168 = vunpack.c.h.b16 %v5803
    %v6169 = vunpack.c.l.b16 %v5804
    %v6170 = vunpack.c.h.b16 %v5804
    %v6171 = vunpack.c.l.b16 %v5805
    %v6172 = vunpack.c.h.b16 %v5805
    %v6173 = vunpack.c.l.b16 %v5806
    %v6174 = vunpack.c.h.b16 %v5806
    %v6175 = vunpack.c.l.b16 %v5807
    %v6176 = vunpack.c.h.b16 %v5807
    %v6177 = vunpack.c.l.b16 %v5808
    %v6178 = vunpack.c.h.b16 %v5808
    %v6179 = vunpack.c.l.b16 %v5809
    %v6180 = vunpack.c.h.b16 %v5809
    %v6181 = vunpack.c.l.b16 %v5810
    %v6182 = vunpack.c.h.b16 %v5810
    %v6183 = vunpack.c.l.b16 %v5811
    %v6184 = vunpack.c.h.b16 %v5811
    %v6185 = vunpack.c.l.b16 %v5812
    %v6186 = vunpack.c.h.b16 %v5812
    %v6187 = vunpack.c.l.b16 %v5813
    %v6188 = vunpack.c.h.b16 %v5813
    %v6189 = vunpack.c.l.b16 %v5814
    %v6190 = vunpack.c.h.b16 %v5814
    %v6191 = vunpack.c.l.b16 %v5815
    %v6192 = vunpack.c.h.b16 %v5815
    %v6193 = vunpack.c.l.b16 %v5816
    %v6194 = vunpack.c.h.b16 %v5816
    %v6195 = vpack.c.b16 %v5947, %v5943
    %v6196 = vpack.c.b16 %v5948, %v5944
    %v6197 = vpack.c.b16 %v5949, %v5945
    %v6198 = vpack.c.b16 %v5950, %v5946
    %v6199 = vpack.c.b16 %v5955, %v5951
    %v6200 = vpack.c.b16 %v5956, %v5952
    %v6201 = vpack.c.b16 %v5957, %v5953
    %v6202 = vpack.c.b16 %v5958, %v5954
    %v6203 = vpack.c.b16 %v5963, %v5959
    %v6204 = vpack.c.b16 %v5964, %v5960
    %v6205 = vpack.c.b16 %v5965, %v5961
    %v6206 = vpack.c.b16 %v5966, %v5962
    %v6207 = vpack.c.b16 %v5971, %v5967
    %v6208 = vpack.c.b16 %v5972, %v5968
    %v6209 = vpack.c.b16 %v5973, %v5969
    %v6210 = vpack.c.b16 %v5974, %v5970
    %v6211 = vpack.c.b16 %v5979, %v5975
    %v6212 = vpack.c.b16 %v5980, %v5976
    %v6213 = vpack.c.b16 %v5981, %v5977
    %v6214 = vpack.c.b16 %v5982, %v5978
    %v6215 = vpack.c.b16 %v5987, %v5983
    %v6216 = vpack.c.b16 %v5988, %v5984
    %v6217 = vpack.c.b16 %v5989, %v5985
    %v6218 = vpack.c.b16 %v5990, %v5986
    %v6219 = vpack.c.b16 %v5995, %v5991
    %v6220 = vpack.c.b16 %v5996, %v5992
    %v6221 = vpack.c.b16 %v5997, %v5993
    %v6222 = vpack.c.b16 %v5998, %v5994
    %v6223 = vpack.c.b16 %v6003, %v5999
    %v6224 = vpack.c.b16 %v6004, %v6000
    %v6225 = vpack.c.b16 %v6005, %v6001
    %v6226 = vpack.c.b16 %v6006, %v6002
    %v6227 = vpack.c.b16 %v6011, %v6007
    %v6228 = vpack.c.b16 %v6012, %v6008
    %v6229 = vpack.c.b16 %v6013, %v6009
    %v6230 = vpack.c.b16 %v6014, %v6010
    %v6231 = vpack.c.b16 %v6019, %v6015
    %v6232 = vpack.c.b16 %v6020, %v6016
    %v6233 = vpack.c.b16 %v6021, %v6017
    %v6234 = vpack.c.b16 %v6022, %v6018
    %v6235 = vpack.c.b16 %v6027, %v6023
    %v6236 = vpack.c.b16 %v6028, %v6024
    %v6237 = vpack.c.b16 %v6029, %v6025
    %v6238 = vpack.c.b16 %v6030, %v6026
    %v6239 = vpack.c.b16 %v6035, %v6031
    %v6240 = vpack.c.b16 %v6036, %v6032
    %v6241 = vpack.c.b16 %v6037, %v6033
    %v6242 = vpack.c.b16 %v6038, %v6034
    %v6243 = vpack.c.b16 %v6043, %v6039
    %v6244 = vpack.c.b16 %v6044, %v6040
    %v6245 = vpack.c.b16 %v6045, %v6041
    %v6246 = vpack.c.b16 %v6046, %v6042
    %v6247 = vpack.c.b16 %v6051, %v6047
    %v6248 = vpack.c.b16 %v6052, %v6048
    %v6249 = vpack.c.b16 %v6053, %v6049
    %v6250 = vpack.c.b16 %v6054, %v6050
    %v6251 = vpack.c.b16 %v6059, %v6055
    %v6252 = vpack.c.b16 %v6060, %v6056
    %v6253 = vpack.c.b16 %v6061, %v6057
    %v6254 = vpack.c.b16 %v6062, %v6058
    %v6255 = vpack.c.b16 %v6067, %v6063
    %v6256 = vpack.c.b16 %v6068, %v6064
    %v6257 = vpack.c.b16 %v6069, %v6065
    %v6258 = vpack.c.b16 %v6070, %v6066
    %v6259 = vpack.c.b16 %v6075, %v6071
    %v6260 = vpack.c.b16 %v6076, %v6072
    %v6261 = vpack.c.b16 %v6077, %v6073
    %v6262 = vpack.c.b16 %v6078, %v6074
    %v6263 = vpack.c.b16 %v6083, %v6079
    %v6264 = vpack.c.b16 %v6084, %v6080
    %v6265 = vpack.c.b16 %v6085, %v6081
    %v6266 = vpack.c.b16 %v6086, %v6082
    %v6267 = vpack.c.b16 %v6091, %v6087
    %v6268 = vpack.c.b16 %v6092, %v6088
    %v6269 = vpack.c.b16 %v6093, %v6089
    %v6270 = vpack.c.b16 %v6094, %v6090
    %v6271 = vpack.c.b16 %v6099, %v6095
    %v6272 = vpack.c.b16 %v6100, %v6096
    %v6273 = vpack.c.b16 %v6101, %v6097
    %v6274 = vpack.c.b16 %v6102, %v6098
    %v6275 = vpack.c.b16 %v6107, %v6103
    %v6276 = vpack.c.b16 %v6108, %v6104
    %v6277 = vpack.c.b16 %v6109, %v6105
    %v6278 = vpack.c.b16 %v6110, %v6106
    %v6279 = vpack.c.b16 %v6115, %v6111
    %v6280 = vpack.c.b16 %v6116, %v6112
    %v6281 = vpack.c.b16 %v6117, %v6113
    %v6282 = vpack.c.b16 %v6118, %v6114
    %v6283 = vpack.c.b16 %v6123, %v6119
    %v6284 = vpack.c.b16 %v6124, %v6120
    %v6285 = vpack.c.b16 %v6125, %v6121
    %v6286 = vpack.c.b16 %v6126, %v6122
    %v6287 = vpack.c.b16 %v6131, %v6127
    %v6288 = vpack.c.b16 %v6132, %v6128
    %v6289 = vpack.c.b16 %v6133, %v6129
    %v6290 = vpack.c.b16 %v6134, %v6130
    %v6291 = vpack.c.b16 %v6139, %v6135
    %v6292 = vpack.c.b16 %v6140, %v6136
    %v6293 = vpack.c.b16 %v6141, %v6137
    %v6294 = vpack.c.b16 %v6142, %v6138
    %v6295 = vpack.c.b16 %v6147, %v6143
    %v6296 = vpack.c.b16 %v6148, %v6144
    %v6297 = vpack.c.b16 %v6149, %v6145
    %v6298 = vpack.c.b16 %v6150, %v6146
    %v6299 = vpack.c.b16 %v6155, %v6151
    %v6300 = vpack.c.b16 %v6156, %v6152
    %v6301 = vpack.c.b16 %v6157, %v6153
    %v6302 = vpack.c.b16 %v6158, %v6154
    %v6303 = vpack.c.b16 %v6163, %v6159
    %v6304 = vpack.c.b16 %v6164, %v6160
    %v6305 = vpack.c.b16 %v6165, %v6161
    %v6306 = vpack.c.b16 %v6166, %v6162
    %v6307 = vpack.c.b16 %v6171, %v6167
    %v6308 = vpack.c.b16 %v6172, %v6168
    %v6309 = vpack.c.b16 %v6173, %v6169
    %v6310 = vpack.c.b16 %v6174, %v6170
    %v6311 = vpack.c.b16 %v6179, %v6175
    %v6312 = vpack.c.b16 %v6180, %v6176
    %v6313 = vpack.c.b16 %v6181, %v6177
    %v6314 = vpack.c.b16 %v6182, %v6178
    %v6315 = vpack.c.b16 %v6187, %v6183
    %v6316 = vpack.c.b16 %v6188, %v6184
    %v6317 = vpack.c.b16 %v6189, %v6185
    %v6318 = vpack.c.b16 %v6190, %v6186
    %v6319 = vpack.c.b16 %v6191, %v6191
    %v6320 = vpack.c.b16 %v6192, %v6192
    %v6321 = vpack.c.b16 %v6193, %v6193
    %v6322 = vpack.c.b16 %v6194, %v6194
    %v6448 = vsel %vm5456, %v5689, 0
    %v6451 = vand.u32 %v6319, %v5462
    %v6454 = vand.u32 %v6320, %v5462
    %v6457 = vand.u32 %v6321, %v5462
    %v6460 = vand.u32 %v6322, %v5462
    %6462 = vmatprep.subr.bf16.mxu0 %v6196
    %6463 = vmatpush1.bf16.msra.mxu0 %v6195
    %6464 = vmatprep.subr.bf16.mxu0 %v6200
    %6465 = vmatpush1.bf16.msra.mxu0 %v6199
    %6466 = vmatprep.subr.bf16.mxu0 %v6204
    %6467 = vmatpush1.bf16.msra.mxu0 %v6203
    %6468 = vmatprep.subr.bf16.mxu0 %v6208
    %6469 = vmatpush1.bf16.msra.mxu0 %v6207
    %6470 = vmatprep.subr.bf16.mxu0 %v6212
    %6471 = vmatpush1.bf16.msra.mxu0 %v6211
    %6472 = vmatprep.subr.bf16.mxu0 %v6216
    %6473 = vmatpush1.bf16.msra.mxu0 %v6215
    %6474 = vmatprep.subr.bf16.mxu0 %v6220
    %6475 = vmatpush1.bf16.msra.mxu0 %v6219
    %6476 = vmatprep.subr.bf16.mxu0 %v6224
    %6477 = vmatpush1.bf16.msra.mxu0 %v6223
    %6478 = vmatprep.subr.bf16.mxu0 %v6228
    %6479 = vmatpush1.bf16.msra.mxu0 %v6227
    %6480 = vmatprep.subr.bf16.mxu0 %v6232
    %6481 = vmatpush1.bf16.msra.mxu0 %v6231
    %6482 = vmatprep.subr.bf16.mxu0 %v6236
    %6483 = vmatpush1.bf16.msra.mxu0 %v6235
    %6484 = vmatprep.subr.bf16.mxu0 %v6240
    %6485 = vmatpush1.bf16.msra.mxu0 %v6239
    %6486 = vmatprep.subr.bf16.mxu0 %v6244
    %6487 = vmatpush1.bf16.msra.mxu0 %v6243
    %6488 = vmatprep.subr.bf16.mxu0 %v6248
    %6489 = vmatpush1.bf16.msra.mxu0 %v6247
    %6490 = vmatprep.subr.bf16.mxu0 %v6252
    %6491 = vmatpush1.bf16.msra.mxu0 %v6251
    %6492 = vmatprep.subr.bf16.mxu0 %v6256
    %6493 = vmatpush1.bf16.msra.mxu0 %v6255
    %6494 = vmatprep.mubr.bf16.mxu0 %v5687
    %6495 = vmatmul.mubr.bf16.gmra.mrb[0].mxu0 %v5686
    %v6496 = vpop.f32.mrb[0].mxu0
    %v6497 = vadd.f32 0.0, %v6496
    %v6498 = vpop.f32.mrb[0].mxu0
    %v6499 = vadd.f32 0.0, %v6498
    %v6500 = vpop.f32.mrb[0].mxu0
    %v6501 = vpop.f32.mrb[0].mxu0
    %6502 = vdwg.mxu0
    %6503 = vmatprep.subr.bf16.mxu0 %v6260
    %6504 = vmatpush1.bf16.msra.mxu0 %v6259
    %6505 = vmatprep.subr.bf16.mxu0 %v6264
    %6506 = vmatpush1.bf16.msra.mxu0 %v6263
    %6507 = vmatprep.subr.bf16.mxu0 %v6268
    %6508 = vmatpush1.bf16.msra.mxu0 %v6267
    %6509 = vmatprep.subr.bf16.mxu0 %v6272
    %6510 = vmatpush1.bf16.msra.mxu0 %v6271
    %6511 = vmatprep.subr.bf16.mxu0 %v6276
    %6512 = vmatpush1.bf16.msra.mxu0 %v6275
    %6513 = vmatprep.subr.bf16.mxu0 %v6280
    %6514 = vmatpush1.bf16.msra.mxu0 %v6279
    %6515 = vmatprep.subr.bf16.mxu0 %v6284
    %6516 = vmatpush1.bf16.msra.mxu0 %v6283
    %6517 = vmatprep.subr.bf16.mxu0 %v6288
    %6518 = vmatpush1.bf16.msra.mxu0 %v6287
    %6519 = vmatprep.subr.bf16.mxu0 %v6292
    %6520 = vmatpush1.bf16.msra.mxu0 %v6291
    %6521 = vmatprep.subr.bf16.mxu0 %v6296
    %6522 = vmatpush1.bf16.msra.mxu0 %v6295
    %6523 = vmatprep.subr.bf16.mxu0 %v6300
    %6524 = vmatpush1.bf16.msra.mxu0 %v6299
    %6525 = vmatprep.subr.bf16.mxu0 %v6304
    %6526 = vmatpush1.bf16.msra.mxu0 %v6303
    %6527 = vmatprep.subr.bf16.mxu0 %v6308
    %6528 = vmatpush1.bf16.msra.mxu0 %v6307
    %6529 = vmatprep.subr.bf16.mxu0 %v6312
    %6530 = vmatpush1.bf16.msra.mxu0 %v6311
    %6531 = vmatprep.subr.bf16.mxu0 %v6316
    %6532 = vmatpush1.bf16.msra.mxu0 %v6315
    %6533 = vmatprep.subr.bf16.mxu0 %v6454
    %6534 = vmatpush1.bf16.msra.mxu0 %v6451
    %6535 = vmatprep.mubr.bf16.mxu0 %v6448
    %6536 = vmatmul.mubr.bf16.gmra.mrb[0].mxu0 %v5688
    %v6537 = vpop.f32.mrb[0].mxu0
    %v6538 = vadd.f32 %v6497, %v6537
    %v6539 = vpop.f32.mrb[0].mxu0
    %v6540 = vadd.f32 %v6499, %v6539
    %v6541 = vpop.f32.mrb[0].mxu0
    %v6542 = vpop.f32.mrb[0].mxu0
    %6543 = vdwg.mxu0
    %6544 = vmatprep.subr.bf16.mxu0 %v6198
    %6545 = vmatpush1.bf16.msra.mxu0 %v6197
    %6546 = vmatprep.subr.bf16.mxu0 %v6202
    %6547 = vmatpush1.bf16.msra.mxu0 %v6201
    %6548 = vmatprep.subr.bf16.mxu0 %v6206
    %6549 = vmatpush1.bf16.msra.mxu0 %v6205
    %6550 = vmatprep.subr.bf16.mxu0 %v6210
    %6551 = vmatpush1.bf16.msra.mxu0 %v6209
    %6552 = vmatprep.subr.bf16.mxu0 %v6214
    %6553 = vmatpush1.bf16.msra.mxu0 %v6213
    %6554 = vmatprep.subr.bf16.mxu0 %v6218
    %6555 = vmatpush1.bf16.msra.mxu0 %v6217
    %6556 = vmatprep.subr.bf16.mxu0 %v6222
    %6557 = vmatpush1.bf16.msra.mxu0 %v6221
    %6558 = vmatprep.subr.bf16.mxu0 %v6226
    %6559 = vmatpush1.bf16.msra.mxu0 %v6225
    %6560 = vmatprep.subr.bf16.mxu0 %v6230
    %6561 = vmatpush1.bf16.msra.mxu0 %v6229
    %6562 = vmatprep.subr.bf16.mxu0 %v6234
    %6563 = vmatpush1.bf16.msra.mxu0 %v6233
    %6564 = vmatprep.subr.bf16.mxu0 %v6238
    %6565 = vmatpush1.bf16.msra.mxu0 %v6237
    %6566 = vmatprep.subr.bf16.mxu0 %v6242
    %6567 = vmatpush1.bf16.msra.mxu0 %v6241
    %6568 = vmatprep.subr.bf16.mxu0 %v6246
    %6569 = vmatpush1.bf16.msra.mxu0 %v6245
    %6570 = vmatprep.subr.bf16.mxu0 %v6250
    %6571 = vmatpush1.bf16.msra.mxu0 %v6249
    %6572 = vmatprep.subr.bf16.mxu0 %v6254
    %6573 = vmatpush1.bf16.msra.mxu0 %v6253
    %6574 = vmatprep.subr.bf16.mxu0 %v6258
    %6575 = vmatpush1.bf16.msra.mxu0 %v6257
    %6576 = vmatprep.mubr.bf16.mxu0 %v5687
    %6577 = vmatmul.mubr.bf16.gmra.mrb[0].mxu0 %v5686
    %v6578 = vpop.f32.mrb[0].mxu0
    %v6579 = vadd.f32 0.0, %v6578
    %v6580 = vpop.f32.mrb[0].mxu0
    %v6581 = vadd.f32 0.0, %v6580
    %v6582 = vpop.f32.mrb[0].mxu0
    %v6583 = vpop.f32.mrb[0].mxu0
    %6584 = vdwg.mxu0
    %6585 = vmatprep.subr.bf16.mxu0 %v6262
    %6586 = vmatpush1.bf16.msra.mxu0 %v6261
    %6587 = vmatprep.subr.bf16.mxu0 %v6266
    %6588 = vmatpush1.bf16.msra.mxu0 %v6265
    %6589 = vmatprep.subr.bf16.mxu0 %v6270
    %6590 = vmatpush1.bf16.msra.mxu0 %v6269
    %6591 = vmatprep.subr.bf16.mxu0 %v6274
    %6592 = vmatpush1.bf16.msra.mxu0 %v6273
    %6593 = vmatprep.subr.bf16.mxu0 %v6278
    %6594 = vmatpush1.bf16.msra.mxu0 %v6277
    %6595 = vmatprep.subr.bf16.mxu0 %v6282
    %6596 = vmatpush1.bf16.msra.mxu0 %v6281
    %6597 = vmatprep.subr.bf16.mxu0 %v6286
    %6598 = vmatpush1.bf16.msra.mxu0 %v6285
    %6599 = vmatprep.subr.bf16.mxu0 %v6290
    %6600 = vmatpush1.bf16.msra.mxu0 %v6289
    %6601 = vmatprep.subr.bf16.mxu0 %v6294
    %6602 = vmatpush1.bf16.msra.mxu0 %v6293
    %6603 = vmatprep.subr.bf16.mxu0 %v6298
    %6604 = vmatpush1.bf16.msra.mxu0 %v6297
    %6605 = vmatprep.subr.bf16.mxu0 %v6302
    %6606 = vmatpush1.bf16.msra.mxu0 %v6301
    %6607 = vmatprep.subr.bf16.mxu0 %v6306
    %6608 = vmatpush1.bf16.msra.mxu0 %v6305
    %6609 = vmatprep.subr.bf16.mxu0 %v6310
    %6610 = vmatpush1.bf16.msra.mxu0 %v6309
    %6611 = vmatprep.subr.bf16.mxu0 %v6314
    %6612 = vmatpush1.bf16.msra.mxu0 %v6313
    %6613 = vmatprep.subr.bf16.mxu0 %v6318
    %6614 = vmatpush1.bf16.msra.mxu0 %v6317
    %6615 = vmatprep.subr.bf16.mxu0 %v6460
    %6616 = vmatpush1.bf16.msra.mxu0 %v6457
    %6617 = vmatprep.mubr.bf16.mxu0 %v6448
    %6618 = vmatmul.mubr.bf16.gmra.mrb[0].mxu0 %v5688
    %v6619 = vpop.f32.mrb[0].mxu0
    %v6620 = vadd.f32 %v6579, %v6619
    %v6621 = vpop.f32.mrb[0].mxu0
    %v6622 = vadd.f32 %v6581, %v6621
    %v6623 = vpop.f32.mrb[0].mxu0
    %v6624 = vpop.f32.mrb[0].mxu0
    %6625 = vdwg.mxu0
    %v6626 = vld [vmem:[#allocation5] sm:$0xff]
    %v6627 = vld [vmem:[#allocation5 + $0x8] sm:$0xff]
    %v6628 = vld [vmem:[#allocation5 + $0x10] sm:$0xff]
    %v6629 = vld [vmem:[#allocation5 + $0x18] sm:$0xff]
    %v6630 = vadd.f32 %v6626, %v6538
    %v6631 = vadd.f32 %v6627, %v6540
    %v6632 = vadd.f32 %v6628, %v6620
    %v6633 = vadd.f32 %v6629, %v6622
    %6634 = vst [vmem:[#allocation5] sm:$0xff] %v6630
    %6635 = vst [vmem:[#allocation5 + $0x8] sm:$0xff] %v6631
    %6636 = vst [vmem:[#allocation5 + $0x10] sm:$0xff] %v6632
    %6637 = vst.msk [vmem:[#allocation5 + $0x18] sm:$0xff] %vm2313, %v6633
    %v6638 = vld [vmem:[#allocation4 + $0x80] sm:$0xff]
    %v6639 = vld [vmem:[#allocation4 + $0x88] sm:$0xff]
    %v6640 = vld [vmem:[#allocation4 + $0x90] sm:$0xff]
    %v6641 = vld [vmem:[#allocation4 + $0x98] sm:$0xff]
    %v6642 = vld [vmem:[#allocation4 + $0xa0] sm:$0xff]
    %v6643 = vld [vmem:[#allocation4 + $0xa8] sm:$0xff]
    %v6644 = vld [vmem:[#allocation4 + $0xb0] sm:$0xff]
    %v6645 = vld [vmem:[#allocation4 + $0xb8] sm:$0xff]
    %v6646 = vmax.f32 %v6638, %v6642
    %v6647 = vmax.f32 %v6639, %v6643
    %v6648 = vmax.f32 %v6640, %v6644
    %v6649 = vmax.f32 %v6641, %v6645
    %6654 = vrot.lane.b32.xlu0 %v6646, 127
    %v6655 = vpop.permute.xlu0 %6654
    %6656 = vrot.lane.b32.xlu0 %v6647, 127
    %v6657 = vpop.permute.xlu0 %6656
    %6658 = vrot.lane.b32.xlu0 %v6648, 127
    %v6659 = vpop.permute.xlu0 %6658
    %6660 = vrot.lane.b32.xlu0 %v6649, 127
    %v6661 = vpop.permute.xlu0 %6660
    %v6662 = vsel %vm762, %v6655, %v6657
    %v6663 = vsel %vm762, %v6657, %v6659
    %v6664 = vsel %vm762, %v6659, %v6661
    %v6669 = vmax.f32 %v6646, %v6662
    %v6670 = vmax.f32 %v6647, %v6663
    %v6671 = vmax.f32 %v6648, %v6664
    %v6672 = vmax.f32 %v6649, %v6661
    %v6673 = vadd.f32 %v6669, %v4671
    %v6674 = vadd.f32 %v6670, %v4675
    %v6675 = vadd.f32 %v6671, %v4679
    %v6676 = vadd.f32 %v6672, %v4683
    %v6677 = vmax.f32 %v6673, 0.0
    %v6678 = vmax.f32 %v6674, 0.0
    %v6679 = vmax.f32 %v6675, 0.0
    %v6680 = vmax.f32 %v6676, 0.0
    %v6681 = vpack.c.bf16 %v6677, %v6677
    %v6682 = vpack.c.bf16 %v6678, %v6678
    %v6683 = vpack.c.bf16 %v6679, %v6679
    %v6684 = vpack.c.bf16 %v6680, %v6680
    %s6685 = scalar_lea.vmem [#allocation13], 2016
    %v6686 = vld [vmem:[%s6685] sm:$0xff]
    %v6687 = vld [vmem:[%s6685 + $0x8] sm:$0xff]
    %v6688 = vld [vmem:[%s6685 + $0x10] sm:$0xff]
    %v6689 = vld [vmem:[%s6685 + $0x18] sm:$0xff]
    %v6690 = vld [vmem:[%s6685 + $0x20] sm:$0xff]
    %v6691 = vld [vmem:[%s6685 + $0x28] sm:$0xff]
    %v6692 = vld [vmem:[%s6685 + $0x30] sm:$0xff]
    %v6693 = vld [vmem:[%s6685 + $0x38] sm:$0xff]
    %v6694 = vld [vmem:[%s6685 + $0x40] sm:$0xff]
    %v6695 = vld [vmem:[%s6685 + $0x48] sm:$0xff]
    %v6696 = vld [vmem:[%s6685 + $0x50] sm:$0xff]
    %v6697 = vld [vmem:[%s6685 + $0x58] sm:$0xff]
    %v6698 = vld [vmem:[%s6685 + $0x60] sm:$0xff]
    %v6699 = vld [vmem:[%s6685 + $0x68] sm:$0xff]
    %v6700 = vld [vmem:[%s6685 + $0x70] sm:$0xff]
    %v6701 = vld [vmem:[%s6685 + $0x78] sm:$0xff]
    %v6702 = vld [vmem:[%s6685 + $0x80] sm:$0xff]
    %v6703 = vld [vmem:[%s6685 + $0x88] sm:$0xff]
    %v6704 = vld [vmem:[%s6685 + $0x90] sm:$0xff]
    %v6705 = vld [vmem:[%s6685 + $0x98] sm:$0xff]
    %v6706 = vld [vmem:[%s6685 + $0xa0] sm:$0xff]
    %v6707 = vld [vmem:[%s6685 + $0xa8] sm:$0xff]
    %v6708 = vld [vmem:[%s6685 + $0xb0] sm:$0xff]
    %v6709 = vld [vmem:[%s6685 + $0xb8] sm:$0xff]
    %v6710 = vld [vmem:[%s6685 + $0xc0] sm:$0xff]
    %v6711 = vld [vmem:[%s6685 + $0xc8] sm:$0xff]
    %v6712 = vld [vmem:[%s6685 + $0xd0] sm:$0xff]
    %v6713 = vld [vmem:[%s6685 + $0xd8] sm:$0xff]
    %v6714 = vld [vmem:[%s6685 + $0xe0] sm:$0xff]
    %v6715 = vld [vmem:[%s6685 + $0xe8] sm:$0xff]
    %v6716 = vld [vmem:[%s6685 + $0xf0] sm:$0xff]
    %v6717 = vld [vmem:[%s6685 + $0xf8] sm:$0xff]
    %v6718 = vld [vmem:[%s6685 + $0x100] sm:$0xff]
    %v6719 = vld [vmem:[%s6685 + $0x108] sm:$0xff]
    %v6720 = vld [vmem:[%s6685 + $0x110] sm:$0xff]
    %v6721 = vld [vmem:[%s6685 + $0x118] sm:$0xff]
    %v6722 = vld [vmem:[%s6685 + $0x120] sm:$0xff]
    %v6723 = vld [vmem:[%s6685 + $0x128] sm:$0xff]
    %v6724 = vld [vmem:[%s6685 + $0x130] sm:$0xff]
    %v6725 = vld [vmem:[%s6685 + $0x138] sm:$0xff]
    %v6726 = vld [vmem:[%s6685 + $0x140] sm:$0xff]
    %v6727 = vld [vmem:[%s6685 + $0x148] sm:$0xff]
    %v6728 = vld [vmem:[%s6685 + $0x150] sm:$0xff]
    %v6729 = vld [vmem:[%s6685 + $0x158] sm:$0xff]
    %v6730 = vld [vmem:[%s6685 + $0x160] sm:$0xff]
    %v6731 = vld [vmem:[%s6685 + $0x168] sm:$0xff]
    %v6732 = vld [vmem:[%s6685 + $0x170] sm:$0xff]
    %v6733 = vld [vmem:[%s6685 + $0x178] sm:$0xff]
    %v6734 = vld [vmem:[%s6685 + $0x180] sm:$0xff]
    %v6735 = vld [vmem:[%s6685 + $0x188] sm:$0xff]
    %v6736 = vld [vmem:[%s6685 + $0x190] sm:$0xff]
    %v6737 = vld [vmem:[%s6685 + $0x198] sm:$0xff]
    %v6738 = vld [vmem:[%s6685 + $0x1a0] sm:$0xff]
    %v6739 = vld [vmem:[%s6685 + $0x1a8] sm:$0xff]
    %v6740 = vld [vmem:[%s6685 + $0x1b0] sm:$0xff]
    %v6741 = vld [vmem:[%s6685 + $0x1b8] sm:$0xff]
    %v6742 = vld [vmem:[%s6685 + $0x1c0] sm:$0xff]
    %v6743 = vld [vmem:[%s6685 + $0x1c8] sm:$0xff]
    %v6744 = vld [vmem:[%s6685 + $0x1d0] sm:$0xff]
    %v6745 = vld [vmem:[%s6685 + $0x1d8] sm:$0xff]
    %v6746 = vld [vmem:[%s6685 + $0x1e0] sm:$0xff]
    %v6747 = vld [vmem:[%s6685 + $0x1e8] sm:$0xff]
    %v6748 = vld [vmem:[%s6685 + $0x1f0] sm:$0xff]
    %v6749 = vld [vmem:[%s6685 + $0x1f8] sm:$0xff]
    %v6750 = vld [vmem:[%s6685 + $0x200] sm:$0xff]
    %v6751 = vld [vmem:[%s6685 + $0x208] sm:$0xff]
    %v6752 = vld [vmem:[%s6685 + $0x210] sm:$0xff]
    %v6753 = vld [vmem:[%s6685 + $0x218] sm:$0xff]
    %v6754 = vld [vmem:[%s6685 + $0x220] sm:$0xff]
    %v6755 = vld [vmem:[%s6685 + $0x228] sm:$0xff]
    %v6756 = vld [vmem:[%s6685 + $0x230] sm:$0xff]
    %v6757 = vld [vmem:[%s6685 + $0x238] sm:$0xff]
    %v6758 = vld [vmem:[%s6685 + $0x240] sm:$0xff]
    %v6759 = vld [vmem:[%s6685 + $0x248] sm:$0xff]
    %v6760 = vld [vmem:[%s6685 + $0x250] sm:$0xff]
    %v6761 = vld [vmem:[%s6685 + $0x258] sm:$0xff]
    %v6762 = vld [vmem:[%s6685 + $0x260] sm:$0xff]
    %v6763 = vld [vmem:[%s6685 + $0x268] sm:$0xff]
    %v6764 = vld [vmem:[%s6685 + $0x270] sm:$0xff]
    %v6765 = vld [vmem:[%s6685 + $0x278] sm:$0xff]
    %v6766 = vld [vmem:[%s6685 + $0x280] sm:$0xff]
    %v6767 = vld [vmem:[%s6685 + $0x288] sm:$0xff]
    %v6768 = vld [vmem:[%s6685 + $0x290] sm:$0xff]
    %v6769 = vld [vmem:[%s6685 + $0x298] sm:$0xff]
    %v6770 = vld [vmem:[%s6685 + $0x2a0] sm:$0xff]
    %v6771 = vld [vmem:[%s6685 + $0x2a8] sm:$0xff]
    %v6772 = vld [vmem:[%s6685 + $0x2b0] sm:$0xff]
    %v6773 = vld [vmem:[%s6685 + $0x2b8] sm:$0xff]
    %v6774 = vld [vmem:[%s6685 + $0x2c0] sm:$0xff]
    %v6775 = vld [vmem:[%s6685 + $0x2c8] sm:$0xff]
    %v6776 = vld [vmem:[%s6685 + $0x2d0] sm:$0xff]
    %v6777 = vld [vmem:[%s6685 + $0x2d8] sm:$0xff]
    %v6778 = vld [vmem:[%s6685 + $0x2e0] sm:$0xff]
    %v6779 = vld [vmem:[%s6685 + $0x2e8] sm:$0xff]
    %v6780 = vld [vmem:[%s6685 + $0x2f0] sm:$0xff]
    %v6781 = vld [vmem:[%s6685 + $0x2f8] sm:$0xff]
    %v6782 = vld [vmem:[%s6685 + $0x300] sm:$0xff]
    %v6783 = vld [vmem:[%s6685 + $0x308] sm:$0xff]
    %v6784 = vld [vmem:[%s6685 + $0x310] sm:$0xff]
    %v6785 = vld [vmem:[%s6685 + $0x318] sm:$0xff]
    %v6786 = vld [vmem:[%s6685 + $0x320] sm:$0xff]
    %v6787 = vld [vmem:[%s6685 + $0x328] sm:$0xff]
    %v6788 = vld [vmem:[%s6685 + $0x330] sm:$0xff]
    %v6789 = vld [vmem:[%s6685 + $0x338] sm:$0xff]
    %v6790 = vld [vmem:[%s6685 + $0x340] sm:$0xff]
    %v6791 = vld [vmem:[%s6685 + $0x348] sm:$0xff]
    %v6792 = vld [vmem:[%s6685 + $0x350] sm:$0xff]
    %v6793 = vld [vmem:[%s6685 + $0x358] sm:$0xff]
    %v6794 = vld [vmem:[%s6685 + $0x360] sm:$0xff]
    %v6795 = vld [vmem:[%s6685 + $0x368] sm:$0xff]
    %v6796 = vld [vmem:[%s6685 + $0x370] sm:$0xff]
    %v6797 = vld [vmem:[%s6685 + $0x378] sm:$0xff]
    %v6798 = vld [vmem:[%s6685 + $0x380] sm:$0xff]
    %v6799 = vld [vmem:[%s6685 + $0x388] sm:$0xff]
    %v6800 = vld [vmem:[%s6685 + $0x390] sm:$0xff]
    %v6801 = vld [vmem:[%s6685 + $0x398] sm:$0xff]
    %v6802 = vld [vmem:[%s6685 + $0x3a0] sm:$0xff]
    %v6803 = vld [vmem:[%s6685 + $0x3a8] sm:$0xff]
    %v6804 = vld [vmem:[%s6685 + $0x3b0] sm:$0xff]
    %v6805 = vld [vmem:[%s6685 + $0x3b8] sm:$0xff]
    %v6806 = vld [vmem:[%s6685 + $0x3c0] sm:$0xff]
    %v6807 = vld [vmem:[%s6685 + $0x3c8] sm:$0xff]
    %v6808 = vld [vmem:[%s6685 + $0x3d0] sm:$0xff]
    %v6809 = vld [vmem:[%s6685 + $0x3d8] sm:$0xff]
    %v6810 = vld [vmem:[%s6685 + $0x3e0] sm:$0x33]
    %v6811 = vld [vmem:[%s6685 + $0x3e8] sm:$0x33]
    %v6938 = vunpack.c.l.b16 %v6686
    %v6939 = vunpack.c.h.b16 %v6686
    %v6940 = vunpack.c.l.b16 %v6687
    %v6941 = vunpack.c.h.b16 %v6687
    %v6942 = vunpack.c.l.b16 %v6688
    %v6943 = vunpack.c.h.b16 %v6688
    %v6944 = vunpack.c.l.b16 %v6689
    %v6945 = vunpack.c.h.b16 %v6689
    %v6946 = vunpack.c.l.b16 %v6690
    %v6947 = vunpack.c.h.b16 %v6690
    %v6948 = vunpack.c.l.b16 %v6691
    %v6949 = vunpack.c.h.b16 %v6691
    %v6950 = vunpack.c.l.b16 %v6692
    %v6951 = vunpack.c.h.b16 %v6692
    %v6952 = vunpack.c.l.b16 %v6693
    %v6953 = vunpack.c.h.b16 %v6693
    %v6954 = vunpack.c.l.b16 %v6694
    %v6955 = vunpack.c.h.b16 %v6694
    %v6956 = vunpack.c.l.b16 %v6695
    %v6957 = vunpack.c.h.b16 %v6695
    %v6958 = vunpack.c.l.b16 %v6696
    %v6959 = vunpack.c.h.b16 %v6696
    %v6960 = vunpack.c.l.b16 %v6697
    %v6961 = vunpack.c.h.b16 %v6697
    %v6962 = vunpack.c.l.b16 %v6698
    %v6963 = vunpack.c.h.b16 %v6698
    %v6964 = vunpack.c.l.b16 %v6699
    %v6965 = vunpack.c.h.b16 %v6699
    %v6966 = vunpack.c.l.b16 %v6700
    %v6967 = vunpack.c.h.b16 %v6700
    %v6968 = vunpack.c.l.b16 %v6701
    %v6969 = vunpack.c.h.b16 %v6701
    %v6970 = vunpack.c.l.b16 %v6702
    %v6971 = vunpack.c.h.b16 %v6702
    %v6972 = vunpack.c.l.b16 %v6703
    %v6973 = vunpack.c.h.b16 %v6703
    %v6974 = vunpack.c.l.b16 %v6704
    %v6975 = vunpack.c.h.b16 %v6704
    %v6976 = vunpack.c.l.b16 %v6705
    %v6977 = vunpack.c.h.b16 %v6705
    %v6978 = vunpack.c.l.b16 %v6706
    %v6979 = vunpack.c.h.b16 %v6706
    %v6980 = vunpack.c.l.b16 %v6707
    %v6981 = vunpack.c.h.b16 %v6707
    %v6982 = vunpack.c.l.b16 %v6708
    %v6983 = vunpack.c.h.b16 %v6708
    %v6984 = vunpack.c.l.b16 %v6709
    %v6985 = vunpack.c.h.b16 %v6709
    %v6986 = vunpack.c.l.b16 %v6710
    %v6987 = vunpack.c.h.b16 %v6710
    %v6988 = vunpack.c.l.b16 %v6711
    %v6989 = vunpack.c.h.b16 %v6711
    %v6990 = vunpack.c.l.b16 %v6712
    %v6991 = vunpack.c.h.b16 %v6712
    %v6992 = vunpack.c.l.b16 %v6713
    %v6993 = vunpack.c.h.b16 %v6713
    %v6994 = vunpack.c.l.b16 %v6714
    %v6995 = vunpack.c.h.b16 %v6714
    %v6996 = vunpack.c.l.b16 %v6715
    %v6997 = vunpack.c.h.b16 %v6715
    %v6998 = vunpack.c.l.b16 %v6716
    %v6999 = vunpack.c.h.b16 %v6716
    %v7000 = vunpack.c.l.b16 %v6717
    %v7001 = vunpack.c.h.b16 %v6717
    %v7002 = vunpack.c.l.b16 %v6718
    %v7003 = vunpack.c.h.b16 %v6718
    %v7004 = vunpack.c.l.b16 %v6719
    %v7005 = vunpack.c.h.b16 %v6719
    %v7006 = vunpack.c.l.b16 %v6720
    %v7007 = vunpack.c.h.b16 %v6720
    %v7008 = vunpack.c.l.b16 %v6721
    %v7009 = vunpack.c.h.b16 %v6721
    %v7010 = vunpack.c.l.b16 %v6722
    %v7011 = vunpack.c.h.b16 %v6722
    %v7012 = vunpack.c.l.b16 %v6723
    %v7013 = vunpack.c.h.b16 %v6723
    %v7014 = vunpack.c.l.b16 %v6724
    %v7015 = vunpack.c.h.b16 %v6724
    %v7016 = vunpack.c.l.b16 %v6725
    %v7017 = vunpack.c.h.b16 %v6725
    %v7018 = vunpack.c.l.b16 %v6726
    %v7019 = vunpack.c.h.b16 %v6726
    %v7020 = vunpack.c.l.b16 %v6727
    %v7021 = vunpack.c.h.b16 %v6727
    %v7022 = vunpack.c.l.b16 %v6728
    %v7023 = vunpack.c.h.b16 %v6728
    %v7024 = vunpack.c.l.b16 %v6729
    %v7025 = vunpack.c.h.b16 %v6729
    %v7026 = vunpack.c.l.b16 %v6730
    %v7027 = vunpack.c.h.b16 %v6730
    %v7028 = vunpack.c.l.b16 %v6731
    %v7029 = vunpack.c.h.b16 %v6731
    %v7030 = vunpack.c.l.b16 %v6732
    %v7031 = vunpack.c.h.b16 %v6732
    %v7032 = vunpack.c.l.b16 %v6733
    %v7033 = vunpack.c.h.b16 %v6733
    %v7034 = vunpack.c.l.b16 %v6734
    %v7035 = vunpack.c.h.b16 %v6734
    %v7036 = vunpack.c.l.b16 %v6735
    %v7037 = vunpack.c.h.b16 %v6735
    %v7038 = vunpack.c.l.b16 %v6736
    %v7039 = vunpack.c.h.b16 %v6736
    %v7040 = vunpack.c.l.b16 %v6737
    %v7041 = vunpack.c.h.b16 %v6737
    %v7042 = vunpack.c.l.b16 %v6738
    %v7043 = vunpack.c.h.b16 %v6738
    %v7044 = vunpack.c.l.b16 %v6739
    %v7045 = vunpack.c.h.b16 %v6739
    %v7046 = vunpack.c.l.b16 %v6740
    %v7047 = vunpack.c.h.b16 %v6740
    %v7048 = vunpack.c.l.b16 %v6741
    %v7049 = vunpack.c.h.b16 %v6741
    %v7050 = vunpack.c.l.b16 %v6742
    %v7051 = vunpack.c.h.b16 %v6742
    %v7052 = vunpack.c.l.b16 %v6743
    %v7053 = vunpack.c.h.b16 %v6743
    %v7054 = vunpack.c.l.b16 %v6744
    %v7055 = vunpack.c.h.b16 %v6744
    %v7056 = vunpack.c.l.b16 %v6745
    %v7057 = vunpack.c.h.b16 %v6745
    %v7058 = vunpack.c.l.b16 %v6746
    %v7059 = vunpack.c.h.b16 %v6746
    %v7060 = vunpack.c.l.b16 %v6747
    %v7061 = vunpack.c.h.b16 %v6747
    %v7062 = vunpack.c.l.b16 %v6748
    %v7063 = vunpack.c.h.b16 %v6748
    %v7064 = vunpack.c.l.b16 %v6749
    %v7065 = vunpack.c.h.b16 %v6749
    %v7066 = vunpack.c.l.b16 %v6750
    %v7067 = vunpack.c.h.b16 %v6750
    %v7068 = vunpack.c.l.b16 %v6751
    %v7069 = vunpack.c.h.b16 %v6751
    %v7070 = vunpack.c.l.b16 %v6752
    %v7071 = vunpack.c.h.b16 %v6752
    %v7072 = vunpack.c.l.b16 %v6753
    %v7073 = vunpack.c.h.b16 %v6753
    %v7074 = vunpack.c.l.b16 %v6754
    %v7075 = vunpack.c.h.b16 %v6754
    %v7076 = vunpack.c.l.b16 %v6755
    %v7077 = vunpack.c.h.b16 %v6755
    %v7078 = vunpack.c.l.b16 %v6756
    %v7079 = vunpack.c.h.b16 %v6756
    %v7080 = vunpack.c.l.b16 %v6757
    %v7081 = vunpack.c.h.b16 %v6757
    %v7082 = vunpack.c.l.b16 %v6758
    %v7083 = vunpack.c.h.b16 %v6758
    %v7084 = vunpack.c.l.b16 %v6759
    %v7085 = vunpack.c.h.b16 %v6759
    %v7086 = vunpack.c.l.b16 %v6760
    %v7087 = vunpack.c.h.b16 %v6760
    %v7088 = vunpack.c.l.b16 %v6761
    %v7089 = vunpack.c.h.b16 %v6761
    %v7090 = vunpack.c.l.b16 %v6762
    %v7091 = vunpack.c.h.b16 %v6762
    %v7092 = vunpack.c.l.b16 %v6763
    %v7093 = vunpack.c.h.b16 %v6763
    %v7094 = vunpack.c.l.b16 %v6764
    %v7095 = vunpack.c.h.b16 %v6764
    %v7096 = vunpack.c.l.b16 %v6765
    %v7097 = vunpack.c.h.b16 %v6765
    %v7098 = vunpack.c.l.b16 %v6766
    %v7099 = vunpack.c.h.b16 %v6766
    %v7100 = vunpack.c.l.b16 %v6767
    %v7101 = vunpack.c.h.b16 %v6767
    %v7102 = vunpack.c.l.b16 %v6768
    %v7103 = vunpack.c.h.b16 %v6768
    %v7104 = vunpack.c.l.b16 %v6769
    %v7105 = vunpack.c.h.b16 %v6769
    %v7106 = vunpack.c.l.b16 %v6770
    %v7107 = vunpack.c.h.b16 %v6770
    %v7108 = vunpack.c.l.b16 %v6771
    %v7109 = vunpack.c.h.b16 %v6771
    %v7110 = vunpack.c.l.b16 %v6772
    %v7111 = vunpack.c.h.b16 %v6772
    %v7112 = vunpack.c.l.b16 %v6773
    %v7113 = vunpack.c.h.b16 %v6773
    %v7114 = vunpack.c.l.b16 %v6774
    %v7115 = vunpack.c.h.b16 %v6774
    %v7116 = vunpack.c.l.b16 %v6775
    %v7117 = vunpack.c.h.b16 %v6775
    %v7118 = vunpack.c.l.b16 %v6776
    %v7119 = vunpack.c.h.b16 %v6776
    %v7120 = vunpack.c.l.b16 %v6777
    %v7121 = vunpack.c.h.b16 %v6777
    %v7122 = vunpack.c.l.b16 %v6778
    %v7123 = vunpack.c.h.b16 %v6778
    %v7124 = vunpack.c.l.b16 %v6779
    %v7125 = vunpack.c.h.b16 %v6779
    %v7126 = vunpack.c.l.b16 %v6780
    %v7127 = vunpack.c.h.b16 %v6780
    %v7128 = vunpack.c.l.b16 %v6781
    %v7129 = vunpack.c.h.b16 %v6781
    %v7130 = vunpack.c.l.b16 %v6782
    %v7131 = vunpack.c.h.b16 %v6782
    %v7132 = vunpack.c.l.b16 %v6783
    %v7133 = vunpack.c.h.b16 %v6783
    %v7134 = vunpack.c.l.b16 %v6784
    %v7135 = vunpack.c.h.b16 %v6784
    %v7136 = vunpack.c.l.b16 %v6785
    %v7137 = vunpack.c.h.b16 %v6785
    %v7138 = vunpack.c.l.b16 %v6786
    %v7139 = vunpack.c.h.b16 %v6786
    %v7140 = vunpack.c.l.b16 %v6787
    %v7141 = vunpack.c.h.b16 %v6787
    %v7142 = vunpack.c.l.b16 %v6788
    %v7143 = vunpack.c.h.b16 %v6788
    %v7144 = vunpack.c.l.b16 %v6789
    %v7145 = vunpack.c.h.b16 %v6789
    %v7146 = vunpack.c.l.b16 %v6790
    %v7147 = vunpack.c.h.b16 %v6790
    %v7148 = vunpack.c.l.b16 %v6791
    %v7149 = vunpack.c.h.b16 %v6791
    %v7150 = vunpack.c.l.b16 %v6792
    %v7151 = vunpack.c.h.b16 %v6792
    %v7152 = vunpack.c.l.b16 %v6793
    %v7153 = vunpack.c.h.b16 %v6793
    %v7154 = vunpack.c.l.b16 %v6794
    %v7155 = vunpack.c.h.b16 %v6794
    %v7156 = vunpack.c.l.b16 %v6795
    %v7157 = vunpack.c.h.b16 %v6795
    %v7158 = vunpack.c.l.b16 %v6796
    %v7159 = vunpack.c.h.b16 %v6796
    %v7160 = vunpack.c.l.b16 %v6797
    %v7161 = vunpack.c.h.b16 %v6797
    %v7162 = vunpack.c.l.b16 %v6798
    %v7163 = vunpack.c.h.b16 %v6798
    %v7164 = vunpack.c.l.b16 %v6799
    %v7165 = vunpack.c.h.b16 %v6799
    %v7166 = vunpack.c.l.b16 %v6800
    %v7167 = vunpack.c.h.b16 %v6800
    %v7168 = vunpack.c.l.b16 %v6801
    %v7169 = vunpack.c.h.b16 %v6801
    %v7170 = vunpack.c.l.b16 %v6802
    %v7171 = vunpack.c.h.b16 %v6802
    %v7172 = vunpack.c.l.b16 %v6803
    %v7173 = vunpack.c.h.b16 %v6803
    %v7174 = vunpack.c.l.b16 %v6804
    %v7175 = vunpack.c.h.b16 %v6804
    %v7176 = vunpack.c.l.b16 %v6805
    %v7177 = vunpack.c.h.b16 %v6805
    %v7178 = vunpack.c.l.b16 %v6806
    %v7179 = vunpack.c.h.b16 %v6806
    %v7180 = vunpack.c.l.b16 %v6807
    %v7181 = vunpack.c.h.b16 %v6807
    %v7182 = vunpack.c.l.b16 %v6808
    %v7183 = vunpack.c.h.b16 %v6808
    %v7184 = vunpack.c.l.b16 %v6809
    %v7185 = vunpack.c.h.b16 %v6809
    %v7186 = vunpack.c.l.b16 %v6810
    %v7187 = vunpack.c.h.b16 %v6810
    %v7188 = vunpack.c.l.b16 %v6811
    %v7189 = vunpack.c.h.b16 %v6811
    %v7190 = vpack.c.b16 %v6942, %v6938
    %v7191 = vpack.c.b16 %v6943, %v6939
    %v7192 = vpack.c.b16 %v6944, %v6940
    %v7193 = vpack.c.b16 %v6945, %v6941
    %v7194 = vpack.c.b16 %v6950, %v6946
    %v7195 = vpack.c.b16 %v6951, %v6947
    %v7196 = vpack.c.b16 %v6952, %v6948
    %v7197 = vpack.c.b16 %v6953, %v6949
    %v7198 = vpack.c.b16 %v6958, %v6954
    %v7199 = vpack.c.b16 %v6959, %v6955
    %v7200 = vpack.c.b16 %v6960, %v6956
    %v7201 = vpack.c.b16 %v6961, %v6957
    %v7202 = vpack.c.b16 %v6966, %v6962
    %v7203 = vpack.c.b16 %v6967, %v6963
    %v7204 = vpack.c.b16 %v6968, %v6964
    %v7205 = vpack.c.b16 %v6969, %v6965
    %v7206 = vpack.c.b16 %v6974, %v6970
    %v7207 = vpack.c.b16 %v6975, %v6971
    %v7208 = vpack.c.b16 %v6976, %v6972
    %v7209 = vpack.c.b16 %v6977, %v6973
    %v7210 = vpack.c.b16 %v6982, %v6978
    %v7211 = vpack.c.b16 %v6983, %v6979
    %v7212 = vpack.c.b16 %v6984, %v6980
    %v7213 = vpack.c.b16 %v6985, %v6981
    %v7214 = vpack.c.b16 %v6990, %v6986
    %v7215 = vpack.c.b16 %v6991, %v6987
    %v7216 = vpack.c.b16 %v6992, %v6988
    %v7217 = vpack.c.b16 %v6993, %v6989
    %v7218 = vpack.c.b16 %v6998, %v6994
    %v7219 = vpack.c.b16 %v6999, %v6995
    %v7220 = vpack.c.b16 %v7000, %v6996
    %v7221 = vpack.c.b16 %v7001, %v6997
    %v7222 = vpack.c.b16 %v7006, %v7002
    %v7223 = vpack.c.b16 %v7007, %v7003
    %v7224 = vpack.c.b16 %v7008, %v7004
    %v7225 = vpack.c.b16 %v7009, %v7005
    %v7226 = vpack.c.b16 %v7014, %v7010
    %v7227 = vpack.c.b16 %v7015, %v7011
    %v7228 = vpack.c.b16 %v7016, %v7012
    %v7229 = vpack.c.b16 %v7017, %v7013
    %v7230 = vpack.c.b16 %v7022, %v7018
    %v7231 = vpack.c.b16 %v7023, %v7019
    %v7232 = vpack.c.b16 %v7024, %v7020
    %v7233 = vpack.c.b16 %v7025, %v7021
    %v7234 = vpack.c.b16 %v7030, %v7026
    %v7235 = vpack.c.b16 %v7031, %v7027
    %v7236 = vpack.c.b16 %v7032, %v7028
    %v7237 = vpack.c.b16 %v7033, %v7029
    %v7238 = vpack.c.b16 %v7038, %v7034
    %v7239 = vpack.c.b16 %v7039, %v7035
    %v7240 = vpack.c.b16 %v7040, %v7036
    %v7241 = vpack.c.b16 %v7041, %v7037
    %v7242 = vpack.c.b16 %v7046, %v7042
    %v7243 = vpack.c.b16 %v7047, %v7043
    %v7244 = vpack.c.b16 %v7048, %v7044
    %v7245 = vpack.c.b16 %v7049, %v7045
    %v7246 = vpack.c.b16 %v7054, %v7050
    %v7247 = vpack.c.b16 %v7055, %v7051
    %v7248 = vpack.c.b16 %v7056, %v7052
    %v7249 = vpack.c.b16 %v7057, %v7053
    %v7250 = vpack.c.b16 %v7062, %v7058
    %v7251 = vpack.c.b16 %v7063, %v7059
    %v7252 = vpack.c.b16 %v7064, %v7060
    %v7253 = vpack.c.b16 %v7065, %v7061
    %v7254 = vpack.c.b16 %v7070, %v7066
    %v7255 = vpack.c.b16 %v7071, %v7067
    %v7256 = vpack.c.b16 %v7072, %v7068
    %v7257 = vpack.c.b16 %v7073, %v7069
    %v7258 = vpack.c.b16 %v7078, %v7074
    %v7259 = vpack.c.b16 %v7079, %v7075
    %v7260 = vpack.c.b16 %v7080, %v7076
    %v7261 = vpack.c.b16 %v7081, %v7077
    %v7262 = vpack.c.b16 %v7086, %v7082
    %v7263 = vpack.c.b16 %v7087, %v7083
    %v7264 = vpack.c.b16 %v7088, %v7084
    %v7265 = vpack.c.b16 %v7089, %v7085
    %v7266 = vpack.c.b16 %v7094, %v7090
    %v7267 = vpack.c.b16 %v7095, %v7091
    %v7268 = vpack.c.b16 %v7096, %v7092
    %v7269 = vpack.c.b16 %v7097, %v7093
    %v7270 = vpack.c.b16 %v7102, %v7098
    %v7271 = vpack.c.b16 %v7103, %v7099
    %v7272 = vpack.c.b16 %v7104, %v7100
    %v7273 = vpack.c.b16 %v7105, %v7101
    %v7274 = vpack.c.b16 %v7110, %v7106
    %v7275 = vpack.c.b16 %v7111, %v7107
    %v7276 = vpack.c.b16 %v7112, %v7108
    %v7277 = vpack.c.b16 %v7113, %v7109
    %v7278 = vpack.c.b16 %v7118, %v7114
    %v7279 = vpack.c.b16 %v7119, %v7115
    %v7280 = vpack.c.b16 %v7120, %v7116
    %v7281 = vpack.c.b16 %v7121, %v7117
    %v7282 = vpack.c.b16 %v7126, %v7122
    %v7283 = vpack.c.b16 %v7127, %v7123
    %v7284 = vpack.c.b16 %v7128, %v7124
    %v7285 = vpack.c.b16 %v7129, %v7125
    %v7286 = vpack.c.b16 %v7134, %v7130
    %v7287 = vpack.c.b16 %v7135, %v7131
    %v7288 = vpack.c.b16 %v7136, %v7132
    %v7289 = vpack.c.b16 %v7137, %v7133
    %v7290 = vpack.c.b16 %v7142, %v7138
    %v7291 = vpack.c.b16 %v7143, %v7139
    %v7292 = vpack.c.b16 %v7144, %v7140
    %v7293 = vpack.c.b16 %v7145, %v7141
    %v7294 = vpack.c.b16 %v7150, %v7146
    %v7295 = vpack.c.b16 %v7151, %v7147
    %v7296 = vpack.c.b16 %v7152, %v7148
    %v7297 = vpack.c.b16 %v7153, %v7149
    %v7298 = vpack.c.b16 %v7158, %v7154
    %v7299 = vpack.c.b16 %v7159, %v7155
    %v7300 = vpack.c.b16 %v7160, %v7156
    %v7301 = vpack.c.b16 %v7161, %v7157
    %v7302 = vpack.c.b16 %v7166, %v7162
    %v7303 = vpack.c.b16 %v7167, %v7163
    %v7304 = vpack.c.b16 %v7168, %v7164
    %v7305 = vpack.c.b16 %v7169, %v7165
    %v7306 = vpack.c.b16 %v7174, %v7170
    %v7307 = vpack.c.b16 %v7175, %v7171
    %v7308 = vpack.c.b16 %v7176, %v7172
    %v7309 = vpack.c.b16 %v7177, %v7173
    %v7310 = vpack.c.b16 %v7182, %v7178
    %v7311 = vpack.c.b16 %v7183, %v7179
    %v7312 = vpack.c.b16 %v7184, %v7180
    %v7313 = vpack.c.b16 %v7185, %v7181
    %v7314 = vpack.c.b16 %v7186, %v7186
    %v7315 = vpack.c.b16 %v7187, %v7187
    %v7316 = vpack.c.b16 %v7188, %v7188
    %v7317 = vpack.c.b16 %v7189, %v7189
    %v7443 = vsel %vm5456, %v6684, 0
    %v7446 = vand.u32 %v7314, %v5462
    %v7449 = vand.u32 %v7315, %v5462
    %v7452 = vand.u32 %v7316, %v5462
    %v7455 = vand.u32 %v7317, %v5462
    %7457 = vmatprep.subr.bf16.mxu0 %v7191
    %7458 = vmatpush1.bf16.msra.mxu0 %v7190
    %7459 = vmatprep.subr.bf16.mxu0 %v7195
    %7460 = vmatpush1.bf16.msra.mxu0 %v7194
    %7461 = vmatprep.subr.bf16.mxu0 %v7199
    %7462 = vmatpush1.bf16.msra.mxu0 %v7198
    %7463 = vmatprep.subr.bf16.mxu0 %v7203
    %7464 = vmatpush1.bf16.msra.mxu0 %v7202
    %7465 = vmatprep.subr.bf16.mxu0 %v7207
    %7466 = vmatpush1.bf16.msra.mxu0 %v7206
    %7467 = vmatprep.subr.bf16.mxu0 %v7211
    %7468 = vmatpush1.bf16.msra.mxu0 %v7210
    %7469 = vmatprep.subr.bf16.mxu0 %v7215
    %7470 = vmatpush1.bf16.msra.mxu0 %v7214
    %7471 = vmatprep.subr.bf16.mxu0 %v7219
    %7472 = vmatpush1.bf16.msra.mxu0 %v7218
    %7473 = vmatprep.subr.bf16.mxu0 %v7223
    %7474 = vmatpush1.bf16.msra.mxu0 %v7222
    %7475 = vmatprep.subr.bf16.mxu0 %v7227
    %7476 = vmatpush1.bf16.msra.mxu0 %v7226
    %7477 = vmatprep.subr.bf16.mxu0 %v7231
    %7478 = vmatpush1.bf16.msra.mxu0 %v7230
    %7479 = vmatprep.subr.bf16.mxu0 %v7235
    %7480 = vmatpush1.bf16.msra.mxu0 %v7234
    %7481 = vmatprep.subr.bf16.mxu0 %v7239
    %7482 = vmatpush1.bf16.msra.mxu0 %v7238
    %7483 = vmatprep.subr.bf16.mxu0 %v7243
    %7484 = vmatpush1.bf16.msra.mxu0 %v7242
    %7485 = vmatprep.subr.bf16.mxu0 %v7247
    %7486 = vmatpush1.bf16.msra.mxu0 %v7246
    %7487 = vmatprep.subr.bf16.mxu0 %v7251
    %7488 = vmatpush1.bf16.msra.mxu0 %v7250
    %7489 = vmatprep.mubr.bf16.mxu0 %v6682
    %7490 = vmatmul.mubr.bf16.gmra.mrb[0].mxu0 %v6681
    %v7491 = vpop.f32.mrb[0].mxu0
    %v7492 = vadd.f32 0.0, %v7491
    %v7493 = vpop.f32.mrb[0].mxu0
    %v7494 = vadd.f32 0.0, %v7493
    %v7495 = vpop.f32.mrb[0].mxu0
    %v7496 = vpop.f32.mrb[0].mxu0
    %7497 = vdwg.mxu0
    %7498 = vmatprep.subr.bf16.mxu0 %v7255
    %7499 = vmatpush1.bf16.msra.mxu0 %v7254
    %7500 = vmatprep.subr.bf16.mxu0 %v7259
    %7501 = vmatpush1.bf16.msra.mxu0 %v7258
    %7502 = vmatprep.subr.bf16.mxu0 %v7263
    %7503 = vmatpush1.bf16.msra.mxu0 %v7262
    %7504 = vmatprep.subr.bf16.mxu0 %v7267
    %7505 = vmatpush1.bf16.msra.mxu0 %v7266
    %7506 = vmatprep.subr.bf16.mxu0 %v7271
    %7507 = vmatpush1.bf16.msra.mxu0 %v7270
    %7508 = vmatprep.subr.bf16.mxu0 %v7275
    %7509 = vmatpush1.bf16.msra.mxu0 %v7274
    %7510 = vmatprep.subr.bf16.mxu0 %v7279
    %7511 = vmatpush1.bf16.msra.mxu0 %v7278
    %7512 = vmatprep.subr.bf16.mxu0 %v7283
    %7513 = vmatpush1.bf16.msra.mxu0 %v7282
    %7514 = vmatprep.subr.bf16.mxu0 %v7287
    %7515 = vmatpush1.bf16.msra.mxu0 %v7286
    %7516 = vmatprep.subr.bf16.mxu0 %v7291
    %7517 = vmatpush1.bf16.msra.mxu0 %v7290
    %7518 = vmatprep.subr.bf16.mxu0 %v7295
    %7519 = vmatpush1.bf16.msra.mxu0 %v7294
    %7520 = vmatprep.subr.bf16.mxu0 %v7299
    %7521 = vmatpush1.bf16.msra.mxu0 %v7298
    %7522 = vmatprep.subr.bf16.mxu0 %v7303
    %7523 = vmatpush1.bf16.msra.mxu0 %v7302
    %7524 = vmatprep.subr.bf16.mxu0 %v7307
    %7525 = vmatpush1.bf16.msra.mxu0 %v7306
    %7526 = vmatprep.subr.bf16.mxu0 %v7311
    %7527 = vmatpush1.bf16.msra.mxu0 %v7310
    %7528 = vmatprep.subr.bf16.mxu0 %v7449
    %7529 = vmatpush1.bf16.msra.mxu0 %v7446
    %7530 = vmatprep.mubr.bf16.mxu0 %v7443
    %7531 = vmatmul.mubr.bf16.gmra.mrb[0].mxu0 %v6683
    %v7532 = vpop.f32.mrb[0].mxu0
    %v7533 = vadd.f32 %v7492, %v7532
    %v7534 = vpop.f32.mrb[0].mxu0
    %v7535 = vadd.f32 %v7494, %v7534
    %v7536 = vpop.f32.mrb[0].mxu0
    %v7537 = vpop.f32.mrb[0].mxu0
    %7538 = vdwg.mxu0
    %7539 = vmatprep.subr.bf16.mxu0 %v7193
    %7540 = vmatpush1.bf16.msra.mxu0 %v7192
    %7541 = vmatprep.subr.bf16.mxu0 %v7197
    %7542 = vmatpush1.bf16.msra.mxu0 %v7196
    %7543 = vmatprep.subr.bf16.mxu0 %v7201
    %7544 = vmatpush1.bf16.msra.mxu0 %v7200
    %7545 = vmatprep.subr.bf16.mxu0 %v7205
    %7546 = vmatpush1.bf16.msra.mxu0 %v7204
    %7547 = vmatprep.subr.bf16.mxu0 %v7209
    %7548 = vmatpush1.bf16.msra.mxu0 %v7208
    %7549 = vmatprep.subr.bf16.mxu0 %v7213
    %7550 = vmatpush1.bf16.msra.mxu0 %v7212
    %7551 = vmatprep.subr.bf16.mxu0 %v7217
    %7552 = vmatpush1.bf16.msra.mxu0 %v7216
    %7553 = vmatprep.subr.bf16.mxu0 %v7221
    %7554 = vmatpush1.bf16.msra.mxu0 %v7220
    %7555 = vmatprep.subr.bf16.mxu0 %v7225
    %7556 = vmatpush1.bf16.msra.mxu0 %v7224
    %7557 = vmatprep.subr.bf16.mxu0 %v7229
    %7558 = vmatpush1.bf16.msra.mxu0 %v7228
    %7559 = vmatprep.subr.bf16.mxu0 %v7233
    %7560 = vmatpush1.bf16.msra.mxu0 %v7232
    %7561 = vmatprep.subr.bf16.mxu0 %v7237
    %7562 = vmatpush1.bf16.msra.mxu0 %v7236
    %7563 = vmatprep.subr.bf16.mxu0 %v7241
    %7564 = vmatpush1.bf16.msra.mxu0 %v7240
    %7565 = vmatprep.subr.bf16.mxu0 %v7245
    %7566 = vmatpush1.bf16.msra.mxu0 %v7244
    %7567 = vmatprep.subr.bf16.mxu0 %v7249
    %7568 = vmatpush1.bf16.msra.mxu0 %v7248
    %7569 = vmatprep.subr.bf16.mxu0 %v7253
    %7570 = vmatpush1.bf16.msra.mxu0 %v7252
    %7571 = vmatprep.mubr.bf16.mxu0 %v6682
    %7572 = vmatmul.mubr.bf16.gmra.mrb[0].mxu0 %v6681
    %v7573 = vpop.f32.mrb[0].mxu0
    %v7574 = vadd.f32 0.0, %v7573
    %v7575 = vpop.f32.mrb[0].mxu0
    %v7576 = vadd.f32 0.0, %v7575
    %v7577 = vpop.f32.mrb[0].mxu0
    %v7578 = vpop.f32.mrb[0].mxu0
    %7579 = vdwg.mxu0
    %7580 = vmatprep.subr.bf16.mxu0 %v7257
    %7581 = vmatpush1.bf16.msra.mxu0 %v7256
    %7582 = vmatprep.subr.bf16.mxu0 %v7261
    %7583 = vmatpush1.bf16.msra.mxu0 %v7260
    %7584 = vmatprep.subr.bf16.mxu0 %v7265
    %7585 = vmatpush1.bf16.msra.mxu0 %v7264
    %7586 = vmatprep.subr.bf16.mxu0 %v7269
    %7587 = vmatpush1.bf16.msra.mxu0 %v7268
    %7588 = vmatprep.subr.bf16.mxu0 %v7273
    %7589 = vmatpush1.bf16.msra.mxu0 %v7272
    %7590 = vmatprep.subr.bf16.mxu0 %v7277
    %7591 = vmatpush1.bf16.msra.mxu0 %v7276
    %7592 = vmatprep.subr.bf16.mxu0 %v7281
    %7593 = vmatpush1.bf16.msra.mxu0 %v7280
    %7594 = vmatprep.subr.bf16.mxu0 %v7285
    %7595 = vmatpush1.bf16.msra.mxu0 %v7284
    %7596 = vmatprep.subr.bf16.mxu0 %v7289
    %7597 = vmatpush1.bf16.msra.mxu0 %v7288
    %7598 = vmatprep.subr.bf16.mxu0 %v7293
    %7599 = vmatpush1.bf16.msra.mxu0 %v7292
    %7600 = vmatprep.subr.bf16.mxu0 %v7297
    %7601 = vmatpush1.bf16.msra.mxu0 %v7296
    %7602 = vmatprep.subr.bf16.mxu0 %v7301
    %7603 = vmatpush1.bf16.msra.mxu0 %v7300
    %7604 = vmatprep.subr.bf16.mxu0 %v7305
    %7605 = vmatpush1.bf16.msra.mxu0 %v7304
    %7606 = vmatprep.subr.bf16.mxu0 %v7309
    %7607 = vmatpush1.bf16.msra.mxu0 %v7308
    %7608 = vmatprep.subr.bf16.mxu0 %v7313
    %7609 = vmatpush1.bf16.msra.mxu0 %v7312
    %7610 = vmatprep.subr.bf16.mxu0 %v7455
    %7611 = vmatpush1.bf16.msra.mxu0 %v7452
    %7612 = vmatprep.mubr.bf16.mxu0 %v7443
    %7613 = vmatmul.mubr.bf16.gmra.mrb[0].mxu0 %v6683
    %v7614 = vpop.f32.mrb[0].mxu0
    %v7615 = vadd.f32 %v7574, %v7614
    %v7616 = vpop.f32.mrb[0].mxu0
    %v7617 = vadd.f32 %v7576, %v7616
    %v7618 = vpop.f32.mrb[0].mxu0
    %v7619 = vpop.f32.mrb[0].mxu0
    %7620 = vdwg.mxu0
    %v7621 = vld [vmem:[#allocation5] sm:$0xff]
    %v7622 = vld [vmem:[#allocation5 + $0x8] sm:$0xff]
    %v7623 = vld [vmem:[#allocation5 + $0x10] sm:$0xff]
    %v7624 = vld [vmem:[#allocation5 + $0x18] sm:$0xff]
    %v7625 = vadd.f32 %v7621, %v7533
    %v7626 = vadd.f32 %v7622, %v7535
    %v7627 = vadd.f32 %v7623, %v7615
    %v7628 = vadd.f32 %v7624, %v7617
    %7629 = vst [vmem:[#allocation5] sm:$0xff] %v7625
    %7630 = vst [vmem:[#allocation5 + $0x8] sm:$0xff] %v7626
    %7631 = vst [vmem:[#allocation5 + $0x10] sm:$0xff] %v7627
    %7632 = vst.msk [vmem:[#allocation5 + $0x18] sm:$0xff] %vm2313, %v7628
    %v7633 = vld [vmem:[#allocation4 + $0xc0] sm:$0xff]
    %v7634 = vld [vmem:[#allocation4 + $0xc8] sm:$0xff]
    %v7635 = vld [vmem:[#allocation4 + $0xd0] sm:$0xff]
    %v7636 = vld [vmem:[#allocation4 + $0xd8] sm:$0xff]
    %v7637 = vld [vmem:[#allocation4 + $0xe0] sm:$0xff]
    %v7638 = vld [vmem:[#allocation4 + $0xe8] sm:$0xff]
    %v7639 = vld [vmem:[#allocation4 + $0xf0] sm:$0xff]
    %v7640 = vld [vmem:[#allocation4 + $0xf8] sm:$0xff]
    %v7641 = vmax.f32 %v7633, %v7637
    %v7642 = vmax.f32 %v7634, %v7638
    %v7643 = vmax.f32 %v7635, %v7639
    %v7644 = vmax.f32 %v7636, %v7640
    %7649 = vrot.lane.b32.xlu0 %v7641, 127
    %v7650 = vpop.permute.xlu0 %7649
    %7651 = vrot.lane.b32.xlu0 %v7642, 127
    %v7652 = vpop.permute.xlu0 %7651
    %7653 = vrot.lane.b32.xlu0 %v7643, 127
    %v7654 = vpop.permute.xlu0 %7653
    %7655 = vrot.lane.b32.xlu0 %v7644, 127
    %v7656 = vpop.permute.xlu0 %7655
    %v7657 = vsel %vm762, %v7650, %v7652
    %v7658 = vsel %vm762, %v7652, %v7654
    %v7659 = vsel %vm762, %v7654, %v7656
    %v7664 = vmax.f32 %v7641, %v7657
    %v7665 = vmax.f32 %v7642, %v7658
    %v7666 = vmax.f32 %v7643, %v7659
    %v7667 = vmax.f32 %v7644, %v7656
    %v7668 = vadd.f32 %v7664, %v4671
    %v7669 = vadd.f32 %v7665, %v4675
    %v7670 = vadd.f32 %v7666, %v4679
    %v7671 = vadd.f32 %v7667, %v4683
    %v7672 = vmax.f32 %v7668, 0.0
    %v7673 = vmax.f32 %v7669, 0.0
    %v7674 = vmax.f32 %v7670, 0.0
    %v7675 = vmax.f32 %v7671, 0.0
    %v7676 = vpack.c.bf16 %v7672, %v7672
    %v7677 = vpack.c.bf16 %v7673, %v7673
    %v7678 = vpack.c.bf16 %v7674, %v7674
    %v7679 = vpack.c.bf16 %v7675, %v7675
    %s7680 = scalar_lea.vmem [#allocation13], 3024
    %v7681 = vld [vmem:[%s7680] sm:$0xff]
    %v7682 = vld [vmem:[%s7680 + $0x8] sm:$0xff]
    %v7683 = vld [vmem:[%s7680 + $0x10] sm:$0xff]
    %v7684 = vld [vmem:[%s7680 + $0x18] sm:$0xff]
    %v7685 = vld [vmem:[%s7680 + $0x20] sm:$0xff]
    %v7686 = vld [vmem:[%s7680 + $0x28] sm:$0xff]
    %v7687 = vld [vmem:[%s7680 + $0x30] sm:$0xff]
    %v7688 = vld [vmem:[%s7680 + $0x38] sm:$0xff]
    %v7689 = vld [vmem:[%s7680 + $0x40] sm:$0xff]
    %v7690 = vld [vmem:[%s7680 + $0x48] sm:$0xff]
    %v7691 = vld [vmem:[%s7680 + $0x50] sm:$0xff]
    %v7692 = vld [vmem:[%s7680 + $0x58] sm:$0xff]
    %v7693 = vld [vmem:[%s7680 + $0x60] sm:$0xff]
    %v7694 = vld [vmem:[%s7680 + $0x68] sm:$0xff]
    %v7695 = vld [vmem:[%s7680 + $0x70] sm:$0xff]
    %v7696 = vld [vmem:[%s7680 + $0x78] sm:$0xff]
    %v7697 = vld [vmem:[%s7680 + $0x80] sm:$0xff]
    %v7698 = vld [vmem:[%s7680 + $0x88] sm:$0xff]
    %v7699 = vld [vmem:[%s7680 + $0x90] sm:$0xff]
    %v7700 = vld [vmem:[%s7680 + $0x98] sm:$0xff]
    %v7701 = vld [vmem:[%s7680 + $0xa0] sm:$0xff]
    %v7702 = vld [vmem:[%s7680 + $0xa8] sm:$0xff]
    %v7703 = vld [vmem:[%s7680 + $0xb0] sm:$0xff]
    %v7704 = vld [vmem:[%s7680 + $0xb8] sm:$0xff]
    %v7705 = vld [vmem:[%s7680 + $0xc0] sm:$0xff]
    %v7706 = vld [vmem:[%s7680 + $0xc8] sm:$0xff]
    %v7707 = vld [vmem:[%s7680 + $0xd0] sm:$0xff]
    %v7708 = vld [vmem:[%s7680 + $0xd8] sm:$0xff]
    %v7709 = vld [vmem:[%s7680 + $0xe0] sm:$0xff]
    %v7710 = vld [vmem:[%s7680 + $0xe8] sm:$0xff]
    %v7711 = vld [vmem:[%s7680 + $0xf0] sm:$0xff]
    %v7712 = vld [vmem:[%s7680 + $0xf8] sm:$0xff]
    %v7713 = vld [vmem:[%s7680 + $0x100] sm:$0xff]
    %v7714 = vld [vmem:[%s7680 + $0x108] sm:$0xff]
    %v7715 = vld [vmem:[%s7680 + $0x110] sm:$0xff]
    %v7716 = vld [vmem:[%s7680 + $0x118] sm:$0xff]
    %v7717 = vld [vmem:[%s7680 + $0x120] sm:$0xff]
    %v7718 = vld [vmem:[%s7680 + $0x128] sm:$0xff]
    %v7719 = vld [vmem:[%s7680 + $0x130] sm:$0xff]
    %v7720 = vld [vmem:[%s7680 + $0x138] sm:$0xff]
    %v7721 = vld [vmem:[%s7680 + $0x140] sm:$0xff]
    %v7722 = vld [vmem:[%s7680 + $0x148] sm:$0xff]
    %v7723 = vld [vmem:[%s7680 + $0x150] sm:$0xff]
    %v7724 = vld [vmem:[%s7680 + $0x158] sm:$0xff]
    %v7725 = vld [vmem:[%s7680 + $0x160] sm:$0xff]
    %v7726 = vld [vmem:[%s7680 + $0x168] sm:$0xff]
    %v7727 = vld [vmem:[%s7680 + $0x170] sm:$0xff]
    %v7728 = vld [vmem:[%s7680 + $0x178] sm:$0xff]
    %v7729 = vld [vmem:[%s7680 + $0x180] sm:$0xff]
    %v7730 = vld [vmem:[%s7680 + $0x188] sm:$0xff]
    %v7731 = vld [vmem:[%s7680 + $0x190] sm:$0xff]
    %v7732 = vld [vmem:[%s7680 + $0x198] sm:$0xff]
    %v7733 = vld [vmem:[%s7680 + $0x1a0] sm:$0xff]
    %v7734 = vld [vmem:[%s7680 + $0x1a8] sm:$0xff]
    %v7735 = vld [vmem:[%s7680 + $0x1b0] sm:$0xff]
    %v7736 = vld [vmem:[%s7680 + $0x1b8] sm:$0xff]
    %v7737 = vld [vmem:[%s7680 + $0x1c0] sm:$0xff]
    %v7738 = vld [vmem:[%s7680 + $0x1c8] sm:$0xff]
    %v7739 = vld [vmem:[%s7680 + $0x1d0] sm:$0xff]
    %v7740 = vld [vmem:[%s7680 + $0x1d8] sm:$0xff]
    %v7741 = vld [vmem:[%s7680 + $0x1e0] sm:$0xff]
    %v7742 = vld [vmem:[%s7680 + $0x1e8] sm:$0xff]
    %v7743 = vld [vmem:[%s7680 + $0x1f0] sm:$0xff]
    %v7744 = vld [vmem:[%s7680 + $0x1f8] sm:$0xff]
    %v7745 = vld [vmem:[%s7680 + $0x200] sm:$0xff]
    %v7746 = vld [vmem:[%s7680 + $0x208] sm:$0xff]
    %v7747 = vld [vmem:[%s7680 + $0x210] sm:$0xff]
    %v7748 = vld [vmem:[%s7680 + $0x218] sm:$0xff]
    %v7749 = vld [vmem:[%s7680 + $0x220] sm:$0xff]
    %v7750 = vld [vmem:[%s7680 + $0x228] sm:$0xff]
    %v7751 = vld [vmem:[%s7680 + $0x230] sm:$0xff]
    %v7752 = vld [vmem:[%s7680 + $0x238] sm:$0xff]
    %v7753 = vld [vmem:[%s7680 + $0x240] sm:$0xff]
    %v7754 = vld [vmem:[%s7680 + $0x248] sm:$0xff]
    %v7755 = vld [vmem:[%s7680 + $0x250] sm:$0xff]
    %v7756 = vld [vmem:[%s7680 + $0x258] sm:$0xff]
    %v7757 = vld [vmem:[%s7680 + $0x260] sm:$0xff]
    %v7758 = vld [vmem:[%s7680 + $0x268] sm:$0xff]
    %v7759 = vld [vmem:[%s7680 + $0x270] sm:$0xff]
    %v7760 = vld [vmem:[%s7680 + $0x278] sm:$0xff]
    %v7761 = vld [vmem:[%s7680 + $0x280] sm:$0xff]
    %v7762 = vld [vmem:[%s7680 + $0x288] sm:$0xff]
    %v7763 = vld [vmem:[%s7680 + $0x290] sm:$0xff]
    %v7764 = vld [vmem:[%s7680 + $0x298] sm:$0xff]
    %v7765 = vld [vmem:[%s7680 + $0x2a0] sm:$0xff]
    %v7766 = vld [vmem:[%s7680 + $0x2a8] sm:$0xff]
    %v7767 = vld [vmem:[%s7680 + $0x2b0] sm:$0xff]
    %v7768 = vld [vmem:[%s7680 + $0x2b8] sm:$0xff]
    %v7769 = vld [vmem:[%s7680 + $0x2c0] sm:$0xff]
    %v7770 = vld [vmem:[%s7680 + $0x2c8] sm:$0xff]
    %v7771 = vld [vmem:[%s7680 + $0x2d0] sm:$0xff]
    %v7772 = vld [vmem:[%s7680 + $0x2d8] sm:$0xff]
    %v7773 = vld [vmem:[%s7680 + $0x2e0] sm:$0xff]
    %v7774 = vld [vmem:[%s7680 + $0x2e8] sm:$0xff]
    %v7775 = vld [vmem:[%s7680 + $0x2f0] sm:$0xff]
    %v7776 = vld [vmem:[%s7680 + $0x2f8] sm:$0xff]
    %v7777 = vld [vmem:[%s7680 + $0x300] sm:$0xff]
    %v7778 = vld [vmem:[%s7680 + $0x308] sm:$0xff]
    %v7779 = vld [vmem:[%s7680 + $0x310] sm:$0xff]
    %v7780 = vld [vmem:[%s7680 + $0x318] sm:$0xff]
    %v7781 = vld [vmem:[%s7680 + $0x320] sm:$0xff]
    %v7782 = vld [vmem:[%s7680 + $0x328] sm:$0xff]
    %v7783 = vld [vmem:[%s7680 + $0x330] sm:$0xff]
    %v7784 = vld [vmem:[%s7680 + $0x338] sm:$0xff]
    %v7785 = vld [vmem:[%s7680 + $0x340] sm:$0xff]
    %v7786 = vld [vmem:[%s7680 + $0x348] sm:$0xff]
    %v7787 = vld [vmem:[%s7680 + $0x350] sm:$0xff]
    %v7788 = vld [vmem:[%s7680 + $0x358] sm:$0xff]
    %v7789 = vld [vmem:[%s7680 + $0x360] sm:$0xff]
    %v7790 = vld [vmem:[%s7680 + $0x368] sm:$0xff]
    %v7791 = vld [vmem:[%s7680 + $0x370] sm:$0xff]
    %v7792 = vld [vmem:[%s7680 + $0x378] sm:$0xff]
    %v7793 = vld [vmem:[%s7680 + $0x380] sm:$0xff]
    %v7794 = vld [vmem:[%s7680 + $0x388] sm:$0xff]
    %v7795 = vld [vmem:[%s7680 + $0x390] sm:$0xff]
    %v7796 = vld [vmem:[%s7680 + $0x398] sm:$0xff]
    %v7797 = vld [vmem:[%s7680 + $0x3a0] sm:$0xff]
    %v7798 = vld [vmem:[%s7680 + $0x3a8] sm:$0xff]
    %v7799 = vld [vmem:[%s7680 + $0x3b0] sm:$0xff]
    %v7800 = vld [vmem:[%s7680 + $0x3b8] sm:$0xff]
    %v7801 = vld [vmem:[%s7680 + $0x3c0] sm:$0xff]
    %v7802 = vld [vmem:[%s7680 + $0x3c8] sm:$0xff]
    %v7803 = vld [vmem:[%s7680 + $0x3d0] sm:$0xff]
    %v7804 = vld [vmem:[%s7680 + $0x3d8] sm:$0xff]
    %v7805 = vld [vmem:[%s7680 + $0x3e0] sm:$0x33]
    %v7806 = vld [vmem:[%s7680 + $0x3e8] sm:$0x33]
    %v7933 = vunpack.c.l.b16 %v7681
    %v7934 = vunpack.c.h.b16 %v7681
    %v7935 = vunpack.c.l.b16 %v7682
    %v7936 = vunpack.c.h.b16 %v7682
    %v7937 = vunpack.c.l.b16 %v7683
    %v7938 = vunpack.c.h.b16 %v7683
    %v7939 = vunpack.c.l.b16 %v7684
    %v7940 = vunpack.c.h.b16 %v7684
    %v7941 = vunpack.c.l.b16 %v7685
    %v7942 = vunpack.c.h.b16 %v7685
    %v7943 = vunpack.c.l.b16 %v7686
    %v7944 = vunpack.c.h.b16 %v7686
    %v7945 = vunpack.c.l.b16 %v7687
    %v7946 = vunpack.c.h.b16 %v7687
    %v7947 = vunpack.c.l.b16 %v7688
    %v7948 = vunpack.c.h.b16 %v7688
    %v7949 = vunpack.c.l.b16 %v7689
    %v7950 = vunpack.c.h.b16 %v7689
    %v7951 = vunpack.c.l.b16 %v7690
    %v7952 = vunpack.c.h.b16 %v7690
    %v7953 = vunpack.c.l.b16 %v7691
    %v7954 = vunpack.c.h.b16 %v7691
    %v7955 = vunpack.c.l.b16 %v7692
    %v7956 = vunpack.c.h.b16 %v7692
    %v7957 = vunpack.c.l.b16 %v7693
    %v7958 = vunpack.c.h.b16 %v7693
    %v7959 = vunpack.c.l.b16 %v7694
    %v7960 = vunpack.c.h.b16 %v7694
    %v7961 = vunpack.c.l.b16 %v7695
    %v7962 = vunpack.c.h.b16 %v7695
    %v7963 = vunpack.c.l.b16 %v7696
    %v7964 = vunpack.c.h.b16 %v7696
    %v7965 = vunpack.c.l.b16 %v7697
    %v7966 = vunpack.c.h.b16 %v7697
    %v7967 = vunpack.c.l.b16 %v7698
    %v7968 = vunpack.c.h.b16 %v7698
    %v7969 = vunpack.c.l.b16 %v7699
    %v7970 = vunpack.c.h.b16 %v7699
    %v7971 = vunpack.c.l.b16 %v7700
    %v7972 = vunpack.c.h.b16 %v7700
    %v7973 = vunpack.c.l.b16 %v7701
    %v7974 = vunpack.c.h.b16 %v7701
    %v7975 = vunpack.c.l.b16 %v7702
    %v7976 = vunpack.c.h.b16 %v7702
    %v7977 = vunpack.c.l.b16 %v7703
    %v7978 = vunpack.c.h.b16 %v7703
    %v7979 = vunpack.c.l.b16 %v7704
    %v7980 = vunpack.c.h.b16 %v7704
    %v7981 = vunpack.c.l.b16 %v7705
    %v7982 = vunpack.c.h.b16 %v7705
    %v7983 = vunpack.c.l.b16 %v7706
    %v7984 = vunpack.c.h.b16 %v7706
    %v7985 = vunpack.c.l.b16 %v7707
    %v7986 = vunpack.c.h.b16 %v7707
    %v7987 = vunpack.c.l.b16 %v7708
    %v7988 = vunpack.c.h.b16 %v7708
    %v7989 = vunpack.c.l.b16 %v7709
    %v7990 = vunpack.c.h.b16 %v7709
    %v7991 = vunpack.c.l.b16 %v7710
    %v7992 = vunpack.c.h.b16 %v7710
    %v7993 = vunpack.c.l.b16 %v7711
    %v7994 = vunpack.c.h.b16 %v7711
    %v7995 = vunpack.c.l.b16 %v7712
    %v7996 = vunpack.c.h.b16 %v7712
    %v7997 = vunpack.c.l.b16 %v7713
    %v7998 = vunpack.c.h.b16 %v7713
    %v7999 = vunpack.c.l.b16 %v7714
    %v8000 = vunpack.c.h.b16 %v7714
    %v8001 = vunpack.c.l.b16 %v7715
    %v8002 = vunpack.c.h.b16 %v7715
    %v8003 = vunpack.c.l.b16 %v7716
    %v8004 = vunpack.c.h.b16 %v7716
    %v8005 = vunpack.c.l.b16 %v7717
    %v8006 = vunpack.c.h.b16 %v7717
    %v8007 = vunpack.c.l.b16 %v7718
    %v8008 = vunpack.c.h.b16 %v7718
    %v8009 = vunpack.c.l.b16 %v7719
    %v8010 = vunpack.c.h.b16 %v7719
    %v8011 = vunpack.c.l.b16 %v7720
    %v8012 = vunpack.c.h.b16 %v7720
    %v8013 = vunpack.c.l.b16 %v7721
    %v8014 = vunpack.c.h.b16 %v7721
    %v8015 = vunpack.c.l.b16 %v7722
    %v8016 = vunpack.c.h.b16 %v7722
    %v8017 = vunpack.c.l.b16 %v7723
    %v8018 = vunpack.c.h.b16 %v7723
    %v8019 = vunpack.c.l.b16 %v7724
    %v8020 = vunpack.c.h.b16 %v7724
    %v8021 = vunpack.c.l.b16 %v7725
    %v8022 = vunpack.c.h.b16 %v7725
    %v8023 = vunpack.c.l.b16 %v7726
    %v8024 = vunpack.c.h.b16 %v7726
    %v8025 = vunpack.c.l.b16 %v7727
    %v8026 = vunpack.c.h.b16 %v7727
    %v8027 = vunpack.c.l.b16 %v7728
    %v8028 = vunpack.c.h.b16 %v7728
    %v8029 = vunpack.c.l.b16 %v7729
    %v8030 = vunpack.c.h.b16 %v7729
    %v8031 = vunpack.c.l.b16 %v7730
    %v8032 = vunpack.c.h.b16 %v7730
    %v8033 = vunpack.c.l.b16 %v7731
    %v8034 = vunpack.c.h.b16 %v7731
    %v8035 = vunpack.c.l.b16 %v7732
    %v8036 = vunpack.c.h.b16 %v7732
    %v8037 = vunpack.c.l.b16 %v7733
    %v8038 = vunpack.c.h.b16 %v7733
    %v8039 = vunpack.c.l.b16 %v7734
    %v8040 = vunpack.c.h.b16 %v7734
    %v8041 = vunpack.c.l.b16 %v7735
    %v8042 = vunpack.c.h.b16 %v7735
    %v8043 = vunpack.c.l.b16 %v7736
    %v8044 = vunpack.c.h.b16 %v7736
    %v8045 = vunpack.c.l.b16 %v7737
    %v8046 = vunpack.c.h.b16 %v7737
    %v8047 = vunpack.c.l.b16 %v7738
    %v8048 = vunpack.c.h.b16 %v7738
    %v8049 = vunpack.c.l.b16 %v7739
    %v8050 = vunpack.c.h.b16 %v7739
    %v8051 = vunpack.c.l.b16 %v7740
    %v8052 = vunpack.c.h.b16 %v7740
    %v8053 = vunpack.c.l.b16 %v7741
    %v8054 = vunpack.c.h.b16 %v7741
    %v8055 = vunpack.c.l.b16 %v7742
    %v8056 = vunpack.c.h.b16 %v7742
    %v8057 = vunpack.c.l.b16 %v7743
    %v8058 = vunpack.c.h.b16 %v7743
    %v8059 = vunpack.c.l.b16 %v7744
    %v8060 = vunpack.c.h.b16 %v7744
    %v8061 = vunpack.c.l.b16 %v7745
    %v8062 = vunpack.c.h.b16 %v7745
    %v8063 = vunpack.c.l.b16 %v7746
    %v8064 = vunpack.c.h.b16 %v7746
    %v8065 = vunpack.c.l.b16 %v7747
    %v8066 = vunpack.c.h.b16 %v7747
    %v8067 = vunpack.c.l.b16 %v7748
    %v8068 = vunpack.c.h.b16 %v7748
    %v8069 = vunpack.c.l.b16 %v7749
    %v8070 = vunpack.c.h.b16 %v7749
    %v8071 = vunpack.c.l.b16 %v7750
    %v8072 = vunpack.c.h.b16 %v7750
    %v8073 = vunpack.c.l.b16 %v7751
    %v8074 = vunpack.c.h.b16 %v7751
    %v8075 = vunpack.c.l.b16 %v7752
    %v8076 = vunpack.c.h.b16 %v7752
    %v8077 = vunpack.c.l.b16 %v7753
    %v8078 = vunpack.c.h.b16 %v7753
    %v8079 = vunpack.c.l.b16 %v7754
    %v8080 = vunpack.c.h.b16 %v7754
    %v8081 = vunpack.c.l.b16 %v7755
    %v8082 = vunpack.c.h.b16 %v7755
    %v8083 = vunpack.c.l.b16 %v7756
    %v8084 = vunpack.c.h.b16 %v7756
    %v8085 = vunpack.c.l.b16 %v7757
    %v8086 = vunpack.c.h.b16 %v7757
    %v8087 = vunpack.c.l.b16 %v7758
    %v8088 = vunpack.c.h.b16 %v7758
    %v8089 = vunpack.c.l.b16 %v7759
    %v8090 = vunpack.c.h.b16 %v7759
    %v8091 = vunpack.c.l.b16 %v7760
    %v8092 = vunpack.c.h.b16 %v7760
    %v8093 = vunpack.c.l.b16 %v7761
    %v8094 = vunpack.c.h.b16 %v7761
    %v8095 = vunpack.c.l.b16 %v7762
    %v8096 = vunpack.c.h.b16 %v7762
    %v8097 = vunpack.c.l.b16 %v7763
    %v8098 = vunpack.c.h.b16 %v7763
    %v8099 = vunpack.c.l.b16 %v7764
    %v8100 = vunpack.c.h.b16 %v7764
    %v8101 = vunpack.c.l.b16 %v7765
    %v8102 = vunpack.c.h.b16 %v7765
    %v8103 = vunpack.c.l.b16 %v7766
    %v8104 = vunpack.c.h.b16 %v7766
    %v8105 = vunpack.c.l.b16 %v7767
    %v8106 = vunpack.c.h.b16 %v7767
    %v8107 = vunpack.c.l.b16 %v7768
    %v8108 = vunpack.c.h.b16 %v7768
    %v8109 = vunpack.c.l.b16 %v7769
    %v8110 = vunpack.c.h.b16 %v7769
    %v8111 = vunpack.c.l.b16 %v7770
    %v8112 = vunpack.c.h.b16 %v7770
    %v8113 = vunpack.c.l.b16 %v7771
    %v8114 = vunpack.c.h.b16 %v7771
    %v8115 = vunpack.c.l.b16 %v7772
    %v8116 = vunpack.c.h.b16 %v7772
    %v8117 = vunpack.c.l.b16 %v7773
    %v8118 = vunpack.c.h.b16 %v7773
    %v8119 = vunpack.c.l.b16 %v7774
    %v8120 = vunpack.c.h.b16 %v7774
    %v8121 = vunpack.c.l.b16 %v7775
    %v8122 = vunpack.c.h.b16 %v7775
    %v8123 = vunpack.c.l.b16 %v7776
    %v8124 = vunpack.c.h.b16 %v7776
    %v8125 = vunpack.c.l.b16 %v7777
    %v8126 = vunpack.c.h.b16 %v7777
    %v8127 = vunpack.c.l.b16 %v7778
    %v8128 = vunpack.c.h.b16 %v7778
    %v8129 = vunpack.c.l.b16 %v7779
    %v8130 = vunpack.c.h.b16 %v7779
    %v8131 = vunpack.c.l.b16 %v7780
    %v8132 = vunpack.c.h.b16 %v7780
    %v8133 = vunpack.c.l.b16 %v7781
    %v8134 = vunpack.c.h.b16 %v7781
    %v8135 = vunpack.c.l.b16 %v7782
    %v8136 = vunpack.c.h.b16 %v7782
    %v8137 = vunpack.c.l.b16 %v7783
    %v8138 = vunpack.c.h.b16 %v7783
    %v8139 = vunpack.c.l.b16 %v7784
    %v8140 = vunpack.c.h.b16 %v7784
    %v8141 = vunpack.c.l.b16 %v7785
    %v8142 = vunpack.c.h.b16 %v7785
    %v8143 = vunpack.c.l.b16 %v7786
    %v8144 = vunpack.c.h.b16 %v7786
    %v8145 = vunpack.c.l.b16 %v7787
    %v8146 = vunpack.c.h.b16 %v7787
    %v8147 = vunpack.c.l.b16 %v7788
    %v8148 = vunpack.c.h.b16 %v7788
    %v8149 = vunpack.c.l.b16 %v7789
    %v8150 = vunpack.c.h.b16 %v7789
    %v8151 = vunpack.c.l.b16 %v7790
    %v8152 = vunpack.c.h.b16 %v7790
    %v8153 = vunpack.c.l.b16 %v7791
    %v8154 = vunpack.c.h.b16 %v7791
    %v8155 = vunpack.c.l.b16 %v7792
    %v8156 = vunpack.c.h.b16 %v7792
    %v8157 = vunpack.c.l.b16 %v7793
    %v8158 = vunpack.c.h.b16 %v7793
    %v8159 = vunpack.c.l.b16 %v7794
    %v8160 = vunpack.c.h.b16 %v7794
    %v8161 = vunpack.c.l.b16 %v7795
    %v8162 = vunpack.c.h.b16 %v7795
    %v8163 = vunpack.c.l.b16 %v7796
    %v8164 = vunpack.c.h.b16 %v7796
    %v8165 = vunpack.c.l.b16 %v7797
    %v8166 = vunpack.c.h.b16 %v7797
    %v8167 = vunpack.c.l.b16 %v7798
    %v8168 = vunpack.c.h.b16 %v7798
    %v8169 = vunpack.c.l.b16 %v7799
    %v8170 = vunpack.c.h.b16 %v7799
    %v8171 = vunpack.c.l.b16 %v7800
    %v8172 = vunpack.c.h.b16 %v7800
    %v8173 = vunpack.c.l.b16 %v7801
    %v8174 = vunpack.c.h.b16 %v7801
    %v8175 = vunpack.c.l.b16 %v7802
    %v8176 = vunpack.c.h.b16 %v7802
    %v8177 = vunpack.c.l.b16 %v7803
    %v8178 = vunpack.c.h.b16 %v7803
    %v8179 = vunpack.c.l.b16 %v7804
    %v8180 = vunpack.c.h.b16 %v7804
    %v8181 = vunpack.c.l.b16 %v7805
    %v8182 = vunpack.c.h.b16 %v7805
    %v8183 = vunpack.c.l.b16 %v7806
    %v8184 = vunpack.c.h.b16 %v7806
    %v8185 = vpack.c.b16 %v7937, %v7933
    %v8186 = vpack.c.b16 %v7938, %v7934
    %v8187 = vpack.c.b16 %v7939, %v7935
    %v8188 = vpack.c.b16 %v7940, %v7936
    %v8189 = vpack.c.b16 %v7945, %v7941
    %v8190 = vpack.c.b16 %v7946, %v7942
    %v8191 = vpack.c.b16 %v7947, %v7943
    %v8192 = vpack.c.b16 %v7948, %v7944
    %v8193 = vpack.c.b16 %v7953, %v7949
    %v8194 = vpack.c.b16 %v7954, %v7950
    %v8195 = vpack.c.b16 %v7955, %v7951
    %v8196 = vpack.c.b16 %v7956, %v7952
    %v8197 = vpack.c.b16 %v7961, %v7957
    %v8198 = vpack.c.b16 %v7962, %v7958
    %v8199 = vpack.c.b16 %v7963, %v7959
    %v8200 = vpack.c.b16 %v7964, %v7960
    %v8201 = vpack.c.b16 %v7969, %v7965
    %v8202 = vpack.c.b16 %v7970, %v7966
    %v8203 = vpack.c.b16 %v7971, %v7967
    %v8204 = vpack.c.b16 %v7972, %v7968
    %v8205 = vpack.c.b16 %v7977, %v7973
    %v8206 = vpack.c.b16 %v7978, %v7974
    %v8207 = vpack.c.b16 %v7979, %v7975
    %v8208 = vpack.c.b16 %v7980, %v7976
    %v8209 = vpack.c.b16 %v7985, %v7981
    %v8210 = vpack.c.b16 %v7986, %v7982
    %v8211 = vpack.c.b16 %v7987, %v7983
    %v8212 = vpack.c.b16 %v7988, %v7984
    %v8213 = vpack.c.b16 %v7993, %v7989
    %v8214 = vpack.c.b16 %v7994, %v7990
    %v8215 = vpack.c.b16 %v7995, %v7991
    %v8216 = vpack.c.b16 %v7996, %v7992
    %v8217 = vpack.c.b16 %v8001, %v7997
    %v8218 = vpack.c.b16 %v8002, %v7998
    %v8219 = vpack.c.b16 %v8003, %v7999
    %v8220 = vpack.c.b16 %v8004, %v8000
    %v8221 = vpack.c.b16 %v8009, %v8005
    %v8222 = vpack.c.b16 %v8010, %v8006
    %v8223 = vpack.c.b16 %v8011, %v8007
    %v8224 = vpack.c.b16 %v8012, %v8008
    %v8225 = vpack.c.b16 %v8017, %v8013
    %v8226 = vpack.c.b16 %v8018, %v8014
    %v8227 = vpack.c.b16 %v8019, %v8015
    %v8228 = vpack.c.b16 %v8020, %v8016
    %v8229 = vpack.c.b16 %v8025, %v8021
    %v8230 = vpack.c.b16 %v8026, %v8022
    %v8231 = vpack.c.b16 %v8027, %v8023
    %v8232 = vpack.c.b16 %v8028, %v8024
    %v8233 = vpack.c.b16 %v8033, %v8029
    %v8234 = vpack.c.b16 %v8034, %v8030
    %v8235 = vpack.c.b16 %v8035, %v8031
    %v8236 = vpack.c.b16 %v8036, %v8032
    %v8237 = vpack.c.b16 %v8041, %v8037
    %v8238 = vpack.c.b16 %v8042, %v8038
    %v8239 = vpack.c.b16 %v8043, %v8039
    %v8240 = vpack.c.b16 %v8044, %v8040
    %v8241 = vpack.c.b16 %v8049, %v8045
    %v8242 = vpack.c.b16 %v8050, %v8046
    %v8243 = vpack.c.b16 %v8051, %v8047
    %v8244 = vpack.c.b16 %v8052, %v8048
    %v8245 = vpack.c.b16 %v8057, %v8053
    %v8246 = vpack.c.b16 %v8058, %v8054
    %v8247 = vpack.c.b16 %v8059, %v8055
    %v8248 = vpack.c.b16 %v8060, %v8056
    %v8249 = vpack.c.b16 %v8065, %v8061
    %v8250 = vpack.c.b16 %v8066, %v8062
    %v8251 = vpack.c.b16 %v8067, %v8063
    %v8252 = vpack.c.b16 %v8068, %v8064
    %v8253 = vpack.c.b16 %v8073, %v8069
    %v8254 = vpack.c.b16 %v8074, %v8070
    %v8255 = vpack.c.b16 %v8075, %v8071
    %v8256 = vpack.c.b16 %v8076, %v8072
    %v8257 = vpack.c.b16 %v8081, %v8077
    %v8258 = vpack.c.b16 %v8082, %v8078
    %v8259 = vpack.c.b16 %v8083, %v8079
    %v8260 = vpack.c.b16 %v8084, %v8080
    %v8261 = vpack.c.b16 %v8089, %v8085
    %v8262 = vpack.c.b16 %v8090, %v8086
    %v8263 = vpack.c.b16 %v8091, %v8087
    %v8264 = vpack.c.b16 %v8092, %v8088
    %v8265 = vpack.c.b16 %v8097, %v8093
    %v8266 = vpack.c.b16 %v8098, %v8094
    %v8267 = vpack.c.b16 %v8099, %v8095
    %v8268 = vpack.c.b16 %v8100, %v8096
    %v8269 = vpack.c.b16 %v8105, %v8101
    %v8270 = vpack.c.b16 %v8106, %v8102
    %v8271 = vpack.c.b16 %v8107, %v8103
    %v8272 = vpack.c.b16 %v8108, %v8104
    %v8273 = vpack.c.b16 %v8113, %v8109
    %v8274 = vpack.c.b16 %v8114, %v8110
    %v8275 = vpack.c.b16 %v8115, %v8111
    %v8276 = vpack.c.b16 %v8116, %v8112
    %v8277 = vpack.c.b16 %v8121, %v8117
    %v8278 = vpack.c.b16 %v8122, %v8118
    %v8279 = vpack.c.b16 %v8123, %v8119
    %v8280 = vpack.c.b16 %v8124, %v8120
    %v8281 = vpack.c.b16 %v8129, %v8125
    %v8282 = vpack.c.b16 %v8130, %v8126
    %v8283 = vpack.c.b16 %v8131, %v8127
    %v8284 = vpack.c.b16 %v8132, %v8128
    %v8285 = vpack.c.b16 %v8137, %v8133
    %v8286 = vpack.c.b16 %v8138, %v8134
    %v8287 = vpack.c.b16 %v8139, %v8135
    %v8288 = vpack.c.b16 %v8140, %v8136
    %v8289 = vpack.c.b16 %v8145, %v8141
    %v8290 = vpack.c.b16 %v8146, %v8142
    %v8291 = vpack.c.b16 %v8147, %v8143
    %v8292 = vpack.c.b16 %v8148, %v8144
    %v8293 = vpack.c.b16 %v8153, %v8149
    %v8294 = vpack.c.b16 %v8154, %v8150
    %v8295 = vpack.c.b16 %v8155, %v8151
    %v8296 = vpack.c.b16 %v8156, %v8152
    %v8297 = vpack.c.b16 %v8161, %v8157
    %v8298 = vpack.c.b16 %v8162, %v8158
    %v8299 = vpack.c.b16 %v8163, %v8159
    %v8300 = vpack.c.b16 %v8164, %v8160
    %v8301 = vpack.c.b16 %v8169, %v8165
    %v8302 = vpack.c.b16 %v8170, %v8166
    %v8303 = vpack.c.b16 %v8171, %v8167
    %v8304 = vpack.c.b16 %v8172, %v8168
    %v8305 = vpack.c.b16 %v8177, %v8173
    %v8306 = vpack.c.b16 %v8178, %v8174
    %v8307 = vpack.c.b16 %v8179, %v8175
    %v8308 = vpack.c.b16 %v8180, %v8176
    %v8309 = vpack.c.b16 %v8181, %v8181
    %v8310 = vpack.c.b16 %v8182, %v8182
    %v8311 = vpack.c.b16 %v8183, %v8183
    %v8312 = vpack.c.b16 %v8184, %v8184
    %v8438 = vsel %vm5456, %v7679, 0
    %v8441 = vand.u32 %v8309, %v5462
    %v8444 = vand.u32 %v8310, %v5462
    %v8447 = vand.u32 %v8311, %v5462
    %v8450 = vand.u32 %v8312, %v5462
    %8452 = vmatprep.subr.bf16.mxu0 %v8186
    %8453 = vmatpush1.bf16.msra.mxu0 %v8185
    %8454 = vmatprep.subr.bf16.mxu0 %v8190
    %8455 = vmatpush1.bf16.msra.mxu0 %v8189
    %8456 = vmatprep.subr.bf16.mxu0 %v8194
    %8457 = vmatpush1.bf16.msra.mxu0 %v8193
    %8458 = vmatprep.subr.bf16.mxu0 %v8198
    %8459 = vmatpush1.bf16.msra.mxu0 %v8197
    %8460 = vmatprep.subr.bf16.mxu0 %v8202
    %8461 = vmatpush1.bf16.msra.mxu0 %v8201
    %8462 = vmatprep.subr.bf16.mxu0 %v8206
    %8463 = vmatpush1.bf16.msra.mxu0 %v8205
    %8464 = vmatprep.subr.bf16.mxu0 %v8210
    %8465 = vmatpush1.bf16.msra.mxu0 %v8209
    %8466 = vmatprep.subr.bf16.mxu0 %v8214
    %8467 = vmatpush1.bf16.msra.mxu0 %v8213
    %8468 = vmatprep.subr.bf16.mxu0 %v8218
    %8469 = vmatpush1.bf16.msra.mxu0 %v8217
    %8470 = vmatprep.subr.bf16.mxu0 %v8222
    %8471 = vmatpush1.bf16.msra.mxu0 %v8221
    %8472 = vmatprep.subr.bf16.mxu0 %v8226
    %8473 = vmatpush1.bf16.msra.mxu0 %v8225
    %8474 = vmatprep.subr.bf16.mxu0 %v8230
    %8475 = vmatpush1.bf16.msra.mxu0 %v8229
    %8476 = vmatprep.subr.bf16.mxu0 %v8234
    %8477 = vmatpush1.bf16.msra.mxu0 %v8233
    %8478 = vmatprep.subr.bf16.mxu0 %v8238
    %8479 = vmatpush1.bf16.msra.mxu0 %v8237
    %8480 = vmatprep.subr.bf16.mxu0 %v8242
    %8481 = vmatpush1.bf16.msra.mxu0 %v8241
    %8482 = vmatprep.subr.bf16.mxu0 %v8246
    %8483 = vmatpush1.bf16.msra.mxu0 %v8245
    %8484 = vmatprep.mubr.bf16.mxu0 %v7677
    %8485 = vmatmul.mubr.bf16.gmra.mrb[0].mxu0 %v7676
    %v8486 = vpop.f32.mrb[0].mxu0
    %v8487 = vadd.f32 0.0, %v8486
    %v8488 = vpop.f32.mrb[0].mxu0
    %v8489 = vadd.f32 0.0, %v8488
    %v8490 = vpop.f32.mrb[0].mxu0
    %v8491 = vpop.f32.mrb[0].mxu0
    %8492 = vdwg.mxu0
    %8493 = vmatprep.subr.bf16.mxu0 %v8250
    %8494 = vmatpush1.bf16.msra.mxu0 %v8249
    %8495 = vmatprep.subr.bf16.mxu0 %v8254
    %8496 = vmatpush1.bf16.msra.mxu0 %v8253
    %8497 = vmatprep.subr.bf16.mxu0 %v8258
    %8498 = vmatpush1.bf16.msra.mxu0 %v8257
    %8499 = vmatprep.subr.bf16.mxu0 %v8262
    %8500 = vmatpush1.bf16.msra.mxu0 %v8261
    %8501 = vmatprep.subr.bf16.mxu0 %v8266
    %8502 = vmatpush1.bf16.msra.mxu0 %v8265
    %8503 = vmatprep.subr.bf16.mxu0 %v8270
    %8504 = vmatpush1.bf16.msra.mxu0 %v8269
    %8505 = vmatprep.subr.bf16.mxu0 %v8274
    %8506 = vmatpush1.bf16.msra.mxu0 %v8273
    %8507 = vmatprep.subr.bf16.mxu0 %v8278
    %8508 = vmatpush1.bf16.msra.mxu0 %v8277
    %8509 = vmatprep.subr.bf16.mxu0 %v8282
    %8510 = vmatpush1.bf16.msra.mxu0 %v8281
    %8511 = vmatprep.subr.bf16.mxu0 %v8286
    %8512 = vmatpush1.bf16.msra.mxu0 %v8285
    %8513 = vmatprep.subr.bf16.mxu0 %v8290
    %8514 = vmatpush1.bf16.msra.mxu0 %v8289
    %8515 = vmatprep.subr.bf16.mxu0 %v8294
    %8516 = vmatpush1.bf16.msra.mxu0 %v8293
    %8517 = vmatprep.subr.bf16.mxu0 %v8298
    %8518 = vmatpush1.bf16.msra.mxu0 %v8297
    %8519 = vmatprep.subr.bf16.mxu0 %v8302
    %8520 = vmatpush1.bf16.msra.mxu0 %v8301
    %8521 = vmatprep.subr.bf16.mxu0 %v8306
    %8522 = vmatpush1.bf16.msra.mxu0 %v8305
    %8523 = vmatprep.subr.bf16.mxu0 %v8444
    %8524 = vmatpush1.bf16.msra.mxu0 %v8441
    %8525 = vmatprep.mubr.bf16.mxu0 %v8438
    %8526 = vmatmul.mubr.bf16.gmra.mrb[0].mxu0 %v7678
    %v8527 = vpop.f32.mrb[0].mxu0
    %v8528 = vadd.f32 %v8487, %v8527
    %v8529 = vpop.f32.mrb[0].mxu0
    %v8530 = vadd.f32 %v8489, %v8529
    %v8531 = vpop.f32.mrb[0].mxu0
    %v8532 = vpop.f32.mrb[0].mxu0
    %8533 = vdwg.mxu0
    %8534 = vmatprep.subr.bf16.mxu0 %v8188
    %8535 = vmatpush1.bf16.msra.mxu0 %v8187
    %8536 = vmatprep.subr.bf16.mxu0 %v8192
    %8537 = vmatpush1.bf16.msra.mxu0 %v8191
    %8538 = vmatprep.subr.bf16.mxu0 %v8196
    %8539 = vmatpush1.bf16.msra.mxu0 %v8195
    %8540 = vmatprep.subr.bf16.mxu0 %v8200
    %8541 = vmatpush1.bf16.msra.mxu0 %v8199
    %8542 = vmatprep.subr.bf16.mxu0 %v8204
    %8543 = vmatpush1.bf16.msra.mxu0 %v8203
    %8544 = vmatprep.subr.bf16.mxu0 %v8208
    %8545 = vmatpush1.bf16.msra.mxu0 %v8207
    %8546 = vmatprep.subr.bf16.mxu0 %v8212
    %8547 = vmatpush1.bf16.msra.mxu0 %v8211
    %8548 = vmatprep.subr.bf16.mxu0 %v8216
    %8549 = vmatpush1.bf16.msra.mxu0 %v8215
    %8550 = vmatprep.subr.bf16.mxu0 %v8220
    %8551 = vmatpush1.bf16.msra.mxu0 %v8219
    %8552 = vmatprep.subr.bf16.mxu0 %v8224
    %8553 = vmatpush1.bf16.msra.mxu0 %v8223
    %8554 = vmatprep.subr.bf16.mxu0 %v8228
    %8555 = vmatpush1.bf16.msra.mxu0 %v8227
    %8556 = vmatprep.subr.bf16.mxu0 %v8232
    %8557 = vmatpush1.bf16.msra.mxu0 %v8231
    %8558 = vmatprep.subr.bf16.mxu0 %v8236
    %8559 = vmatpush1.bf16.msra.mxu0 %v8235
    %8560 = vmatprep.subr.bf16.mxu0 %v8240
    %8561 = vmatpush1.bf16.msra.mxu0 %v8239
    %8562 = vmatprep.subr.bf16.mxu0 %v8244
    %8563 = vmatpush1.bf16.msra.mxu0 %v8243
    %8564 = vmatprep.subr.bf16.mxu0 %v8248
    %8565 = vmatpush1.bf16.msra.mxu0 %v8247
    %8566 = vmatprep.mubr.bf16.mxu0 %v7677
    %8567 = vmatmul.mubr.bf16.gmra.mrb[0].mxu0 %v7676
    %v8568 = vpop.f32.mrb[0].mxu0
    %v8569 = vadd.f32 0.0, %v8568
    %v8570 = vpop.f32.mrb[0].mxu0
    %v8571 = vadd.f32 0.0, %v8570
    %v8572 = vpop.f32.mrb[0].mxu0
    %v8573 = vpop.f32.mrb[0].mxu0
    %8574 = vdwg.mxu0
    %8575 = vmatprep.subr.bf16.mxu0 %v8252
    %8576 = vmatpush1.bf16.msra.mxu0 %v8251
    %8577 = vmatprep.subr.bf16.mxu0 %v8256
    %8578 = vmatpush1.bf16.msra.mxu0 %v8255
    %8579 = vmatprep.subr.bf16.mxu0 %v8260
    %8580 = vmatpush1.bf16.msra.mxu0 %v8259
    %8581 = vmatprep.subr.bf16.mxu0 %v8264
    %8582 = vmatpush1.bf16.msra.mxu0 %v8263
    %8583 = vmatprep.subr.bf16.mxu0 %v8268
    %8584 = vmatpush1.bf16.msra.mxu0 %v8267
    %8585 = vmatprep.subr.bf16.mxu0 %v8272
    %8586 = vmatpush1.bf16.msra.mxu0 %v8271
    %8587 = vmatprep.subr.bf16.mxu0 %v8276
    %8588 = vmatpush1.bf16.msra.mxu0 %v8275
    %8589 = vmatprep.subr.bf16.mxu0 %v8280
    %8590 = vmatpush1.bf16.msra.mxu0 %v8279
    %8591 = vmatprep.subr.bf16.mxu0 %v8284
    %8592 = vmatpush1.bf16.msra.mxu0 %v8283
    %8593 = vmatprep.subr.bf16.mxu0 %v8288
    %8594 = vmatpush1.bf16.msra.mxu0 %v8287
    %8595 = vmatprep.subr.bf16.mxu0 %v8292
    %8596 = vmatpush1.bf16.msra.mxu0 %v8291
    %8597 = vmatprep.subr.bf16.mxu0 %v8296
    %8598 = vmatpush1.bf16.msra.mxu0 %v8295
    %8599 = vmatprep.subr.bf16.mxu0 %v8300
    %8600 = vmatpush1.bf16.msra.mxu0 %v8299
    %8601 = vmatprep.subr.bf16.mxu0 %v8304
    %8602 = vmatpush1.bf16.msra.mxu0 %v8303
    %8603 = vmatprep.subr.bf16.mxu0 %v8308
    %8604 = vmatpush1.bf16.msra.mxu0 %v8307
    %8605 = vmatprep.subr.bf16.mxu0 %v8450
    %8606 = vmatpush1.bf16.msra.mxu0 %v8447
    %8607 = vmatprep.mubr.bf16.mxu0 %v8438
    %8608 = vmatmul.mubr.bf16.gmra.mrb[0].mxu0 %v7678
    %v8609 = vpop.f32.mrb[0].mxu0
    %v8610 = vadd.f32 %v8569, %v8609
    %v8611 = vpop.f32.mrb[0].mxu0
    %v8612 = vadd.f32 %v8571, %v8611
    %v8613 = vpop.f32.mrb[0].mxu0
    %v8614 = vpop.f32.mrb[0].mxu0
    %8615 = vdwg.mxu0
    %v8616 = vld [vmem:[#allocation5] sm:$0xff]
    %v8617 = vld [vmem:[#allocation5 + $0x8] sm:$0xff]
    %v8618 = vld [vmem:[#allocation5 + $0x10] sm:$0xff]
    %v8619 = vld [vmem:[#allocation5 + $0x18] sm:$0xff]
    %v8620 = vadd.f32 %v8616, %v8528
    %v8621 = vadd.f32 %v8617, %v8530
    %v8622 = vadd.f32 %v8618, %v8610
    %v8623 = vadd.f32 %v8619, %v8612
    %8624 = vst [vmem:[#allocation5] sm:$0xff] %v8620
    %8625 = vst [vmem:[#allocation5 + $0x8] sm:$0xff] %v8621
    %8626 = vst [vmem:[#allocation5 + $0x10] sm:$0xff] %v8622
    %8627 = vst.msk [vmem:[#allocation5 + $0x18] sm:$0xff] %vm2313, %v8623
    %v8628 = vld [vmem:[#allocation4 + $0x100] sm:$0xff]
    %v8629 = vld [vmem:[#allocation4 + $0x108] sm:$0xff]
    %v8630 = vld [vmem:[#allocation4 + $0x110] sm:$0xff]
    %v8631 = vld [vmem:[#allocation4 + $0x118] sm:$0xff]
    %v8632 = vld [vmem:[#allocation4 + $0x120] sm:$0xff]
    %v8633 = vld [vmem:[#allocation4 + $0x128] sm:$0xff]
    %v8634 = vld [vmem:[#allocation4 + $0x130] sm:$0xff]
    %v8635 = vld [vmem:[#allocation4 + $0x138] sm:$0xff]
    %v8636 = vmax.f32 %v8628, %v8632
    %v8637 = vmax.f32 %v8629, %v8633
    %v8638 = vmax.f32 %v8630, %v8634
    %v8639 = vmax.f32 %v8631, %v8635
    %8644 = vrot.lane.b32.xlu0 %v8636, 127
    %v8645 = vpop.permute.xlu0 %8644
    %8646 = vrot.lane.b32.xlu0 %v8637, 127
    %v8647 = vpop.permute.xlu0 %8646
    %8648 = vrot.lane.b32.xlu0 %v8638, 127
    %v8649 = vpop.permute.xlu0 %8648
    %8650 = vrot.lane.b32.xlu0 %v8639, 127
    %v8651 = vpop.permute.xlu0 %8650
    %v8652 = vsel %vm762, %v8645, %v8647
    %v8653 = vsel %vm762, %v8647, %v8649
    %v8654 = vsel %vm762, %v8649, %v8651
    %v8659 = vmax.f32 %v8636, %v8652
    %v8660 = vmax.f32 %v8637, %v8653
    %v8661 = vmax.f32 %v8638, %v8654
    %v8662 = vmax.f32 %v8639, %v8651
    %v8663 = vadd.f32 %v8659, %v4671
    %v8664 = vadd.f32 %v8660, %v4675
    %v8665 = vadd.f32 %v8661, %v4679
    %v8666 = vadd.f32 %v8662, %v4683
    %v8667 = vmax.f32 %v8663, 0.0
    %v8668 = vmax.f32 %v8664, 0.0
    %v8669 = vmax.f32 %v8665, 0.0
    %v8670 = vmax.f32 %v8666, 0.0
    %v8671 = vpack.c.bf16 %v8667, %v8667
    %v8672 = vpack.c.bf16 %v8668, %v8668
    %v8673 = vpack.c.bf16 %v8669, %v8669
    %v8674 = vpack.c.bf16 %v8670, %v8670
    %s8675 = scalar_lea.vmem [#allocation13], 4032
    %v8676 = vld [vmem:[%s8675] sm:$0xff]
    %v8677 = vld [vmem:[%s8675 + $0x8] sm:$0xff]
    %v8678 = vld [vmem:[%s8675 + $0x10] sm:$0xff]
    %v8679 = vld [vmem:[%s8675 + $0x18] sm:$0xff]
    %v8680 = vld [vmem:[%s8675 + $0x20] sm:$0xff]
    %v8681 = vld [vmem:[%s8675 + $0x28] sm:$0xff]
    %v8682 = vld [vmem:[%s8675 + $0x30] sm:$0xff]
    %v8683 = vld [vmem:[%s8675 + $0x38] sm:$0xff]
    %v8684 = vld [vmem:[%s8675 + $0x40] sm:$0xff]
    %v8685 = vld [vmem:[%s8675 + $0x48] sm:$0xff]
    %v8686 = vld [vmem:[%s8675 + $0x50] sm:$0xff]
    %v8687 = vld [vmem:[%s8675 + $0x58] sm:$0xff]
    %v8688 = vld [vmem:[%s8675 + $0x60] sm:$0xff]
    %v8689 = vld [vmem:[%s8675 + $0x68] sm:$0xff]
    %v8690 = vld [vmem:[%s8675 + $0x70] sm:$0xff]
    %v8691 = vld [vmem:[%s8675 + $0x78] sm:$0xff]
    %v8692 = vld [vmem:[%s8675 + $0x80] sm:$0xff]
    %v8693 = vld [vmem:[%s8675 + $0x88] sm:$0xff]
    %v8694 = vld [vmem:[%s8675 + $0x90] sm:$0xff]
    %v8695 = vld [vmem:[%s8675 + $0x98] sm:$0xff]
    %v8696 = vld [vmem:[%s8675 + $0xa0] sm:$0xff]
    %v8697 = vld [vmem:[%s8675 + $0xa8] sm:$0xff]
    %v8698 = vld [vmem:[%s8675 + $0xb0] sm:$0xff]
    %v8699 = vld [vmem:[%s8675 + $0xb8] sm:$0xff]
    %v8700 = vld [vmem:[%s8675 + $0xc0] sm:$0xff]
    %v8701 = vld [vmem:[%s8675 + $0xc8] sm:$0xff]
    %v8702 = vld [vmem:[%s8675 + $0xd0] sm:$0xff]
    %v8703 = vld [vmem:[%s8675 + $0xd8] sm:$0xff]
    %v8704 = vld [vmem:[%s8675 + $0xe0] sm:$0xff]
    %v8705 = vld [vmem:[%s8675 + $0xe8] sm:$0xff]
    %v8706 = vld [vmem:[%s8675 + $0xf0] sm:$0xff]
    %v8707 = vld [vmem:[%s8675 + $0xf8] sm:$0xff]
    %v8708 = vld [vmem:[%s8675 + $0x100] sm:$0xff]
    %v8709 = vld [vmem:[%s8675 + $0x108] sm:$0xff]
    %v8710 = vld [vmem:[%s8675 + $0x110] sm:$0xff]
    %v8711 = vld [vmem:[%s8675 + $0x118] sm:$0xff]
    %v8712 = vld [vmem:[%s8675 + $0x120] sm:$0xff]
    %v8713 = vld [vmem:[%s8675 + $0x128] sm:$0xff]
    %v8714 = vld [vmem:[%s8675 + $0x130] sm:$0xff]
    %v8715 = vld [vmem:[%s8675 + $0x138] sm:$0xff]
    %v8716 = vld [vmem:[%s8675 + $0x140] sm:$0xff]
    %v8717 = vld [vmem:[%s8675 + $0x148] sm:$0xff]
    %v8718 = vld [vmem:[%s8675 + $0x150] sm:$0xff]
    %v8719 = vld [vmem:[%s8675 + $0x158] sm:$0xff]
    %v8720 = vld [vmem:[%s8675 + $0x160] sm:$0xff]
    %v8721 = vld [vmem:[%s8675 + $0x168] sm:$0xff]
    %v8722 = vld [vmem:[%s8675 + $0x170] sm:$0xff]
    %v8723 = vld [vmem:[%s8675 + $0x178] sm:$0xff]
    %v8724 = vld [vmem:[%s8675 + $0x180] sm:$0xff]
    %v8725 = vld [vmem:[%s8675 + $0x188] sm:$0xff]
    %v8726 = vld [vmem:[%s8675 + $0x190] sm:$0xff]
    %v8727 = vld [vmem:[%s8675 + $0x198] sm:$0xff]
    %v8728 = vld [vmem:[%s8675 + $0x1a0] sm:$0xff]
    %v8729 = vld [vmem:[%s8675 + $0x1a8] sm:$0xff]
    %v8730 = vld [vmem:[%s8675 + $0x1b0] sm:$0xff]
    %v8731 = vld [vmem:[%s8675 + $0x1b8] sm:$0xff]
    %v8732 = vld [vmem:[%s8675 + $0x1c0] sm:$0xff]
    %v8733 = vld [vmem:[%s8675 + $0x1c8] sm:$0xff]
    %v8734 = vld [vmem:[%s8675 + $0x1d0] sm:$0xff]
    %v8735 = vld [vmem:[%s8675 + $0x1d8] sm:$0xff]
    %v8736 = vld [vmem:[%s8675 + $0x1e0] sm:$0xff]
    %v8737 = vld [vmem:[%s8675 + $0x1e8] sm:$0xff]
    %v8738 = vld [vmem:[%s8675 + $0x1f0] sm:$0xff]
    %v8739 = vld [vmem:[%s8675 + $0x1f8] sm:$0xff]
    %v8740 = vld [vmem:[%s8675 + $0x200] sm:$0xff]
    %v8741 = vld [vmem:[%s8675 + $0x208] sm:$0xff]
    %v8742 = vld [vmem:[%s8675 + $0x210] sm:$0xff]
    %v8743 = vld [vmem:[%s8675 + $0x218] sm:$0xff]
    %v8744 = vld [vmem:[%s8675 + $0x220] sm:$0xff]
    %v8745 = vld [vmem:[%s8675 + $0x228] sm:$0xff]
    %v8746 = vld [vmem:[%s8675 + $0x230] sm:$0xff]
    %v8747 = vld [vmem:[%s8675 + $0x238] sm:$0xff]
    %v8748 = vld [vmem:[%s8675 + $0x240] sm:$0xff]
    %v8749 = vld [vmem:[%s8675 + $0x248] sm:$0xff]
    %v8750 = vld [vmem:[%s8675 + $0x250] sm:$0xff]
    %v8751 = vld [vmem:[%s8675 + $0x258] sm:$0xff]
    %v8752 = vld [vmem:[%s8675 + $0x260] sm:$0xff]
    %v8753 = vld [vmem:[%s8675 + $0x268] sm:$0xff]
    %v8754 = vld [vmem:[%s8675 + $0x270] sm:$0xff]
    %v8755 = vld [vmem:[%s8675 + $0x278] sm:$0xff]
    %v8756 = vld [vmem:[%s8675 + $0x280] sm:$0xff]
    %v8757 = vld [vmem:[%s8675 + $0x288] sm:$0xff]
    %v8758 = vld [vmem:[%s8675 + $0x290] sm:$0xff]
    %v8759 = vld [vmem:[%s8675 + $0x298] sm:$0xff]
    %v8760 = vld [vmem:[%s8675 + $0x2a0] sm:$0xff]
    %v8761 = vld [vmem:[%s8675 + $0x2a8] sm:$0xff]
    %v8762 = vld [vmem:[%s8675 + $0x2b0] sm:$0xff]
    %v8763 = vld [vmem:[%s8675 + $0x2b8] sm:$0xff]
    %v8764 = vld [vmem:[%s8675 + $0x2c0] sm:$0xff]
    %v8765 = vld [vmem:[%s8675 + $0x2c8] sm:$0xff]
    %v8766 = vld [vmem:[%s8675 + $0x2d0] sm:$0xff]
    %v8767 = vld [vmem:[%s8675 + $0x2d8] sm:$0xff]
    %v8768 = vld [vmem:[%s8675 + $0x2e0] sm:$0xff]
    %v8769 = vld [vmem:[%s8675 + $0x2e8] sm:$0xff]
    %v8770 = vld [vmem:[%s8675 + $0x2f0] sm:$0xff]
    %v8771 = vld [vmem:[%s8675 + $0x2f8] sm:$0xff]
    %v8772 = vld [vmem:[%s8675 + $0x300] sm:$0xff]
    %v8773 = vld [vmem:[%s8675 + $0x308] sm:$0xff]
    %v8774 = vld [vmem:[%s8675 + $0x310] sm:$0xff]
    %v8775 = vld [vmem:[%s8675 + $0x318] sm:$0xff]
    %v8776 = vld [vmem:[%s8675 + $0x320] sm:$0xff]
    %v8777 = vld [vmem:[%s8675 + $0x328] sm:$0xff]
    %v8778 = vld [vmem:[%s8675 + $0x330] sm:$0xff]
    %v8779 = vld [vmem:[%s8675 + $0x338] sm:$0xff]
    %v8780 = vld [vmem:[%s8675 + $0x340] sm:$0xff]
    %v8781 = vld [vmem:[%s8675 + $0x348] sm:$0xff]
    %v8782 = vld [vmem:[%s8675 + $0x350] sm:$0xff]
    %v8783 = vld [vmem:[%s8675 + $0x358] sm:$0xff]
    %v8784 = vld [vmem:[%s8675 + $0x360] sm:$0xff]
    %v8785 = vld [vmem:[%s8675 + $0x368] sm:$0xff]
    %v8786 = vld [vmem:[%s8675 + $0x370] sm:$0xff]
    %v8787 = vld [vmem:[%s8675 + $0x378] sm:$0xff]
    %v8788 = vld [vmem:[%s8675 + $0x380] sm:$0xff]
    %v8789 = vld [vmem:[%s8675 + $0x388] sm:$0xff]
    %v8790 = vld [vmem:[%s8675 + $0x390] sm:$0xff]
    %v8791 = vld [vmem:[%s8675 + $0x398] sm:$0xff]
    %v8792 = vld [vmem:[%s8675 + $0x3a0] sm:$0xff]
    %v8793 = vld [vmem:[%s8675 + $0x3a8] sm:$0xff]
    %v8794 = vld [vmem:[%s8675 + $0x3b0] sm:$0xff]
    %v8795 = vld [vmem:[%s8675 + $0x3b8] sm:$0xff]
    %v8796 = vld [vmem:[%s8675 + $0x3c0] sm:$0xff]
    %v8797 = vld [vmem:[%s8675 + $0x3c8] sm:$0xff]
    %v8798 = vld [vmem:[%s8675 + $0x3d0] sm:$0xff]
    %v8799 = vld [vmem:[%s8675 + $0x3d8] sm:$0xff]
    %v8800 = vld [vmem:[%s8675 + $0x3e0] sm:$0x33]
    %v8801 = vld [vmem:[%s8675 + $0x3e8] sm:$0x33]
    %v8928 = vunpack.c.l.b16 %v8676
    %v8929 = vunpack.c.h.b16 %v8676
    %v8930 = vunpack.c.l.b16 %v8677
    %v8931 = vunpack.c.h.b16 %v8677
    %v8932 = vunpack.c.l.b16 %v8678
    %v8933 = vunpack.c.h.b16 %v8678
    %v8934 = vunpack.c.l.b16 %v8679
    %v8935 = vunpack.c.h.b16 %v8679
    %v8936 = vunpack.c.l.b16 %v8680
    %v8937 = vunpack.c.h.b16 %v8680
    %v8938 = vunpack.c.l.b16 %v8681
    %v8939 = vunpack.c.h.b16 %v8681
    %v8940 = vunpack.c.l.b16 %v8682
    %v8941 = vunpack.c.h.b16 %v8682
    %v8942 = vunpack.c.l.b16 %v8683
    %v8943 = vunpack.c.h.b16 %v8683
    %v8944 = vunpack.c.l.b16 %v8684
    %v8945 = vunpack.c.h.b16 %v8684
    %v8946 = vunpack.c.l.b16 %v8685
    %v8947 = vunpack.c.h.b16 %v8685
    %v8948 = vunpack.c.l.b16 %v8686
    %v8949 = vunpack.c.h.b16 %v8686
    %v8950 = vunpack.c.l.b16 %v8687
    %v8951 = vunpack.c.h.b16 %v8687
    %v8952 = vunpack.c.l.b16 %v8688
    %v8953 = vunpack.c.h.b16 %v8688
    %v8954 = vunpack.c.l.b16 %v8689
    %v8955 = vunpack.c.h.b16 %v8689
    %v8956 = vunpack.c.l.b16 %v8690
    %v8957 = vunpack.c.h.b16 %v8690
    %v8958 = vunpack.c.l.b16 %v8691
    %v8959 = vunpack.c.h.b16 %v8691
    %v8960 = vunpack.c.l.b16 %v8692
    %v8961 = vunpack.c.h.b16 %v8692
    %v8962 = vunpack.c.l.b16 %v8693
    %v8963 = vunpack.c.h.b16 %v8693
    %v8964 = vunpack.c.l.b16 %v8694
    %v8965 = vunpack.c.h.b16 %v8694
    %v8966 = vunpack.c.l.b16 %v8695
    %v8967 = vunpack.c.h.b16 %v8695
    %v8968 = vunpack.c.l.b16 %v8696
    %v8969 = vunpack.c.h.b16 %v8696
    %v8970 = vunpack.c.l.b16 %v8697
    %v8971 = vunpack.c.h.b16 %v8697
    %v8972 = vunpack.c.l.b16 %v8698
    %v8973 = vunpack.c.h.b16 %v8698
    %v8974 = vunpack.c.l.b16 %v8699
    %v8975 = vunpack.c.h.b16 %v8699
    %v8976 = vunpack.c.l.b16 %v8700
    %v8977 = vunpack.c.h.b16 %v8700
    %v8978 = vunpack.c.l.b16 %v8701
    %v8979 = vunpack.c.h.b16 %v8701
    %v8980 = vunpack.c.l.b16 %v8702
    %v8981 = vunpack.c.h.b16 %v8702
    %v8982 = vunpack.c.l.b16 %v8703
    %v8983 = vunpack.c.h.b16 %v8703
    %v8984 = vunpack.c.l.b16 %v8704
    %v8985 = vunpack.c.h.b16 %v8704
    %v8986 = vunpack.c.l.b16 %v8705
    %v8987 = vunpack.c.h.b16 %v8705
    %v8988 = vunpack.c.l.b16 %v8706
    %v8989 = vunpack.c.h.b16 %v8706
    %v8990 = vunpack.c.l.b16 %v8707
    %v8991 = vunpack.c.h.b16 %v8707
    %v8992 = vunpack.c.l.b16 %v8708
    %v8993 = vunpack.c.h.b16 %v8708
    %v8994 = vunpack.c.l.b16 %v8709
    %v8995 = vunpack.c.h.b16 %v8709
    %v8996 = vunpack.c.l.b16 %v8710
    %v8997 = vunpack.c.h.b16 %v8710
    %v8998 = vunpack.c.l.b16 %v8711
    %v8999 = vunpack.c.h.b16 %v8711
    %v9000 = vunpack.c.l.b16 %v8712
    %v9001 = vunpack.c.h.b16 %v8712
    %v9002 = vunpack.c.l.b16 %v8713
    %v9003 = vunpack.c.h.b16 %v8713
    %v9004 = vunpack.c.l.b16 %v8714
    %v9005 = vunpack.c.h.b16 %v8714
    %v9006 = vunpack.c.l.b16 %v8715
    %v9007 = vunpack.c.h.b16 %v8715
    %v9008 = vunpack.c.l.b16 %v8716
    %v9009 = vunpack.c.h.b16 %v8716
    %v9010 = vunpack.c.l.b16 %v8717
    %v9011 = vunpack.c.h.b16 %v8717
    %v9012 = vunpack.c.l.b16 %v8718
    %v9013 = vunpack.c.h.b16 %v8718
    %v9014 = vunpack.c.l.b16 %v8719
    %v9015 = vunpack.c.h.b16 %v8719
    %v9016 = vunpack.c.l.b16 %v8720
    %v9017 = vunpack.c.h.b16 %v8720
    %v9018 = vunpack.c.l.b16 %v8721
    %v9019 = vunpack.c.h.b16 %v8721
    %v9020 = vunpack.c.l.b16 %v8722
    %v9021 = vunpack.c.h.b16 %v8722
    %v9022 = vunpack.c.l.b16 %v8723
    %v9023 = vunpack.c.h.b16 %v8723
    %v9024 = vunpack.c.l.b16 %v8724
    %v9025 = vunpack.c.h.b16 %v8724
    %v9026 = vunpack.c.l.b16 %v8725
    %v9027 = vunpack.c.h.b16 %v8725
    %v9028 = vunpack.c.l.b16 %v8726
    %v9029 = vunpack.c.h.b16 %v8726
    %v9030 = vunpack.c.l.b16 %v8727
    %v9031 = vunpack.c.h.b16 %v8727
    %v9032 = vunpack.c.l.b16 %v8728
    %v9033 = vunpack.c.h.b16 %v8728
    %v9034 = vunpack.c.l.b16 %v8729
    %v9035 = vunpack.c.h.b16 %v8729
    %v9036 = vunpack.c.l.b16 %v8730
    %v9037 = vunpack.c.h.b16 %v8730
    %v9038 = vunpack.c.l.b16 %v8731
    %v9039 = vunpack.c.h.b16 %v8731
    %v9040 = vunpack.c.l.b16 %v8732
    %v9041 = vunpack.c.h.b16 %v8732
    %v9042 = vunpack.c.l.b16 %v8733
    %v9043 = vunpack.c.h.b16 %v8733
    %v9044 = vunpack.c.l.b16 %v8734
    %v9045 = vunpack.c.h.b16 %v8734
    %v9046 = vunpack.c.l.b16 %v8735
    %v9047 = vunpack.c.h.b16 %v8735
    %v9048 = vunpack.c.l.b16 %v8736
    %v9049 = vunpack.c.h.b16 %v8736
    %v9050 = vunpack.c.l.b16 %v8737
    %v9051 = vunpack.c.h.b16 %v8737
    %v9052 = vunpack.c.l.b16 %v8738
    %v9053 = vunpack.c.h.b16 %v8738
    %v9054 = vunpack.c.l.b16 %v8739
    %v9055 = vunpack.c.h.b16 %v8739
    %v9056 = vunpack.c.l.b16 %v8740
    %v9057 = vunpack.c.h.b16 %v8740
    %v9058 = vunpack.c.l.b16 %v8741
    %v9059 = vunpack.c.h.b16 %v8741
    %v9060 = vunpack.c.l.b16 %v8742
    %v9061 = vunpack.c.h.b16 %v8742
    %v9062 = vunpack.c.l.b16 %v8743
    %v9063 = vunpack.c.h.b16 %v8743
    %v9064 = vunpack.c.l.b16 %v8744
    %v9065 = vunpack.c.h.b16 %v8744
    %v9066 = vunpack.c.l.b16 %v8745
    %v9067 = vunpack.c.h.b16 %v8745
    %v9068 = vunpack.c.l.b16 %v8746
    %v9069 = vunpack.c.h.b16 %v8746
    %v9070 = vunpack.c.l.b16 %v8747
    %v9071 = vunpack.c.h.b16 %v8747
    %v9072 = vunpack.c.l.b16 %v8748
    %v9073 = vunpack.c.h.b16 %v8748
    %v9074 = vunpack.c.l.b16 %v8749
    %v9075 = vunpack.c.h.b16 %v8749
    %v9076 = vunpack.c.l.b16 %v8750
    %v9077 = vunpack.c.h.b16 %v8750
    %v9078 = vunpack.c.l.b16 %v8751
    %v9079 = vunpack.c.h.b16 %v8751
    %v9080 = vunpack.c.l.b16 %v8752
    %v9081 = vunpack.c.h.b16 %v8752
    %v9082 = vunpack.c.l.b16 %v8753
    %v9083 = vunpack.c.h.b16 %v8753
    %v9084 = vunpack.c.l.b16 %v8754
    %v9085 = vunpack.c.h.b16 %v8754
    %v9086 = vunpack.c.l.b16 %v8755
    %v9087 = vunpack.c.h.b16 %v8755
    %v9088 = vunpack.c.l.b16 %v8756
    %v9089 = vunpack.c.h.b16 %v8756
    %v9090 = vunpack.c.l.b16 %v8757
    %v9091 = vunpack.c.h.b16 %v8757
    %v9092 = vunpack.c.l.b16 %v8758
    %v9093 = vunpack.c.h.b16 %v8758
    %v9094 = vunpack.c.l.b16 %v8759
    %v9095 = vunpack.c.h.b16 %v8759
    %v9096 = vunpack.c.l.b16 %v8760
    %v9097 = vunpack.c.h.b16 %v8760
    %v9098 = vunpack.c.l.b16 %v8761
    %v9099 = vunpack.c.h.b16 %v8761
    %v9100 = vunpack.c.l.b16 %v8762
    %v9101 = vunpack.c.h.b16 %v8762
    %v9102 = vunpack.c.l.b16 %v8763
    %v9103 = vunpack.c.h.b16 %v8763
    %v9104 = vunpack.c.l.b16 %v8764
    %v9105 = vunpack.c.h.b16 %v8764
    %v9106 = vunpack.c.l.b16 %v8765
    %v9107 = vunpack.c.h.b16 %v8765
    %v9108 = vunpack.c.l.b16 %v8766
    %v9109 = vunpack.c.h.b16 %v8766
    %v9110 = vunpack.c.l.b16 %v8767
    %v9111 = vunpack.c.h.b16 %v8767
    %v9112 = vunpack.c.l.b16 %v8768
    %v9113 = vunpack.c.h.b16 %v8768
    %v9114 = vunpack.c.l.b16 %v8769
    %v9115 = vunpack.c.h.b16 %v8769
    %v9116 = vunpack.c.l.b16 %v8770
    %v9117 = vunpack.c.h.b16 %v8770
    %v9118 = vunpack.c.l.b16 %v8771
    %v9119 = vunpack.c.h.b16 %v8771
    %v9120 = vunpack.c.l.b16 %v8772
    %v9121 = vunpack.c.h.b16 %v8772
    %v9122 = vunpack.c.l.b16 %v8773
    %v9123 = vunpack.c.h.b16 %v8773
    %v9124 = vunpack.c.l.b16 %v8774
    %v9125 = vunpack.c.h.b16 %v8774
    %v9126 = vunpack.c.l.b16 %v8775
    %v9127 = vunpack.c.h.b16 %v8775
    %v9128 = vunpack.c.l.b16 %v8776
    %v9129 = vunpack.c.h.b16 %v8776
    %v9130 = vunpack.c.l.b16 %v8777
    %v9131 = vunpack.c.h.b16 %v8777
    %v9132 = vunpack.c.l.b16 %v8778
    %v9133 = vunpack.c.h.b16 %v8778
    %v9134 = vunpack.c.l.b16 %v8779
    %v9135 = vunpack.c.h.b16 %v8779
    %v9136 = vunpack.c.l.b16 %v8780
    %v9137 = vunpack.c.h.b16 %v8780
    %v9138 = vunpack.c.l.b16 %v8781
    %v9139 = vunpack.c.h.b16 %v8781
    %v9140 = vunpack.c.l.b16 %v8782
    %v9141 = vunpack.c.h.b16 %v8782
    %v9142 = vunpack.c.l.b16 %v8783
    %v9143 = vunpack.c.h.b16 %v8783
    %v9144 = vunpack.c.l.b16 %v8784
    %v9145 = vunpack.c.h.b16 %v8784
    %v9146 = vunpack.c.l.b16 %v8785
    %v9147 = vunpack.c.h.b16 %v8785
    %v9148 = vunpack.c.l.b16 %v8786
    %v9149 = vunpack.c.h.b16 %v8786
    %v9150 = vunpack.c.l.b16 %v8787
    %v9151 = vunpack.c.h.b16 %v8787
    %v9152 = vunpack.c.l.b16 %v8788
    %v9153 = vunpack.c.h.b16 %v8788
    %v9154 = vunpack.c.l.b16 %v8789
    %v9155 = vunpack.c.h.b16 %v8789
    %v9156 = vunpack.c.l.b16 %v8790
    %v9157 = vunpack.c.h.b16 %v8790
    %v9158 = vunpack.c.l.b16 %v8791
    %v9159 = vunpack.c.h.b16 %v8791
    %v9160 = vunpack.c.l.b16 %v8792
    %v9161 = vunpack.c.h.b16 %v8792
    %v9162 = vunpack.c.l.b16 %v8793
    %v9163 = vunpack.c.h.b16 %v8793
    %v9164 = vunpack.c.l.b16 %v8794
    %v9165 = vunpack.c.h.b16 %v8794
    %v9166 = vunpack.c.l.b16 %v8795
    %v9167 = vunpack.c.h.b16 %v8795
    %v9168 = vunpack.c.l.b16 %v8796
    %v9169 = vunpack.c.h.b16 %v8796
    %v9170 = vunpack.c.l.b16 %v8797
    %v9171 = vunpack.c.h.b16 %v8797
    %v9172 = vunpack.c.l.b16 %v8798
    %v9173 = vunpack.c.h.b16 %v8798
    %v9174 = vunpack.c.l.b16 %v8799
    %v9175 = vunpack.c.h.b16 %v8799
    %v9176 = vunpack.c.l.b16 %v8800
    %v9177 = vunpack.c.h.b16 %v8800
    %v9178 = vunpack.c.l.b16 %v8801
    %v9179 = vunpack.c.h.b16 %v8801
    %v9180 = vpack.c.b16 %v8932, %v8928
    %v9181 = vpack.c.b16 %v8933, %v8929
    %v9182 = vpack.c.b16 %v8934, %v8930
    %v9183 = vpack.c.b16 %v8935, %v8931
    %v9184 = vpack.c.b16 %v8940, %v8936
    %v9185 = vpack.c.b16 %v8941, %v8937
    %v9186 = vpack.c.b16 %v8942, %v8938
    %v9187 = vpack.c.b16 %v8943, %v8939
    %v9188 = vpack.c.b16 %v8948, %v8944
    %v9189 = vpack.c.b16 %v8949, %v8945
    %v9190 = vpack.c.b16 %v8950, %v8946
    %v9191 = vpack.c.b16 %v8951, %v8947
    %v9192 = vpack.c.b16 %v8956, %v8952
    %v9193 = vpack.c.b16 %v8957, %v8953
    %v9194 = vpack.c.b16 %v8958, %v8954
    %v9195 = vpack.c.b16 %v8959, %v8955
    %v9196 = vpack.c.b16 %v8964, %v8960
    %v9197 = vpack.c.b16 %v8965, %v8961
    %v9198 = vpack.c.b16 %v8966, %v8962
    %v9199 = vpack.c.b16 %v8967, %v8963
    %v9200 = vpack.c.b16 %v8972, %v8968
    %v9201 = vpack.c.b16 %v8973, %v8969
    %v9202 = vpack.c.b16 %v8974, %v8970
    %v9203 = vpack.c.b16 %v8975, %v8971
    %v9204 = vpack.c.b16 %v8980, %v8976
    %v9205 = vpack.c.b16 %v8981, %v8977
    %v9206 = vpack.c.b16 %v8982, %v8978
    %v9207 = vpack.c.b16 %v8983, %v8979
    %v9208 = vpack.c.b16 %v8988, %v8984
    %v9209 = vpack.c.b16 %v8989, %v8985
    %v9210 = vpack.c.b16 %v8990, %v8986
    %v9211 = vpack.c.b16 %v8991, %v8987
    %v9212 = vpack.c.b16 %v8996, %v8992
    %v9213 = vpack.c.b16 %v8997, %v8993
    %v9214 = vpack.c.b16 %v8998, %v8994
    %v9215 = vpack.c.b16 %v8999, %v8995
    %v9216 = vpack.c.b16 %v9004, %v9000
    %v9217 = vpack.c.b16 %v9005, %v9001
    %v9218 = vpack.c.b16 %v9006, %v9002
    %v9219 = vpack.c.b16 %v9007, %v9003
    %v9220 = vpack.c.b16 %v9012, %v9008
    %v9221 = vpack.c.b16 %v9013, %v9009
    %v9222 = vpack.c.b16 %v9014, %v9010
    %v9223 = vpack.c.b16 %v9015, %v9011
    %v9224 = vpack.c.b16 %v9020, %v9016
    %v9225 = vpack.c.b16 %v9021, %v9017
    %v9226 = vpack.c.b16 %v9022, %v9018
    %v9227 = vpack.c.b16 %v9023, %v9019
    %v9228 = vpack.c.b16 %v9028, %v9024
    %v9229 = vpack.c.b16 %v9029, %v9025
    %v9230 = vpack.c.b16 %v9030, %v9026
    %v9231 = vpack.c.b16 %v9031, %v9027
    %v9232 = vpack.c.b16 %v9036, %v9032
    %v9233 = vpack.c.b16 %v9037, %v9033
    %v9234 = vpack.c.b16 %v9038, %v9034
    %v9235 = vpack.c.b16 %v9039, %v9035
    %v9236 = vpack.c.b16 %v9044, %v9040
    %v9237 = vpack.c.b16 %v9045, %v9041
    %v9238 = vpack.c.b16 %v9046, %v9042
    %v9239 = vpack.c.b16 %v9047, %v9043
    %v9240 = vpack.c.b16 %v9052, %v9048
    %v9241 = vpack.c.b16 %v9053, %v9049
    %v9242 = vpack.c.b16 %v9054, %v9050
    %v9243 = vpack.c.b16 %v9055, %v9051
    %v9244 = vpack.c.b16 %v9060, %v9056
    %v9245 = vpack.c.b16 %v9061, %v9057
    %v9246 = vpack.c.b16 %v9062, %v9058
    %v9247 = vpack.c.b16 %v9063, %v9059
    %v9248 = vpack.c.b16 %v9068, %v9064
    %v9249 = vpack.c.b16 %v9069, %v9065
    %v9250 = vpack.c.b16 %v9070, %v9066
    %v9251 = vpack.c.b16 %v9071, %v9067
    %v9252 = vpack.c.b16 %v9076, %v9072
    %v9253 = vpack.c.b16 %v9077, %v9073
    %v9254 = vpack.c.b16 %v9078, %v9074
    %v9255 = vpack.c.b16 %v9079, %v9075
    %v9256 = vpack.c.b16 %v9084, %v9080
    %v9257 = vpack.c.b16 %v9085, %v9081
    %v9258 = vpack.c.b16 %v9086, %v9082
    %v9259 = vpack.c.b16 %v9087, %v9083
    %v9260 = vpack.c.b16 %v9092, %v9088
    %v9261 = vpack.c.b16 %v9093, %v9089
    %v9262 = vpack.c.b16 %v9094, %v9090
    %v9263 = vpack.c.b16 %v9095, %v9091
    %v9264 = vpack.c.b16 %v9100, %v9096
    %v9265 = vpack.c.b16 %v9101, %v9097
    %v9266 = vpack.c.b16 %v9102, %v9098
    %v9267 = vpack.c.b16 %v9103, %v9099
    %v9268 = vpack.c.b16 %v9108, %v9104
    %v9269 = vpack.c.b16 %v9109, %v9105
    %v9270 = vpack.c.b16 %v9110, %v9106
    %v9271 = vpack.c.b16 %v9111, %v9107
    %v9272 = vpack.c.b16 %v9116, %v9112
    %v9273 = vpack.c.b16 %v9117, %v9113
    %v9274 = vpack.c.b16 %v9118, %v9114
    %v9275 = vpack.c.b16 %v9119, %v9115
    %v9276 = vpack.c.b16 %v9124, %v9120
    %v9277 = vpack.c.b16 %v9125, %v9121
    %v9278 = vpack.c.b16 %v9126, %v9122
    %v9279 = vpack.c.b16 %v9127, %v9123
    %v9280 = vpack.c.b16 %v9132, %v9128
    %v9281 = vpack.c.b16 %v9133, %v9129
    %v9282 = vpack.c.b16 %v9134, %v9130
    %v9283 = vpack.c.b16 %v9135, %v9131
    %v9284 = vpack.c.b16 %v9140, %v9136
    %v9285 = vpack.c.b16 %v9141, %v9137
    %v9286 = vpack.c.b16 %v9142, %v9138
    %v9287 = vpack.c.b16 %v9143, %v9139
    %v9288 = vpack.c.b16 %v9148, %v9144
    %v9289 = vpack.c.b16 %v9149, %v9145
    %v9290 = vpack.c.b16 %v9150, %v9146
    %v9291 = vpack.c.b16 %v9151, %v9147
    %v9292 = vpack.c.b16 %v9156, %v9152
    %v9293 = vpack.c.b16 %v9157, %v9153
    %v9294 = vpack.c.b16 %v9158, %v9154
    %v9295 = vpack.c.b16 %v9159, %v9155
    %v9296 = vpack.c.b16 %v9164, %v9160
    %v9297 = vpack.c.b16 %v9165, %v9161
    %v9298 = vpack.c.b16 %v9166, %v9162
    %v9299 = vpack.c.b16 %v9167, %v9163
    %v9300 = vpack.c.b16 %v9172, %v9168
    %v9301 = vpack.c.b16 %v9173, %v9169
    %v9302 = vpack.c.b16 %v9174, %v9170
    %v9303 = vpack.c.b16 %v9175, %v9171
    %v9304 = vpack.c.b16 %v9176, %v9176
    %v9305 = vpack.c.b16 %v9177, %v9177
    %v9306 = vpack.c.b16 %v9178, %v9178
    %v9307 = vpack.c.b16 %v9179, %v9179
    %v9433 = vsel %vm5456, %v8674, 0
    %v9436 = vand.u32 %v9304, %v5462
    %v9439 = vand.u32 %v9305, %v5462
    %v9442 = vand.u32 %v9306, %v5462
    %v9445 = vand.u32 %v9307, %v5462
    %9447 = vmatprep.subr.bf16.mxu0 %v9181
    %9448 = vmatpush1.bf16.msra.mxu0 %v9180
    %9449 = vmatprep.subr.bf16.mxu0 %v9185
    %9450 = vmatpush1.bf16.msra.mxu0 %v9184
    %9451 = vmatprep.subr.bf16.mxu0 %v9189
    %9452 = vmatpush1.bf16.msra.mxu0 %v9188
    %9453 = vmatprep.subr.bf16.mxu0 %v9193
    %9454 = vmatpush1.bf16.msra.mxu0 %v9192
    %9455 = vmatprep.subr.bf16.mxu0 %v9197
    %9456 = vmatpush1.bf16.msra.mxu0 %v9196
    %9457 = vmatprep.subr.bf16.mxu0 %v9201
    %9458 = vmatpush1.bf16.msra.mxu0 %v9200
    %9459 = vmatprep.subr.bf16.mxu0 %v9205
    %9460 = vmatpush1.bf16.msra.mxu0 %v9204
    %9461 = vmatprep.subr.bf16.mxu0 %v9209
    %9462 = vmatpush1.bf16.msra.mxu0 %v9208
    %9463 = vmatprep.subr.bf16.mxu0 %v9213
    %9464 = vmatpush1.bf16.msra.mxu0 %v9212
    %9465 = vmatprep.subr.bf16.mxu0 %v9217
    %9466 = vmatpush1.bf16.msra.mxu0 %v9216
    %9467 = vmatprep.subr.bf16.mxu0 %v9221
    %9468 = vmatpush1.bf16.msra.mxu0 %v9220
    %9469 = vmatprep.subr.bf16.mxu0 %v9225
    %9470 = vmatpush1.bf16.msra.mxu0 %v9224
    %9471 = vmatprep.subr.bf16.mxu0 %v9229
    %9472 = vmatpush1.bf16.msra.mxu0 %v9228
    %9473 = vmatprep.subr.bf16.mxu0 %v9233
    %9474 = vmatpush1.bf16.msra.mxu0 %v9232
    %9475 = vmatprep.subr.bf16.mxu0 %v9237
    %9476 = vmatpush1.bf16.msra.mxu0 %v9236
    %9477 = vmatprep.subr.bf16.mxu0 %v9241
    %9478 = vmatpush1.bf16.msra.mxu0 %v9240
    %9479 = vmatprep.mubr.bf16.mxu0 %v8672
    %9480 = vmatmul.mubr.bf16.gmra.mrb[0].mxu0 %v8671
    %v9481 = vpop.f32.mrb[0].mxu0
    %v9482 = vadd.f32 0.0, %v9481
    %v9483 = vpop.f32.mrb[0].mxu0
    %v9484 = vadd.f32 0.0, %v9483
    %v9485 = vpop.f32.mrb[0].mxu0
    %v9486 = vpop.f32.mrb[0].mxu0
    %9487 = vdwg.mxu0
    %9488 = vmatprep.subr.bf16.mxu0 %v9245
    %9489 = vmatpush1.bf16.msra.mxu0 %v9244
    %9490 = vmatprep.subr.bf16.mxu0 %v9249
    %9491 = vmatpush1.bf16.msra.mxu0 %v9248
    %9492 = vmatprep.subr.bf16.mxu0 %v9253
    %9493 = vmatpush1.bf16.msra.mxu0 %v9252
    %9494 = vmatprep.subr.bf16.mxu0 %v9257
    %9495 = vmatpush1.bf16.msra.mxu0 %v9256
    %9496 = vmatprep.subr.bf16.mxu0 %v9261
    %9497 = vmatpush1.bf16.msra.mxu0 %v9260
    %9498 = vmatprep.subr.bf16.mxu0 %v9265
    %9499 = vmatpush1.bf16.msra.mxu0 %v9264
    %9500 = vmatprep.subr.bf16.mxu0 %v9269
    %9501 = vmatpush1.bf16.msra.mxu0 %v9268
    %9502 = vmatprep.subr.bf16.mxu0 %v9273
    %9503 = vmatpush1.bf16.msra.mxu0 %v9272
    %9504 = vmatprep.subr.bf16.mxu0 %v9277
    %9505 = vmatpush1.bf16.msra.mxu0 %v9276
    %9506 = vmatprep.subr.bf16.mxu0 %v9281
    %9507 = vmatpush1.bf16.msra.mxu0 %v9280
    %9508 = vmatprep.subr.bf16.mxu0 %v9285
    %9509 = vmatpush1.bf16.msra.mxu0 %v9284
    %9510 = vmatprep.subr.bf16.mxu0 %v9289
    %9511 = vmatpush1.bf16.msra.mxu0 %v9288
    %9512 = vmatprep.subr.bf16.mxu0 %v9293
    %9513 = vmatpush1.bf16.msra.mxu0 %v9292
    %9514 = vmatprep.subr.bf16.mxu0 %v9297
    %9515 = vmatpush1.bf16.msra.mxu0 %v9296
    %9516 = vmatprep.subr.bf16.mxu0 %v9301
    %9517 = vmatpush1.bf16.msra.mxu0 %v9300
    %9518 = vmatprep.subr.bf16.mxu0 %v9439
    %9519 = vmatpush1.bf16.msra.mxu0 %v9436
    %9520 = vmatprep.mubr.bf16.mxu0 %v9433
    %9521 = vmatmul.mubr.bf16.gmra.mrb[0].mxu0 %v8673
    %v9522 = vpop.f32.mrb[0].mxu0
    %v9523 = vadd.f32 %v9482, %v9522
    %v9524 = vpop.f32.mrb[0].mxu0
    %v9525 = vadd.f32 %v9484, %v9524
    %v9526 = vpop.f32.mrb[0].mxu0
    %v9527 = vpop.f32.mrb[0].mxu0
    %9528 = vdwg.mxu0
    %9529 = vmatprep.subr.bf16.mxu0 %v9183
    %9530 = vmatpush1.bf16.msra.mxu0 %v9182
    %9531 = vmatprep.subr.bf16.mxu0 %v9187
    %9532 = vmatpush1.bf16.msra.mxu0 %v9186
    %9533 = vmatprep.subr.bf16.mxu0 %v9191
    %9534 = vmatpush1.bf16.msra.mxu0 %v9190
    %9535 = vmatprep.subr.bf16.mxu0 %v9195
    %9536 = vmatpush1.bf16.msra.mxu0 %v9194
    %9537 = vmatprep.subr.bf16.mxu0 %v9199
    %9538 = vmatpush1.bf16.msra.mxu0 %v9198
    %9539 = vmatprep.subr.bf16.mxu0 %v9203
    %9540 = vmatpush1.bf16.msra.mxu0 %v9202
    %9541 = vmatprep.subr.bf16.mxu0 %v9207
    %9542 = vmatpush1.bf16.msra.mxu0 %v9206
    %9543 = vmatprep.subr.bf16.mxu0 %v9211
    %9544 = vmatpush1.bf16.msra.mxu0 %v9210
    %9545 = vmatprep.subr.bf16.mxu0 %v9215
    %9546 = vmatpush1.bf16.msra.mxu0 %v9214
    %9547 = vmatprep.subr.bf16.mxu0 %v9219
    %9548 = vmatpush1.bf16.msra.mxu0 %v9218
    %9549 = vmatprep.subr.bf16.mxu0 %v9223
    %9550 = vmatpush1.bf16.msra.mxu0 %v9222
    %9551 = vmatprep.subr.bf16.mxu0 %v9227
    %9552 = vmatpush1.bf16.msra.mxu0 %v9226
    %9553 = vmatprep.subr.bf16.mxu0 %v9231
    %9554 = vmatpush1.bf16.msra.mxu0 %v9230
    %9555 = vmatprep.subr.bf16.mxu0 %v9235
    %9556 = vmatpush1.bf16.msra.mxu0 %v9234
    %9557 = vmatprep.subr.bf16.mxu0 %v9239
    %9558 = vmatpush1.bf16.msra.mxu0 %v9238
    %9559 = vmatprep.subr.bf16.mxu0 %v9243
    %9560 = vmatpush1.bf16.msra.mxu0 %v9242
    %9561 = vmatprep.mubr.bf16.mxu0 %v8672
    %9562 = vmatmul.mubr.bf16.gmra.mrb[0].mxu0 %v8671
    %v9563 = vpop.f32.mrb[0].mxu0
    %v9564 = vadd.f32 0.0, %v9563
    %v9565 = vpop.f32.mrb[0].mxu0
    %v9566 = vadd.f32 0.0, %v9565
    %v9567 = vpop.f32.mrb[0].mxu0
    %v9568 = vpop.f32.mrb[0].mxu0
    %9569 = vdwg.mxu0
    %9570 = vmatprep.subr.bf16.mxu0 %v9247
    %9571 = vmatpush1.bf16.msra.mxu0 %v9246
    %9572 = vmatprep.subr.bf16.mxu0 %v9251
    %9573 = vmatpush1.bf16.msra.mxu0 %v9250
    %9574 = vmatprep.subr.bf16.mxu0 %v9255
    %9575 = vmatpush1.bf16.msra.mxu0 %v9254
    %9576 = vmatprep.subr.bf16.mxu0 %v9259
    %9577 = vmatpush1.bf16.msra.mxu0 %v9258
    %9578 = vmatprep.subr.bf16.mxu0 %v9263
    %9579 = vmatpush1.bf16.msra.mxu0 %v9262
    %9580 = vmatprep.subr.bf16.mxu0 %v9267
    %9581 = vmatpush1.bf16.msra.mxu0 %v9266
    %9582 = vmatprep.subr.bf16.mxu0 %v9271
    %9583 = vmatpush1.bf16.msra.mxu0 %v9270
    %9584 = vmatprep.subr.bf16.mxu0 %v9275
    %9585 = vmatpush1.bf16.msra.mxu0 %v9274
    %9586 = vmatprep.subr.bf16.mxu0 %v9279
    %9587 = vmatpush1.bf16.msra.mxu0 %v9278
    %9588 = vmatprep.subr.bf16.mxu0 %v9283
    %9589 = vmatpush1.bf16.msra.mxu0 %v9282
    %9590 = vmatprep.subr.bf16.mxu0 %v9287
    %9591 = vmatpush1.bf16.msra.mxu0 %v9286
    %9592 = vmatprep.subr.bf16.mxu0 %v9291
    %9593 = vmatpush1.bf16.msra.mxu0 %v9290
    %9594 = vmatprep.subr.bf16.mxu0 %v9295
    %9595 = vmatpush1.bf16.msra.mxu0 %v9294
    %9596 = vmatprep.subr.bf16.mxu0 %v9299
    %9597 = vmatpush1.bf16.msra.mxu0 %v9298
    %9598 = vmatprep.subr.bf16.mxu0 %v9303
    %9599 = vmatpush1.bf16.msra.mxu0 %v9302
    %9600 = vmatprep.subr.bf16.mxu0 %v9445
    %9601 = vmatpush1.bf16.msra.mxu0 %v9442
    %9602 = vmatprep.mubr.bf16.mxu0 %v9433
    %9603 = vmatmul.mubr.bf16.gmra.mrb[0].mxu0 %v8673
    %v9604 = vpop.f32.mrb[0].mxu0
    %v9605 = vadd.f32 %v9564, %v9604
    %v9606 = vpop.f32.mrb[0].mxu0
    %v9607 = vadd.f32 %v9566, %v9606
    %v9608 = vpop.f32.mrb[0].mxu0
    %v9609 = vpop.f32.mrb[0].mxu0
    %9610 = vdwg.mxu0
    %v9611 = vld [vmem:[#allocation5] sm:$0xff]
    %v9612 = vld [vmem:[#allocation5 + $0x8] sm:$0xff]
    %v9613 = vld [vmem:[#allocation5 + $0x10] sm:$0xff]
    %v9614 = vld [vmem:[#allocation5 + $0x18] sm:$0xff]
    %v9615 = vadd.f32 %v9611, %v9523
    %v9616 = vadd.f32 %v9612, %v9525
    %v9617 = vadd.f32 %v9613, %v9605
    %v9618 = vadd.f32 %v9614, %v9607
    %9619 = vst [vmem:[#allocation5] sm:$0xff] %v9615
    %9620 = vst [vmem:[#allocation5 + $0x8] sm:$0xff] %v9616
    %9621 = vst [vmem:[#allocation5 + $0x10] sm:$0xff] %v9617
    %9622 = vst.msk [vmem:[#allocation5 + $0x18] sm:$0xff] %vm2313, %v9618
    %v9623 = vld [vmem:[#allocation5] sm:$0xff]
    %v9624 = vld [vmem:[#allocation5 + $0x8] sm:$0xff]
    %v9625 = vld [vmem:[#allocation5 + $0x10] sm:$0xff]
    %v9626 = vld [vmem:[#allocation5 + $0x18] sm:$0xff]
    %v9627 = vld [vmem:[#allocation14] sm:$0xf]
    %v9629 = vlaneseq
    %v9630 = vshrl.u32 %v9629, 7
    %v9631 = vsub.s32 0, %v9630
    %v9632 = vrot.slane %v9627, %v9631
    %v9633 = vlaneseq
    %v9634 = vshrl.u32 %v9633, 7
    %v9635 = vsub.s32 1, %v9634
    %v9636 = vrot.slane %v9627, %v9635
    %v9637 = vlaneseq
    %v9638 = vshrl.u32 %v9637, 7
    %v9639 = vsub.s32 2, %v9638
    %v9640 = vrot.slane %v9627, %v9639
    %v9641 = vlaneseq
    %v9642 = vshrl.u32 %v9641, 7
    %v9643 = vsub.s32 3, %v9642
    %v9644 = vrot.slane %v9627, %v9643
    %v9649 = vadd.f32 %v9623, %v9632
    %v9650 = vadd.f32 %v9624, %v9636
    %v9651 = vadd.f32 %v9625, %v9640
    %v9652 = vadd.f32 %v9626, %v9644
    %v9653 = vmax.f32 %v9649, 0.0
    %v9654 = vmax.f32 %v9650, 0.0
    %v9655 = vmax.f32 %v9651, 0.0
    %v9656 = vmax.f32 %v9652, 0.0
    %v9657 = vpack.c.bf16 %v9653, %v9653
    %v9658 = vpack.c.bf16 %v9654, %v9654
    %v9659 = vpack.c.bf16 %v9655, %v9655
    %v9660 = vpack.c.bf16 %v9656, %v9656
    %v9661 = vld [vmem:[%s7] sm:$0xf]
    %v9662 = vld [vmem:[%s7 + $0x4] sm:$0xf]
    %v9663 = vld [vmem:[%s7 + $0x8] sm:$0xf]
    %v9664 = vld [vmem:[%s7 + $0xc] sm:$0xf]
    %v9665 = vld [vmem:[%s7 + $0x10] sm:$0xf]
    %v9666 = vld [vmem:[%s7 + $0x14] sm:$0xf]
    %v9667 = vld [vmem:[%s7 + $0x18] sm:$0xf]
    %v9668 = vld [vmem:[%s7 + $0x1c] sm:$0xf]
    %v9669 = vld [vmem:[%s7 + $0x20] sm:$0xf]
    %v9670 = vld [vmem:[%s7 + $0x24] sm:$0xf]
    %v9671 = vld [vmem:[%s7 + $0x28] sm:$0xf]
    %v9672 = vld [vmem:[%s7 + $0x2c] sm:$0xf]
    %v9673 = vld [vmem:[%s7 + $0x30] sm:$0xf]
    %v9674 = vld [vmem:[%s7 + $0x34] sm:$0xf]
    %v9675 = vld [vmem:[%s7 + $0x38] sm:$0xf]
    %v9676 = vld [vmem:[%s7 + $0x3c] sm:$0xf]
    %v9677 = vld [vmem:[%s7 + $0x40] sm:$0xf]
    %v9678 = vld [vmem:[%s7 + $0x44] sm:$0xf]
    %v9679 = vld [vmem:[%s7 + $0x48] sm:$0xf]
    %v9680 = vld [vmem:[%s7 + $0x4c] sm:$0xf]
    %v9681 = vld [vmem:[%s7 + $0x50] sm:$0xf]
    %v9682 = vld [vmem:[%s7 + $0x54] sm:$0xf]
    %v9683 = vld [vmem:[%s7 + $0x58] sm:$0xf]
    %v9684 = vld [vmem:[%s7 + $0x5c] sm:$0xf]
    %v9685 = vld [vmem:[%s7 + $0x60] sm:$0xf]
    %v9686 = vld [vmem:[%s7 + $0x64] sm:$0xf]
    %v9687 = vld [vmem:[%s7 + $0x68] sm:$0xf]
    %v9688 = vld [vmem:[%s7 + $0x6c] sm:$0xf]
    %v9689 = vld [vmem:[%s7 + $0x70] sm:$0xf]
    %v9690 = vld [vmem:[%s7 + $0x74] sm:$0xf]
    %v9691 = vld [vmem:[%s7 + $0x78] sm:$0xf]
    %v9692 = vld [vmem:[%s7 + $0x7c] sm:$0xf]
    %v9693 = vld [vmem:[%s7 + $0x80] sm:$0xf]
    %v9694 = vld [vmem:[%s7 + $0x84] sm:$0xf]
    %v9695 = vld [vmem:[%s7 + $0x88] sm:$0xf]
    %v9696 = vld [vmem:[%s7 + $0x8c] sm:$0xf]
    %v9697 = vld [vmem:[%s7 + $0x90] sm:$0xf]
    %v9698 = vld [vmem:[%s7 + $0x94] sm:$0xf]
    %v9699 = vld [vmem:[%s7 + $0x98] sm:$0xf]
    %v9700 = vld [vmem:[%s7 + $0x9c] sm:$0xf]
    %v9701 = vld [vmem:[%s7 + $0xa0] sm:$0xf]
    %v9702 = vld [vmem:[%s7 + $0xa4] sm:$0xf]
    %v9703 = vld [vmem:[%s7 + $0xa8] sm:$0xf]
    %v9704 = vld [vmem:[%s7 + $0xac] sm:$0xf]
    %v9705 = vld [vmem:[%s7 + $0xb0] sm:$0xf]
    %v9706 = vld [vmem:[%s7 + $0xb4] sm:$0xf]
    %v9707 = vld [vmem:[%s7 + $0xb8] sm:$0xf]
    %v9708 = vld [vmem:[%s7 + $0xbc] sm:$0xf]
    %v9709 = vld [vmem:[%s7 + $0xc0] sm:$0xf]
    %v9710 = vld [vmem:[%s7 + $0xc4] sm:$0xf]
    %v9711 = vld [vmem:[%s7 + $0xc8] sm:$0xf]
    %v9712 = vld [vmem:[%s7 + $0xcc] sm:$0xf]
    %v9713 = vld [vmem:[%s7 + $0xd0] sm:$0xf]
    %v9714 = vld [vmem:[%s7 + $0xd4] sm:$0xf]
    %v9715 = vld [vmem:[%s7 + $0xd8] sm:$0xf]
    %v9716 = vld [vmem:[%s7 + $0xdc] sm:$0xf]
    %v9717 = vld [vmem:[%s7 + $0xe0] sm:$0xf]
    %v9718 = vld [vmem:[%s7 + $0xe4] sm:$0xf]
    %v9719 = vld [vmem:[%s7 + $0xe8] sm:$0xf]
    %v9720 = vld [vmem:[%s7 + $0xec] sm:$0xf]
    %v9721 = vld [vmem:[%s7 + $0xf0] sm:$0xf]
    %v9722 = vld [vmem:[%s7 + $0xf4] sm:$0xf]
    %v9723 = vld [vmem:[%s7 + $0xf8] sm:$0x3]
    %v9724 = vld [vmem:[#allocation16] sm:$0x1]
    %v9726 = vlaneseq
    %v9727 = vshrl.u32 %v9726, 7
    %v9728 = vsub.s32 0, %v9727
    %v9729 = vrot.slane %v9724, %v9728
    %v9794 = vunpack.c.l.b16 %v9661
    %v9795 = vunpack.c.l.b16 %v9662
    %v9796 = vunpack.c.l.b16 %v9663
    %v9797 = vunpack.c.l.b16 %v9664
    %v9798 = vunpack.c.l.b16 %v9665
    %v9799 = vunpack.c.l.b16 %v9666
    %v9800 = vunpack.c.l.b16 %v9667
    %v9801 = vunpack.c.l.b16 %v9668
    %v9802 = vunpack.c.l.b16 %v9669
    %v9803 = vunpack.c.l.b16 %v9670
    %v9804 = vunpack.c.l.b16 %v9671
    %v9805 = vunpack.c.l.b16 %v9672
    %v9806 = vunpack.c.l.b16 %v9673
    %v9807 = vunpack.c.l.b16 %v9674
    %v9808 = vunpack.c.l.b16 %v9675
    %v9809 = vunpack.c.l.b16 %v9676
    %v9810 = vunpack.c.l.b16 %v9677
    %v9811 = vunpack.c.l.b16 %v9678
    %v9812 = vunpack.c.l.b16 %v9679
    %v9813 = vunpack.c.l.b16 %v9680
    %v9814 = vunpack.c.l.b16 %v9681
    %v9815 = vunpack.c.l.b16 %v9682
    %v9816 = vunpack.c.l.b16 %v9683
    %v9817 = vunpack.c.l.b16 %v9684
    %v9818 = vunpack.c.l.b16 %v9685
    %v9819 = vunpack.c.l.b16 %v9686
    %v9820 = vunpack.c.l.b16 %v9687
    %v9821 = vunpack.c.l.b16 %v9688
    %v9822 = vunpack.c.l.b16 %v9689
    %v9823 = vunpack.c.l.b16 %v9690
    %v9824 = vunpack.c.l.b16 %v9691
    %v9825 = vunpack.c.l.b16 %v9692
    %v9826 = vunpack.c.l.b16 %v9693
    %v9827 = vunpack.c.l.b16 %v9694
    %v9828 = vunpack.c.l.b16 %v9695
    %v9829 = vunpack.c.l.b16 %v9696
    %v9830 = vunpack.c.l.b16 %v9697
    %v9831 = vunpack.c.l.b16 %v9698
    %v9832 = vunpack.c.l.b16 %v9699
    %v9833 = vunpack.c.l.b16 %v9700
    %v9834 = vunpack.c.l.b16 %v9701
    %v9835 = vunpack.c.l.b16 %v9702
    %v9836 = vunpack.c.l.b16 %v9703
    %v9837 = vunpack.c.l.b16 %v9704
    %v9838 = vunpack.c.l.b16 %v9705
    %v9839 = vunpack.c.l.b16 %v9706
    %v9840 = vunpack.c.l.b16 %v9707
    %v9841 = vunpack.c.l.b16 %v9708
    %v9842 = vunpack.c.l.b16 %v9709
    %v9843 = vunpack.c.l.b16 %v9710
    %v9844 = vunpack.c.l.b16 %v9711
    %v9845 = vunpack.c.l.b16 %v9712
    %v9846 = vunpack.c.l.b16 %v9713
    %v9847 = vunpack.c.l.b16 %v9714
    %v9848 = vunpack.c.l.b16 %v9715
    %v9849 = vunpack.c.l.b16 %v9716
    %v9850 = vunpack.c.l.b16 %v9717
    %v9851 = vunpack.c.l.b16 %v9718
    %v9852 = vunpack.c.l.b16 %v9719
    %v9853 = vunpack.c.l.b16 %v9720
    %v9854 = vunpack.c.l.b16 %v9721
    %v9855 = vunpack.c.l.b16 %v9722
    %v9856 = vunpack.c.l.b16 %v9723
    %v9857 = vpack.c.b16 %v9795, %v9794
    %v9858 = vpack.c.b16 %v9797, %v9796
    %v9859 = vpack.c.b16 %v9799, %v9798
    %v9860 = vpack.c.b16 %v9801, %v9800
    %v9861 = vpack.c.b16 %v9803, %v9802
    %v9862 = vpack.c.b16 %v9805, %v9804
    %v9863 = vpack.c.b16 %v9807, %v9806
    %v9864 = vpack.c.b16 %v9809, %v9808
    %v9865 = vpack.c.b16 %v9811, %v9810
    %v9866 = vpack.c.b16 %v9813, %v9812
    %v9867 = vpack.c.b16 %v9815, %v9814
    %v9868 = vpack.c.b16 %v9817, %v9816
    %v9869 = vpack.c.b16 %v9819, %v9818
    %v9870 = vpack.c.b16 %v9821, %v9820
    %v9871 = vpack.c.b16 %v9823, %v9822
    %v9872 = vpack.c.b16 %v9825, %v9824
    %v9873 = vpack.c.b16 %v9827, %v9826
    %v9874 = vpack.c.b16 %v9829, %v9828
    %v9875 = vpack.c.b16 %v9831, %v9830
    %v9876 = vpack.c.b16 %v9833, %v9832
    %v9877 = vpack.c.b16 %v9835, %v9834
    %v9878 = vpack.c.b16 %v9837, %v9836
    %v9879 = vpack.c.b16 %v9839, %v9838
    %v9880 = vpack.c.b16 %v9841, %v9840
    %v9881 = vpack.c.b16 %v9843, %v9842
    %v9882 = vpack.c.b16 %v9845, %v9844
    %v9883 = vpack.c.b16 %v9847, %v9846
    %v9884 = vpack.c.b16 %v9849, %v9848
    %v9885 = vpack.c.b16 %v9851, %v9850
    %v9886 = vpack.c.b16 %v9853, %v9852
    %v9887 = vpack.c.b16 %v9855, %v9854
    %v9888 = vpack.c.b16 %v9856, %v9856
    %v9921 = vsel %vm2313, %v9660, 0
    %v9924 = vsel %vm5460, %v9888, 0
    %9926 = vmatprep.subr.bf16.mxu0 0
    %9927 = vmatpush1.bf16.msra.mxu0 %v9857
    %9928 = vmatprep.subr.bf16.mxu0 0
    %9929 = vmatpush1.bf16.msra.mxu0 %v9858
    %9930 = vmatprep.subr.bf16.mxu0 0
    %9931 = vmatpush1.bf16.msra.mxu0 %v9859
    %9932 = vmatprep.subr.bf16.mxu0 0
    %9933 = vmatpush1.bf16.msra.mxu0 %v9860
    %9934 = vmatprep.subr.bf16.mxu0 0
    %9935 = vmatpush1.bf16.msra.mxu0 %v9861
    %9936 = vmatprep.subr.bf16.mxu0 0
    %9937 = vmatpush1.bf16.msra.mxu0 %v9862
    %9938 = vmatprep.subr.bf16.mxu0 0
    %9939 = vmatpush1.bf16.msra.mxu0 %v9863
    %9940 = vmatprep.subr.bf16.mxu0 0
    %9941 = vmatpush1.bf16.msra.mxu0 %v9864
    %9942 = vmatprep.subr.bf16.mxu0 0
    %9943 = vmatpush1.bf16.msra.mxu0 %v9865
    %9944 = vmatprep.subr.bf16.mxu0 0
    %9945 = vmatpush1.bf16.msra.mxu0 %v9866
    %9946 = vmatprep.subr.bf16.mxu0 0
    %9947 = vmatpush1.bf16.msra.mxu0 %v9867
    %9948 = vmatprep.subr.bf16.mxu0 0
    %9949 = vmatpush1.bf16.msra.mxu0 %v9868
    %9950 = vmatprep.subr.bf16.mxu0 0
    %9951 = vmatpush1.bf16.msra.mxu0 %v9869
    %9952 = vmatprep.subr.bf16.mxu0 0
    %9953 = vmatpush1.bf16.msra.mxu0 %v9870
    %9954 = vmatprep.subr.bf16.mxu0 0
    %9955 = vmatpush1.bf16.msra.mxu0 %v9871
    %9956 = vmatprep.subr.bf16.mxu0 0
    %9957 = vmatpush1.bf16.msra.mxu0 %v9872
    %9958 = vmatprep.mubr.bf16.mxu0 %v9658
    %9959 = vmatmul.mubr.bf16.gmra.mrb[0].mxu0 %v9657
    %v9960 = vpop.f32.mrb[0].mxu0
    %v9961 = vadd.f32 %v9729, %v9960
    %v9962 = vpop.f32.mrb[0].mxu0
    %v9963 = vpop.f32.mrb[0].mxu0
    %v9964 = vpop.f32.mrb[0].mxu0
    %9965 = vdwg.mxu0
    %9966 = vmatprep.subr.bf16.mxu0 0
    %9967 = vmatpush1.bf16.msra.mxu0 %v9873
    %9968 = vmatprep.subr.bf16.mxu0 0
    %9969 = vmatpush1.bf16.msra.mxu0 %v9874
    %9970 = vmatprep.subr.bf16.mxu0 0
    %9971 = vmatpush1.bf16.msra.mxu0 %v9875
    %9972 = vmatprep.subr.bf16.mxu0 0
    %9973 = vmatpush1.bf16.msra.mxu0 %v9876
    %9974 = vmatprep.subr.bf16.mxu0 0
    %9975 = vmatpush1.bf16.msra.mxu0 %v9877
    %9976 = vmatprep.subr.bf16.mxu0 0
    %9977 = vmatpush1.bf16.msra.mxu0 %v9878
    %9978 = vmatprep.subr.bf16.mxu0 0
    %9979 = vmatpush1.bf16.msra.mxu0 %v9879
    %9980 = vmatprep.subr.bf16.mxu0 0
    %9981 = vmatpush1.bf16.msra.mxu0 %v9880
    %9982 = vmatprep.subr.bf16.mxu0 0
    %9983 = vmatpush1.bf16.msra.mxu0 %v9881
    %9984 = vmatprep.subr.bf16.mxu0 0
    %9985 = vmatpush1.bf16.msra.mxu0 %v9882
    %9986 = vmatprep.subr.bf16.mxu0 0
    %9987 = vmatpush1.bf16.msra.mxu0 %v9883
    %9988 = vmatprep.subr.bf16.mxu0 0
    %9989 = vmatpush1.bf16.msra.mxu0 %v9884
    %9990 = vmatprep.subr.bf16.mxu0 0
    %9991 = vmatpush1.bf16.msra.mxu0 %v9885
    %9992 = vmatprep.subr.bf16.mxu0 0
    %9993 = vmatpush1.bf16.msra.mxu0 %v9886
    %9994 = vmatprep.subr.bf16.mxu0 0
    %9995 = vmatpush1.bf16.msra.mxu0 %v9887
    %9996 = vmatprep.subr.bf16.mxu0 0
    %9997 = vmatpush1.bf16.msra.mxu0 %v9924
    %9998 = vmatprep.mubr.bf16.mxu0 %v9921
    %9999 = vmatmul.mubr.bf16.gmra.mrb[0].mxu0 %v9659
    %v10000 = vpop.f32.mrb[0].mxu0
    %v10001 = vadd.f32 %v9961, %v10000
    %v10002 = vpop.f32.mrb[0].mxu0
    %v10003 = vpop.f32.mrb[0].mxu0
    %v10004 = vpop.f32.mrb[0].mxu0
    %10005 = vdwg.mxu0
    %vm10006 = vcmask 80896
    %v10007 = vsel %vm10006, %v10001, -inf
    %10008 = vmax.xlane.f32.xlu0 %v10007
    %v10009 = vpop.xlane.xlu0 %10008
    %v10010 = vsub.f32 %v10001, %v10009
    %v10011 = vmul.f32 %v10010, 1.442695
    %v10012 = vpow.pop %v10011
    %v10013 = vsel %vm10006, %v10012, 0.0
    %10014 = vadd.xlane.f32.xlu0 %v10013
    %v10015 = vpop.xlane.xlu0 %10014
    %v10016 = vlog2.pop %v10015
    %v10017 = vmul.f32 %v10016, 0.6931472
    %v10018 = vadd.f32 %v10009, %v10017
    %v10019 = vsub.f32 %v10001, %v10018
    %10020 = vst.msk [vmem:[%s9] sm:$0xff] %vm10006, %v10019
    // Predicated region
    $region66: #{_forward_impl.1} parent=1 // pred_check
      _
    $region67: #{_forward_impl.1} parent=1 // pred_check_branch
      %10022 = sbr.rel (0) target = $region69
    $region68: #{_forward_impl.1} parent=1 // pred_region
      _
    $region69: #{_forward_impl.1} parent=1 // pred_fallthru
      _
    // Predicated region
    $region70: #{_forward_impl.1} parent=1 // pred_check
      _
    $region71: #{_forward_impl.1} parent=1 // pred_check_branch
      %10024 = sbr.rel (0) target = $region73
    $region72: #{_forward_impl.1} parent=1 // pred_region
      _
    $region73: #{_forward_impl.1} parent=1 // pred_fallthru
      _
    %10025 = vsyncpa [#allocation7], 1
    %10026 = vsyncpa [#allocation9], 1
    %10027 = vsyncpa [#allocation12], 1
    %10028 = vsyncpa [#allocation15], 1

</llo_original>
